<compile_context>
chip_gen: v6e
topology: v6e:2x2x1
jax: 0.10.0
libtpu: 0.0.40
codegen_flags: <defaults>
</compile_context>

<pallas_src>
import jax
import jax.numpy as jnp
from jax.experimental import pallas as pl
from jax.experimental.pallas import tpu as pltpu


# Geometry for the fixed 84x84 input of the DQN module:
#   conv1 (8x8 s4): 20x20x32   -> emitted as stride-2 s2d map: 10x10x128
#   conv2 (4x4 s2): 9x9x64     -> computed as 2x2 s1 conv on the s2d map
#   conv3 (3x3 s1): 7x7x64
# Feature maps are carried as 2D (flattened rows, row stride 10) VMEM values;
# "wide" rows past the valid width hold junk that is never read downstream.
_S2D_ROWS = 100          # 10 * 10 rows of the s2d map
_ROW_STRIDE = 10         # flattened row stride for conv2/conv3 shifts
_W2_WIDE = 89            # (9-1)*10 + 9   rows holding conv2's 9x9 valid output
_W3_WIDE = 67            # (7-1)*10 + 7   rows holding conv3's 7x7 valid output


# ----------------------------------------------------------------------------
# Fused whole-network kernel (one grid step == one sample)
# ----------------------------------------------------------------------------
def _dqn_kernel(p1_ref, w1_ref, b1_ref, w2_ref, b2_ref, w3_ref, b3_ref,
                wf1_ref, bf1_ref, wf2_ref, bf2_ref, q_ref, x3_ref):
    # ---- conv1: one (100, 64F)@(64F, 32) matmul per stride-2 output phase.
    # Phase (ph, pw) rows are ordered (h2*10 + w2) so the lane-concat below is
    # exactly the space-to-depth map conv2 needs (lanes = ph*64 + pw*32 + c).
    w1 = w1_ref[...]                                   # (64F, 32) bf16, /255 folded
    b1 = b1_ref[...]                                   # (1, 32) f32
    phases = []
    for qidx in range(4):
        pq = p1_ref[0, qidx].astype(jnp.float32).astype(jnp.bfloat16)  # u8 -> bf16
        acc = jnp.dot(pq, w1, preferred_element_type=jnp.float32)      # (100, 32)
        phases.append(jnp.maximum(acc + b1, 0.0).astype(jnp.bfloat16))
    a1 = jnp.concatenate(phases, axis=1)               # (100, 128) bf16 s2d map

    # ---- conv2 (4x4 stride 2) == 2x2 stride-1 conv on the s2d map:
    # 4 shifted (89,128)@(128,64) matmuls, accumulate in f32.
    acc2 = jnp.zeros((_W2_WIDE, 64), jnp.float32)
    for a in range(2):
        for b in range(2):
            off = a * _ROW_STRIDE + b
            acc2 = acc2 + jnp.dot(a1[off:off + _W2_WIDE, :],
                                  w2_ref[a * 2 + b],
                                  preferred_element_type=jnp.float32)
    a2 = jnp.maximum(acc2 + b2_ref[...], 0.0).astype(jnp.bfloat16)   # (89, 64)

    # ---- conv3 (3x3 stride 1): 9 shifted (67,64)@(64,64) matmuls.
    acc3 = jnp.zeros((_W3_WIDE, 64), jnp.float32)
    for di in range(3):
        for dj in range(3):
            off = di * _ROW_STRIDE + dj
            acc3 = acc3 + jnp.dot(a2[off:off + _W3_WIDE, :],
                                  w3_ref[di * 3 + dj],
                                  preferred_element_type=jnp.float32)
    a3 = jnp.maximum(acc3 + b3_ref[...], 0.0)                         # (67, 64) f32

    # ---- flatten the valid 7x7x64 block to (1, 3136) in (h, w, c) order via a
    # VMEM scratch (sublane-major -> lane-major relayout through memory).
    # wf1's rows are pre-permuted so this matches torch's NCHW Flatten.
    for h in range(7):
        for w in range(7):
            src = h * _ROW_STRIDE + w
            dst = (h * 7 + w) * 64
            x3_ref[:, dst:dst + 64] = a3[src:src + 1, :]

    # ---- FC head: (1,3136)@(3136,512) + ReLU, then (1,512)@(512,A) + bias.
    xf = x3_ref[...].astype(jnp.bfloat16)
    h1 = jnp.dot(xf, wf1_ref[...], preferred_element_type=jnp.float32)
    h1 = jnp.maximum(h1 + bf1_ref[...], 0.0).astype(jnp.bfloat16)
    qv = jnp.dot(h1, wf2_ref[...], preferred_element_type=jnp.float32) + bf2_ref[...]
    q_ref[...] = qv.reshape(q_ref.shape)


# ----------------------------------------------------------------------------
# Wrapper: uint8 phase-separated im2col for conv1 + the fused pallas_call
# ----------------------------------------------------------------------------
def _conv1_phase_patches(obs_u8):
    """(B, F, 84, 84) uint8 -> (B, 4, 100, 64*F) uint8.

    Row r = h2*10 + w2 of phase q = ph*2 + pw holds the 8x8xF conv1 receptive
    field of output position (2*h2 + ph, 2*w2 + pw), columns ordered (ki,kj,f).
    """
    B, F = obs_u8.shape[0], obs_u8.shape[1]
    x = obs_u8.transpose(0, 2, 3, 1)                    # (B, 84, 84, F) NHWC
    cols = []
    for ki in range(8):
        for kj in range(8):
            cols.append(x[:, ki:ki + 77:4, kj:kj + 77:4, :])   # (B, 20, 20, F)
    p = jnp.stack(cols, axis=3)                         # (B, 20, 20, 64, F)
    p = p.reshape(B, 20, 20, 64 * F)                    # columns (ki, kj, f)
    phases = [p[:, ph::2, pw::2, :].reshape(B, _S2D_ROWS, 64 * F)
              for ph in range(2) for pw in range(2)]
    return jnp.stack(phases, axis=1)                    # (B, 4, 100, 64F) uint8


def dqn_forward(params, obs_u8):
    B, F = obs_u8.shape[0], obs_u8.shape[1]
    K1 = 64 * F
    A = params["wf2"].shape[1]
    patches = _conv1_phase_patches(obs_u8)              # uint8, 100 KB/sample

    def resident(shape):                                # weight: same block every step
        nd = len(shape)
        return pl.BlockSpec(shape, lambda i, _nd=nd: (0,) * _nd)

    grid_spec = pltpu.PrefetchScalarGridSpec(
        num_scalar_prefetch=0,
        grid=(B,),
        in_specs=[
            pl.BlockSpec((1, 4, _S2D_ROWS, K1), lambda i: (i, 0, 0, 0)),  # patches
            resident((K1, 32)), resident((1, 32)),       # conv1 w, b
            resident((4, 128, 64)), resident((1, 64)),   # conv2 (s2d taps) w, b
            resident((9, 64, 64)), resident((1, 64)),    # conv3 taps w, b
            resident((3136, 512)), resident((1, 512)),   # fc1 w, b
            resident((512, A)), resident((1, A)),        # fc2 w, b
        ],
        out_specs=pl.BlockSpec((1, 1, A), lambda i: (i, 0, 0)),
        scratch_shapes=[pltpu.VMEM((1, 3136), jnp.float32)],
    )

    out = pl.pallas_call(
        _dqn_kernel,
        out_shape=jax.ShapeDtypeStruct((B, 1, A), jnp.float32),
        grid_spec=grid_spec,
        compiler_params=pltpu.CompilerParams(
            dimension_semantics=("parallel",),
            vmem_limit_bytes=32 * 1024 * 1024,
        ),
    )(patches, params["w1"], params["b1"], params["w2"], params["b2"],
      params["w3"], params["b3"], params["wf1"], params["bf1"],
      params["wf2"], params["bf2"])
    return out.reshape(B, A)


# ----------------------------------------------------------------------------
# Parameters: PyTorch-layout init, then a one-time kernel-layout prep
# ----------------------------------------------------------------------------
def init_params(key, num_frames, num_actions):
    ks = jax.random.split(key, 10)

    def u(k, shape, fan_in):
        bound = 1.0 / float(fan_in) ** 0.5
        return jax.random.uniform(k, shape, jnp.float32, -bound, bound)

    conv_out = 64 * 7 * 7  # 3136 for 84x84 inputs, as derived in DQN.__init__
    return {
        "w1": u(ks[0], (32, num_frames, 8, 8), num_frames * 64),
        "b1": u(ks[1], (32,), num_frames * 64),
        "w2": u(ks[2], (64, 32, 4, 4), 32 * 16),
        "b2": u(ks[3], (64,), 32 * 16),
        "w3": u(ks[4], (64, 64, 3, 3), 64 * 9),
        "b3": u(ks[5], (64,), 64 * 9),
        "wf1": u(ks[6], (conv_out, 512), conv_out),   # rows in NCHW-flatten order
        "bf1": u(ks[7], (512,), conv_out),
        "wf2": u(ks[8], (512, num_actions), 512),
        "bf2": u(ks[9], (num_actions,), 512),
    }


def prepare_params(raw):
    """One-time transform to the kernel layouts (bf16 matmul operands,
    f32 biases, 1/255 folded into conv1, FC1 rows permuted to (h,w,c))."""
    F = raw["w1"].shape[1]

    # conv1: (oc, f, ki, kj) -> ((ki, kj, f), oc), 1/255 folded in.
    w1 = (raw["w1"] / 255.0).transpose(2, 3, 1, 0).reshape(64 * F, 32)

    # conv2 as a 2x2 stride-1 conv over the stride-2 space-to-depth map:
    # tap t = a*2 + b, row index = ph*64 + pw*32 + c, with (di, dj) = (2a+ph, 2b+pw).
    w2 = raw["w2"].reshape(64, 32, 2, 2, 2, 2)            # (oc, c, a, ph, b, pw)
    w2 = w2.transpose(2, 4, 3, 5, 1, 0).reshape(4, 128, 64)

    # conv3 taps: t = di*3 + dj, (c, oc).
    w3 = raw["w3"].transpose(2, 3, 1, 0).reshape(9, 64, 64)

    # FC1 rows permuted from torch's (c, h, w) flatten to the kernel's (h, w, c).
    wf1 = raw["wf1"].reshape(64, 7, 7, 512).transpose(1, 2, 0, 3).reshape(3136, 512)

    bf16 = jnp.bfloat16
    return {
        "w1": w1.astype(bf16), "b1": raw["b1"].reshape(1, 32).astype(jnp.float32),
        "w2": w2.astype(bf16), "b2": raw["b2"].reshape(1, 64).astype(jnp.float32),
        "w3": w3.astype(bf16), "b3": raw["b3"].reshape(1, 64).astype(jnp.float32),
        "wf1": wf1.astype(bf16), "bf1": raw["bf1"].reshape(1, 512).astype(jnp.float32),
        "wf2": raw["wf2"].astype(bf16),
        "bf2": raw["bf2"].reshape(1, -1).astype(jnp.float32),
    }


if __name__ == "__main__":
    num_frames, num_actions, batch = 4, 6, 2
    key = jax.random.PRNGKey(0)
    pkey, xkey = jax.random.split(key)
    params = prepare_params(init_params(pkey, num_frames, num_actions))
    # 84x84 spatial size is fixed by the module's FC-input derivation.
    obs = jax.random.randint(
        xkey, (batch, num_frames, 84, 84), 0, 256, dtype=jnp.int32
    ).astype(jnp.uint8)

    q_values = jax.jit(dqn_forward)(params, obs)
    q_values = jax.block_until_ready(q_values)
    assert q_values.shape == (batch, num_actions), q_values.shape
    assert q_values.dtype == jnp.float32
    print("KERNEL_OK")
</pallas_src>

<mosaic_0001>
module attributes {stable_mosaic.version = 11 : i64} {
  func.func @_dqn_kernel(%arg0: i32, %arg1: memref<1x4x100x256xi8, #tpu.memory_space<vmem>>, %arg2: memref<256x32xbf16, #tpu.memory_space<vmem>>, %arg3: memref<1x32xf32, #tpu.memory_space<vmem>>, %arg4: memref<4x128x64xbf16, #tpu.memory_space<vmem>>, %arg5: memref<1x64xf32, #tpu.memory_space<vmem>>, %arg6: memref<9x64x64xbf16, #tpu.memory_space<vmem>>, %arg7: memref<1x64xf32, #tpu.memory_space<vmem>>, %arg8: memref<3136x512xbf16, #tpu.memory_space<vmem>>, %arg9: memref<1x512xf32, #tpu.memory_space<vmem>>, %arg10: memref<512x6xbf16, #tpu.memory_space<vmem>>, %arg11: memref<1x6xf32, #tpu.memory_space<vmem>>, %arg12: memref<1x1x6xf32, #tpu.memory_space<vmem>>, %arg13: memref<1x3136xf32, #tpu.memory_space<vmem>>) attributes {dimension_semantics = [#tpu.dimension_semantics<parallel>], iteration_bounds = array<i64: 2>, scalar_prefetch = 0 : i64, scratch_operands = 1 : i64, tpu.core_type = #tpu.core_type<tc>, window_params = [{transform_indices = @transform_0, window_bounds = array<i64: 1, 4, 100, 256>}, {pipeline_mode = #tpu.pipeline_mode<synchronous>, transform_indices = @transform_1, window_bounds = array<i64: 256, 32>}, {pipeline_mode = #tpu.pipeline_mode<synchronous>, transform_indices = @transform_2, window_bounds = array<i64: 1, 32>}, {pipeline_mode = #tpu.pipeline_mode<synchronous>, transform_indices = @transform_3, window_bounds = array<i64: 4, 128, 64>}, {pipeline_mode = #tpu.pipeline_mode<synchronous>, transform_indices = @transform_4, window_bounds = array<i64: 1, 64>}, {pipeline_mode = #tpu.pipeline_mode<synchronous>, transform_indices = @transform_5, window_bounds = array<i64: 9, 64, 64>}, {pipeline_mode = #tpu.pipeline_mode<synchronous>, transform_indices = @transform_6, window_bounds = array<i64: 1, 64>}, {pipeline_mode = #tpu.pipeline_mode<synchronous>, transform_indices = @transform_7, window_bounds = array<i64: 3136, 512>}, {pipeline_mode = #tpu.pipeline_mode<synchronous>, transform_indices = @transform_8, window_bounds = array<i64: 1, 512>}, {pipeline_mode = #tpu.pipeline_mode<synchronous>, transform_indices = @transform_9, window_bounds = array<i64: 512, 6>}, {pipeline_mode = #tpu.pipeline_mode<synchronous>, transform_indices = @transform_10, window_bounds = array<i64: 1, 6>}, {transform_indices = @transform_11, window_bounds = array<i64: 1, 1, 6>}]} {
    %c0 = arith.constant 0 : index
    %c0_0 = arith.constant 0 : index
    %0 = vector.load %arg2[%c0, %c0_0] : memref<256x32xbf16, #tpu.memory_space<vmem>>, vector<256x32xbf16>
    %c0_1 = arith.constant 0 : index
    %c0_2 = arith.constant 0 : index
    %1 = vector.load %arg3[%c0_1, %c0_2] : memref<1x32xf32, #tpu.memory_space<vmem>>, vector<1x32xf32>
    %c0_3 = arith.constant 0 : index
    %c0_4 = arith.constant 0 : index
    %c0_5 = arith.constant 0 : index
    %c0_6 = arith.constant 0 : index
    %2 = vector.load %arg1[%c0_3, %c0_4, %c0_5, %c0_6] : memref<1x4x100x256xi8, #tpu.memory_space<vmem>>, vector<1x1x100x256xi8>
    %3 = vector.shape_cast %2 : vector<1x1x100x256xi8> to vector<100x256xi8>
    %4 = arith.uitofp %3 : vector<100x256xi8> to vector<100x256xf32>
    %5 = arith.truncf %4 : vector<100x256xf32> to vector<100x256xbf16>
    %cst = arith.constant dense<0.000000e+00> : vector<100x32xf32>
    %6 = tpu.matmul %5, %0, %cst {dimension_numbers = #tpu.dot_dimension_numbers<[1], [0], [0], [1], [0, 0, 1, 1], [], []>} : vector<100x256xbf16>, vector<256x32xbf16>, vector<100x32xf32> -> vector<100x32xf32>
    %7 = vector.broadcast %1 : vector<1x32xf32> to vector<100x32xf32>
    %8 = arith.addf %6, %7 : vector<100x32xf32>
    %cst_7 = arith.constant 0.000000e+00 : f32
    %9 = vector.broadcast %cst_7 : f32 to vector<100x32xf32>
    %10 = arith.maximumf %8, %9 : vector<100x32xf32>
    %11 = arith.truncf %10 : vector<100x32xf32> to vector<100x32xbf16>
    %c0_8 = arith.constant 0 : index
    %c1 = arith.constant 1 : index
    %c0_9 = arith.constant 0 : index
    %c0_10 = arith.constant 0 : index
    %12 = vector.load %arg1[%c0_8, %c1, %c0_9, %c0_10] : memref<1x4x100x256xi8, #tpu.memory_space<vmem>>, vector<1x1x100x256xi8>
    %13 = vector.shape_cast %12 : vector<1x1x100x256xi8> to vector<100x256xi8>
    %14 = arith.uitofp %13 : vector<100x256xi8> to vector<100x256xf32>
    %15 = arith.truncf %14 : vector<100x256xf32> to vector<100x256xbf16>
    %cst_11 = arith.constant dense<0.000000e+00> : vector<100x32xf32>
    %16 = tpu.matmul %15, %0, %cst_11 {dimension_numbers = #tpu.dot_dimension_numbers<[1], [0], [0], [1], [0, 0, 1, 1], [], []>} : vector<100x256xbf16>, vector<256x32xbf16>, vector<100x32xf32> -> vector<100x32xf32>
    %17 = vector.broadcast %1 : vector<1x32xf32> to vector<100x32xf32>
    %18 = arith.addf %16, %17 : vector<100x32xf32>
    %cst_12 = arith.constant 0.000000e+00 : f32
    %19 = vector.broadcast %cst_12 : f32 to vector<100x32xf32>
    %20 = arith.maximumf %18, %19 : vector<100x32xf32>
    %21 = arith.truncf %20 : vector<100x32xf32> to vector<100x32xbf16>
    %c0_13 = arith.constant 0 : index
    %c2 = arith.constant 2 : index
    %c0_14 = arith.constant 0 : index
    %c0_15 = arith.constant 0 : index
    %22 = vector.load %arg1[%c0_13, %c2, %c0_14, %c0_15] : memref<1x4x100x256xi8, #tpu.memory_space<vmem>>, vector<1x1x100x256xi8>
    %23 = vector.shape_cast %22 : vector<1x1x100x256xi8> to vector<100x256xi8>
    %24 = arith.uitofp %23 : vector<100x256xi8> to vector<100x256xf32>
    %25 = arith.truncf %24 : vector<100x256xf32> to vector<100x256xbf16>
    %cst_16 = arith.constant dense<0.000000e+00> : vector<100x32xf32>
    %26 = tpu.matmul %25, %0, %cst_16 {dimension_numbers = #tpu.dot_dimension_numbers<[1], [0], [0], [1], [0, 0, 1, 1], [], []>} : vector<100x256xbf16>, vector<256x32xbf16>, vector<100x32xf32> -> vector<100x32xf32>
    %27 = vector.broadcast %1 : vector<1x32xf32> to vector<100x32xf32>
    %28 = arith.addf %26, %27 : vector<100x32xf32>
    %cst_17 = arith.constant 0.000000e+00 : f32
    %29 = vector.broadcast %cst_17 : f32 to vector<100x32xf32>
    %30 = arith.maximumf %28, %29 : vector<100x32xf32>
    %31 = arith.truncf %30 : vector<100x32xf32> to vector<100x32xbf16>
    %c0_18 = arith.constant 0 : index
    %c3 = arith.constant 3 : index
    %c0_19 = arith.constant 0 : index
    %c0_20 = arith.constant 0 : index
    %32 = vector.load %arg1[%c0_18, %c3, %c0_19, %c0_20] : memref<1x4x100x256xi8, #tpu.memory_space<vmem>>, vector<1x1x100x256xi8>
    %33 = vector.shape_cast %32 : vector<1x1x100x256xi8> to vector<100x256xi8>
    %34 = arith.uitofp %33 : vector<100x256xi8> to vector<100x256xf32>
    %35 = arith.truncf %34 : vector<100x256xf32> to vector<100x256xbf16>
    %cst_21 = arith.constant dense<0.000000e+00> : vector<100x32xf32>
    %36 = tpu.matmul %35, %0, %cst_21 {dimension_numbers = #tpu.dot_dimension_numbers<[1], [0], [0], [1], [0, 0, 1, 1], [], []>} : vector<100x256xbf16>, vector<256x32xbf16>, vector<100x32xf32> -> vector<100x32xf32>
    %37 = vector.broadcast %1 : vector<1x32xf32> to vector<100x32xf32>
    %38 = arith.addf %36, %37 : vector<100x32xf32>
    %cst_22 = arith.constant 0.000000e+00 : f32
    %39 = vector.broadcast %cst_22 : f32 to vector<100x32xf32>
    %40 = arith.maximumf %38, %39 : vector<100x32xf32>
    %41 = arith.truncf %40 : vector<100x32xf32> to vector<100x32xbf16>
    %42 = tpu.concatenate %11, %21, %31, %41 in 1 : vector<100x32xbf16>, vector<100x32xbf16>, vector<100x32xbf16>, vector<100x32xbf16> -> vector<100x128xbf16>
    %cst_23 = arith.constant 0.000000e+00 : f32
    %43 = vector.broadcast %cst_23 : f32 to vector<89x64xf32>
    %44 = vector.extract_strided_slice %42 {offsets = [0, 0], sizes = [89, 128], strides = [1, 1]} : vector<100x128xbf16> to vector<89x128xbf16>
    %c0_24 = arith.constant 0 : index
    %c0_25 = arith.constant 0 : index
    %c0_26 = arith.constant 0 : index
    %45 = vector.load %arg4[%c0_24, %c0_25, %c0_26] : memref<4x128x64xbf16, #tpu.memory_space<vmem>>, vector<1x128x64xbf16>
    %46 = vector.shape_cast %45 : vector<1x128x64xbf16> to vector<128x64xbf16>
    %cst_27 = arith.constant dense<0.000000e+00> : vector<89x64xf32>
    %47 = tpu.matmul %44, %46, %cst_27 {dimension_numbers = #tpu.dot_dimension_numbers<[1], [0], [0], [1], [0, 0, 1, 1], [], []>} : vector<89x128xbf16>, vector<128x64xbf16>, vector<89x64xf32> -> vector<89x64xf32>
    %48 = arith.addf %43, %47 : vector<89x64xf32>
    %49 = vector.extract_strided_slice %42 {offsets = [1, 0], sizes = [89, 128], strides = [1, 1]} : vector<100x128xbf16> to vector<89x128xbf16>
    %c1_28 = arith.constant 1 : index
    %c0_29 = arith.constant 0 : index
    %c0_30 = arith.constant 0 : index
    %50 = vector.load %arg4[%c1_28, %c0_29, %c0_30] : memref<4x128x64xbf16, #tpu.memory_space<vmem>>, vector<1x128x64xbf16>
    %51 = vector.shape_cast %50 : vector<1x128x64xbf16> to vector<128x64xbf16>
    %cst_31 = arith.constant dense<0.000000e+00> : vector<89x64xf32>
    %52 = tpu.matmul %49, %51, %cst_31 {dimension_numbers = #tpu.dot_dimension_numbers<[1], [0], [0], [1], [0, 0, 1, 1], [], []>} : vector<89x128xbf16>, vector<128x64xbf16>, vector<89x64xf32> -> vector<89x64xf32>
    %53 = arith.addf %48, %52 : vector<89x64xf32>
    %54 = vector.extract_strided_slice %42 {offsets = [10, 0], sizes = [89, 128], strides = [1, 1]} : vector<100x128xbf16> to vector<89x128xbf16>
    %c2_32 = arith.constant 2 : index
    %c0_33 = arith.constant 0 : index
    %c0_34 = arith.constant 0 : index
    %55 = vector.load %arg4[%c2_32, %c0_33, %c0_34] : memref<4x128x64xbf16, #tpu.memory_space<vmem>>, vector<1x128x64xbf16>
    %56 = vector.shape_cast %55 : vector<1x128x64xbf16> to vector<128x64xbf16>
    %cst_35 = arith.constant dense<0.000000e+00> : vector<89x64xf32>
    %57 = tpu.matmul %54, %56, %cst_35 {dimension_numbers = #tpu.dot_dimension_numbers<[1], [0], [0], [1], [0, 0, 1, 1], [], []>} : vector<89x128xbf16>, vector<128x64xbf16>, vector<89x64xf32> -> vector<89x64xf32>
    %58 = arith.addf %53, %57 : vector<89x64xf32>
    %59 = vector.extract_strided_slice %42 {offsets = [11, 0], sizes = [89, 128], strides = [1, 1]} : vector<100x128xbf16> to vector<89x128xbf16>
    %c3_36 = arith.constant 3 : index
    %c0_37 = arith.constant 0 : index
    %c0_38 = arith.constant 0 : index
    %60 = vector.load %arg4[%c3_36, %c0_37, %c0_38] : memref<4x128x64xbf16, #tpu.memory_space<vmem>>, vector<1x128x64xbf16>
    %61 = vector.shape_cast %60 : vector<1x128x64xbf16> to vector<128x64xbf16>
    %cst_39 = arith.constant dense<0.000000e+00> : vector<89x64xf32>
    %62 = tpu.matmul %59, %61, %cst_39 {dimension_numbers = #tpu.dot_dimension_numbers<[1], [0], [0], [1], [0, 0, 1, 1], [], []>} : vector<89x128xbf16>, vector<128x64xbf16>, vector<89x64xf32> -> vector<89x64xf32>
    %63 = arith.addf %58, %62 : vector<89x64xf32>
    %c0_40 = arith.constant 0 : index
    %c0_41 = arith.constant 0 : index
    %64 = vector.load %arg5[%c0_40, %c0_41] : memref<1x64xf32, #tpu.memory_space<vmem>>, vector<1x64xf32>
    %65 = vector.broadcast %64 : vector<1x64xf32> to vector<89x64xf32>
    %66 = arith.addf %63, %65 : vector<89x64xf32>
    %cst_42 = arith.constant 0.000000e+00 : f32
    %67 = vector.broadcast %cst_42 : f32 to vector<89x64xf32>
    %68 = arith.maximumf %66, %67 : vector<89x64xf32>
    %69 = arith.truncf %68 : vector<89x64xf32> to vector<89x64xbf16>
    %cst_43 = arith.constant 0.000000e+00 : f32
    %70 = vector.broadcast %cst_43 : f32 to vector<67x64xf32>
    %71 = vector.extract_strided_slice %69 {offsets = [0, 0], sizes = [67, 64], strides = [1, 1]} : vector<89x64xbf16> to vector<67x64xbf16>
    %c0_44 = arith.constant 0 : index
    %c0_45 = arith.constant 0 : index
    %c0_46 = arith.constant 0 : index
    %72 = vector.load %arg6[%c0_44, %c0_45, %c0_46] : memref<9x64x64xbf16, #tpu.memory_space<vmem>>, vector<1x64x64xbf16>
    %73 = vector.shape_cast %72 : vector<1x64x64xbf16> to vector<64x64xbf16>
    %cst_47 = arith.constant dense<0.000000e+00> : vector<67x64xf32>
    %74 = tpu.matmul %71, %73, %cst_47 {dimension_numbers = #tpu.dot_dimension_numbers<[1], [0], [0], [1], [0, 0, 1, 1], [], []>} : vector<67x64xbf16>, vector<64x64xbf16>, vector<67x64xf32> -> vector<67x64xf32>
    %75 = arith.addf %70, %74 : vector<67x64xf32>
    %76 = vector.extract_strided_slice %69 {offsets = [1, 0], sizes = [67, 64], strides = [1, 1]} : vector<89x64xbf16> to vector<67x64xbf16>
    %c1_48 = arith.constant 1 : index
    %c0_49 = arith.constant 0 : index
    %c0_50 = arith.constant 0 : index
    %77 = vector.load %arg6[%c1_48, %c0_49, %c0_50] : memref<9x64x64xbf16, #tpu.memory_space<vmem>>, vector<1x64x64xbf16>
    %78 = vector.shape_cast %77 : vector<1x64x64xbf16> to vector<64x64xbf16>
    %cst_51 = arith.constant dense<0.000000e+00> : vector<67x64xf32>
    %79 = tpu.matmul %76, %78, %cst_51 {dimension_numbers = #tpu.dot_dimension_numbers<[1], [0], [0], [1], [0, 0, 1, 1], [], []>} : vector<67x64xbf16>, vector<64x64xbf16>, vector<67x64xf32> -> vector<67x64xf32>
    %80 = arith.addf %75, %79 : vector<67x64xf32>
    %81 = vector.extract_strided_slice %69 {offsets = [2, 0], sizes = [67, 64], strides = [1, 1]} : vector<89x64xbf16> to vector<67x64xbf16>
    %c2_52 = arith.constant 2 : index
    %c0_53 = arith.constant 0 : index
    %c0_54 = arith.constant 0 : index
    %82 = vector.load %arg6[%c2_52, %c0_53, %c0_54] : memref<9x64x64xbf16, #tpu.memory_space<vmem>>, vector<1x64x64xbf16>
    %83 = vector.shape_cast %82 : vector<1x64x64xbf16> to vector<64x64xbf16>
    %cst_55 = arith.constant dense<0.000000e+00> : vector<67x64xf32>
    %84 = tpu.matmul %81, %83, %cst_55 {dimension_numbers = #tpu.dot_dimension_numbers<[1], [0], [0], [1], [0, 0, 1, 1], [], []>} : vector<67x64xbf16>, vector<64x64xbf16>, vector<67x64xf32> -> vector<67x64xf32>
    %85 = arith.addf %80, %84 : vector<67x64xf32>
    %86 = vector.extract_strided_slice %69 {offsets = [10, 0], sizes = [67, 64], strides = [1, 1]} : vector<89x64xbf16> to vector<67x64xbf16>
    %c3_56 = arith.constant 3 : index
    %c0_57 = arith.constant 0 : index
    %c0_58 = arith.constant 0 : index
    %87 = vector.load %arg6[%c3_56, %c0_57, %c0_58] : memref<9x64x64xbf16, #tpu.memory_space<vmem>>, vector<1x64x64xbf16>
    %88 = vector.shape_cast %87 : vector<1x64x64xbf16> to vector<64x64xbf16>
    %cst_59 = arith.constant dense<0.000000e+00> : vector<67x64xf32>
    %89 = tpu.matmul %86, %88, %cst_59 {dimension_numbers = #tpu.dot_dimension_numbers<[1], [0], [0], [1], [0, 0, 1, 1], [], []>} : vector<67x64xbf16>, vector<64x64xbf16>, vector<67x64xf32> -> vector<67x64xf32>
    %90 = arith.addf %85, %89 : vector<67x64xf32>
    %91 = vector.extract_strided_slice %69 {offsets = [11, 0], sizes = [67, 64], strides = [1, 1]} : vector<89x64xbf16> to vector<67x64xbf16>
    %c4 = arith.constant 4 : index
    %c0_60 = arith.constant 0 : index
    %c0_61 = arith.constant 0 : index
    %92 = vector.load %arg6[%c4, %c0_60, %c0_61] : memref<9x64x64xbf16, #tpu.memory_space<vmem>>, vector<1x64x64xbf16>
    %93 = vector.shape_cast %92 : vector<1x64x64xbf16> to vector<64x64xbf16>
    %cst_62 = arith.constant dense<0.000000e+00> : vector<67x64xf32>
    %94 = tpu.matmul %91, %93, %cst_62 {dimension_numbers = #tpu.dot_dimension_numbers<[1], [0], [0], [1], [0, 0, 1, 1], [], []>} : vector<67x64xbf16>, vector<64x64xbf16>, vector<67x64xf32> -> vector<67x64xf32>
    %95 = arith.addf %90, %94 : vector<67x64xf32>
    %96 = vector.extract_strided_slice %69 {offsets = [12, 0], sizes = [67, 64], strides = [1, 1]} : vector<89x64xbf16> to vector<67x64xbf16>
    %c5 = arith.constant 5 : index
    %c0_63 = arith.constant 0 : index
    %c0_64 = arith.constant 0 : index
    %97 = vector.load %arg6[%c5, %c0_63, %c0_64] : memref<9x64x64xbf16, #tpu.memory_space<vmem>>, vector<1x64x64xbf16>
    %98 = vector.shape_cast %97 : vector<1x64x64xbf16> to vector<64x64xbf16>
    %cst_65 = arith.constant dense<0.000000e+00> : vector<67x64xf32>
    %99 = tpu.matmul %96, %98, %cst_65 {dimension_numbers = #tpu.dot_dimension_numbers<[1], [0], [0], [1], [0, 0, 1, 1], [], []>} : vector<67x64xbf16>, vector<64x64xbf16>, vector<67x64xf32> -> vector<67x64xf32>
    %100 = arith.addf %95, %99 : vector<67x64xf32>
    %101 = vector.extract_strided_slice %69 {offsets = [20, 0], sizes = [67, 64], strides = [1, 1]} : vector<89x64xbf16> to vector<67x64xbf16>
    %c6 = arith.constant 6 : index
    %c0_66 = arith.constant 0 : index
    %c0_67 = arith.constant 0 : index
    %102 = vector.load %arg6[%c6, %c0_66, %c0_67] : memref<9x64x64xbf16, #tpu.memory_space<vmem>>, vector<1x64x64xbf16>
    %103 = vector.shape_cast %102 : vector<1x64x64xbf16> to vector<64x64xbf16>
    %cst_68 = arith.constant dense<0.000000e+00> : vector<67x64xf32>
    %104 = tpu.matmul %101, %103, %cst_68 {dimension_numbers = #tpu.dot_dimension_numbers<[1], [0], [0], [1], [0, 0, 1, 1], [], []>} : vector<67x64xbf16>, vector<64x64xbf16>, vector<67x64xf32> -> vector<67x64xf32>
    %105 = arith.addf %100, %104 : vector<67x64xf32>
    %106 = vector.extract_strided_slice %69 {offsets = [21, 0], sizes = [67, 64], strides = [1, 1]} : vector<89x64xbf16> to vector<67x64xbf16>
    %c7 = arith.constant 7 : index
    %c0_69 = arith.constant 0 : index
    %c0_70 = arith.constant 0 : index
    %107 = vector.load %arg6[%c7, %c0_69, %c0_70] : memref<9x64x64xbf16, #tpu.memory_space<vmem>>, vector<1x64x64xbf16>
    %108 = vector.shape_cast %107 : vector<1x64x64xbf16> to vector<64x64xbf16>
    %cst_71 = arith.constant dense<0.000000e+00> : vector<67x64xf32>
    %109 = tpu.matmul %106, %108, %cst_71 {dimension_numbers = #tpu.dot_dimension_numbers<[1], [0], [0], [1], [0, 0, 1, 1], [], []>} : vector<67x64xbf16>, vector<64x64xbf16>, vector<67x64xf32> -> vector<67x64xf32>
    %110 = arith.addf %105, %109 : vector<67x64xf32>
    %111 = vector.extract_strided_slice %69 {offsets = [22, 0], sizes = [67, 64], strides = [1, 1]} : vector<89x64xbf16> to vector<67x64xbf16>
    %c8 = arith.constant 8 : index
    %c0_72 = arith.constant 0 : index
    %c0_73 = arith.constant 0 : index
    %112 = vector.load %arg6[%c8, %c0_72, %c0_73] : memref<9x64x64xbf16, #tpu.memory_space<vmem>>, vector<1x64x64xbf16>
    %113 = vector.shape_cast %112 : vector<1x64x64xbf16> to vector<64x64xbf16>
    %cst_74 = arith.constant dense<0.000000e+00> : vector<67x64xf32>
    %114 = tpu.matmul %111, %113, %cst_74 {dimension_numbers = #tpu.dot_dimension_numbers<[1], [0], [0], [1], [0, 0, 1, 1], [], []>} : vector<67x64xbf16>, vector<64x64xbf16>, vector<67x64xf32> -> vector<67x64xf32>
    %115 = arith.addf %110, %114 : vector<67x64xf32>
    %c0_75 = arith.constant 0 : index
    %c0_76 = arith.constant 0 : index
    %116 = vector.load %arg7[%c0_75, %c0_76] : memref<1x64xf32, #tpu.memory_space<vmem>>, vector<1x64xf32>
    %117 = vector.broadcast %116 : vector<1x64xf32> to vector<67x64xf32>
    %118 = arith.addf %115, %117 : vector<67x64xf32>
    %cst_77 = arith.constant 0.000000e+00 : f32
    %119 = vector.broadcast %cst_77 : f32 to vector<67x64xf32>
    %120 = arith.maximumf %118, %119 : vector<67x64xf32>
    %121 = vector.extract_strided_slice %120 {offsets = [0, 0], sizes = [1, 64], strides = [1, 1]} : vector<67x64xf32> to vector<1x64xf32>
    %c0_78 = arith.constant 0 : index
    %c0_79 = arith.constant 0 : index
    %122 = vector.load %arg13[%c0_78, %c0_79] : memref<1x3136xf32, #tpu.memory_space<vmem>>, vector<1x64xf32>
    tpu.vector_store %arg13[%c0_78, %c0_79], %121 {strides = array<i32>} : memref<1x3136xf32, #tpu.memory_space<vmem>>, vector<1x64xf32>,
    %123 = vector.extract_strided_slice %120 {offsets = [1, 0], sizes = [1, 64], strides = [1, 1]} : vector<67x64xf32> to vector<1x64xf32>
    %c0_80 = arith.constant 0 : index
    %c64 = arith.constant 64 : index
    %124 = vector.load %arg13[%c0_80, %c64] : memref<1x3136xf32, #tpu.memory_space<vmem>>, vector<1x64xf32>
    tpu.vector_store %arg13[%c0_80, %c64], %123 {strides = array<i32>} : memref<1x3136xf32, #tpu.memory_space<vmem>>, vector<1x64xf32>,
    %125 = vector.extract_strided_slice %120 {offsets = [2, 0], sizes = [1, 64], strides = [1, 1]} : vector<67x64xf32> to vector<1x64xf32>
    %c0_81 = arith.constant 0 : index
    %c128 = arith.constant 128 : index
    %126 = vector.load %arg13[%c0_81, %c128] : memref<1x3136xf32, #tpu.memory_space<vmem>>, vector<1x64xf32>
    tpu.vector_store %arg13[%c0_81, %c128], %125 {strides = array<i32>} : memref<1x3136xf32, #tpu.memory_space<vmem>>, vector<1x64xf32>,
    %127 = vector.extract_strided_slice %120 {offsets = [3, 0], sizes = [1, 64], strides = [1, 1]} : vector<67x64xf32> to vector<1x64xf32>
    %c0_82 = arith.constant 0 : index
    %c192 = arith.constant 192 : index
    %128 = vector.load %arg13[%c0_82, %c192] : memref<1x3136xf32, #tpu.memory_space<vmem>>, vector<1x64xf32>
    tpu.vector_store %arg13[%c0_82, %c192], %127 {strides = array<i32>} : memref<1x3136xf32, #tpu.memory_space<vmem>>, vector<1x64xf32>,
    %129 = vector.extract_strided_slice %120 {offsets = [4, 0], sizes = [1, 64], strides = [1, 1]} : vector<67x64xf32> to vector<1x64xf32>
    %c0_83 = arith.constant 0 : index
    %c256 = arith.constant 256 : index
    %130 = vector.load %arg13[%c0_83, %c256] : memref<1x3136xf32, #tpu.memory_space<vmem>>, vector<1x64xf32>
    tpu.vector_store %arg13[%c0_83, %c256], %129 {strides = array<i32>} : memref<1x3136xf32, #tpu.memory_space<vmem>>, vector<1x64xf32>,
    %131 = vector.extract_strided_slice %120 {offsets = [5, 0], sizes = [1, 64], strides = [1, 1]} : vector<67x64xf32> to vector<1x64xf32>
    %c0_84 = arith.constant 0 : index
    %c320 = arith.constant 320 : index
    %132 = vector.load %arg13[%c0_84, %c320] : memref<1x3136xf32, #tpu.memory_space<vmem>>, vector<1x64xf32>
    tpu.vector_store %arg13[%c0_84, %c320], %131 {strides = array<i32>} : memref<1x3136xf32, #tpu.memory_space<vmem>>, vector<1x64xf32>,
    %133 = vector.extract_strided_slice %120 {offsets = [6, 0], sizes = [1, 64], strides = [1, 1]} : vector<67x64xf32> to vector<1x64xf32>
    %c0_85 = arith.constant 0 : index
    %c384 = arith.constant 384 : index
    %134 = vector.load %arg13[%c0_85, %c384] : memref<1x3136xf32, #tpu.memory_space<vmem>>, vector<1x64xf32>
    tpu.vector_store %arg13[%c0_85, %c384], %133 {strides = array<i32>} : memref<1x3136xf32, #tpu.memory_space<vmem>>, vector<1x64xf32>,
    %135 = vector.extract_strided_slice %120 {offsets = [10, 0], sizes = [1, 64], strides = [1, 1]} : vector<67x64xf32> to vector<1x64xf32>
    %c0_86 = arith.constant 0 : index
    %c448 = arith.constant 448 : index
    %136 = vector.load %arg13[%c0_86, %c448] : memref<1x3136xf32, #tpu.memory_space<vmem>>, vector<1x64xf32>
    tpu.vector_store %arg13[%c0_86, %c448], %135 {strides = array<i32>} : memref<1x3136xf32, #tpu.memory_space<vmem>>, vector<1x64xf32>,
    %137 = vector.extract_strided_slice %120 {offsets = [11, 0], sizes = [1, 64], strides = [1, 1]} : vector<67x64xf32> to vector<1x64xf32>
    %c0_87 = arith.constant 0 : index
    %c512 = arith.constant 512 : index
    %138 = vector.load %arg13[%c0_87, %c512] : memref<1x3136xf32, #tpu.memory_space<vmem>>, vector<1x64xf32>
    tpu.vector_store %arg13[%c0_87, %c512], %137 {strides = array<i32>} : memref<1x3136xf32, #tpu.memory_space<vmem>>, vector<1x64xf32>,
    %139 = vector.extract_strided_slice %120 {offsets = [12, 0], sizes = [1, 64], strides = [1, 1]} : vector<67x64xf32> to vector<1x64xf32>
    %c0_88 = arith.constant 0 : index
    %c576 = arith.constant 576 : index
    %140 = vector.load %arg13[%c0_88, %c576] : memref<1x3136xf32, #tpu.memory_space<vmem>>, vector<1x64xf32>
    tpu.vector_store %arg13[%c0_88, %c576], %139 {strides = array<i32>} : memref<1x3136xf32, #tpu.memory_space<vmem>>, vector<1x64xf32>,
    %141 = vector.extract_strided_slice %120 {offsets = [13, 0], sizes = [1, 64], strides = [1, 1]} : vector<67x64xf32> to vector<1x64xf32>
    %c0_89 = arith.constant 0 : index
    %c640 = arith.constant 640 : index
    %142 = vector.load %arg13[%c0_89, %c640] : memref<1x3136xf32, #tpu.memory_space<vmem>>, vector<1x64xf32>
    tpu.vector_store %arg13[%c0_89, %c640], %141 {strides = array<i32>} : memref<1x3136xf32, #tpu.memory_space<vmem>>, vector<1x64xf32>,
    %143 = vector.extract_strided_slice %120 {offsets = [14, 0], sizes = [1, 64], strides = [1, 1]} : vector<67x64xf32> to vector<1x64xf32>
    %c0_90 = arith.constant 0 : index
    %c704 = arith.constant 704 : index
    %144 = vector.load %arg13[%c0_90, %c704] : memref<1x3136xf32, #tpu.memory_space<vmem>>, vector<1x64xf32>
    tpu.vector_store %arg13[%c0_90, %c704], %143 {strides = array<i32>} : memref<1x3136xf32, #tpu.memory_space<vmem>>, vector<1x64xf32>,
    %145 = vector.extract_strided_slice %120 {offsets = [15, 0], sizes = [1, 64], strides = [1, 1]} : vector<67x64xf32> to vector<1x64xf32>
    %c0_91 = arith.constant 0 : index
    %c768 = arith.constant 768 : index
    %146 = vector.load %arg13[%c0_91, %c768] : memref<1x3136xf32, #tpu.memory_space<vmem>>, vector<1x64xf32>
    tpu.vector_store %arg13[%c0_91, %c768], %145 {strides = array<i32>} : memref<1x3136xf32, #tpu.memory_space<vmem>>, vector<1x64xf32>,
    %147 = vector.extract_strided_slice %120 {offsets = [16, 0], sizes = [1, 64], strides = [1, 1]} : vector<67x64xf32> to vector<1x64xf32>
    %c0_92 = arith.constant 0 : index
    %c832 = arith.constant 832 : index
    %148 = vector.load %arg13[%c0_92, %c832] : memref<1x3136xf32, #tpu.memory_space<vmem>>, vector<1x64xf32>
    tpu.vector_store %arg13[%c0_92, %c832], %147 {strides = array<i32>} : memref<1x3136xf32, #tpu.memory_space<vmem>>, vector<1x64xf32>,
    %149 = vector.extract_strided_slice %120 {offsets = [20, 0], sizes = [1, 64], strides = [1, 1]} : vector<67x64xf32> to vector<1x64xf32>
    %c0_93 = arith.constant 0 : index
    %c896 = arith.constant 896 : index
    %150 = vector.load %arg13[%c0_93, %c896] : memref<1x3136xf32, #tpu.memory_space<vmem>>, vector<1x64xf32>
    tpu.vector_store %arg13[%c0_93, %c896], %149 {strides = array<i32>} : memref<1x3136xf32, #tpu.memory_space<vmem>>, vector<1x64xf32>,
    %151 = vector.extract_strided_slice %120 {offsets = [21, 0], sizes = [1, 64], strides = [1, 1]} : vector<67x64xf32> to vector<1x64xf32>
    %c0_94 = arith.constant 0 : index
    %c960 = arith.constant 960 : index
    %152 = vector.load %arg13[%c0_94, %c960] : memref<1x3136xf32, #tpu.memory_space<vmem>>, vector<1x64xf32>
    tpu.vector_store %arg13[%c0_94, %c960], %151 {strides = array<i32>} : memref<1x3136xf32, #tpu.memory_space<vmem>>, vector<1x64xf32>,
    %153 = vector.extract_strided_slice %120 {offsets = [22, 0], sizes = [1, 64], strides = [1, 1]} : vector<67x64xf32> to vector<1x64xf32>
    %c0_95 = arith.constant 0 : index
    %c1024 = arith.constant 1024 : index
    %154 = vector.load %arg13[%c0_95, %c1024] : memref<1x3136xf32, #tpu.memory_space<vmem>>, vector<1x64xf32>
    tpu.vector_store %arg13[%c0_95, %c1024], %153 {strides = array<i32>} : memref<1x3136xf32, #tpu.memory_space<vmem>>, vector<1x64xf32>,
    %155 = vector.extract_strided_slice %120 {offsets = [23, 0], sizes = [1, 64], strides = [1, 1]} : vector<67x64xf32> to vector<1x64xf32>
    %c0_96 = arith.constant 0 : index
    %c1088 = arith.constant 1088 : index
    %156 = vector.load %arg13[%c0_96, %c1088] : memref<1x3136xf32, #tpu.memory_space<vmem>>, vector<1x64xf32>
    tpu.vector_store %arg13[%c0_96, %c1088], %155 {strides = array<i32>} : memref<1x3136xf32, #tpu.memory_space<vmem>>, vector<1x64xf32>,
    %157 = vector.extract_strided_slice %120 {offsets = [24, 0], sizes = [1, 64], strides = [1, 1]} : vector<67x64xf32> to vector<1x64xf32>
    %c0_97 = arith.constant 0 : index
    %c1152 = arith.constant 1152 : index
    %158 = vector.load %arg13[%c0_97, %c1152] : memref<1x3136xf32, #tpu.memory_space<vmem>>, vector<1x64xf32>
    tpu.vector_store %arg13[%c0_97, %c1152], %157 {strides = array<i32>} : memref<1x3136xf32, #tpu.memory_space<vmem>>, vector<1x64xf32>,
    %159 = vector.extract_strided_slice %120 {offsets = [25, 0], sizes = [1, 64], strides = [1, 1]} : vector<67x64xf32> to vector<1x64xf32>
    %c0_98 = arith.constant 0 : index
    %c1216 = arith.constant 1216 : index
    %160 = vector.load %arg13[%c0_98, %c1216] : memref<1x3136xf32, #tpu.memory_space<vmem>>, vector<1x64xf32>
    tpu.vector_store %arg13[%c0_98, %c1216], %159 {strides = array<i32>} : memref<1x3136xf32, #tpu.memory_space<vmem>>, vector<1x64xf32>,
    %161 = vector.extract_strided_slice %120 {offsets = [26, 0], sizes = [1, 64], strides = [1, 1]} : vector<67x64xf32> to vector<1x64xf32>
    %c0_99 = arith.constant 0 : index
    %c1280 = arith.constant 1280 : index
    %162 = vector.load %arg13[%c0_99, %c1280] : memref<1x3136xf32, #tpu.memory_space<vmem>>, vector<1x64xf32>
    tpu.vector_store %arg13[%c0_99, %c1280], %161 {strides = array<i32>} : memref<1x3136xf32, #tpu.memory_space<vmem>>, vector<1x64xf32>,
    %163 = vector.extract_strided_slice %120 {offsets = [30, 0], sizes = [1, 64], strides = [1, 1]} : vector<67x64xf32> to vector<1x64xf32>
    %c0_100 = arith.constant 0 : index
    %c1344 = arith.constant 1344 : index
    %164 = vector.load %arg13[%c0_100, %c1344] : memref<1x3136xf32, #tpu.memory_space<vmem>>, vector<1x64xf32>
    tpu.vector_store %arg13[%c0_100, %c1344], %163 {strides = array<i32>} : memref<1x3136xf32, #tpu.memory_space<vmem>>, vector<1x64xf32>,
    %165 = vector.extract_strided_slice %120 {offsets = [31, 0], sizes = [1, 64], strides = [1, 1]} : vector<67x64xf32> to vector<1x64xf32>
    %c0_101 = arith.constant 0 : index
    %c1408 = arith.constant 1408 : index
    %166 = vector.load %arg13[%c0_101, %c1408] : memref<1x3136xf32, #tpu.memory_space<vmem>>, vector<1x64xf32>
    tpu.vector_store %arg13[%c0_101, %c1408], %165 {strides = array<i32>} : memref<1x3136xf32, #tpu.memory_space<vmem>>, vector<1x64xf32>,
    %167 = vector.extract_strided_slice %120 {offsets = [32, 0], sizes = [1, 64], strides = [1, 1]} : vector<67x64xf32> to vector<1x64xf32>
    %c0_102 = arith.constant 0 : index
    %c1472 = arith.constant 1472 : index
    %168 = vector.load %arg13[%c0_102, %c1472] : memref<1x3136xf32, #tpu.memory_space<vmem>>, vector<1x64xf32>
    tpu.vector_store %arg13[%c0_102, %c1472], %167 {strides = array<i32>} : memref<1x3136xf32, #tpu.memory_space<vmem>>, vector<1x64xf32>,
    %169 = vector.extract_strided_slice %120 {offsets = [33, 0], sizes = [1, 64], strides = [1, 1]} : vector<67x64xf32> to vector<1x64xf32>
    %c0_103 = arith.constant 0 : index
    %c1536 = arith.constant 1536 : index
    %170 = vector.load %arg13[%c0_103, %c1536] : memref<1x3136xf32, #tpu.memory_space<vmem>>, vector<1x64xf32>
    tpu.vector_store %arg13[%c0_103, %c1536], %169 {strides = array<i32>} : memref<1x3136xf32, #tpu.memory_space<vmem>>, vector<1x64xf32>,
    %171 = vector.extract_strided_slice %120 {offsets = [34, 0], sizes = [1, 64], strides = [1, 1]} : vector<67x64xf32> to vector<1x64xf32>
    %c0_104 = arith.constant 0 : index
    %c1600 = arith.constant 1600 : index
    %172 = vector.load %arg13[%c0_104, %c1600] : memref<1x3136xf32, #tpu.memory_space<vmem>>, vector<1x64xf32>
    tpu.vector_store %arg13[%c0_104, %c1600], %171 {strides = array<i32>} : memref<1x3136xf32, #tpu.memory_space<vmem>>, vector<1x64xf32>,
    %173 = vector.extract_strided_slice %120 {offsets = [35, 0], sizes = [1, 64], strides = [1, 1]} : vector<67x64xf32> to vector<1x64xf32>
    %c0_105 = arith.constant 0 : index
    %c1664 = arith.constant 1664 : index
    %174 = vector.load %arg13[%c0_105, %c1664] : memref<1x3136xf32, #tpu.memory_space<vmem>>, vector<1x64xf32>
    tpu.vector_store %arg13[%c0_105, %c1664], %173 {strides = array<i32>} : memref<1x3136xf32, #tpu.memory_space<vmem>>, vector<1x64xf32>,
    %175 = vector.extract_strided_slice %120 {offsets = [36, 0], sizes = [1, 64], strides = [1, 1]} : vector<67x64xf32> to vector<1x64xf32>
    %c0_106 = arith.constant 0 : index
    %c1728 = arith.constant 1728 : index
    %176 = vector.load %arg13[%c0_106, %c1728] : memref<1x3136xf32, #tpu.memory_space<vmem>>, vector<1x64xf32>
    tpu.vector_store %arg13[%c0_106, %c1728], %175 {strides = array<i32>} : memref<1x3136xf32, #tpu.memory_space<vmem>>, vector<1x64xf32>,
    %177 = vector.extract_strided_slice %120 {offsets = [40, 0], sizes = [1, 64], strides = [1, 1]} : vector<67x64xf32> to vector<1x64xf32>
    %c0_107 = arith.constant 0 : index
    %c1792 = arith.constant 1792 : index
    %178 = vector.load %arg13[%c0_107, %c1792] : memref<1x3136xf32, #tpu.memory_space<vmem>>, vector<1x64xf32>
    tpu.vector_store %arg13[%c0_107, %c1792], %177 {strides = array<i32>} : memref<1x3136xf32, #tpu.memory_space<vmem>>, vector<1x64xf32>,
    %179 = vector.extract_strided_slice %120 {offsets = [41, 0], sizes = [1, 64], strides = [1, 1]} : vector<67x64xf32> to vector<1x64xf32>
    %c0_108 = arith.constant 0 : index
    %c1856 = arith.constant 1856 : index
    %180 = vector.load %arg13[%c0_108, %c1856] : memref<1x3136xf32, #tpu.memory_space<vmem>>, vector<1x64xf32>
    tpu.vector_store %arg13[%c0_108, %c1856], %179 {strides = array<i32>} : memref<1x3136xf32, #tpu.memory_space<vmem>>, vector<1x64xf32>,
    %181 = vector.extract_strided_slice %120 {offsets = [42, 0], sizes = [1, 64], strides = [1, 1]} : vector<67x64xf32> to vector<1x64xf32>
    %c0_109 = arith.constant 0 : index
    %c1920 = arith.constant 1920 : index
    %182 = vector.load %arg13[%c0_109, %c1920] : memref<1x3136xf32, #tpu.memory_space<vmem>>, vector<1x64xf32>
    tpu.vector_store %arg13[%c0_109, %c1920], %181 {strides = array<i32>} : memref<1x3136xf32, #tpu.memory_space<vmem>>, vector<1x64xf32>,
    %183 = vector.extract_strided_slice %120 {offsets = [43, 0], sizes = [1, 64], strides = [1, 1]} : vector<67x64xf32> to vector<1x64xf32>
    %c0_110 = arith.constant 0 : index
    %c1984 = arith.constant 1984 : index
    %184 = vector.load %arg13[%c0_110, %c1984] : memref<1x3136xf32, #tpu.memory_space<vmem>>, vector<1x64xf32>
    tpu.vector_store %arg13[%c0_110, %c1984], %183 {strides = array<i32>} : memref<1x3136xf32, #tpu.memory_space<vmem>>, vector<1x64xf32>,
    %185 = vector.extract_strided_slice %120 {offsets = [44, 0], sizes = [1, 64], strides = [1, 1]} : vector<67x64xf32> to vector<1x64xf32>
    %c0_111 = arith.constant 0 : index
    %c2048 = arith.constant 2048 : index
    %186 = vector.load %arg13[%c0_111, %c2048] : memref<1x3136xf32, #tpu.memory_space<vmem>>, vector<1x64xf32>
    tpu.vector_store %arg13[%c0_111, %c2048], %185 {strides = array<i32>} : memref<1x3136xf32, #tpu.memory_space<vmem>>, vector<1x64xf32>,
    %187 = vector.extract_strided_slice %120 {offsets = [45, 0], sizes = [1, 64], strides = [1, 1]} : vector<67x64xf32> to vector<1x64xf32>
    %c0_112 = arith.constant 0 : index
    %c2112 = arith.constant 2112 : index
    %188 = vector.load %arg13[%c0_112, %c2112] : memref<1x3136xf32, #tpu.memory_space<vmem>>, vector<1x64xf32>
    tpu.vector_store %arg13[%c0_112, %c2112], %187 {strides = array<i32>} : memref<1x3136xf32, #tpu.memory_space<vmem>>, vector<1x64xf32>,
    %189 = vector.extract_strided_slice %120 {offsets = [46, 0], sizes = [1, 64], strides = [1, 1]} : vector<67x64xf32> to vector<1x64xf32>
    %c0_113 = arith.constant 0 : index
    %c2176 = arith.constant 2176 : index
    %190 = vector.load %arg13[%c0_113, %c2176] : memref<1x3136xf32, #tpu.memory_space<vmem>>, vector<1x64xf32>
    tpu.vector_store %arg13[%c0_113, %c2176], %189 {strides = array<i32>} : memref<1x3136xf32, #tpu.memory_space<vmem>>, vector<1x64xf32>,
    %191 = vector.extract_strided_slice %120 {offsets = [50, 0], sizes = [1, 64], strides = [1, 1]} : vector<67x64xf32> to vector<1x64xf32>
    %c0_114 = arith.constant 0 : index
    %c2240 = arith.constant 2240 : index
    %192 = vector.load %arg13[%c0_114, %c2240] : memref<1x3136xf32, #tpu.memory_space<vmem>>, vector<1x64xf32>
    tpu.vector_store %arg13[%c0_114, %c2240], %191 {strides = array<i32>} : memref<1x3136xf32, #tpu.memory_space<vmem>>, vector<1x64xf32>,
    %193 = vector.extract_strided_slice %120 {offsets = [51, 0], sizes = [1, 64], strides = [1, 1]} : vector<67x64xf32> to vector<1x64xf32>
    %c0_115 = arith.constant 0 : index
    %c2304 = arith.constant 2304 : index
    %194 = vector.load %arg13[%c0_115, %c2304] : memref<1x3136xf32, #tpu.memory_space<vmem>>, vector<1x64xf32>
    tpu.vector_store %arg13[%c0_115, %c2304], %193 {strides = array<i32>} : memref<1x3136xf32, #tpu.memory_space<vmem>>, vector<1x64xf32>,
    %195 = vector.extract_strided_slice %120 {offsets = [52, 0], sizes = [1, 64], strides = [1, 1]} : vector<67x64xf32> to vector<1x64xf32>
    %c0_116 = arith.constant 0 : index
    %c2368 = arith.constant 2368 : index
    %196 = vector.load %arg13[%c0_116, %c2368] : memref<1x3136xf32, #tpu.memory_space<vmem>>, vector<1x64xf32>
    tpu.vector_store %arg13[%c0_116, %c2368], %195 {strides = array<i32>} : memref<1x3136xf32, #tpu.memory_space<vmem>>, vector<1x64xf32>,
    %197 = vector.extract_strided_slice %120 {offsets = [53, 0], sizes = [1, 64], strides = [1, 1]} : vector<67x64xf32> to vector<1x64xf32>
    %c0_117 = arith.constant 0 : index
    %c2432 = arith.constant 2432 : index
    %198 = vector.load %arg13[%c0_117, %c2432] : memref<1x3136xf32, #tpu.memory_space<vmem>>, vector<1x64xf32>
    tpu.vector_store %arg13[%c0_117, %c2432], %197 {strides = array<i32>} : memref<1x3136xf32, #tpu.memory_space<vmem>>, vector<1x64xf32>,
    %199 = vector.extract_strided_slice %120 {offsets = [54, 0], sizes = [1, 64], strides = [1, 1]} : vector<67x64xf32> to vector<1x64xf32>
    %c0_118 = arith.constant 0 : index
    %c2496 = arith.constant 2496 : index
    %200 = vector.load %arg13[%c0_118, %c2496] : memref<1x3136xf32, #tpu.memory_space<vmem>>, vector<1x64xf32>
    tpu.vector_store %arg13[%c0_118, %c2496], %199 {strides = array<i32>} : memref<1x3136xf32, #tpu.memory_space<vmem>>, vector<1x64xf32>,
    %201 = vector.extract_strided_slice %120 {offsets = [55, 0], sizes = [1, 64], strides = [1, 1]} : vector<67x64xf32> to vector<1x64xf32>
    %c0_119 = arith.constant 0 : index
    %c2560 = arith.constant 2560 : index
    %202 = vector.load %arg13[%c0_119, %c2560] : memref<1x3136xf32, #tpu.memory_space<vmem>>, vector<1x64xf32>
    tpu.vector_store %arg13[%c0_119, %c2560], %201 {strides = array<i32>} : memref<1x3136xf32, #tpu.memory_space<vmem>>, vector<1x64xf32>,
    %203 = vector.extract_strided_slice %120 {offsets = [56, 0], sizes = [1, 64], strides = [1, 1]} : vector<67x64xf32> to vector<1x64xf32>
    %c0_120 = arith.constant 0 : index
    %c2624 = arith.constant 2624 : index
    %204 = vector.load %arg13[%c0_120, %c2624] : memref<1x3136xf32, #tpu.memory_space<vmem>>, vector<1x64xf32>
    tpu.vector_store %arg13[%c0_120, %c2624], %203 {strides = array<i32>} : memref<1x3136xf32, #tpu.memory_space<vmem>>, vector<1x64xf32>,
    %205 = vector.extract_strided_slice %120 {offsets = [60, 0], sizes = [1, 64], strides = [1, 1]} : vector<67x64xf32> to vector<1x64xf32>
    %c0_121 = arith.constant 0 : index
    %c2688 = arith.constant 2688 : index
    %206 = vector.load %arg13[%c0_121, %c2688] : memref<1x3136xf32, #tpu.memory_space<vmem>>, vector<1x64xf32>
    tpu.vector_store %arg13[%c0_121, %c2688], %205 {strides = array<i32>} : memref<1x3136xf32, #tpu.memory_space<vmem>>, vector<1x64xf32>,
    %207 = vector.extract_strided_slice %120 {offsets = [61, 0], sizes = [1, 64], strides = [1, 1]} : vector<67x64xf32> to vector<1x64xf32>
    %c0_122 = arith.constant 0 : index
    %c2752 = arith.constant 2752 : index
    %208 = vector.load %arg13[%c0_122, %c2752] : memref<1x3136xf32, #tpu.memory_space<vmem>>, vector<1x64xf32>
    tpu.vector_store %arg13[%c0_122, %c2752], %207 {strides = array<i32>} : memref<1x3136xf32, #tpu.memory_space<vmem>>, vector<1x64xf32>,
    %209 = vector.extract_strided_slice %120 {offsets = [62, 0], sizes = [1, 64], strides = [1, 1]} : vector<67x64xf32> to vector<1x64xf32>
    %c0_123 = arith.constant 0 : index
    %c2816 = arith.constant 2816 : index
    %210 = vector.load %arg13[%c0_123, %c2816] : memref<1x3136xf32, #tpu.memory_space<vmem>>, vector<1x64xf32>
    tpu.vector_store %arg13[%c0_123, %c2816], %209 {strides = array<i32>} : memref<1x3136xf32, #tpu.memory_space<vmem>>, vector<1x64xf32>,
    %211 = vector.extract_strided_slice %120 {offsets = [63, 0], sizes = [1, 64], strides = [1, 1]} : vector<67x64xf32> to vector<1x64xf32>
    %c0_124 = arith.constant 0 : index
    %c2880 = arith.constant 2880 : index
    %212 = vector.load %arg13[%c0_124, %c2880] : memref<1x3136xf32, #tpu.memory_space<vmem>>, vector<1x64xf32>
    tpu.vector_store %arg13[%c0_124, %c2880], %211 {strides = array<i32>} : memref<1x3136xf32, #tpu.memory_space<vmem>>, vector<1x64xf32>,
    %213 = vector.extract_strided_slice %120 {offsets = [64, 0], sizes = [1, 64], strides = [1, 1]} : vector<67x64xf32> to vector<1x64xf32>
    %c0_125 = arith.constant 0 : index
    %c2944 = arith.constant 2944 : index
    %214 = vector.load %arg13[%c0_125, %c2944] : memref<1x3136xf32, #tpu.memory_space<vmem>>, vector<1x64xf32>
    tpu.vector_store %arg13[%c0_125, %c2944], %213 {strides = array<i32>} : memref<1x3136xf32, #tpu.memory_space<vmem>>, vector<1x64xf32>,
    %215 = vector.extract_strided_slice %120 {offsets = [65, 0], sizes = [1, 64], strides = [1, 1]} : vector<67x64xf32> to vector<1x64xf32>
    %c0_126 = arith.constant 0 : index
    %c3008 = arith.constant 3008 : index
    %216 = vector.load %arg13[%c0_126, %c3008] : memref<1x3136xf32, #tpu.memory_space<vmem>>, vector<1x64xf32>
    tpu.vector_store %arg13[%c0_126, %c3008], %215 {strides = array<i32>} : memref<1x3136xf32, #tpu.memory_space<vmem>>, vector<1x64xf32>,
    %217 = vector.extract_strided_slice %120 {offsets = [66, 0], sizes = [1, 64], strides = [1, 1]} : vector<67x64xf32> to vector<1x64xf32>
    %c0_127 = arith.constant 0 : index
    %c3072 = arith.constant 3072 : index
    %218 = vector.load %arg13[%c0_127, %c3072] : memref<1x3136xf32, #tpu.memory_space<vmem>>, vector<1x64xf32>
    tpu.vector_store %arg13[%c0_127, %c3072], %217 {strides = array<i32>} : memref<1x3136xf32, #tpu.memory_space<vmem>>, vector<1x64xf32>,
    %c0_128 = arith.constant 0 : index
    %c0_129 = arith.constant 0 : index
    %219 = vector.load %arg13[%c0_128, %c0_129] : memref<1x3136xf32, #tpu.memory_space<vmem>>, vector<1x3136xf32>
    %220 = arith.truncf %219 : vector<1x3136xf32> to vector<1x3136xbf16>
    %c0_130 = arith.constant 0 : index
    %c0_131 = arith.constant 0 : index
    %221 = vector.load %arg8[%c0_130, %c0_131] : memref<3136x512xbf16, #tpu.memory_space<vmem>>, vector<3136x512xbf16>
    %cst_132 = arith.constant dense<0.000000e+00> : vector<1x512xf32>
    %222 = tpu.matmul %220, %221, %cst_132 {dimension_numbers = #tpu.dot_dimension_numbers<[1], [0], [0], [1], [0, 0, 1, 1], [], []>} : vector<1x3136xbf16>, vector<3136x512xbf16>, vector<1x512xf32> -> vector<1x512xf32>
    %c0_133 = arith.constant 0 : index
    %c0_134 = arith.constant 0 : index
    %223 = vector.load %arg9[%c0_133, %c0_134] : memref<1x512xf32, #tpu.memory_space<vmem>>, vector<1x512xf32>
    %224 = arith.addf %222, %223 : vector<1x512xf32>
    %cst_135 = arith.constant 0.000000e+00 : f32
    %225 = vector.broadcast %cst_135 : f32 to vector<1x512xf32>
    %226 = arith.maximumf %224, %225 : vector<1x512xf32>
    %227 = arith.truncf %226 : vector<1x512xf32> to vector<1x512xbf16>
    %c0_136 = arith.constant 0 : index
    %c0_137 = arith.constant 0 : index
    %228 = vector.load %arg10[%c0_136, %c0_137] : memref<512x6xbf16, #tpu.memory_space<vmem>>, vector<512x6xbf16>
    %cst_138 = arith.constant dense<0.000000e+00> : vector<1x6xf32>
    %229 = tpu.matmul %227, %228, %cst_138 {dimension_numbers = #tpu.dot_dimension_numbers<[1], [0], [0], [1], [0, 0, 1, 1], [], []>} : vector<1x512xbf16>, vector<512x6xbf16>, vector<1x6xf32> -> vector<1x6xf32>
    %c0_139 = arith.constant 0 : index
    %c0_140 = arith.constant 0 : index
    %230 = vector.load %arg11[%c0_139, %c0_140] : memref<1x6xf32, #tpu.memory_space<vmem>>, vector<1x6xf32>
    %231 = arith.addf %229, %230 : vector<1x6xf32>
    %232 = vector.shape_cast %231 : vector<1x6xf32> to vector<1x1x6xf32>
    %c0_141 = arith.constant 0 : index
    %c0_142 = arith.constant 0 : index
    %c0_143 = arith.constant 0 : index
    %233 = vector.load %arg12[%c0_141, %c0_142, %c0_143] : memref<1x1x6xf32, #tpu.memory_space<vmem>>, vector<1x1x6xf32>
    tpu.vector_store %arg12[%c0_141, %c0_142, %c0_143], %232 {strides = array<i32>} : memref<1x1x6xf32, #tpu.memory_space<vmem>>, vector<1x1x6xf32>,
    return
  }
  func.func @transform_0(%arg0: i32) -> (i32, i32, i32, i32) {
    %c0_i32 = arith.constant 0 : i32
    %c0_i32_0 = arith.constant 0 : i32
    %c0_i32_1 = arith.constant 0 : i32
    %c0_i32_2 = arith.constant 0 : i32
    return %arg0, %c0_i32, %c0_i32_0, %c0_i32_1 : i32, i32, i32, i32
  }
  func.func @transform_1(%arg0: i32) -> (i32, i32) {
    %c0_i32 = arith.constant 0 : i32
    %c0_i32_0 = arith.constant 0 : i32
    %c0_i32_1 = arith.constant 0 : i32
    return %c0_i32, %c0_i32_0 : i32, i32
  }
  func.func @transform_2(%arg0: i32) -> (i32, i32) {
    %c0_i32 = arith.constant 0 : i32
    %c0_i32_0 = arith.constant 0 : i32
    %c0_i32_1 = arith.constant 0 : i32
    return %c0_i32, %c0_i32_0 : i32, i32
  }
  func.func @transform_3(%arg0: i32) -> (i32, i32, i32) {
    %c0_i32 = arith.constant 0 : i32
    %c0_i32_0 = arith.constant 0 : i32
    %c0_i32_1 = arith.constant 0 : i32
    %c0_i32_2 = arith.constant 0 : i32
    return %c0_i32, %c0_i32_0, %c0_i32_1 : i32, i32, i32
  }
  func.func @transform_4(%arg0: i32) -> (i32, i32) {
    %c0_i32 = arith.constant 0 : i32
    %c0_i32_0 = arith.constant 0 : i32
    %c0_i32_1 = arith.constant 0 : i32
    return %c0_i32, %c0_i32_0 : i32, i32
  }
  func.func @transform_5(%arg0: i32) -> (i32, i32, i32) {
    %c0_i32 = arith.constant 0 : i32
    %c0_i32_0 = arith.constant 0 : i32
    %c0_i32_1 = arith.constant 0 : i32
    %c0_i32_2 = arith.constant 0 : i32
    return %c0_i32, %c0_i32_0, %c0_i32_1 : i32, i32, i32
  }
  func.func @transform_6(%arg0: i32) -> (i32, i32) {
    %c0_i32 = arith.constant 0 : i32
    %c0_i32_0 = arith.constant 0 : i32
    %c0_i32_1 = arith.constant 0 : i32
    return %c0_i32, %c0_i32_0 : i32, i32
  }
  func.func @transform_7(%arg0: i32) -> (i32, i32) {
    %c0_i32 = arith.constant 0 : i32
    %c0_i32_0 = arith.constant 0 : i32
    %c0_i32_1 = arith.constant 0 : i32
    return %c0_i32, %c0_i32_0 : i32, i32
  }
  func.func @transform_8(%arg0: i32) -> (i32, i32) {
    %c0_i32 = arith.constant 0 : i32
    %c0_i32_0 = arith.constant 0 : i32
    %c0_i32_1 = arith.constant 0 : i32
    return %c0_i32, %c0_i32_0 : i32, i32
  }
  func.func @transform_9(%arg0: i32) -> (i32, i32) {
    %c0_i32 = arith.constant 0 : i32
    %c0_i32_0 = arith.constant 0 : i32
    %c0_i32_1 = arith.constant 0 : i32
    return %c0_i32, %c0_i32_0 : i32, i32
  }
  func.func @transform_10(%arg0: i32) -> (i32, i32) {
    %c0_i32 = arith.constant 0 : i32
    %c0_i32_0 = arith.constant 0 : i32
    %c0_i32_1 = arith.constant 0 : i32
    return %c0_i32, %c0_i32_0 : i32, i32
  }
  func.func @transform_11(%arg0: i32) -> (i32, i32, i32) {
    %c0_i32 = arith.constant 0 : i32
    %c0_i32_0 = arith.constant 0 : i32
    %c0_i32_1 = arith.constant 0 : i32
    return %arg0, %c0_i32, %c0_i32_0 : i32, i32, i32
  }
}

</mosaic_0001>

<llo_original>
// kernel: dqn_forward.1
$region0: #{dqn_forward.1}
  #allocation0 [shape = 'u32[]', space=smem, size = 0x4, offset = 0x4, fixed_abs, tag = 'smem constant byte address 0x4 - core index']
  #allocation1 [shape = 'u32[144,128]{1,0:T(1,128)}', space=vmem, size = 0x12000, scoped, tag = 'internal scratch']
  #allocation2 [shape = 'f32[1,3136]{1,0:T(1,128)}', space=vmem, size = 0x3200, scoped, tag = 'scratch operand']
  %s0 = inlined_call_operand.vmem [shape: u8[2,4,100,256], index: 0, kind: input, shape index: {}]
  %s1 = inlined_call_operand.vmem [shape: bf16[256,32], index: 1, kind: input, shape index: {}]
  %s2 = inlined_call_operand.vmem [shape: f32[1,32], index: 2, kind: input, shape index: {}]
  %s3 = inlined_call_operand.vmem [shape: bf16[4,128,64], index: 3, kind: input, shape index: {}]
  %s4 = inlined_call_operand.vmem [shape: f32[1,64], index: 4, kind: input, shape index: {}]
  %s5 = inlined_call_operand.vmem [shape: bf16[9,64,64], index: 5, kind: input, shape index: {}]
  %s6 = inlined_call_operand.vmem [shape: f32[1,64], index: 6, kind: input, shape index: {}]
  %s7 = inlined_call_operand.vmem [shape: bf16[3136,512], index: 7, kind: input, shape index: {}]
  %s8 = inlined_call_operand.vmem [shape: f32[1,512], index: 8, kind: input, shape index: {}]
  %s9 = inlined_call_operand.vmem [shape: bf16[512,6], index: 9, kind: input, shape index: {}]
  %s10 = inlined_call_operand.vmem [shape: f32[1,6], index: 10, kind: input, shape index: {}]
  %s11 = inlined_call_operand.hbm [shape: f32[2,1,6], index: 11, kind: output, shape index: {}]
  %s12 = sld [smem:[#allocation0]]
  $region77: #{dqn_forward.1} parent=0
    _
  %s14 = ssub.s32 1, %s12
  %s15 = scalar_select 0, %s14, %s12
  $region1: #{dqn_forward.1} parent=0
    #allocation3 [shape = 'u8[1024]{0}', space=vmem, size = 0x400, scoped, tag = 'output window, operand 0']
    #allocation4 [shape = 's32[2]{0}', space=sflag, size = 0x8, scoped, tag = 'scoped memory for dqn_forward.1']
    %16 = vsyncpa [#allocation4], 0
    %s17 = scalar_lea.sflag [#allocation4], 1
    %18 = vsyncpa %s17, 0
    loop: start=0, step=1, limit=4
    $region2: #{dqn_forward.1} parent=1 // loop_pre_header
      _
    $region3: #{dqn_forward.1} parent=1 // loop_header
      %s20 = sphi 0, %s24
      %p21 = scmp.ge.s32.totalorder %s20, 4
      %s30 = sphi 0, %s32
      %s33 = sphi 0, %s30
      %s34 = sphi 0, %s33
      %s50 = sphi 0, %s34
      %s54 = sphi 0, %s54
      %s56 = sphi 0, %s54
      %s57 = sphi 0, %s56
      %s71 = sphi 0, %s57
      %s75 = sphi 0, %s75
      %s77 = sphi 0, %s75
      %s78 = sphi 0, %s77
      %s92 = sphi 0, %s78
      %s96 = sphi 0, %s96
      %s98 = sphi 0, %s96
      %s99 = sphi 0, %s98
      %s113 = sphi 0, %s99
      %s117 = sphi 0, %s117
      %s119 = sphi 0, %s117
      %s120 = sphi 0, %s119
      %s134 = sphi 0, %s120
      %s138 = sphi 0, %s138
      %s140 = sphi 0, %s138
      %s141 = sphi 0, %s140
      %s155 = sphi 0, %s141
      %s159 = sphi 0, %s159
      %s161 = sphi 0, %s159
      %s162 = sphi 0, %s161
      %s176 = sphi 0, %s162
      %s180 = sphi 0, %s180
      %s182 = sphi 0, %s180
      %s183 = sphi 0, %s182
      %s197 = sphi 0, %s183
      %s201 = sphi 0, %s201
      %s203 = sphi 0, %s201
      %s204 = sphi 0, %s203
      %s218 = sphi 0, %s204
      %s222 = sphi 0, %s222
      %s224 = sphi 0, %s222
      %s225 = sphi 0, %s224
      %s239 = sphi 0, %s225
      %s243 = sphi 0, %s243
      %s245 = sphi 0, %s243
      %s246 = sphi 0, %s245
      %s260 = sphi 0, %s246
      %s266 = sphi 0, %s268
      %s269 = sphi 0, %s266
      %s270 = sphi 0, %s269
      %s286 = sphi 0, %s270
    $region4: #{dqn_forward.1} parent=1 // loop_header_branch
      %23 = sbr.rel (%p21) target = $region8
    $region5: #{dqn_forward.1} parent=1 // loop_body
      %s25 = ssub.s32 %s20, 1
      %s26 = ssub.s32 %s20, 2
      %s27 = sadd.s32 %s20, 1
      %s28 = ssub.s32 %s20, %s27
      %p29 = scmp.eq.s32.totalorder %s28, 0
      %s31 = sadd.s32 %s30, 1
      %s32 = scalar_select %p29, %s30, %s31
      %p35 = pneg %p29
      %p36 = scmp.eq.s32.totalorder %s20, 1
      %p37 = por %p35, %p36
      %p38 = scmp.ne.s32.totalorder %s30, %s33
      %p39 = scmp.eq.s32.totalorder %s20, 0
      %p40 = por %p38, %p39
      %p41 = scmp.ne.s32.totalorder %s30, %s33
      %p42 = scmp.eq.s32.totalorder %s25, 1
      %p43 = por %p41, %p42
      %p44 = scmp.ne.s32.totalorder %s33, %s34
      %p45 = scmp.eq.s32.totalorder %s25, 0
      %p46 = por %p44, %p45
      %p47 = scmp.ne.s32.totalorder %s33, %s34
      %p48 = scmp.eq.s32.totalorder %s26, 1
      %p49 = por %p47, %p48
      %p51 = scmp.ne.s32.totalorder %s34, %s50
      %p52 = scmp.eq.s32.totalorder %s26, 0
      %p53 = por %p51, %p52
      %s55 = sadd.s32 %s54, 1
      %p58 = scmp.eq.s32.totalorder %s20, 1
      %p59 = scmp.ne.s32.totalorder %s54, %s56
      %p60 = scmp.eq.s32.totalorder %s20, 0
      %p61 = por %p59, %p60
      %p62 = scmp.ne.s32.totalorder %s54, %s56
      %p63 = scmp.eq.s32.totalorder %s25, 1
      %p64 = por %p62, %p63
      %p65 = scmp.ne.s32.totalorder %s56, %s57
      %p66 = scmp.eq.s32.totalorder %s25, 0
      %p67 = por %p65, %p66
      %p68 = scmp.ne.s32.totalorder %s56, %s57
      %p69 = scmp.eq.s32.totalorder %s26, 1
      %p70 = por %p68, %p69
      %p72 = scmp.ne.s32.totalorder %s57, %s71
      %p73 = scmp.eq.s32.totalorder %s26, 0
      %p74 = por %p72, %p73
      %s76 = sadd.s32 %s75, 1
      %p79 = scmp.eq.s32.totalorder %s20, 1
      %p80 = scmp.ne.s32.totalorder %s75, %s77
      %p81 = scmp.eq.s32.totalorder %s20, 0
      %p82 = por %p80, %p81
      %p83 = scmp.ne.s32.totalorder %s75, %s77
      %p84 = scmp.eq.s32.totalorder %s25, 1
      %p85 = por %p83, %p84
      %p86 = scmp.ne.s32.totalorder %s77, %s78
      %p87 = scmp.eq.s32.totalorder %s25, 0
      %p88 = por %p86, %p87
      %p89 = scmp.ne.s32.totalorder %s77, %s78
      %p90 = scmp.eq.s32.totalorder %s26, 1
      %p91 = por %p89, %p90
      %p93 = scmp.ne.s32.totalorder %s78, %s92
      %p94 = scmp.eq.s32.totalorder %s26, 0
      %p95 = por %p93, %p94
      %s97 = sadd.s32 %s96, 1
      %p100 = scmp.eq.s32.totalorder %s20, 1
      %p101 = scmp.ne.s32.totalorder %s96, %s98
      %p102 = scmp.eq.s32.totalorder %s20, 0
      %p103 = por %p101, %p102
      %p104 = scmp.ne.s32.totalorder %s96, %s98
      %p105 = scmp.eq.s32.totalorder %s25, 1
      %p106 = por %p104, %p105
      %p107 = scmp.ne.s32.totalorder %s98, %s99
      %p108 = scmp.eq.s32.totalorder %s25, 0
      %p109 = por %p107, %p108
      %p110 = scmp.ne.s32.totalorder %s98, %s99
      %p111 = scmp.eq.s32.totalorder %s26, 1
      %p112 = por %p110, %p111
      %p114 = scmp.ne.s32.totalorder %s99, %s113
      %p115 = scmp.eq.s32.totalorder %s26, 0
      %p116 = por %p114, %p115
      %s118 = sadd.s32 %s117, 1
      %p121 = scmp.eq.s32.totalorder %s20, 1
      %p122 = scmp.ne.s32.totalorder %s117, %s119
      %p123 = scmp.eq.s32.totalorder %s20, 0
      %p124 = por %p122, %p123
      %p125 = scmp.ne.s32.totalorder %s117, %s119
      %p126 = scmp.eq.s32.totalorder %s25, 1
      %p127 = por %p125, %p126
      %p128 = scmp.ne.s32.totalorder %s119, %s120
      %p129 = scmp.eq.s32.totalorder %s25, 0
      %p130 = por %p128, %p129
      %p131 = scmp.ne.s32.totalorder %s119, %s120
      %p132 = scmp.eq.s32.totalorder %s26, 1
      %p133 = por %p131, %p132
      %p135 = scmp.ne.s32.totalorder %s120, %s134
      %p136 = scmp.eq.s32.totalorder %s26, 0
      %p137 = por %p135, %p136
      %s139 = sadd.s32 %s138, 1
      %p142 = scmp.eq.s32.totalorder %s20, 1
      %p143 = scmp.ne.s32.totalorder %s138, %s140
      %p144 = scmp.eq.s32.totalorder %s20, 0
      %p145 = por %p143, %p144
      %p146 = scmp.ne.s32.totalorder %s138, %s140
      %p147 = scmp.eq.s32.totalorder %s25, 1
      %p148 = por %p146, %p147
      %p149 = scmp.ne.s32.totalorder %s140, %s141
      %p150 = scmp.eq.s32.totalorder %s25, 0
      %p151 = por %p149, %p150
      %p152 = scmp.ne.s32.totalorder %s140, %s141
      %p153 = scmp.eq.s32.totalorder %s26, 1
      %p154 = por %p152, %p153
      %p156 = scmp.ne.s32.totalorder %s141, %s155
      %p157 = scmp.eq.s32.totalorder %s26, 0
      %p158 = por %p156, %p157
      %s160 = sadd.s32 %s159, 1
      %p163 = scmp.eq.s32.totalorder %s20, 1
      %p164 = scmp.ne.s32.totalorder %s159, %s161
      %p165 = scmp.eq.s32.totalorder %s20, 0
      %p166 = por %p164, %p165
      %p167 = scmp.ne.s32.totalorder %s159, %s161
      %p168 = scmp.eq.s32.totalorder %s25, 1
      %p169 = por %p167, %p168
      %p170 = scmp.ne.s32.totalorder %s161, %s162
      %p171 = scmp.eq.s32.totalorder %s25, 0
      %p172 = por %p170, %p171
      %p173 = scmp.ne.s32.totalorder %s161, %s162
      %p174 = scmp.eq.s32.totalorder %s26, 1
      %p175 = por %p173, %p174
      %p177 = scmp.ne.s32.totalorder %s162, %s176
      %p178 = scmp.eq.s32.totalorder %s26, 0
      %p179 = por %p177, %p178
      %s181 = sadd.s32 %s180, 1
      %p184 = scmp.eq.s32.totalorder %s20, 1
      %p185 = scmp.ne.s32.totalorder %s180, %s182
      %p186 = scmp.eq.s32.totalorder %s20, 0
      %p187 = por %p185, %p186
      %p188 = scmp.ne.s32.totalorder %s180, %s182
      %p189 = scmp.eq.s32.totalorder %s25, 1
      %p190 = por %p188, %p189
      %p191 = scmp.ne.s32.totalorder %s182, %s183
      %p192 = scmp.eq.s32.totalorder %s25, 0
      %p193 = por %p191, %p192
      %p194 = scmp.ne.s32.totalorder %s182, %s183
      %p195 = scmp.eq.s32.totalorder %s26, 1
      %p196 = por %p194, %p195
      %p198 = scmp.ne.s32.totalorder %s183, %s197
      %p199 = scmp.eq.s32.totalorder %s26, 0
      %p200 = por %p198, %p199
      %s202 = sadd.s32 %s201, 1
      %p205 = scmp.eq.s32.totalorder %s20, 1
      %p206 = scmp.ne.s32.totalorder %s201, %s203
      %p207 = scmp.eq.s32.totalorder %s20, 0
      %p208 = por %p206, %p207
      %p209 = scmp.ne.s32.totalorder %s201, %s203
      %p210 = scmp.eq.s32.totalorder %s25, 1
      %p211 = por %p209, %p210
      %p212 = scmp.ne.s32.totalorder %s203, %s204
      %p213 = scmp.eq.s32.totalorder %s25, 0
      %p214 = por %p212, %p213
      %p215 = scmp.ne.s32.totalorder %s203, %s204
      %p216 = scmp.eq.s32.totalorder %s26, 1
      %p217 = por %p215, %p216
      %p219 = scmp.ne.s32.totalorder %s204, %s218
      %p220 = scmp.eq.s32.totalorder %s26, 0
      %p221 = por %p219, %p220
      %s223 = sadd.s32 %s222, 1
      %p226 = scmp.eq.s32.totalorder %s20, 1
      %p227 = scmp.ne.s32.totalorder %s222, %s224
      %p228 = scmp.eq.s32.totalorder %s20, 0
      %p229 = por %p227, %p228
      %p230 = scmp.ne.s32.totalorder %s222, %s224
      %p231 = scmp.eq.s32.totalorder %s25, 1
      %p232 = por %p230, %p231
      %p233 = scmp.ne.s32.totalorder %s224, %s225
      %p234 = scmp.eq.s32.totalorder %s25, 0
      %p235 = por %p233, %p234
      %p236 = scmp.ne.s32.totalorder %s224, %s225
      %p237 = scmp.eq.s32.totalorder %s26, 1
      %p238 = por %p236, %p237
      %p240 = scmp.ne.s32.totalorder %s225, %s239
      %p241 = scmp.eq.s32.totalorder %s26, 0
      %p242 = por %p240, %p241
      %s244 = sadd.s32 %s243, 1
      %p247 = scmp.eq.s32.totalorder %s20, 1
      %p248 = scmp.ne.s32.totalorder %s243, %s245
      %p249 = scmp.eq.s32.totalorder %s20, 0
      %p250 = por %p248, %p249
      %p251 = scmp.ne.s32.totalorder %s243, %s245
      %p252 = scmp.eq.s32.totalorder %s25, 1
      %p253 = por %p251, %p252
      %p254 = scmp.ne.s32.totalorder %s245, %s246
      %p255 = scmp.eq.s32.totalorder %s25, 0
      %p256 = por %p254, %p255
      %p257 = scmp.ne.s32.totalorder %s245, %s246
      %p258 = scmp.eq.s32.totalorder %s26, 1
      %p259 = por %p257, %p258
      %p261 = scmp.ne.s32.totalorder %s246, %s260
      %p262 = scmp.eq.s32.totalorder %s26, 0
      %p263 = por %p261, %p262
      %s264 = ssub.s32 %s20, %s27
      %p265 = scmp.eq.s32.totalorder %s264, 0
      %s267 = sadd.s32 %s266, 1
      %s268 = scalar_select %p265, %s266, %s267
      %p271 = pneg %p265
      %p272 = scmp.eq.s32.totalorder %s20, 1
      %p273 = por %p271, %p272
      %p274 = scmp.ne.s32.totalorder %s266, %s269
      %p275 = scmp.eq.s32.totalorder %s20, 0
      %p276 = por %p274, %p275
      %p277 = scmp.ne.s32.totalorder %s266, %s269
      %p278 = scmp.eq.s32.totalorder %s25, 1
      %p279 = por %p277, %p278
      %p280 = scmp.ne.s32.totalorder %s269, %s270
      %p281 = scmp.eq.s32.totalorder %s25, 0
      %p282 = por %p280, %p281
      %p283 = scmp.ne.s32.totalorder %s269, %s270
      %p284 = scmp.eq.s32.totalorder %s26, 1
      %p285 = por %p283, %p284
      %p287 = scmp.ne.s32.totalorder %s270, %s286
      %p288 = scmp.eq.s32.totalorder %s26, 0
      %p289 = por %p287, %p288
      %p290 = scmp.le.s32.totalorder 1, %s20
      %p291 = scmp.lt.s32.totalorder %s20, 3
      %p292 = pnand %p290, %p291
      %p293 = pneg %p292
      // Predicated region
      $region9: #{dqn_forward.1} parent=5 // pred_check
        _
      $region10: #{dqn_forward.1} parent=5 // pred_check_branch
        %295 = sbr.rel (%p292) target = $region12
      $region11: #{dqn_forward.1} parent=5 // pred_region
        %s296 = ssub.s32 %s20, 1
        // Predicated region
        $region13: #{dqn_forward.1} parent=11 // pred_check
          %p297 = pneg %p67
        $region14: #{dqn_forward.1} parent=11 // pred_check_branch
          %299 = sbr.rel (%p297) target = $region16
        $region15: #{dqn_forward.1} parent=11 // pred_region
          _
        $region16: #{dqn_forward.1} parent=11 // pred_fallthru
          _
        // Predicated region
        $region17: #{dqn_forward.1} parent=11 // pred_check
          %p300 = pneg %p88
        $region18: #{dqn_forward.1} parent=11 // pred_check_branch
          %302 = sbr.rel (%p300) target = $region20
        $region19: #{dqn_forward.1} parent=11 // pred_region
          _
        $region20: #{dqn_forward.1} parent=11 // pred_fallthru
          _
        // Predicated region
        $region21: #{dqn_forward.1} parent=11 // pred_check
          %p303 = pneg %p109
        $region22: #{dqn_forward.1} parent=11 // pred_check_branch
          %305 = sbr.rel (%p303) target = $region24
        $region23: #{dqn_forward.1} parent=11 // pred_region
          _
        $region24: #{dqn_forward.1} parent=11 // pred_fallthru
          _
        // Predicated region
        $region25: #{dqn_forward.1} parent=11 // pred_check
          %p306 = pneg %p130
        $region26: #{dqn_forward.1} parent=11 // pred_check_branch
          %308 = sbr.rel (%p306) target = $region28
        $region27: #{dqn_forward.1} parent=11 // pred_region
          _
        $region28: #{dqn_forward.1} parent=11 // pred_fallthru
          _
        // Predicated region
        $region29: #{dqn_forward.1} parent=11 // pred_check
          %p309 = pneg %p151
        $region30: #{dqn_forward.1} parent=11 // pred_check_branch
          %311 = sbr.rel (%p309) target = $region32
        $region31: #{dqn_forward.1} parent=11 // pred_region
          _
        $region32: #{dqn_forward.1} parent=11 // pred_fallthru
          _
        // Predicated region
        $region33: #{dqn_forward.1} parent=11 // pred_check
          %p312 = pneg %p172
        $region34: #{dqn_forward.1} parent=11 // pred_check_branch
          %314 = sbr.rel (%p312) target = $region36
        $region35: #{dqn_forward.1} parent=11 // pred_region
          _
        $region36: #{dqn_forward.1} parent=11 // pred_fallthru
          _
        // Predicated region
        $region37: #{dqn_forward.1} parent=11 // pred_check
          %p315 = pneg %p193
        $region38: #{dqn_forward.1} parent=11 // pred_check_branch
          %317 = sbr.rel (%p315) target = $region40
        $region39: #{dqn_forward.1} parent=11 // pred_region
          _
        $region40: #{dqn_forward.1} parent=11 // pred_fallthru
          _
        // Predicated region
        $region41: #{dqn_forward.1} parent=11 // pred_check
          %p318 = pneg %p214
        $region42: #{dqn_forward.1} parent=11 // pred_check_branch
          %320 = sbr.rel (%p318) target = $region44
        $region43: #{dqn_forward.1} parent=11 // pred_region
          _
        $region44: #{dqn_forward.1} parent=11 // pred_fallthru
          _
        // Predicated region
        $region45: #{dqn_forward.1} parent=11 // pred_check
          %p321 = pneg %p235
        $region46: #{dqn_forward.1} parent=11 // pred_check_branch
          %323 = sbr.rel (%p321) target = $region48
        $region47: #{dqn_forward.1} parent=11 // pred_region
          _
        $region48: #{dqn_forward.1} parent=11 // pred_fallthru
          _
        // Predicated region
        $region49: #{dqn_forward.1} parent=11 // pred_check
          %p324 = pneg %p256
        $region50: #{dqn_forward.1} parent=11 // pred_check_branch
          %326 = sbr.rel (%p324) target = $region52
        $region51: #{dqn_forward.1} parent=11 // pred_region
          _
        $region52: #{dqn_forward.1} parent=11 // pred_fallthru
          _
      $region12: #{dqn_forward.1} parent=5 // pred_fallthru
        _
      %p327 = scmp.lt.s32.totalorder %s20, 2
      // Predicated region
      $region53: #{dqn_forward.1} parent=5 // pred_check
        %p328 = pneg %p327
      $region54: #{dqn_forward.1} parent=5 // pred_check_branch
        %330 = sbr.rel (%p328) target = $region56
      $region55: #{dqn_forward.1} parent=5 // pred_region
        // Predicated region
        $region57: #{dqn_forward.1} parent=55 // pred_check
          %p331 = pneg %p40
        $region58: #{dqn_forward.1} parent=55 // pred_check_branch
          %333 = sbr.rel (%p331) target = $region60
        $region59: #{dqn_forward.1} parent=55 // pred_region
          %p334 = scmp.lt.s32.totalorder %s20, 1
          %s335 = scalar_select %p334, %s20, 1
          %s336 = smul.addr %s335, 104
          %s337 = smul.addr %s336, 2
          %s338 = scalar_lea.vmem %s0, %s337
        $region60: #{dqn_forward.1} parent=55 // pred_fallthru
          _
      $region56: #{dqn_forward.1} parent=5 // pred_fallthru
        _
      %p339 = scmp.le.s32.totalorder 1, %s20
      %p340 = scmp.lt.s32.totalorder %s20, 3
      %p341 = pnand %p339, %p340
      %p342 = pneg %p341
      // Predicated region
      $region61: #{dqn_forward.1} parent=5 // pred_check
        _
      $region62: #{dqn_forward.1} parent=5 // pred_check_branch
        %344 = sbr.rel (%p341) target = $region64
      $region63: #{dqn_forward.1} parent=5 // pred_region
        %s345 = ssub.s32 %s20, 1
        %p346 = scmp.lt.s32.totalorder %s25, 1
        %s347 = scalar_select %p346, %s25, 1
        %s348 = smul.addr %s347, 104
        %s349 = smul.addr %s348, 2
        %s350 = scalar_lea.vmem %s0, %s349
        %p351 = pneg %p46
        %p352 = pneg %p43
        %p353 = pneg %p67
        %p354 = pneg %p64
        %p355 = pneg %p88
        %p356 = pneg %p85
        %p357 = pneg %p109
        %p358 = pneg %p106
        %p359 = pneg %p130
        %p360 = pneg %p127
        %p361 = pneg %p151
        %p362 = pneg %p148
        %p363 = pneg %p172
        %p364 = pneg %p169
        %p365 = pneg %p193
        %p366 = pneg %p190
        %p367 = pneg %p214
        %p368 = pneg %p211
        %p369 = pneg %p235
        %p370 = pneg %p232
        %p371 = pneg %p256
        %p372 = pneg %p253
        %p373 = pneg %p282
        %p374 = pneg %p279
        %s375 = sand.u32 %s269, 1
        %s376 = scalar_lea.sflag [#allocation4], %s375
        %s377 = sand.u32 %s269, 1
        %s378 = scalar_lea.vmem [#allocation3], %s377
        %p379 = scmp.lt.s32.totalorder %s25, 1
        %s380 = scalar_select %p379, %s25, 1
        %s381 = smul.addr %s380, 104
        %s382 = smul.addr %s381, 2
        %s383 = scalar_lea.vmem %s0, %s382
        %v385 = vld [vmem:[%s1] sm:$0xf]
        %v386 = vld [vmem:[%s1 + $0x4] sm:$0xf]
        %v387 = vld [vmem:[%s1 + $0x8] sm:$0xf]
        %v388 = vld [vmem:[%s1 + $0xc] sm:$0xf]
        %v389 = vld [vmem:[%s1 + $0x10] sm:$0xf]
        %v390 = vld [vmem:[%s1 + $0x14] sm:$0xf]
        %v391 = vld [vmem:[%s1 + $0x18] sm:$0xf]
        %v392 = vld [vmem:[%s1 + $0x1c] sm:$0xf]
        %v393 = vld [vmem:[%s1 + $0x20] sm:$0xf]
        %v394 = vld [vmem:[%s1 + $0x24] sm:$0xf]
        %v395 = vld [vmem:[%s1 + $0x28] sm:$0xf]
        %v396 = vld [vmem:[%s1 + $0x2c] sm:$0xf]
        %v397 = vld [vmem:[%s1 + $0x30] sm:$0xf]
        %v398 = vld [vmem:[%s1 + $0x34] sm:$0xf]
        %v399 = vld [vmem:[%s1 + $0x38] sm:$0xf]
        %v400 = vld [vmem:[%s1 + $0x3c] sm:$0xf]
        %v401 = vld [vmem:[%s1 + $0x40] sm:$0xf]
        %v402 = vld [vmem:[%s1 + $0x44] sm:$0xf]
        %v403 = vld [vmem:[%s1 + $0x48] sm:$0xf]
        %v404 = vld [vmem:[%s1 + $0x4c] sm:$0xf]
        %v405 = vld [vmem:[%s1 + $0x50] sm:$0xf]
        %v406 = vld [vmem:[%s1 + $0x54] sm:$0xf]
        %v407 = vld [vmem:[%s1 + $0x58] sm:$0xf]
        %v408 = vld [vmem:[%s1 + $0x5c] sm:$0xf]
        %v409 = vld [vmem:[%s1 + $0x60] sm:$0xf]
        %v410 = vld [vmem:[%s1 + $0x64] sm:$0xf]
        %v411 = vld [vmem:[%s1 + $0x68] sm:$0xf]
        %v412 = vld [vmem:[%s1 + $0x6c] sm:$0xf]
        %v413 = vld [vmem:[%s1 + $0x70] sm:$0xf]
        %v414 = vld [vmem:[%s1 + $0x74] sm:$0xf]
        %v415 = vld [vmem:[%s1 + $0x78] sm:$0xf]
        %v416 = vld [vmem:[%s1 + $0x7c] sm:$0xf]
        %v417 = vld [vmem:[%s2] sm:$0x1]
        %v418 = vld [vmem:[%s383] sm:$0xf]
        %v419 = vld [vmem:[%s383 + $0x4] sm:$0xf]
        %v420 = vld [vmem:[%s383 + $0x8] sm:$0xf]
        %v421 = vld [vmem:[%s383 + $0xc] sm:$0xf]
        %v422 = vld [vmem:[%s383 + $0x10] sm:$0xf]
        %v423 = vld [vmem:[%s383 + $0x14] sm:$0xf]
        %v424 = vld [vmem:[%s383 + $0x18] sm:$0xf]
        %v425 = vld [vmem:[%s383 + $0x1c] sm:$0xf]
        %v426 = vld [vmem:[%s383 + $0x20] sm:$0xf]
        %v427 = vld [vmem:[%s383 + $0x24] sm:$0xf]
        %v428 = vld [vmem:[%s383 + $0x28] sm:$0xf]
        %v429 = vld [vmem:[%s383 + $0x2c] sm:$0xf]
        %v430 = vld [vmem:[%s383 + $0x30] sm:$0x5]
        %v431 = vunpack.c.l.u8.bf16 %v418
        %v432 = vunpack.c.l.u8.bf16 %v419
        %v433 = vunpack.c.l.u8.bf16 %v420
        %v434 = vunpack.c.l.u8.bf16 %v421
        %v435 = vunpack.c.l.u8.bf16 %v422
        %v436 = vunpack.c.l.u8.bf16 %v423
        %v437 = vunpack.c.l.u8.bf16 %v424
        %v438 = vunpack.c.l.u8.bf16 %v425
        %v439 = vunpack.c.l.u8.bf16 %v426
        %v440 = vunpack.c.l.u8.bf16 %v427
        %v441 = vunpack.c.l.u8.bf16 %v428
        %v442 = vunpack.c.l.u8.bf16 %v429
        %v443 = vunpack.c.l.u8.bf16 %v430
        %v445 = vlaneseq
        %v446 = vshrl.u32 %v445, 7
        %v447 = vsub.s32 0, %v446
        %v448 = vrot.slane %v417, %v447
        %v463 = vunpack.c.l.b16 %v431
        %v464 = vunpack.c.h.b16 %v431
        %v465 = vunpack.c.l.b16 %v432
        %v466 = vunpack.c.h.b16 %v432
        %v467 = vunpack.c.l.b16 %v433
        %v468 = vunpack.c.h.b16 %v433
        %v469 = vunpack.c.l.b16 %v434
        %v470 = vunpack.c.h.b16 %v434
        %v471 = vunpack.c.l.b16 %v435
        %v472 = vunpack.c.h.b16 %v435
        %v473 = vunpack.c.l.b16 %v436
        %v474 = vunpack.c.h.b16 %v436
        %v475 = vunpack.c.l.b16 %v437
        %v476 = vunpack.c.h.b16 %v437
        %v477 = vunpack.c.l.b16 %v438
        %v478 = vunpack.c.h.b16 %v438
        %v479 = vunpack.c.l.b16 %v439
        %v480 = vunpack.c.h.b16 %v439
        %v481 = vunpack.c.l.b16 %v440
        %v482 = vunpack.c.h.b16 %v440
        %v483 = vunpack.c.l.b16 %v441
        %v484 = vunpack.c.h.b16 %v441
        %v485 = vunpack.c.l.b16 %v442
        %v486 = vunpack.c.h.b16 %v442
        %v487 = vunpack.c.l.b16 %v443
        %v488 = vunpack.c.h.b16 %v443
        %v489 = vpack.c.b16 %v465, %v463
        %v490 = vpack.c.b16 %v466, %v464
        %v491 = vpack.c.b16 %v469, %v467
        %v492 = vpack.c.b16 %v470, %v468
        %v493 = vpack.c.b16 %v473, %v471
        %v494 = vpack.c.b16 %v474, %v472
        %v495 = vpack.c.b16 %v477, %v475
        %v496 = vpack.c.b16 %v478, %v476
        %v497 = vpack.c.b16 %v481, %v479
        %v498 = vpack.c.b16 %v482, %v480
        %v499 = vpack.c.b16 %v485, %v483
        %v500 = vpack.c.b16 %v486, %v484
        %v501 = vpack.c.b16 %v487, %v487
        %v502 = vpack.c.b16 %v488, %v488
        %v549 = vunpack.c.l.b16 %v385
        %v550 = vunpack.c.l.b16 %v386
        %v551 = vunpack.c.l.b16 %v387
        %v552 = vunpack.c.l.b16 %v388
        %v553 = vunpack.c.l.b16 %v389
        %v554 = vunpack.c.l.b16 %v390
        %v555 = vunpack.c.l.b16 %v391
        %v556 = vunpack.c.l.b16 %v392
        %v557 = vunpack.c.l.b16 %v393
        %v558 = vunpack.c.l.b16 %v394
        %v559 = vunpack.c.l.b16 %v395
        %v560 = vunpack.c.l.b16 %v396
        %v561 = vunpack.c.l.b16 %v397
        %v562 = vunpack.c.l.b16 %v398
        %v563 = vunpack.c.l.b16 %v399
        %v564 = vunpack.c.l.b16 %v400
        %v565 = vunpack.c.l.b16 %v401
        %v566 = vunpack.c.l.b16 %v402
        %v567 = vunpack.c.l.b16 %v403
        %v568 = vunpack.c.l.b16 %v404
        %v569 = vunpack.c.l.b16 %v405
        %v570 = vunpack.c.l.b16 %v406
        %v571 = vunpack.c.l.b16 %v407
        %v572 = vunpack.c.l.b16 %v408
        %v573 = vunpack.c.l.b16 %v409
        %v574 = vunpack.c.l.b16 %v410
        %v575 = vunpack.c.l.b16 %v411
        %v576 = vunpack.c.l.b16 %v412
        %v577 = vunpack.c.l.b16 %v413
        %v578 = vunpack.c.l.b16 %v414
        %v579 = vunpack.c.l.b16 %v415
        %v580 = vunpack.c.l.b16 %v416
        %v581 = vpack.c.b16 %v550, %v549
        %v582 = vpack.c.b16 %v552, %v551
        %v583 = vpack.c.b16 %v554, %v553
        %v584 = vpack.c.b16 %v556, %v555
        %v585 = vpack.c.b16 %v558, %v557
        %v586 = vpack.c.b16 %v560, %v559
        %v587 = vpack.c.b16 %v562, %v561
        %v588 = vpack.c.b16 %v564, %v563
        %v589 = vpack.c.b16 %v566, %v565
        %v590 = vpack.c.b16 %v568, %v567
        %v591 = vpack.c.b16 %v570, %v569
        %v592 = vpack.c.b16 %v572, %v571
        %v593 = vpack.c.b16 %v574, %v573
        %v594 = vpack.c.b16 %v576, %v575
        %v595 = vpack.c.b16 %v578, %v577
        %v596 = vpack.c.b16 %v580, %v579
        %613 = vmatprep.subr.bf16.mxu0 0
        %614 = vmatpush1.bf16.msra.mxu0 %v588
        %615 = vmatprep.subr.bf16.mxu0 0
        %616 = vmatpush1.bf16.msra.mxu0 %v587
        %617 = vmatprep.subr.bf16.mxu0 0
        %618 = vmatpush1.bf16.msra.mxu0 %v586
        %619 = vmatprep.subr.bf16.mxu0 0
        %620 = vmatpush1.bf16.msra.mxu0 %v585
        %621 = vmatprep.subr.bf16.mxu0 0
        %622 = vmatpush1.bf16.msra.mxu0 %v584
        %623 = vmatprep.subr.bf16.mxu0 0
        %624 = vmatpush1.bf16.msra.mxu0 %v583
        %625 = vmatprep.subr.bf16.mxu0 0
        %626 = vmatpush1.bf16.msra.mxu0 %v582
        %627 = vmatprep.subr.bf16.mxu0 0
        %628 = vmatpush1.bf16.msra.mxu0 %v581
        %629 = vmatprep.subr.bf16.mxu0 0
        %630 = vmatpush2.bf16.msra.mxu0 %v596
        %631 = vmatprep.subr.bf16.mxu0 0
        %632 = vmatpush2.bf16.msra.mxu0 %v595
        %633 = vmatprep.subr.bf16.mxu0 0
        %634 = vmatpush2.bf16.msra.mxu0 %v594
        %635 = vmatprep.subr.bf16.mxu0 0
        %636 = vmatpush2.bf16.msra.mxu0 %v593
        %637 = vmatprep.subr.bf16.mxu0 0
        %638 = vmatpush2.bf16.msra.mxu0 %v592
        %639 = vmatprep.subr.bf16.mxu0 0
        %640 = vmatpush2.bf16.msra.mxu0 %v591
        %641 = vmatprep.subr.bf16.mxu0 0
        %642 = vmatpush2.bf16.msra.mxu0 %v590
        %643 = vmatprep.subr.bf16.mxu0 0
        %644 = vmatpush2.bf16.msra.mxu0 %v589
        %645 = vmatprep.mubr.bf16.mxu0 %v490
        %646 = vmatmul.mubr.bf16.gmra.mxu0 %v489
        %v647 = vpop.f32.mrf.mxu0
        %v648 = vadd.f32 %v448, %v647
        %v649 = vpop.f32.mrf.mxu0
        %v650 = vpop.f32.mrf.mxu0
        %v651 = vadd.f32 %v448, %v650
        %v652 = vpop.f32.mrf.mxu0
        %653 = vmatprep.mubr.bf16.mxu0 %v492
        %654 = vmatmul.mubr.bf16.gmra.mxu0 %v491
        %v655 = vpop.f32.mrf.mxu0
        %v656 = vadd.f32 %v448, %v655
        %v657 = vpop.f32.mrf.mxu0
        %v658 = vpop.f32.mrf.mxu0
        %v659 = vadd.f32 %v448, %v658
        %v660 = vpop.f32.mrf.mxu0
        %661 = vmatprep.mubr.bf16.mxu0 %v494
        %662 = vmatmul.mubr.bf16.gmra.mxu0 %v493
        %v663 = vpop.f32.mrf.mxu0
        %v664 = vadd.f32 %v448, %v663
        %v665 = vpop.f32.mrf.mxu0
        %v666 = vpop.f32.mrf.mxu0
        %v667 = vadd.f32 %v448, %v666
        %v668 = vpop.f32.mrf.mxu0
        %669 = vmatprep.mubr.bf16.mxu0 %v496
        %670 = vmatmul.mubr.bf16.gmra.mxu0 %v495
        %v671 = vpop.f32.mrf.mxu0
        %v672 = vadd.f32 %v448, %v671
        %v673 = vpop.f32.mrf.mxu0
        %v674 = vpop.f32.mrf.mxu0
        %v675 = vadd.f32 %v448, %v674
        %v676 = vpop.f32.mrf.mxu0
        %677 = vmatprep.mubr.bf16.mxu0 %v498
        %678 = vmatmul.mubr.bf16.gmra.mxu0 %v497
        %v679 = vpop.f32.mrf.mxu0
        %v680 = vadd.f32 %v448, %v679
        %v681 = vpop.f32.mrf.mxu0
        %v682 = vpop.f32.mrf.mxu0
        %v683 = vadd.f32 %v448, %v682
        %v684 = vpop.f32.mrf.mxu0
        %685 = vmatprep.mubr.bf16.mxu0 %v500
        %686 = vmatmul.mubr.bf16.gmra.mxu0 %v499
        %v687 = vpop.f32.mrf.mxu0
        %v688 = vadd.f32 %v448, %v687
        %v689 = vpop.f32.mrf.mxu0
        %v690 = vpop.f32.mrf.mxu0
        %v691 = vadd.f32 %v448, %v690
        %v692 = vpop.f32.mrf.mxu0
        %693 = vmatprep.mubr.bf16.mxu0 %v502
        %694 = vmatmul.mubr.bf16.gmra.mxu0 %v501
        %v695 = vpop.f32.mrf.mxu0
        %v696 = vadd.f32 %v448, %v695
        %v697 = vpop.f32.mrf.mxu0
        %v698 = vpop.f32.mrf.mxu0
        %v699 = vpop.f32.mrf.mxu0
        %700 = vdwg.mxu0
        %v701 = vmax.f32 %v648, 0.0
        %v702 = vmax.f32 %v651, 0.0
        %v703 = vmax.f32 %v656, 0.0
        %v704 = vmax.f32 %v659, 0.0
        %v705 = vmax.f32 %v664, 0.0
        %v706 = vmax.f32 %v667, 0.0
        %v707 = vmax.f32 %v672, 0.0
        %v708 = vmax.f32 %v675, 0.0
        %v709 = vmax.f32 %v680, 0.0
        %v710 = vmax.f32 %v683, 0.0
        %v711 = vmax.f32 %v688, 0.0
        %v712 = vmax.f32 %v691, 0.0
        %v713 = vmax.f32 %v696, 0.0
        %v714 = vpack.c.bf16 %v702, %v701
        %v715 = vpack.c.bf16 %v704, %v703
        %v716 = vpack.c.bf16 %v706, %v705
        %v717 = vpack.c.bf16 %v708, %v707
        %v718 = vpack.c.bf16 %v710, %v709
        %v719 = vpack.c.bf16 %v712, %v711
        %v720 = vpack.c.bf16 %v713, %v713
        %s721 = scalar_lea.vmem %s383, 52
        %v722 = vld [vmem:[%s721] sm:$0xf]
        %v723 = vld [vmem:[%s721 + $0x4] sm:$0xf]
        %v724 = vld [vmem:[%s721 + $0x8] sm:$0xf]
        %v725 = vld [vmem:[%s721 + $0xc] sm:$0xf]
        %v726 = vld [vmem:[%s721 + $0x10] sm:$0xf]
        %v727 = vld [vmem:[%s721 + $0x14] sm:$0xf]
        %v728 = vld [vmem:[%s721 + $0x18] sm:$0xf]
        %v729 = vld [vmem:[%s721 + $0x1c] sm:$0xf]
        %v730 = vld [vmem:[%s721 + $0x20] sm:$0xf]
        %v731 = vld [vmem:[%s721 + $0x24] sm:$0xf]
        %v732 = vld [vmem:[%s721 + $0x28] sm:$0xf]
        %v733 = vld [vmem:[%s721 + $0x2c] sm:$0xf]
        %v734 = vld [vmem:[%s721 + $0x30] sm:$0x5]
        %v735 = vunpack.c.l.u8.bf16 %v722
        %v736 = vunpack.c.l.u8.bf16 %v723
        %v737 = vunpack.c.l.u8.bf16 %v724
        %v738 = vunpack.c.l.u8.bf16 %v725
        %v739 = vunpack.c.l.u8.bf16 %v726
        %v740 = vunpack.c.l.u8.bf16 %v727
        %v741 = vunpack.c.l.u8.bf16 %v728
        %v742 = vunpack.c.l.u8.bf16 %v729
        %v743 = vunpack.c.l.u8.bf16 %v730
        %v744 = vunpack.c.l.u8.bf16 %v731
        %v745 = vunpack.c.l.u8.bf16 %v732
        %v746 = vunpack.c.l.u8.bf16 %v733
        %v747 = vunpack.c.l.u8.bf16 %v734
        %v761 = vunpack.c.l.b16 %v735
        %v762 = vunpack.c.h.b16 %v735
        %v763 = vunpack.c.l.b16 %v736
        %v764 = vunpack.c.h.b16 %v736
        %v765 = vunpack.c.l.b16 %v737
        %v766 = vunpack.c.h.b16 %v737
        %v767 = vunpack.c.l.b16 %v738
        %v768 = vunpack.c.h.b16 %v738
        %v769 = vunpack.c.l.b16 %v739
        %v770 = vunpack.c.h.b16 %v739
        %v771 = vunpack.c.l.b16 %v740
        %v772 = vunpack.c.h.b16 %v740
        %v773 = vunpack.c.l.b16 %v741
        %v774 = vunpack.c.h.b16 %v741
        %v775 = vunpack.c.l.b16 %v742
        %v776 = vunpack.c.h.b16 %v742
        %v777 = vunpack.c.l.b16 %v743
        %v778 = vunpack.c.h.b16 %v743
        %v779 = vunpack.c.l.b16 %v744
        %v780 = vunpack.c.h.b16 %v744
        %v781 = vunpack.c.l.b16 %v745
        %v782 = vunpack.c.h.b16 %v745
        %v783 = vunpack.c.l.b16 %v746
        %v784 = vunpack.c.h.b16 %v746
        %v785 = vunpack.c.l.b16 %v747
        %v786 = vunpack.c.h.b16 %v747
        %v787 = vpack.c.b16 %v763, %v761
        %v788 = vpack.c.b16 %v764, %v762
        %v789 = vpack.c.b16 %v767, %v765
        %v790 = vpack.c.b16 %v768, %v766
        %v791 = vpack.c.b16 %v771, %v769
        %v792 = vpack.c.b16 %v772, %v770
        %v793 = vpack.c.b16 %v775, %v773
        %v794 = vpack.c.b16 %v776, %v774
        %v795 = vpack.c.b16 %v779, %v777
        %v796 = vpack.c.b16 %v780, %v778
        %v797 = vpack.c.b16 %v783, %v781
        %v798 = vpack.c.b16 %v784, %v782
        %v799 = vpack.c.b16 %v785, %v785
        %v800 = vpack.c.b16 %v786, %v786
        %815 = vmatprep.subr.bf16.mxu0 0
        %816 = vmatpush1.bf16.msra.mxu0 %v588
        %817 = vmatprep.subr.bf16.mxu0 0
        %818 = vmatpush1.bf16.msra.mxu0 %v587
        %819 = vmatprep.subr.bf16.mxu0 0
        %820 = vmatpush1.bf16.msra.mxu0 %v586
        %821 = vmatprep.subr.bf16.mxu0 0
        %822 = vmatpush1.bf16.msra.mxu0 %v585
        %823 = vmatprep.subr.bf16.mxu0 0
        %824 = vmatpush1.bf16.msra.mxu0 %v584
        %825 = vmatprep.subr.bf16.mxu0 0
        %826 = vmatpush1.bf16.msra.mxu0 %v583
        %827 = vmatprep.subr.bf16.mxu0 0
        %828 = vmatpush1.bf16.msra.mxu0 %v582
        %829 = vmatprep.subr.bf16.mxu0 0
        %830 = vmatpush1.bf16.msra.mxu0 %v581
        %831 = vmatprep.subr.bf16.mxu0 0
        %832 = vmatpush2.bf16.msra.mxu0 %v596
        %833 = vmatprep.subr.bf16.mxu0 0
        %834 = vmatpush2.bf16.msra.mxu0 %v595
        %835 = vmatprep.subr.bf16.mxu0 0
        %836 = vmatpush2.bf16.msra.mxu0 %v594
        %837 = vmatprep.subr.bf16.mxu0 0
        %838 = vmatpush2.bf16.msra.mxu0 %v593
        %839 = vmatprep.subr.bf16.mxu0 0
        %840 = vmatpush2.bf16.msra.mxu0 %v592
        %841 = vmatprep.subr.bf16.mxu0 0
        %842 = vmatpush2.bf16.msra.mxu0 %v591
        %843 = vmatprep.subr.bf16.mxu0 0
        %844 = vmatpush2.bf16.msra.mxu0 %v590
        %845 = vmatprep.subr.bf16.mxu0 0
        %846 = vmatpush2.bf16.msra.mxu0 %v589
        %847 = vmatprep.mubr.bf16.mxu0 %v788
        %848 = vmatmul.mubr.bf16.gmra.mxu0 %v787
        %v849 = vpop.f32.mrf.mxu0
        %v850 = vadd.f32 %v448, %v849
        %v851 = vpop.f32.mrf.mxu0
        %v852 = vpop.f32.mrf.mxu0
        %v853 = vadd.f32 %v448, %v852
        %v854 = vpop.f32.mrf.mxu0
        %855 = vmatprep.mubr.bf16.mxu0 %v790
        %856 = vmatmul.mubr.bf16.gmra.mxu0 %v789
        %v857 = vpop.f32.mrf.mxu0
        %v858 = vadd.f32 %v448, %v857
        %v859 = vpop.f32.mrf.mxu0
        %v860 = vpop.f32.mrf.mxu0
        %v861 = vadd.f32 %v448, %v860
        %v862 = vpop.f32.mrf.mxu0
        %863 = vmatprep.mubr.bf16.mxu0 %v792
        %864 = vmatmul.mubr.bf16.gmra.mxu0 %v791
        %v865 = vpop.f32.mrf.mxu0
        %v866 = vadd.f32 %v448, %v865
        %v867 = vpop.f32.mrf.mxu0
        %v868 = vpop.f32.mrf.mxu0
        %v869 = vadd.f32 %v448, %v868
        %v870 = vpop.f32.mrf.mxu0
        %871 = vmatprep.mubr.bf16.mxu0 %v794
        %872 = vmatmul.mubr.bf16.gmra.mxu0 %v793
        %v873 = vpop.f32.mrf.mxu0
        %v874 = vadd.f32 %v448, %v873
        %v875 = vpop.f32.mrf.mxu0
        %v876 = vpop.f32.mrf.mxu0
        %v877 = vadd.f32 %v448, %v876
        %v878 = vpop.f32.mrf.mxu0
        %879 = vmatprep.mubr.bf16.mxu0 %v796
        %880 = vmatmul.mubr.bf16.gmra.mxu0 %v795
        %v881 = vpop.f32.mrf.mxu0
        %v882 = vadd.f32 %v448, %v881
        %v883 = vpop.f32.mrf.mxu0
        %v884 = vpop.f32.mrf.mxu0
        %v885 = vadd.f32 %v448, %v884
        %v886 = vpop.f32.mrf.mxu0
        %887 = vmatprep.mubr.bf16.mxu0 %v798
        %888 = vmatmul.mubr.bf16.gmra.mxu0 %v797
        %v889 = vpop.f32.mrf.mxu0
        %v890 = vadd.f32 %v448, %v889
        %v891 = vpop.f32.mrf.mxu0
        %v892 = vpop.f32.mrf.mxu0
        %v893 = vadd.f32 %v448, %v892
        %v894 = vpop.f32.mrf.mxu0
        %895 = vmatprep.mubr.bf16.mxu0 %v800
        %896 = vmatmul.mubr.bf16.gmra.mxu0 %v799
        %v897 = vpop.f32.mrf.mxu0
        %v898 = vadd.f32 %v448, %v897
        %v899 = vpop.f32.mrf.mxu0
        %v900 = vpop.f32.mrf.mxu0
        %v901 = vpop.f32.mrf.mxu0
        %902 = vdwg.mxu0
        %v903 = vmax.f32 %v850, 0.0
        %v904 = vmax.f32 %v853, 0.0
        %v905 = vmax.f32 %v858, 0.0
        %v906 = vmax.f32 %v861, 0.0
        %v907 = vmax.f32 %v866, 0.0
        %v908 = vmax.f32 %v869, 0.0
        %v909 = vmax.f32 %v874, 0.0
        %v910 = vmax.f32 %v877, 0.0
        %v911 = vmax.f32 %v882, 0.0
        %v912 = vmax.f32 %v885, 0.0
        %v913 = vmax.f32 %v890, 0.0
        %v914 = vmax.f32 %v893, 0.0
        %v915 = vmax.f32 %v898, 0.0
        %v916 = vpack.c.bf16 %v904, %v903
        %v917 = vpack.c.bf16 %v906, %v905
        %v918 = vpack.c.bf16 %v908, %v907
        %v919 = vpack.c.bf16 %v910, %v909
        %v920 = vpack.c.bf16 %v912, %v911
        %v921 = vpack.c.bf16 %v914, %v913
        %v922 = vpack.c.bf16 %v915, %v915
        %s923 = scalar_lea.vmem %s383, 104
        %v924 = vld [vmem:[%s923] sm:$0xf]
        %v925 = vld [vmem:[%s923 + $0x4] sm:$0xf]
        %v926 = vld [vmem:[%s923 + $0x8] sm:$0xf]
        %v927 = vld [vmem:[%s923 + $0xc] sm:$0xf]
        %v928 = vld [vmem:[%s923 + $0x10] sm:$0xf]
        %v929 = vld [vmem:[%s923 + $0x14] sm:$0xf]
        %v930 = vld [vmem:[%s923 + $0x18] sm:$0xf]
        %v931 = vld [vmem:[%s923 + $0x1c] sm:$0xf]
        %v932 = vld [vmem:[%s923 + $0x20] sm:$0xf]
        %v933 = vld [vmem:[%s923 + $0x24] sm:$0xf]
        %v934 = vld [vmem:[%s923 + $0x28] sm:$0xf]
        %v935 = vld [vmem:[%s923 + $0x2c] sm:$0xf]
        %v936 = vld [vmem:[%s923 + $0x30] sm:$0x5]
        %v937 = vunpack.c.l.u8.bf16 %v924
        %v938 = vunpack.c.l.u8.bf16 %v925
        %v939 = vunpack.c.l.u8.bf16 %v926
        %v940 = vunpack.c.l.u8.bf16 %v927
        %v941 = vunpack.c.l.u8.bf16 %v928
        %v942 = vunpack.c.l.u8.bf16 %v929
        %v943 = vunpack.c.l.u8.bf16 %v930
        %v944 = vunpack.c.l.u8.bf16 %v931
        %v945 = vunpack.c.l.u8.bf16 %v932
        %v946 = vunpack.c.l.u8.bf16 %v933
        %v947 = vunpack.c.l.u8.bf16 %v934
        %v948 = vunpack.c.l.u8.bf16 %v935
        %v949 = vunpack.c.l.u8.bf16 %v936
        %v963 = vunpack.c.l.b16 %v937
        %v964 = vunpack.c.h.b16 %v937
        %v965 = vunpack.c.l.b16 %v938
        %v966 = vunpack.c.h.b16 %v938
        %v967 = vunpack.c.l.b16 %v939
        %v968 = vunpack.c.h.b16 %v939
        %v969 = vunpack.c.l.b16 %v940
        %v970 = vunpack.c.h.b16 %v940
        %v971 = vunpack.c.l.b16 %v941
        %v972 = vunpack.c.h.b16 %v941
        %v973 = vunpack.c.l.b16 %v942
        %v974 = vunpack.c.h.b16 %v942
        %v975 = vunpack.c.l.b16 %v943
        %v976 = vunpack.c.h.b16 %v943
        %v977 = vunpack.c.l.b16 %v944
        %v978 = vunpack.c.h.b16 %v944
        %v979 = vunpack.c.l.b16 %v945
        %v980 = vunpack.c.h.b16 %v945
        %v981 = vunpack.c.l.b16 %v946
        %v982 = vunpack.c.h.b16 %v946
        %v983 = vunpack.c.l.b16 %v947
        %v984 = vunpack.c.h.b16 %v947
        %v985 = vunpack.c.l.b16 %v948
        %v986 = vunpack.c.h.b16 %v948
        %v987 = vunpack.c.l.b16 %v949
        %v988 = vunpack.c.h.b16 %v949
        %v989 = vpack.c.b16 %v965, %v963
        %v990 = vpack.c.b16 %v966, %v964
        %v991 = vpack.c.b16 %v969, %v967
        %v992 = vpack.c.b16 %v970, %v968
        %v993 = vpack.c.b16 %v973, %v971
        %v994 = vpack.c.b16 %v974, %v972
        %v995 = vpack.c.b16 %v977, %v975
        %v996 = vpack.c.b16 %v978, %v976
        %v997 = vpack.c.b16 %v981, %v979
        %v998 = vpack.c.b16 %v982, %v980
        %v999 = vpack.c.b16 %v985, %v983
        %v1000 = vpack.c.b16 %v986, %v984
        %v1001 = vpack.c.b16 %v987, %v987
        %v1002 = vpack.c.b16 %v988, %v988
        %1017 = vmatprep.subr.bf16.mxu0 0
        %1018 = vmatpush1.bf16.msra.mxu0 %v588
        %1019 = vmatprep.subr.bf16.mxu0 0
        %1020 = vmatpush1.bf16.msra.mxu0 %v587
        %1021 = vmatprep.subr.bf16.mxu0 0
        %1022 = vmatpush1.bf16.msra.mxu0 %v586
        %1023 = vmatprep.subr.bf16.mxu0 0
        %1024 = vmatpush1.bf16.msra.mxu0 %v585
        %1025 = vmatprep.subr.bf16.mxu0 0
        %1026 = vmatpush1.bf16.msra.mxu0 %v584
        %1027 = vmatprep.subr.bf16.mxu0 0
        %1028 = vmatpush1.bf16.msra.mxu0 %v583
        %1029 = vmatprep.subr.bf16.mxu0 0
        %1030 = vmatpush1.bf16.msra.mxu0 %v582
        %1031 = vmatprep.subr.bf16.mxu0 0
        %1032 = vmatpush1.bf16.msra.mxu0 %v581
        %1033 = vmatprep.subr.bf16.mxu0 0
        %1034 = vmatpush2.bf16.msra.mxu0 %v596
        %1035 = vmatprep.subr.bf16.mxu0 0
        %1036 = vmatpush2.bf16.msra.mxu0 %v595
        %1037 = vmatprep.subr.bf16.mxu0 0
        %1038 = vmatpush2.bf16.msra.mxu0 %v594
        %1039 = vmatprep.subr.bf16.mxu0 0
        %1040 = vmatpush2.bf16.msra.mxu0 %v593
        %1041 = vmatprep.subr.bf16.mxu0 0
        %1042 = vmatpush2.bf16.msra.mxu0 %v592
        %1043 = vmatprep.subr.bf16.mxu0 0
        %1044 = vmatpush2.bf16.msra.mxu0 %v591
        %1045 = vmatprep.subr.bf16.mxu0 0
        %1046 = vmatpush2.bf16.msra.mxu0 %v590
        %1047 = vmatprep.subr.bf16.mxu0 0
        %1048 = vmatpush2.bf16.msra.mxu0 %v589
        %1049 = vmatprep.mubr.bf16.mxu0 %v990
        %1050 = vmatmul.mubr.bf16.gmra.mxu0 %v989
        %v1051 = vpop.f32.mrf.mxu0
        %v1052 = vadd.f32 %v448, %v1051
        %v1053 = vpop.f32.mrf.mxu0
        %v1054 = vpop.f32.mrf.mxu0
        %v1055 = vadd.f32 %v448, %v1054
        %v1056 = vpop.f32.mrf.mxu0
        %1057 = vmatprep.mubr.bf16.mxu0 %v992
        %1058 = vmatmul.mubr.bf16.gmra.mxu0 %v991
        %v1059 = vpop.f32.mrf.mxu0
        %v1060 = vadd.f32 %v448, %v1059
        %v1061 = vpop.f32.mrf.mxu0
        %v1062 = vpop.f32.mrf.mxu0
        %v1063 = vadd.f32 %v448, %v1062
        %v1064 = vpop.f32.mrf.mxu0
        %1065 = vmatprep.mubr.bf16.mxu0 %v994
        %1066 = vmatmul.mubr.bf16.gmra.mxu0 %v993
        %v1067 = vpop.f32.mrf.mxu0
        %v1068 = vadd.f32 %v448, %v1067
        %v1069 = vpop.f32.mrf.mxu0
        %v1070 = vpop.f32.mrf.mxu0
        %v1071 = vadd.f32 %v448, %v1070
        %v1072 = vpop.f32.mrf.mxu0
        %1073 = vmatprep.mubr.bf16.mxu0 %v996
        %1074 = vmatmul.mubr.bf16.gmra.mxu0 %v995
        %v1075 = vpop.f32.mrf.mxu0
        %v1076 = vadd.f32 %v448, %v1075
        %v1077 = vpop.f32.mrf.mxu0
        %v1078 = vpop.f32.mrf.mxu0
        %v1079 = vadd.f32 %v448, %v1078
        %v1080 = vpop.f32.mrf.mxu0
        %1081 = vmatprep.mubr.bf16.mxu0 %v998
        %1082 = vmatmul.mubr.bf16.gmra.mxu0 %v997
        %v1083 = vpop.f32.mrf.mxu0
        %v1084 = vadd.f32 %v448, %v1083
        %v1085 = vpop.f32.mrf.mxu0
        %v1086 = vpop.f32.mrf.mxu0
        %v1087 = vadd.f32 %v448, %v1086
        %v1088 = vpop.f32.mrf.mxu0
        %1089 = vmatprep.mubr.bf16.mxu0 %v1000
        %1090 = vmatmul.mubr.bf16.gmra.mxu0 %v999
        %v1091 = vpop.f32.mrf.mxu0
        %v1092 = vadd.f32 %v448, %v1091
        %v1093 = vpop.f32.mrf.mxu0
        %v1094 = vpop.f32.mrf.mxu0
        %v1095 = vadd.f32 %v448, %v1094
        %v1096 = vpop.f32.mrf.mxu0
        %1097 = vmatprep.mubr.bf16.mxu0 %v1002
        %1098 = vmatmul.mubr.bf16.gmra.mxu0 %v1001
        %v1099 = vpop.f32.mrf.mxu0
        %v1100 = vadd.f32 %v448, %v1099
        %v1101 = vpop.f32.mrf.mxu0
        %v1102 = vpop.f32.mrf.mxu0
        %v1103 = vpop.f32.mrf.mxu0
        %1104 = vdwg.mxu0
        %v1105 = vmax.f32 %v1052, 0.0
        %v1106 = vmax.f32 %v1055, 0.0
        %v1107 = vmax.f32 %v1060, 0.0
        %v1108 = vmax.f32 %v1063, 0.0
        %v1109 = vmax.f32 %v1068, 0.0
        %v1110 = vmax.f32 %v1071, 0.0
        %v1111 = vmax.f32 %v1076, 0.0
        %v1112 = vmax.f32 %v1079, 0.0
        %v1113 = vmax.f32 %v1084, 0.0
        %v1114 = vmax.f32 %v1087, 0.0
        %v1115 = vmax.f32 %v1092, 0.0
        %v1116 = vmax.f32 %v1095, 0.0
        %v1117 = vmax.f32 %v1100, 0.0
        %v1118 = vpack.c.bf16 %v1106, %v1105
        %v1119 = vpack.c.bf16 %v1108, %v1107
        %v1120 = vpack.c.bf16 %v1110, %v1109
        %v1121 = vpack.c.bf16 %v1112, %v1111
        %v1122 = vpack.c.bf16 %v1114, %v1113
        %v1123 = vpack.c.bf16 %v1116, %v1115
        %v1124 = vpack.c.bf16 %v1117, %v1117
        %s1125 = scalar_lea.vmem %s383, 156
        %v1126 = vld [vmem:[%s1125] sm:$0xf]
        %v1127 = vld [vmem:[%s1125 + $0x4] sm:$0xf]
        %v1128 = vld [vmem:[%s1125 + $0x8] sm:$0xf]
        %v1129 = vld [vmem:[%s1125 + $0xc] sm:$0xf]
        %v1130 = vld [vmem:[%s1125 + $0x10] sm:$0xf]
        %v1131 = vld [vmem:[%s1125 + $0x14] sm:$0xf]
        %v1132 = vld [vmem:[%s1125 + $0x18] sm:$0xf]
        %v1133 = vld [vmem:[%s1125 + $0x1c] sm:$0xf]
        %v1134 = vld [vmem:[%s1125 + $0x20] sm:$0xf]
        %v1135 = vld [vmem:[%s1125 + $0x24] sm:$0xf]
        %v1136 = vld [vmem:[%s1125 + $0x28] sm:$0xf]
        %v1137 = vld [vmem:[%s1125 + $0x2c] sm:$0xf]
        %v1138 = vld [vmem:[%s1125 + $0x30] sm:$0x5]
        %v1139 = vunpack.c.l.u8.bf16 %v1126
        %v1140 = vunpack.c.l.u8.bf16 %v1127
        %v1141 = vunpack.c.l.u8.bf16 %v1128
        %v1142 = vunpack.c.l.u8.bf16 %v1129
        %v1143 = vunpack.c.l.u8.bf16 %v1130
        %v1144 = vunpack.c.l.u8.bf16 %v1131
        %v1145 = vunpack.c.l.u8.bf16 %v1132
        %v1146 = vunpack.c.l.u8.bf16 %v1133
        %v1147 = vunpack.c.l.u8.bf16 %v1134
        %v1148 = vunpack.c.l.u8.bf16 %v1135
        %v1149 = vunpack.c.l.u8.bf16 %v1136
        %v1150 = vunpack.c.l.u8.bf16 %v1137
        %v1151 = vunpack.c.l.u8.bf16 %v1138
        %v1165 = vunpack.c.l.b16 %v1139
        %v1166 = vunpack.c.h.b16 %v1139
        %v1167 = vunpack.c.l.b16 %v1140
        %v1168 = vunpack.c.h.b16 %v1140
        %v1169 = vunpack.c.l.b16 %v1141
        %v1170 = vunpack.c.h.b16 %v1141
        %v1171 = vunpack.c.l.b16 %v1142
        %v1172 = vunpack.c.h.b16 %v1142
        %v1173 = vunpack.c.l.b16 %v1143
        %v1174 = vunpack.c.h.b16 %v1143
        %v1175 = vunpack.c.l.b16 %v1144
        %v1176 = vunpack.c.h.b16 %v1144
        %v1177 = vunpack.c.l.b16 %v1145
        %v1178 = vunpack.c.h.b16 %v1145
        %v1179 = vunpack.c.l.b16 %v1146
        %v1180 = vunpack.c.h.b16 %v1146
        %v1181 = vunpack.c.l.b16 %v1147
        %v1182 = vunpack.c.h.b16 %v1147
        %v1183 = vunpack.c.l.b16 %v1148
        %v1184 = vunpack.c.h.b16 %v1148
        %v1185 = vunpack.c.l.b16 %v1149
        %v1186 = vunpack.c.h.b16 %v1149
        %v1187 = vunpack.c.l.b16 %v1150
        %v1188 = vunpack.c.h.b16 %v1150
        %v1189 = vunpack.c.l.b16 %v1151
        %v1190 = vunpack.c.h.b16 %v1151
        %v1191 = vpack.c.b16 %v1167, %v1165
        %v1192 = vpack.c.b16 %v1168, %v1166
        %v1193 = vpack.c.b16 %v1171, %v1169
        %v1194 = vpack.c.b16 %v1172, %v1170
        %v1195 = vpack.c.b16 %v1175, %v1173
        %v1196 = vpack.c.b16 %v1176, %v1174
        %v1197 = vpack.c.b16 %v1179, %v1177
        %v1198 = vpack.c.b16 %v1180, %v1178
        %v1199 = vpack.c.b16 %v1183, %v1181
        %v1200 = vpack.c.b16 %v1184, %v1182
        %v1201 = vpack.c.b16 %v1187, %v1185
        %v1202 = vpack.c.b16 %v1188, %v1186
        %v1203 = vpack.c.b16 %v1189, %v1189
        %v1204 = vpack.c.b16 %v1190, %v1190
        %1219 = vmatprep.subr.bf16.mxu0 0
        %1220 = vmatpush1.bf16.msra.mxu0 %v588
        %1221 = vmatprep.subr.bf16.mxu0 0
        %1222 = vmatpush1.bf16.msra.mxu0 %v587
        %1223 = vmatprep.subr.bf16.mxu0 0
        %1224 = vmatpush1.bf16.msra.mxu0 %v586
        %1225 = vmatprep.subr.bf16.mxu0 0
        %1226 = vmatpush1.bf16.msra.mxu0 %v585
        %1227 = vmatprep.subr.bf16.mxu0 0
        %1228 = vmatpush1.bf16.msra.mxu0 %v584
        %1229 = vmatprep.subr.bf16.mxu0 0
        %1230 = vmatpush1.bf16.msra.mxu0 %v583
        %1231 = vmatprep.subr.bf16.mxu0 0
        %1232 = vmatpush1.bf16.msra.mxu0 %v582
        %1233 = vmatprep.subr.bf16.mxu0 0
        %1234 = vmatpush1.bf16.msra.mxu0 %v581
        %1235 = vmatprep.subr.bf16.mxu0 0
        %1236 = vmatpush2.bf16.msra.mxu0 %v596
        %1237 = vmatprep.subr.bf16.mxu0 0
        %1238 = vmatpush2.bf16.msra.mxu0 %v595
        %1239 = vmatprep.subr.bf16.mxu0 0
        %1240 = vmatpush2.bf16.msra.mxu0 %v594
        %1241 = vmatprep.subr.bf16.mxu0 0
        %1242 = vmatpush2.bf16.msra.mxu0 %v593
        %1243 = vmatprep.subr.bf16.mxu0 0
        %1244 = vmatpush2.bf16.msra.mxu0 %v592
        %1245 = vmatprep.subr.bf16.mxu0 0
        %1246 = vmatpush2.bf16.msra.mxu0 %v591
        %1247 = vmatprep.subr.bf16.mxu0 0
        %1248 = vmatpush2.bf16.msra.mxu0 %v590
        %1249 = vmatprep.subr.bf16.mxu0 0
        %1250 = vmatpush2.bf16.msra.mxu0 %v589
        %1251 = vmatprep.mubr.bf16.mxu0 %v1192
        %1252 = vmatmul.mubr.bf16.gmra.mxu0 %v1191
        %v1253 = vpop.f32.mrf.mxu0
        %v1254 = vadd.f32 %v448, %v1253
        %v1255 = vpop.f32.mrf.mxu0
        %v1256 = vpop.f32.mrf.mxu0
        %v1257 = vadd.f32 %v448, %v1256
        %v1258 = vpop.f32.mrf.mxu0
        %1259 = vmatprep.mubr.bf16.mxu0 %v1194
        %1260 = vmatmul.mubr.bf16.gmra.mxu0 %v1193
        %v1261 = vpop.f32.mrf.mxu0
        %v1262 = vadd.f32 %v448, %v1261
        %v1263 = vpop.f32.mrf.mxu0
        %v1264 = vpop.f32.mrf.mxu0
        %v1265 = vadd.f32 %v448, %v1264
        %v1266 = vpop.f32.mrf.mxu0
        %1267 = vmatprep.mubr.bf16.mxu0 %v1196
        %1268 = vmatmul.mubr.bf16.gmra.mxu0 %v1195
        %v1269 = vpop.f32.mrf.mxu0
        %v1270 = vadd.f32 %v448, %v1269
        %v1271 = vpop.f32.mrf.mxu0
        %v1272 = vpop.f32.mrf.mxu0
        %v1273 = vadd.f32 %v448, %v1272
        %v1274 = vpop.f32.mrf.mxu0
        %1275 = vmatprep.mubr.bf16.mxu0 %v1198
        %1276 = vmatmul.mubr.bf16.gmra.mxu0 %v1197
        %v1277 = vpop.f32.mrf.mxu0
        %v1278 = vadd.f32 %v448, %v1277
        %v1279 = vpop.f32.mrf.mxu0
        %v1280 = vpop.f32.mrf.mxu0
        %v1281 = vadd.f32 %v448, %v1280
        %v1282 = vpop.f32.mrf.mxu0
        %1283 = vmatprep.mubr.bf16.mxu0 %v1200
        %1284 = vmatmul.mubr.bf16.gmra.mxu0 %v1199
        %v1285 = vpop.f32.mrf.mxu0
        %v1286 = vadd.f32 %v448, %v1285
        %v1287 = vpop.f32.mrf.mxu0
        %v1288 = vpop.f32.mrf.mxu0
        %v1289 = vadd.f32 %v448, %v1288
        %v1290 = vpop.f32.mrf.mxu0
        %1291 = vmatprep.mubr.bf16.mxu0 %v1202
        %1292 = vmatmul.mubr.bf16.gmra.mxu0 %v1201
        %v1293 = vpop.f32.mrf.mxu0
        %v1294 = vadd.f32 %v448, %v1293
        %v1295 = vpop.f32.mrf.mxu0
        %v1296 = vpop.f32.mrf.mxu0
        %v1297 = vadd.f32 %v448, %v1296
        %v1298 = vpop.f32.mrf.mxu0
        %1299 = vmatprep.mubr.bf16.mxu0 %v1204
        %1300 = vmatmul.mubr.bf16.gmra.mxu0 %v1203
        %v1301 = vpop.f32.mrf.mxu0
        %v1302 = vadd.f32 %v448, %v1301
        %v1303 = vpop.f32.mrf.mxu0
        %v1304 = vpop.f32.mrf.mxu0
        %v1305 = vpop.f32.mrf.mxu0
        %1306 = vdwg.mxu0
        %v1307 = vmax.f32 %v1254, 0.0
        %v1308 = vmax.f32 %v1257, 0.0
        %v1309 = vmax.f32 %v1262, 0.0
        %v1310 = vmax.f32 %v1265, 0.0
        %v1311 = vmax.f32 %v1270, 0.0
        %v1312 = vmax.f32 %v1273, 0.0
        %v1313 = vmax.f32 %v1278, 0.0
        %v1314 = vmax.f32 %v1281, 0.0
        %v1315 = vmax.f32 %v1286, 0.0
        %v1316 = vmax.f32 %v1289, 0.0
        %v1317 = vmax.f32 %v1294, 0.0
        %v1318 = vmax.f32 %v1297, 0.0
        %v1319 = vmax.f32 %v1302, 0.0
        %v1320 = vpack.c.bf16 %v1308, %v1307
        %v1321 = vpack.c.bf16 %v1310, %v1309
        %v1322 = vpack.c.bf16 %v1312, %v1311
        %v1323 = vpack.c.bf16 %v1314, %v1313
        %v1324 = vpack.c.bf16 %v1316, %v1315
        %v1325 = vpack.c.bf16 %v1318, %v1317
        %v1326 = vpack.c.bf16 %v1319, %v1319
        %1334 = vrot.lane.b32.xlu0 %v916, 32
        %v1335 = vpop.permute.xlu0 %1334
        %1336 = vrot.lane.b32.xlu0 %v917, 32
        %v1337 = vpop.permute.xlu0 %1336
        %1338 = vrot.lane.b32.xlu0 %v918, 32
        %v1339 = vpop.permute.xlu0 %1338
        %1340 = vrot.lane.b32.xlu0 %v919, 32
        %v1341 = vpop.permute.xlu0 %1340
        %1342 = vrot.lane.b32.xlu0 %v920, 32
        %v1343 = vpop.permute.xlu0 %1342
        %1344 = vrot.lane.b32.xlu0 %v921, 32
        %v1345 = vpop.permute.xlu0 %1344
        %1346 = vrot.lane.b32.xlu0 %v922, 32
        %v1347 = vpop.permute.xlu0 %1346
        %1355 = vrot.lane.b32.xlu0 %v1118, 64
        %v1356 = vpop.permute.xlu0 %1355
        %1357 = vrot.lane.b32.xlu0 %v1119, 64
        %v1358 = vpop.permute.xlu0 %1357
        %1359 = vrot.lane.b32.xlu0 %v1120, 64
        %v1360 = vpop.permute.xlu0 %1359
        %1361 = vrot.lane.b32.xlu0 %v1121, 64
        %v1362 = vpop.permute.xlu0 %1361
        %1363 = vrot.lane.b32.xlu0 %v1122, 64
        %v1364 = vpop.permute.xlu0 %1363
        %1365 = vrot.lane.b32.xlu0 %v1123, 64
        %v1366 = vpop.permute.xlu0 %1365
        %1367 = vrot.lane.b32.xlu0 %v1124, 64
        %v1368 = vpop.permute.xlu0 %1367
        %1376 = vrot.lane.b32.xlu0 %v1320, 96
        %v1377 = vpop.permute.xlu0 %1376
        %1378 = vrot.lane.b32.xlu0 %v1321, 96
        %v1379 = vpop.permute.xlu0 %1378
        %1380 = vrot.lane.b32.xlu0 %v1322, 96
        %v1381 = vpop.permute.xlu0 %1380
        %1382 = vrot.lane.b32.xlu0 %v1323, 96
        %v1383 = vpop.permute.xlu0 %1382
        %1384 = vrot.lane.b32.xlu0 %v1324, 96
        %v1385 = vpop.permute.xlu0 %1384
        %1386 = vrot.lane.b32.xlu0 %v1325, 96
        %v1387 = vpop.permute.xlu0 %1386
        %1388 = vrot.lane.b32.xlu0 %v1326, 96
        %v1389 = vpop.permute.xlu0 %1388
        %vm1390 = vcmask 261120
        %v1393 = vsel %vm1390, %v714, %v1335
        %v1396 = vsel %vm1390, %v715, %v1337
        %v1399 = vsel %vm1390, %v716, %v1339
        %v1402 = vsel %vm1390, %v717, %v1341
        %v1405 = vsel %vm1390, %v718, %v1343
        %v1408 = vsel %vm1390, %v719, %v1345
        %v1411 = vsel %vm1390, %v720, %v1347
        %vm1412 = vcmask 523264
        %v1414 = vsel %vm1412, %v1393, %v1356
        %v1416 = vsel %vm1412, %v1396, %v1358
        %v1418 = vsel %vm1412, %v1399, %v1360
        %v1420 = vsel %vm1412, %v1402, %v1362
        %v1422 = vsel %vm1412, %v1405, %v1364
        %v1424 = vsel %vm1412, %v1408, %v1366
        %v1426 = vsel %vm1412, %v1411, %v1368
        %vm1427 = vcmask 785408
        %v1429 = vsel %vm1427, %v1414, %v1377
        %v1432 = vsel %vm1427, %v1416, %v1379
        %v1435 = vsel %vm1427, %v1418, %v1381
        %v1438 = vsel %vm1427, %v1420, %v1383
        %v1441 = vsel %vm1427, %v1422, %v1385
        %v1444 = vsel %vm1427, %v1424, %v1387
        %v1447 = vsel %vm1427, %v1426, %v1389
        %v1448 = vld [vmem:[%s3] sm:$0xf]
        %v1449 = vld [vmem:[%s3 + $0x4] sm:$0xf]
        %v1450 = vld [vmem:[%s3 + $0x8] sm:$0xf]
        %v1451 = vld [vmem:[%s3 + $0xc] sm:$0xf]
        %v1452 = vld [vmem:[%s3 + $0x10] sm:$0xf]
        %v1453 = vld [vmem:[%s3 + $0x14] sm:$0xf]
        %v1454 = vld [vmem:[%s3 + $0x18] sm:$0xf]
        %v1455 = vld [vmem:[%s3 + $0x1c] sm:$0xf]
        %v1456 = vld [vmem:[%s3 + $0x20] sm:$0xf]
        %v1457 = vld [vmem:[%s3 + $0x24] sm:$0xf]
        %v1458 = vld [vmem:[%s3 + $0x28] sm:$0xf]
        %v1459 = vld [vmem:[%s3 + $0x2c] sm:$0xf]
        %v1460 = vld [vmem:[%s3 + $0x30] sm:$0xf]
        %v1461 = vld [vmem:[%s3 + $0x34] sm:$0xf]
        %v1462 = vld [vmem:[%s3 + $0x38] sm:$0xf]
        %v1463 = vld [vmem:[%s3 + $0x3c] sm:$0xf]
        %s1464 = scalar_lea.vmem %s3, 64
        %v1465 = vld [vmem:[%s1464] sm:$0xf]
        %v1466 = vld [vmem:[%s1464 + $0x4] sm:$0xf]
        %v1467 = vld [vmem:[%s1464 + $0x8] sm:$0xf]
        %v1468 = vld [vmem:[%s1464 + $0xc] sm:$0xf]
        %v1469 = vld [vmem:[%s1464 + $0x10] sm:$0xf]
        %v1470 = vld [vmem:[%s1464 + $0x14] sm:$0xf]
        %v1471 = vld [vmem:[%s1464 + $0x18] sm:$0xf]
        %v1472 = vld [vmem:[%s1464 + $0x1c] sm:$0xf]
        %v1473 = vld [vmem:[%s1464 + $0x20] sm:$0xf]
        %v1474 = vld [vmem:[%s1464 + $0x24] sm:$0xf]
        %v1475 = vld [vmem:[%s1464 + $0x28] sm:$0xf]
        %v1476 = vld [vmem:[%s1464 + $0x2c] sm:$0xf]
        %v1477 = vld [vmem:[%s1464 + $0x30] sm:$0xf]
        %v1478 = vld [vmem:[%s1464 + $0x34] sm:$0xf]
        %v1479 = vld [vmem:[%s1464 + $0x38] sm:$0xf]
        %v1480 = vld [vmem:[%s1464 + $0x3c] sm:$0xf]
        %vm1481 = vsmask.f32 7424
        %v1482 = vshrl.u32 %v1429, 16
        %v1484 = vshll.u32 %v1429, 16
        %v1486 = vrot.slane %v1484, 1
        %v1487 = vor.u32 %v1482, %v1486
        %v1488 = vshll.u32 %v1432, 16
        %v1490 = vrot.slane %v1488, 1
        %v1491 = vsel %vm1481, %v1487, %v1490
        %v1492 = vshrl.u32 %v1432, 16
        %v1494 = vor.u32 %v1492, %v1490
        %v1495 = vshll.u32 %v1435, 16
        %v1497 = vrot.slane %v1495, 1
        %v1498 = vsel %vm1481, %v1494, %v1497
        %v1499 = vshrl.u32 %v1435, 16
        %v1501 = vor.u32 %v1499, %v1497
        %v1502 = vshll.u32 %v1438, 16
        %v1504 = vrot.slane %v1502, 1
        %v1505 = vsel %vm1481, %v1501, %v1504
        %v1506 = vshrl.u32 %v1438, 16
        %v1508 = vor.u32 %v1506, %v1504
        %v1509 = vshll.u32 %v1441, 16
        %v1511 = vrot.slane %v1509, 1
        %v1512 = vsel %vm1481, %v1508, %v1511
        %v1513 = vshrl.u32 %v1441, 16
        %v1515 = vor.u32 %v1513, %v1511
        %v1516 = vshll.u32 %v1444, 16
        %v1518 = vrot.slane %v1516, 1
        %v1519 = vsel %vm1481, %v1515, %v1518
        %v1520 = vshrl.u32 %v1444, 16
        %v1522 = vor.u32 %v1520, %v1518
        %v1545 = vunpack.c.l.b16 %v1465
        %v1546 = vunpack.c.l.b16 %v1466
        %v1547 = vunpack.c.l.b16 %v1467
        %v1548 = vunpack.c.l.b16 %v1468
        %v1549 = vunpack.c.l.b16 %v1469
        %v1550 = vunpack.c.l.b16 %v1470
        %v1551 = vunpack.c.l.b16 %v1471
        %v1552 = vunpack.c.l.b16 %v1472
        %v1553 = vunpack.c.l.b16 %v1473
        %v1554 = vunpack.c.l.b16 %v1474
        %v1555 = vunpack.c.l.b16 %v1475
        %v1556 = vunpack.c.l.b16 %v1476
        %v1557 = vunpack.c.l.b16 %v1477
        %v1558 = vunpack.c.l.b16 %v1478
        %v1559 = vunpack.c.l.b16 %v1479
        %v1560 = vunpack.c.l.b16 %v1480
        %v1561 = vpack.c.b16 %v1546, %v1545
        %v1562 = vpack.c.b16 %v1548, %v1547
        %v1563 = vpack.c.b16 %v1550, %v1549
        %v1564 = vpack.c.b16 %v1552, %v1551
        %v1565 = vpack.c.b16 %v1554, %v1553
        %v1566 = vpack.c.b16 %v1556, %v1555
        %v1567 = vpack.c.b16 %v1558, %v1557
        %v1568 = vpack.c.b16 %v1560, %v1559
        %1577 = vmatprep.subr.bf16.mxu0 0
        %1578 = vmatpush1.bf16.msra.mxu0 %v1568
        %1579 = vmatprep.subr.bf16.mxu0 0
        %1580 = vmatpush1.bf16.msra.mxu0 %v1567
        %1581 = vmatprep.subr.bf16.mxu0 0
        %1582 = vmatpush1.bf16.msra.mxu0 %v1566
        %1583 = vmatprep.subr.bf16.mxu0 0
        %1584 = vmatpush1.bf16.msra.mxu0 %v1565
        %1585 = vmatprep.subr.bf16.mxu0 0
        %1586 = vmatpush1.bf16.msra.mxu0 %v1564
        %1587 = vmatprep.subr.bf16.mxu0 0
        %1588 = vmatpush1.bf16.msra.mxu0 %v1563
        %1589 = vmatprep.subr.bf16.mxu0 0
        %1590 = vmatpush1.bf16.msra.mxu0 %v1562
        %1591 = vmatprep.subr.bf16.mxu0 0
        %1592 = vmatpush1.bf16.msra.mxu0 %v1561
        %1593 = vmatprep.subr.bf16.mxu0 0
        %1594 = vmatpush2.bf16.msra.mxu0 0
        %1595 = vmatprep.subr.bf16.mxu0 0
        %1596 = vmatpush2.bf16.msra.mxu0 0
        %1597 = vmatprep.subr.bf16.mxu0 0
        %1598 = vmatpush2.bf16.msra.mxu0 0
        %1599 = vmatprep.subr.bf16.mxu0 0
        %1600 = vmatpush2.bf16.msra.mxu0 0
        %1601 = vmatprep.subr.bf16.mxu0 0
        %1602 = vmatpush2.bf16.msra.mxu0 0
        %1603 = vmatprep.subr.bf16.mxu0 0
        %1604 = vmatpush2.bf16.msra.mxu0 0
        %1605 = vmatprep.subr.bf16.mxu0 0
        %1606 = vmatpush2.bf16.msra.mxu0 0
        %1607 = vmatprep.subr.bf16.mxu0 0
        %1608 = vmatpush2.bf16.msra.mxu0 0
        %1609 = vmatprep.mubr.bf16.mxu0 0
        %1610 = vmatmul.mubr.bf16.gmra.mxu0 %v1491
        %v1611 = vpop.f32.mrf.mxu0
        %v1612 = vadd.f32 0.0, %v1611
        %v1613 = vpop.f32.mrf.mxu0
        %v1614 = vpop.f32.mrf.mxu0
        %v1615 = vadd.f32 0.0, %v1614
        %v1616 = vpop.f32.mrf.mxu0
        %1617 = vmatprep.mubr.bf16.mxu0 0
        %1618 = vmatmul.mubr.bf16.gmra.mxu0 %v1498
        %v1619 = vpop.f32.mrf.mxu0
        %v1620 = vadd.f32 0.0, %v1619
        %v1621 = vpop.f32.mrf.mxu0
        %v1622 = vpop.f32.mrf.mxu0
        %v1623 = vadd.f32 0.0, %v1622
        %v1624 = vpop.f32.mrf.mxu0
        %1625 = vmatprep.mubr.bf16.mxu0 0
        %1626 = vmatmul.mubr.bf16.gmra.mxu0 %v1505
        %v1627 = vpop.f32.mrf.mxu0
        %v1628 = vadd.f32 0.0, %v1627
        %v1629 = vpop.f32.mrf.mxu0
        %v1630 = vpop.f32.mrf.mxu0
        %v1631 = vadd.f32 0.0, %v1630
        %v1632 = vpop.f32.mrf.mxu0
        %1633 = vmatprep.mubr.bf16.mxu0 0
        %1634 = vmatmul.mubr.bf16.gmra.mxu0 %v1512
        %v1635 = vpop.f32.mrf.mxu0
        %v1636 = vadd.f32 0.0, %v1635
        %v1637 = vpop.f32.mrf.mxu0
        %v1638 = vpop.f32.mrf.mxu0
        %v1639 = vadd.f32 0.0, %v1638
        %v1640 = vpop.f32.mrf.mxu0
        %1641 = vmatprep.mubr.bf16.mxu0 0
        %1642 = vmatmul.mubr.bf16.gmra.mxu0 %v1519
        %v1643 = vpop.f32.mrf.mxu0
        %v1644 = vadd.f32 0.0, %v1643
        %v1645 = vpop.f32.mrf.mxu0
        %v1646 = vpop.f32.mrf.mxu0
        %v1647 = vadd.f32 0.0, %v1646
        %v1648 = vpop.f32.mrf.mxu0
        %1649 = vmatprep.mubr.bf16.mxu0 0
        %1650 = vmatmul.mubr.bf16.gmra.mxu0 %v1522
        %v1651 = vpop.f32.mrf.mxu0
        %v1652 = vadd.f32 0.0, %v1651
        %v1653 = vpop.f32.mrf.mxu0
        %v1654 = vpop.f32.mrf.mxu0
        %v1655 = vadd.f32 0.0, %v1654
        %v1656 = vpop.f32.mrf.mxu0
        %1657 = vdwg.mxu0
        %v1674 = vunpack.c.l.b16 %v1448
        %v1675 = vunpack.c.l.b16 %v1449
        %v1676 = vunpack.c.l.b16 %v1450
        %v1677 = vunpack.c.l.b16 %v1451
        %v1678 = vunpack.c.l.b16 %v1452
        %v1679 = vunpack.c.l.b16 %v1453
        %v1680 = vunpack.c.l.b16 %v1454
        %v1681 = vunpack.c.l.b16 %v1455
        %v1682 = vunpack.c.l.b16 %v1456
        %v1683 = vunpack.c.l.b16 %v1457
        %v1684 = vunpack.c.l.b16 %v1458
        %v1685 = vunpack.c.l.b16 %v1459
        %v1686 = vunpack.c.l.b16 %v1460
        %v1687 = vunpack.c.l.b16 %v1461
        %v1688 = vunpack.c.l.b16 %v1462
        %v1689 = vunpack.c.l.b16 %v1463
        %v1690 = vpack.c.b16 %v1675, %v1674
        %v1691 = vpack.c.b16 %v1677, %v1676
        %v1692 = vpack.c.b16 %v1679, %v1678
        %v1693 = vpack.c.b16 %v1681, %v1680
        %v1694 = vpack.c.b16 %v1683, %v1682
        %v1695 = vpack.c.b16 %v1685, %v1684
        %v1696 = vpack.c.b16 %v1687, %v1686
        %v1697 = vpack.c.b16 %v1689, %v1688
        %1706 = vmatprep.subr.bf16.mxu0 0
        %1707 = vmatpush1.bf16.msra.mxu0 %v1697
        %1708 = vmatprep.subr.bf16.mxu0 0
        %1709 = vmatpush1.bf16.msra.mxu0 %v1696
        %1710 = vmatprep.subr.bf16.mxu0 0
        %1711 = vmatpush1.bf16.msra.mxu0 %v1695
        %1712 = vmatprep.subr.bf16.mxu0 0
        %1713 = vmatpush1.bf16.msra.mxu0 %v1694
        %1714 = vmatprep.subr.bf16.mxu0 0
        %1715 = vmatpush1.bf16.msra.mxu0 %v1693
        %1716 = vmatprep.subr.bf16.mxu0 0
        %1717 = vmatpush1.bf16.msra.mxu0 %v1692
        %1718 = vmatprep.subr.bf16.mxu0 0
        %1719 = vmatpush1.bf16.msra.mxu0 %v1691
        %1720 = vmatprep.subr.bf16.mxu0 0
        %1721 = vmatpush1.bf16.msra.mxu0 %v1690
        %1722 = vmatprep.subr.bf16.mxu0 0
        %1723 = vmatpush2.bf16.msra.mxu0 0
        %1724 = vmatprep.subr.bf16.mxu0 0
        %1725 = vmatpush2.bf16.msra.mxu0 0
        %1726 = vmatprep.subr.bf16.mxu0 0
        %1727 = vmatpush2.bf16.msra.mxu0 0
        %1728 = vmatprep.subr.bf16.mxu0 0
        %1729 = vmatpush2.bf16.msra.mxu0 0
        %1730 = vmatprep.subr.bf16.mxu0 0
        %1731 = vmatpush2.bf16.msra.mxu0 0
        %1732 = vmatprep.subr.bf16.mxu0 0
        %1733 = vmatpush2.bf16.msra.mxu0 0
        %1734 = vmatprep.subr.bf16.mxu0 0
        %1735 = vmatpush2.bf16.msra.mxu0 0
        %1736 = vmatprep.subr.bf16.mxu0 0
        %1737 = vmatpush2.bf16.msra.mxu0 0
        %1738 = vmatprep.mubr.bf16.mxu0 0
        %1739 = vmatmul.mubr.bf16.gmra.mxu0 %v1429
        %v1740 = vpop.f32.mrf.mxu0
        %v1741 = vadd.f32 %v1612, %v1740
        %v1742 = vpop.f32.mrf.mxu0
        %v1743 = vpop.f32.mrf.mxu0
        %v1744 = vadd.f32 %v1615, %v1743
        %v1745 = vpop.f32.mrf.mxu0
        %1746 = vmatprep.mubr.bf16.mxu0 0
        %1747 = vmatmul.mubr.bf16.gmra.mxu0 %v1432
        %v1748 = vpop.f32.mrf.mxu0
        %v1749 = vadd.f32 %v1620, %v1748
        %v1750 = vpop.f32.mrf.mxu0
        %v1751 = vpop.f32.mrf.mxu0
        %v1752 = vadd.f32 %v1623, %v1751
        %v1753 = vpop.f32.mrf.mxu0
        %1754 = vmatprep.mubr.bf16.mxu0 0
        %1755 = vmatmul.mubr.bf16.gmra.mxu0 %v1435
        %v1756 = vpop.f32.mrf.mxu0
        %v1757 = vadd.f32 %v1628, %v1756
        %v1758 = vpop.f32.mrf.mxu0
        %v1759 = vpop.f32.mrf.mxu0
        %v1760 = vadd.f32 %v1631, %v1759
        %v1761 = vpop.f32.mrf.mxu0
        %1762 = vmatprep.mubr.bf16.mxu0 0
        %1763 = vmatmul.mubr.bf16.gmra.mxu0 %v1438
        %v1764 = vpop.f32.mrf.mxu0
        %v1765 = vadd.f32 %v1636, %v1764
        %v1766 = vpop.f32.mrf.mxu0
        %v1767 = vpop.f32.mrf.mxu0
        %v1768 = vadd.f32 %v1639, %v1767
        %v1769 = vpop.f32.mrf.mxu0
        %1770 = vmatprep.mubr.bf16.mxu0 0
        %1771 = vmatmul.mubr.bf16.gmra.mxu0 %v1441
        %v1772 = vpop.f32.mrf.mxu0
        %v1773 = vadd.f32 %v1644, %v1772
        %v1774 = vpop.f32.mrf.mxu0
        %v1775 = vpop.f32.mrf.mxu0
        %v1776 = vadd.f32 %v1647, %v1775
        %v1777 = vpop.f32.mrf.mxu0
        %1778 = vmatprep.mubr.bf16.mxu0 0
        %1779 = vmatmul.mubr.bf16.gmra.mxu0 %v1444
        %v1780 = vpop.f32.mrf.mxu0
        %v1781 = vadd.f32 %v1652, %v1780
        %v1782 = vpop.f32.mrf.mxu0
        %v1783 = vpop.f32.mrf.mxu0
        %v1784 = vadd.f32 %v1655, %v1783
        %v1785 = vpop.f32.mrf.mxu0
        %1786 = vdwg.mxu0
        %s1787 = scalar_lea.vmem %s3, 128
        %v1788 = vld [vmem:[%s1787] sm:$0xf]
        %v1789 = vld [vmem:[%s1787 + $0x4] sm:$0xf]
        %v1790 = vld [vmem:[%s1787 + $0x8] sm:$0xf]
        %v1791 = vld [vmem:[%s1787 + $0xc] sm:$0xf]
        %v1792 = vld [vmem:[%s1787 + $0x10] sm:$0xf]
        %v1793 = vld [vmem:[%s1787 + $0x14] sm:$0xf]
        %v1794 = vld [vmem:[%s1787 + $0x18] sm:$0xf]
        %v1795 = vld [vmem:[%s1787 + $0x1c] sm:$0xf]
        %v1796 = vld [vmem:[%s1787 + $0x20] sm:$0xf]
        %v1797 = vld [vmem:[%s1787 + $0x24] sm:$0xf]
        %v1798 = vld [vmem:[%s1787 + $0x28] sm:$0xf]
        %v1799 = vld [vmem:[%s1787 + $0x2c] sm:$0xf]
        %v1800 = vld [vmem:[%s1787 + $0x30] sm:$0xf]
        %v1801 = vld [vmem:[%s1787 + $0x34] sm:$0xf]
        %v1802 = vld [vmem:[%s1787 + $0x38] sm:$0xf]
        %v1803 = vld [vmem:[%s1787 + $0x3c] sm:$0xf]
        %vm1811 = vcmask 1042432
        %v1812 = vrot.slane %v1429, 5
        %v1813 = vrot.slane %v1432, 5
        %v1814 = vsel %vm1811, %v1812, %v1813
        %v1815 = vrot.slane %v1435, 5
        %v1816 = vsel %vm1811, %v1813, %v1815
        %v1817 = vrot.slane %v1438, 5
        %v1818 = vsel %vm1811, %v1815, %v1817
        %v1819 = vrot.slane %v1441, 5
        %v1820 = vsel %vm1811, %v1817, %v1819
        %v1821 = vrot.slane %v1444, 5
        %v1822 = vsel %vm1811, %v1819, %v1821
        %v1823 = vrot.slane %v1447, 5
        %v1824 = vsel %vm1811, %v1821, %v1823
        %v1847 = vunpack.c.l.b16 %v1788
        %v1848 = vunpack.c.l.b16 %v1789
        %v1849 = vunpack.c.l.b16 %v1790
        %v1850 = vunpack.c.l.b16 %v1791
        %v1851 = vunpack.c.l.b16 %v1792
        %v1852 = vunpack.c.l.b16 %v1793
        %v1853 = vunpack.c.l.b16 %v1794
        %v1854 = vunpack.c.l.b16 %v1795
        %v1855 = vunpack.c.l.b16 %v1796
        %v1856 = vunpack.c.l.b16 %v1797
        %v1857 = vunpack.c.l.b16 %v1798
        %v1858 = vunpack.c.l.b16 %v1799
        %v1859 = vunpack.c.l.b16 %v1800
        %v1860 = vunpack.c.l.b16 %v1801
        %v1861 = vunpack.c.l.b16 %v1802
        %v1862 = vunpack.c.l.b16 %v1803
        %v1863 = vpack.c.b16 %v1848, %v1847
        %v1864 = vpack.c.b16 %v1850, %v1849
        %v1865 = vpack.c.b16 %v1852, %v1851
        %v1866 = vpack.c.b16 %v1854, %v1853
        %v1867 = vpack.c.b16 %v1856, %v1855
        %v1868 = vpack.c.b16 %v1858, %v1857
        %v1869 = vpack.c.b16 %v1860, %v1859
        %v1870 = vpack.c.b16 %v1862, %v1861
        %1879 = vmatprep.subr.bf16.mxu0 0
        %1880 = vmatpush1.bf16.msra.mxu0 %v1870
        %1881 = vmatprep.subr.bf16.mxu0 0
        %1882 = vmatpush1.bf16.msra.mxu0 %v1869
        %1883 = vmatprep.subr.bf16.mxu0 0
        %1884 = vmatpush1.bf16.msra.mxu0 %v1868
        %1885 = vmatprep.subr.bf16.mxu0 0
        %1886 = vmatpush1.bf16.msra.mxu0 %v1867
        %1887 = vmatprep.subr.bf16.mxu0 0
        %1888 = vmatpush1.bf16.msra.mxu0 %v1866
        %1889 = vmatprep.subr.bf16.mxu0 0
        %1890 = vmatpush1.bf16.msra.mxu0 %v1865
        %1891 = vmatprep.subr.bf16.mxu0 0
        %1892 = vmatpush1.bf16.msra.mxu0 %v1864
        %1893 = vmatprep.subr.bf16.mxu0 0
        %1894 = vmatpush1.bf16.msra.mxu0 %v1863
        %1895 = vmatprep.subr.bf16.mxu0 0
        %1896 = vmatpush2.bf16.msra.mxu0 0
        %1897 = vmatprep.subr.bf16.mxu0 0
        %1898 = vmatpush2.bf16.msra.mxu0 0
        %1899 = vmatprep.subr.bf16.mxu0 0
        %1900 = vmatpush2.bf16.msra.mxu0 0
        %1901 = vmatprep.subr.bf16.mxu0 0
        %1902 = vmatpush2.bf16.msra.mxu0 0
        %1903 = vmatprep.subr.bf16.mxu0 0
        %1904 = vmatpush2.bf16.msra.mxu0 0
        %1905 = vmatprep.subr.bf16.mxu0 0
        %1906 = vmatpush2.bf16.msra.mxu0 0
        %1907 = vmatprep.subr.bf16.mxu0 0
        %1908 = vmatpush2.bf16.msra.mxu0 0
        %1909 = vmatprep.subr.bf16.mxu0 0
        %1910 = vmatpush2.bf16.msra.mxu0 0
        %1911 = vmatprep.mubr.bf16.mxu0 0
        %1912 = vmatmul.mubr.bf16.gmra.mxu0 %v1814
        %v1913 = vpop.f32.mrf.mxu0
        %v1914 = vadd.f32 0.0, %v1913
        %v1915 = vpop.f32.mrf.mxu0
        %v1916 = vpop.f32.mrf.mxu0
        %v1917 = vadd.f32 0.0, %v1916
        %v1918 = vpop.f32.mrf.mxu0
        %1919 = vmatprep.mubr.bf16.mxu0 0
        %1920 = vmatmul.mubr.bf16.gmra.mxu0 %v1816
        %v1921 = vpop.f32.mrf.mxu0
        %v1922 = vadd.f32 0.0, %v1921
        %v1923 = vpop.f32.mrf.mxu0
        %v1924 = vpop.f32.mrf.mxu0
        %v1925 = vadd.f32 0.0, %v1924
        %v1926 = vpop.f32.mrf.mxu0
        %1927 = vmatprep.mubr.bf16.mxu0 0
        %1928 = vmatmul.mubr.bf16.gmra.mxu0 %v1818
        %v1929 = vpop.f32.mrf.mxu0
        %v1930 = vadd.f32 0.0, %v1929
        %v1931 = vpop.f32.mrf.mxu0
        %v1932 = vpop.f32.mrf.mxu0
        %v1933 = vadd.f32 0.0, %v1932
        %v1934 = vpop.f32.mrf.mxu0
        %1935 = vmatprep.mubr.bf16.mxu0 0
        %1936 = vmatmul.mubr.bf16.gmra.mxu0 %v1820
        %v1937 = vpop.f32.mrf.mxu0
        %v1938 = vadd.f32 0.0, %v1937
        %v1939 = vpop.f32.mrf.mxu0
        %v1940 = vpop.f32.mrf.mxu0
        %v1941 = vadd.f32 0.0, %v1940
        %v1942 = vpop.f32.mrf.mxu0
        %1943 = vmatprep.mubr.bf16.mxu0 0
        %1944 = vmatmul.mubr.bf16.gmra.mxu0 %v1822
        %v1945 = vpop.f32.mrf.mxu0
        %v1946 = vadd.f32 0.0, %v1945
        %v1947 = vpop.f32.mrf.mxu0
        %v1948 = vpop.f32.mrf.mxu0
        %v1949 = vadd.f32 0.0, %v1948
        %v1950 = vpop.f32.mrf.mxu0
        %1951 = vmatprep.mubr.bf16.mxu0 0
        %1952 = vmatmul.mubr.bf16.gmra.mxu0 %v1824
        %v1953 = vpop.f32.mrf.mxu0
        %v1954 = vadd.f32 0.0, %v1953
        %v1955 = vpop.f32.mrf.mxu0
        %v1956 = vpop.f32.mrf.mxu0
        %v1957 = vadd.f32 0.0, %v1956
        %v1958 = vpop.f32.mrf.mxu0
        %1959 = vdwg.mxu0
        %v1960 = vadd.f32 %v1741, %v1914
        %v1961 = vadd.f32 %v1744, %v1917
        %v1962 = vadd.f32 %v1749, %v1922
        %v1963 = vadd.f32 %v1752, %v1925
        %v1964 = vadd.f32 %v1757, %v1930
        %v1965 = vadd.f32 %v1760, %v1933
        %v1966 = vadd.f32 %v1765, %v1938
        %v1967 = vadd.f32 %v1768, %v1941
        %v1968 = vadd.f32 %v1773, %v1946
        %v1969 = vadd.f32 %v1776, %v1949
        %v1970 = vadd.f32 %v1781, %v1954
        %v1971 = vadd.f32 %v1784, %v1957
        %s1972 = scalar_lea.vmem %s3, 192
        %v1973 = vld [vmem:[%s1972] sm:$0xf]
        %v1974 = vld [vmem:[%s1972 + $0x4] sm:$0xf]
        %v1975 = vld [vmem:[%s1972 + $0x8] sm:$0xf]
        %v1976 = vld [vmem:[%s1972 + $0xc] sm:$0xf]
        %v1977 = vld [vmem:[%s1972 + $0x10] sm:$0xf]
        %v1978 = vld [vmem:[%s1972 + $0x14] sm:$0xf]
        %v1979 = vld [vmem:[%s1972 + $0x18] sm:$0xf]
        %v1980 = vld [vmem:[%s1972 + $0x1c] sm:$0xf]
        %v1981 = vld [vmem:[%s1972 + $0x20] sm:$0xf]
        %v1982 = vld [vmem:[%s1972 + $0x24] sm:$0xf]
        %v1983 = vld [vmem:[%s1972 + $0x28] sm:$0xf]
        %v1984 = vld [vmem:[%s1972 + $0x2c] sm:$0xf]
        %v1985 = vld [vmem:[%s1972 + $0x30] sm:$0xf]
        %v1986 = vld [vmem:[%s1972 + $0x34] sm:$0xf]
        %v1987 = vld [vmem:[%s1972 + $0x38] sm:$0xf]
        %v1988 = vld [vmem:[%s1972 + $0x3c] sm:$0xf]
        %vm1989 = vsmask.f32 2304
        %v1990 = vrot.slane %v1482, 5
        %v1991 = vrot.slane %v1484, 6
        %v1992 = vor.u32 %v1990, %v1991
        %v1993 = vrot.slane %v1492, 5
        %v1994 = vrot.slane %v1488, 6
        %v1995 = vor.u32 %v1993, %v1994
        %v1996 = vsel %vm1989, %v1992, %v1995
        %v1997 = vrot.slane %v1499, 5
        %v1998 = vrot.slane %v1495, 6
        %v1999 = vor.u32 %v1997, %v1998
        %v2000 = vsel %vm1989, %v1995, %v1999
        %v2001 = vrot.slane %v1506, 5
        %v2002 = vrot.slane %v1502, 6
        %v2003 = vor.u32 %v2001, %v2002
        %v2004 = vsel %vm1989, %v1999, %v2003
        %v2005 = vrot.slane %v1513, 5
        %v2006 = vrot.slane %v1509, 6
        %v2007 = vor.u32 %v2005, %v2006
        %v2008 = vsel %vm1989, %v2003, %v2007
        %v2009 = vrot.slane %v1520, 5
        %v2010 = vrot.slane %v1516, 6
        %v2011 = vor.u32 %v2009, %v2010
        %v2012 = vsel %vm1989, %v2007, %v2011
        %v2013 = vshrl.u32 %v1447, 16
        %v2015 = vrot.slane %v2013, 5
        %v2016 = vshll.u32 %v1447, 16
        %v2018 = vrot.slane %v2016, 6
        %v2019 = vor.u32 %v2015, %v2018
        %v2020 = vsel %vm1989, %v2011, %v2019
        %v2043 = vunpack.c.l.b16 %v1973
        %v2044 = vunpack.c.l.b16 %v1974
        %v2045 = vunpack.c.l.b16 %v1975
        %v2046 = vunpack.c.l.b16 %v1976
        %v2047 = vunpack.c.l.b16 %v1977
        %v2048 = vunpack.c.l.b16 %v1978
        %v2049 = vunpack.c.l.b16 %v1979
        %v2050 = vunpack.c.l.b16 %v1980
        %v2051 = vunpack.c.l.b16 %v1981
        %v2052 = vunpack.c.l.b16 %v1982
        %v2053 = vunpack.c.l.b16 %v1983
        %v2054 = vunpack.c.l.b16 %v1984
        %v2055 = vunpack.c.l.b16 %v1985
        %v2056 = vunpack.c.l.b16 %v1986
        %v2057 = vunpack.c.l.b16 %v1987
        %v2058 = vunpack.c.l.b16 %v1988
        %v2059 = vpack.c.b16 %v2044, %v2043
        %v2060 = vpack.c.b16 %v2046, %v2045
        %v2061 = vpack.c.b16 %v2048, %v2047
        %v2062 = vpack.c.b16 %v2050, %v2049
        %v2063 = vpack.c.b16 %v2052, %v2051
        %v2064 = vpack.c.b16 %v2054, %v2053
        %v2065 = vpack.c.b16 %v2056, %v2055
        %v2066 = vpack.c.b16 %v2058, %v2057
        %2075 = vmatprep.subr.bf16.mxu0 0
        %2076 = vmatpush1.bf16.msra.mxu0 %v2066
        %2077 = vmatprep.subr.bf16.mxu0 0
        %2078 = vmatpush1.bf16.msra.mxu0 %v2065
        %2079 = vmatprep.subr.bf16.mxu0 0
        %2080 = vmatpush1.bf16.msra.mxu0 %v2064
        %2081 = vmatprep.subr.bf16.mxu0 0
        %2082 = vmatpush1.bf16.msra.mxu0 %v2063
        %2083 = vmatprep.subr.bf16.mxu0 0
        %2084 = vmatpush1.bf16.msra.mxu0 %v2062
        %2085 = vmatprep.subr.bf16.mxu0 0
        %2086 = vmatpush1.bf16.msra.mxu0 %v2061
        %2087 = vmatprep.subr.bf16.mxu0 0
        %2088 = vmatpush1.bf16.msra.mxu0 %v2060
        %2089 = vmatprep.subr.bf16.mxu0 0
        %2090 = vmatpush1.bf16.msra.mxu0 %v2059
        %2091 = vmatprep.subr.bf16.mxu0 0
        %2092 = vmatpush2.bf16.msra.mxu0 0
        %2093 = vmatprep.subr.bf16.mxu0 0
        %2094 = vmatpush2.bf16.msra.mxu0 0
        %2095 = vmatprep.subr.bf16.mxu0 0
        %2096 = vmatpush2.bf16.msra.mxu0 0
        %2097 = vmatprep.subr.bf16.mxu0 0
        %2098 = vmatpush2.bf16.msra.mxu0 0
        %2099 = vmatprep.subr.bf16.mxu0 0
        %2100 = vmatpush2.bf16.msra.mxu0 0
        %2101 = vmatprep.subr.bf16.mxu0 0
        %2102 = vmatpush2.bf16.msra.mxu0 0
        %2103 = vmatprep.subr.bf16.mxu0 0
        %2104 = vmatpush2.bf16.msra.mxu0 0
        %2105 = vmatprep.subr.bf16.mxu0 0
        %2106 = vmatpush2.bf16.msra.mxu0 0
        %2107 = vmatprep.mubr.bf16.mxu0 0
        %2108 = vmatmul.mubr.bf16.gmra.mxu0 %v1996
        %v2109 = vpop.f32.mrf.mxu0
        %v2110 = vadd.f32 0.0, %v2109
        %v2111 = vpop.f32.mrf.mxu0
        %v2112 = vpop.f32.mrf.mxu0
        %v2113 = vadd.f32 0.0, %v2112
        %v2114 = vpop.f32.mrf.mxu0
        %2115 = vmatprep.mubr.bf16.mxu0 0
        %2116 = vmatmul.mubr.bf16.gmra.mxu0 %v2000
        %v2117 = vpop.f32.mrf.mxu0
        %v2118 = vadd.f32 0.0, %v2117
        %v2119 = vpop.f32.mrf.mxu0
        %v2120 = vpop.f32.mrf.mxu0
        %v2121 = vadd.f32 0.0, %v2120
        %v2122 = vpop.f32.mrf.mxu0
        %2123 = vmatprep.mubr.bf16.mxu0 0
        %2124 = vmatmul.mubr.bf16.gmra.mxu0 %v2004
        %v2125 = vpop.f32.mrf.mxu0
        %v2126 = vadd.f32 0.0, %v2125
        %v2127 = vpop.f32.mrf.mxu0
        %v2128 = vpop.f32.mrf.mxu0
        %v2129 = vadd.f32 0.0, %v2128
        %v2130 = vpop.f32.mrf.mxu0
        %2131 = vmatprep.mubr.bf16.mxu0 0
        %2132 = vmatmul.mubr.bf16.gmra.mxu0 %v2008
        %v2133 = vpop.f32.mrf.mxu0
        %v2134 = vadd.f32 0.0, %v2133
        %v2135 = vpop.f32.mrf.mxu0
        %v2136 = vpop.f32.mrf.mxu0
        %v2137 = vadd.f32 0.0, %v2136
        %v2138 = vpop.f32.mrf.mxu0
        %2139 = vmatprep.mubr.bf16.mxu0 0
        %2140 = vmatmul.mubr.bf16.gmra.mxu0 %v2012
        %v2141 = vpop.f32.mrf.mxu0
        %v2142 = vadd.f32 0.0, %v2141
        %v2143 = vpop.f32.mrf.mxu0
        %v2144 = vpop.f32.mrf.mxu0
        %v2145 = vadd.f32 0.0, %v2144
        %v2146 = vpop.f32.mrf.mxu0
        %2147 = vmatprep.mubr.bf16.mxu0 0
        %2148 = vmatmul.mubr.bf16.gmra.mxu0 %v2020
        %v2149 = vpop.f32.mrf.mxu0
        %v2150 = vadd.f32 0.0, %v2149
        %v2151 = vpop.f32.mrf.mxu0
        %v2152 = vpop.f32.mrf.mxu0
        %v2153 = vadd.f32 0.0, %v2152
        %v2154 = vpop.f32.mrf.mxu0
        %2155 = vdwg.mxu0
        %v2156 = vadd.f32 %v1960, %v2110
        %v2157 = vadd.f32 %v1961, %v2113
        %v2158 = vadd.f32 %v1962, %v2118
        %v2159 = vadd.f32 %v1963, %v2121
        %v2160 = vadd.f32 %v1964, %v2126
        %v2161 = vadd.f32 %v1965, %v2129
        %v2162 = vadd.f32 %v1966, %v2134
        %v2163 = vadd.f32 %v1967, %v2137
        %v2164 = vadd.f32 %v1968, %v2142
        %v2165 = vadd.f32 %v1969, %v2145
        %v2166 = vadd.f32 %v1970, %v2150
        %v2167 = vadd.f32 %v1971, %v2153
        %v2168 = vld [vmem:[%s4] sm:$0x1]
        %v2170 = vlaneseq
        %v2171 = vshrl.u32 %v2170, 7
        %v2172 = vsub.s32 0, %v2171
        %v2173 = vrot.slane %v2168, %v2172
        %v2175 = vadd.f32 %v2156, %v2173
        %v2176 = vadd.f32 %v2157, %v2173
        %v2177 = vadd.f32 %v2158, %v2173
        %v2178 = vadd.f32 %v2159, %v2173
        %v2179 = vadd.f32 %v2160, %v2173
        %v2180 = vadd.f32 %v2161, %v2173
        %v2181 = vadd.f32 %v2162, %v2173
        %v2182 = vadd.f32 %v2163, %v2173
        %v2183 = vadd.f32 %v2164, %v2173
        %v2184 = vadd.f32 %v2165, %v2173
        %v2185 = vadd.f32 %v2166, %v2173
        %v2186 = vadd.f32 %v2167, %v2173
        %v2187 = vmax.f32 %v2175, 0.0
        %v2188 = vmax.f32 %v2176, 0.0
        %v2189 = vmax.f32 %v2177, 0.0
        %v2190 = vmax.f32 %v2178, 0.0
        %v2191 = vmax.f32 %v2179, 0.0
        %v2192 = vmax.f32 %v2180, 0.0
        %v2193 = vmax.f32 %v2181, 0.0
        %v2194 = vmax.f32 %v2182, 0.0
        %v2195 = vmax.f32 %v2183, 0.0
        %v2196 = vmax.f32 %v2184, 0.0
        %v2197 = vmax.f32 %v2185, 0.0
        %v2198 = vmax.f32 %v2186, 0.0
        %v2199 = vpack.c.bf16 %v2188, %v2187
        %v2200 = vpack.c.bf16 %v2190, %v2189
        %v2201 = vpack.c.bf16 %v2192, %v2191
        %v2202 = vpack.c.bf16 %v2194, %v2193
        %v2203 = vpack.c.bf16 %v2196, %v2195
        %v2204 = vpack.c.bf16 %v2198, %v2197
        %v2205 = vld [vmem:[%s5] sm:$0xf]
        %v2206 = vld [vmem:[%s5 + $0x4] sm:$0xf]
        %v2207 = vld [vmem:[%s5 + $0x8] sm:$0xf]
        %v2208 = vld [vmem:[%s5 + $0xc] sm:$0xf]
        %v2209 = vld [vmem:[%s5 + $0x10] sm:$0xf]
        %v2210 = vld [vmem:[%s5 + $0x14] sm:$0xf]
        %v2211 = vld [vmem:[%s5 + $0x18] sm:$0xf]
        %v2212 = vld [vmem:[%s5 + $0x1c] sm:$0xf]
        %s2213 = scalar_lea.vmem %s5, 32
        %v2214 = vld [vmem:[%s2213] sm:$0xf]
        %v2215 = vld [vmem:[%s2213 + $0x4] sm:$0xf]
        %v2216 = vld [vmem:[%s2213 + $0x8] sm:$0xf]
        %v2217 = vld [vmem:[%s2213 + $0xc] sm:$0xf]
        %v2218 = vld [vmem:[%s2213 + $0x10] sm:$0xf]
        %v2219 = vld [vmem:[%s2213 + $0x14] sm:$0xf]
        %v2220 = vld [vmem:[%s2213 + $0x18] sm:$0xf]
        %v2221 = vld [vmem:[%s2213 + $0x1c] sm:$0xf]
        %v2223 = vshrl.u32 %v2199, 16
        %v2225 = vshll.u32 %v2199, 16
        %v2227 = vrot.slane %v2225, 1
        %v2228 = vor.u32 %v2223, %v2227
        %v2230 = vshll.u32 %v2200, 16
        %v2232 = vrot.slane %v2230, 1
        %v2233 = vsel %vm1481, %v2228, %v2232
        %v2234 = vshrl.u32 %v2200, 16
        %v2236 = vor.u32 %v2234, %v2232
        %v2238 = vshll.u32 %v2201, 16
        %v2240 = vrot.slane %v2238, 1
        %v2241 = vsel %vm1481, %v2236, %v2240
        %v2242 = vshrl.u32 %v2201, 16
        %v2244 = vor.u32 %v2242, %v2240
        %v2246 = vshll.u32 %v2202, 16
        %v2248 = vrot.slane %v2246, 1
        %v2249 = vsel %vm1481, %v2244, %v2248
        %v2250 = vshrl.u32 %v2202, 16
        %v2252 = vor.u32 %v2250, %v2248
        %v2254 = vshll.u32 %v2203, 16
        %v2256 = vrot.slane %v2254, 1
        %v2257 = vsel %vm1481, %v2252, %v2256
        %v2258 = vshrl.u32 %v2203, 16
        %v2260 = vor.u32 %v2258, %v2256
        %v2269 = vunpack.c.l.b16 %v2214
        %v2270 = vunpack.c.l.b16 %v2215
        %v2271 = vunpack.c.l.b16 %v2216
        %v2272 = vunpack.c.l.b16 %v2217
        %v2273 = vunpack.c.l.b16 %v2218
        %v2274 = vunpack.c.l.b16 %v2219
        %v2275 = vunpack.c.l.b16 %v2220
        %v2276 = vunpack.c.l.b16 %v2221
        %v2277 = vpack.c.b16 %v2270, %v2269
        %v2278 = vpack.c.b16 %v2272, %v2271
        %v2279 = vpack.c.b16 %v2274, %v2273
        %v2280 = vpack.c.b16 %v2276, %v2275
        %v2286 = vsel %vm1412, %v2233, 0
        %v2289 = vsel %vm1412, %v2241, 0
        %v2292 = vsel %vm1412, %v2249, 0
        %v2295 = vsel %vm1412, %v2257, 0
        %v2298 = vsel %vm1412, %v2260, 0
        %2300 = vmatprep.subr.bf16.mxu0 0
        %2301 = vmatpush1.bf16.msra.mxu0 0
        %2302 = vmatprep.subr.bf16.mxu0 0
        %2303 = vmatpush1.bf16.msra.mxu0 0
        %2304 = vmatprep.subr.bf16.mxu0 0
        %2305 = vmatpush1.bf16.msra.mxu0 0
        %2306 = vmatprep.subr.bf16.mxu0 0
        %2307 = vmatpush1.bf16.msra.mxu0 0
        %2308 = vmatprep.subr.bf16.mxu0 0
        %2309 = vmatpush1.bf16.msra.mxu0 %v2280
        %2310 = vmatprep.subr.bf16.mxu0 0
        %2311 = vmatpush1.bf16.msra.mxu0 %v2279
        %2312 = vmatprep.subr.bf16.mxu0 0
        %2313 = vmatpush1.bf16.msra.mxu0 %v2278
        %2314 = vmatprep.subr.bf16.mxu0 0
        %2315 = vmatpush1.bf16.msra.mxu0 %v2277
        %2316 = vmatprep.subr.bf16.mxu0 0
        %2317 = vmatpush2.bf16.msra.mxu0 0
        %2318 = vmatprep.subr.bf16.mxu0 0
        %2319 = vmatpush2.bf16.msra.mxu0 0
        %2320 = vmatprep.subr.bf16.mxu0 0
        %2321 = vmatpush2.bf16.msra.mxu0 0
        %2322 = vmatprep.subr.bf16.mxu0 0
        %2323 = vmatpush2.bf16.msra.mxu0 0
        %2324 = vmatprep.subr.bf16.mxu0 0
        %2325 = vmatpush2.bf16.msra.mxu0 0
        %2326 = vmatprep.subr.bf16.mxu0 0
        %2327 = vmatpush2.bf16.msra.mxu0 0
        %2328 = vmatprep.subr.bf16.mxu0 0
        %2329 = vmatpush2.bf16.msra.mxu0 0
        %2330 = vmatprep.subr.bf16.mxu0 0
        %2331 = vmatpush2.bf16.msra.mxu0 0
        %2332 = vmatprep.mubr.bf16.mxu0 0
        %2333 = vmatmul.mubr.bf16.gmra.mxu0 %v2286
        %v2334 = vpop.f32.mrf.mxu0
        %v2335 = vadd.f32 0.0, %v2334
        %v2336 = vpop.f32.mrf.mxu0
        %v2337 = vpop.f32.mrf.mxu0
        %v2338 = vadd.f32 0.0, %v2337
        %v2339 = vpop.f32.mrf.mxu0
        %2340 = vmatprep.mubr.bf16.mxu0 0
        %2341 = vmatmul.mubr.bf16.gmra.mxu0 %v2289
        %v2342 = vpop.f32.mrf.mxu0
        %v2343 = vadd.f32 0.0, %v2342
        %v2344 = vpop.f32.mrf.mxu0
        %v2345 = vpop.f32.mrf.mxu0
        %v2346 = vadd.f32 0.0, %v2345
        %v2347 = vpop.f32.mrf.mxu0
        %2348 = vmatprep.mubr.bf16.mxu0 0
        %2349 = vmatmul.mubr.bf16.gmra.mxu0 %v2292
        %v2350 = vpop.f32.mrf.mxu0
        %v2351 = vadd.f32 0.0, %v2350
        %v2352 = vpop.f32.mrf.mxu0
        %v2353 = vpop.f32.mrf.mxu0
        %v2354 = vadd.f32 0.0, %v2353
        %v2355 = vpop.f32.mrf.mxu0
        %2356 = vmatprep.mubr.bf16.mxu0 0
        %2357 = vmatmul.mubr.bf16.gmra.mxu0 %v2295
        %v2358 = vpop.f32.mrf.mxu0
        %v2359 = vadd.f32 0.0, %v2358
        %v2360 = vpop.f32.mrf.mxu0
        %v2361 = vpop.f32.mrf.mxu0
        %v2362 = vadd.f32 0.0, %v2361
        %v2363 = vpop.f32.mrf.mxu0
        %2364 = vmatprep.mubr.bf16.mxu0 0
        %2365 = vmatmul.mubr.bf16.gmra.mxu0 %v2298
        %v2366 = vpop.f32.mrf.mxu0
        %v2367 = vadd.f32 0.0, %v2366
        %v2368 = vpop.f32.mrf.mxu0
        %v2369 = vpop.f32.mrf.mxu0
        %v2370 = vpop.f32.mrf.mxu0
        %2371 = vdwg.mxu0
        %v2380 = vunpack.c.l.b16 %v2205
        %v2381 = vunpack.c.l.b16 %v2206
        %v2382 = vunpack.c.l.b16 %v2207
        %v2383 = vunpack.c.l.b16 %v2208
        %v2384 = vunpack.c.l.b16 %v2209
        %v2385 = vunpack.c.l.b16 %v2210
        %v2386 = vunpack.c.l.b16 %v2211
        %v2387 = vunpack.c.l.b16 %v2212
        %v2388 = vpack.c.b16 %v2381, %v2380
        %v2389 = vpack.c.b16 %v2383, %v2382
        %v2390 = vpack.c.b16 %v2385, %v2384
        %v2391 = vpack.c.b16 %v2387, %v2386
        %v2396 = vsel %vm1412, %v2199, 0
        %v2398 = vsel %vm1412, %v2200, 0
        %v2400 = vsel %vm1412, %v2201, 0
        %v2402 = vsel %vm1412, %v2202, 0
        %v2404 = vsel %vm1412, %v2203, 0
        %2406 = vmatprep.subr.bf16.mxu0 0
        %2407 = vmatpush1.bf16.msra.mxu0 0
        %2408 = vmatprep.subr.bf16.mxu0 0
        %2409 = vmatpush1.bf16.msra.mxu0 0
        %2410 = vmatprep.subr.bf16.mxu0 0
        %2411 = vmatpush1.bf16.msra.mxu0 0
        %2412 = vmatprep.subr.bf16.mxu0 0
        %2413 = vmatpush1.bf16.msra.mxu0 0
        %2414 = vmatprep.subr.bf16.mxu0 0
        %2415 = vmatpush1.bf16.msra.mxu0 %v2391
        %2416 = vmatprep.subr.bf16.mxu0 0
        %2417 = vmatpush1.bf16.msra.mxu0 %v2390
        %2418 = vmatprep.subr.bf16.mxu0 0
        %2419 = vmatpush1.bf16.msra.mxu0 %v2389
        %2420 = vmatprep.subr.bf16.mxu0 0
        %2421 = vmatpush1.bf16.msra.mxu0 %v2388
        %2422 = vmatprep.subr.bf16.mxu0 0
        %2423 = vmatpush2.bf16.msra.mxu0 0
        %2424 = vmatprep.subr.bf16.mxu0 0
        %2425 = vmatpush2.bf16.msra.mxu0 0
        %2426 = vmatprep.subr.bf16.mxu0 0
        %2427 = vmatpush2.bf16.msra.mxu0 0
        %2428 = vmatprep.subr.bf16.mxu0 0
        %2429 = vmatpush2.bf16.msra.mxu0 0
        %2430 = vmatprep.subr.bf16.mxu0 0
        %2431 = vmatpush2.bf16.msra.mxu0 0
        %2432 = vmatprep.subr.bf16.mxu0 0
        %2433 = vmatpush2.bf16.msra.mxu0 0
        %2434 = vmatprep.subr.bf16.mxu0 0
        %2435 = vmatpush2.bf16.msra.mxu0 0
        %2436 = vmatprep.subr.bf16.mxu0 0
        %2437 = vmatpush2.bf16.msra.mxu0 0
        %2438 = vmatprep.mubr.bf16.mxu0 0
        %2439 = vmatmul.mubr.bf16.gmra.mxu0 %v2396
        %v2440 = vpop.f32.mrf.mxu0
        %v2441 = vadd.f32 %v2335, %v2440
        %v2442 = vpop.f32.mrf.mxu0
        %v2443 = vpop.f32.mrf.mxu0
        %v2444 = vadd.f32 %v2338, %v2443
        %v2445 = vpop.f32.mrf.mxu0
        %2446 = vmatprep.mubr.bf16.mxu0 0
        %2447 = vmatmul.mubr.bf16.gmra.mxu0 %v2398
        %v2448 = vpop.f32.mrf.mxu0
        %v2449 = vadd.f32 %v2343, %v2448
        %v2450 = vpop.f32.mrf.mxu0
        %v2451 = vpop.f32.mrf.mxu0
        %v2452 = vadd.f32 %v2346, %v2451
        %v2453 = vpop.f32.mrf.mxu0
        %2454 = vmatprep.mubr.bf16.mxu0 0
        %2455 = vmatmul.mubr.bf16.gmra.mxu0 %v2400
        %v2456 = vpop.f32.mrf.mxu0
        %v2457 = vadd.f32 %v2351, %v2456
        %v2458 = vpop.f32.mrf.mxu0
        %v2459 = vpop.f32.mrf.mxu0
        %v2460 = vadd.f32 %v2354, %v2459
        %v2461 = vpop.f32.mrf.mxu0
        %2462 = vmatprep.mubr.bf16.mxu0 0
        %2463 = vmatmul.mubr.bf16.gmra.mxu0 %v2402
        %v2464 = vpop.f32.mrf.mxu0
        %v2465 = vadd.f32 %v2359, %v2464
        %v2466 = vpop.f32.mrf.mxu0
        %v2467 = vpop.f32.mrf.mxu0
        %v2468 = vadd.f32 %v2362, %v2467
        %v2469 = vpop.f32.mrf.mxu0
        %2470 = vmatprep.mubr.bf16.mxu0 0
        %2471 = vmatmul.mubr.bf16.gmra.mxu0 %v2404
        %v2472 = vpop.f32.mrf.mxu0
        %v2473 = vadd.f32 %v2367, %v2472
        %v2474 = vpop.f32.mrf.mxu0
        %v2475 = vpop.f32.mrf.mxu0
        %v2476 = vpop.f32.mrf.mxu0
        %2477 = vdwg.mxu0
        %s2478 = scalar_lea.vmem %s5, 64
        %v2479 = vld [vmem:[%s2478] sm:$0xf]
        %v2480 = vld [vmem:[%s2478 + $0x4] sm:$0xf]
        %v2481 = vld [vmem:[%s2478 + $0x8] sm:$0xf]
        %v2482 = vld [vmem:[%s2478 + $0xc] sm:$0xf]
        %v2483 = vld [vmem:[%s2478 + $0x10] sm:$0xf]
        %v2484 = vld [vmem:[%s2478 + $0x14] sm:$0xf]
        %v2485 = vld [vmem:[%s2478 + $0x18] sm:$0xf]
        %v2486 = vld [vmem:[%s2478 + $0x1c] sm:$0xf]
        %vm2492 = vcmask 1046528
        %v2493 = vrot.slane %v2199, 1
        %v2494 = vrot.slane %v2200, 1
        %v2495 = vsel %vm2492, %v2493, %v2494
        %v2496 = vrot.slane %v2201, 1
        %v2497 = vsel %vm2492, %v2494, %v2496
        %v2498 = vrot.slane %v2202, 1
        %v2499 = vsel %vm2492, %v2496, %v2498
        %v2500 = vrot.slane %v2203, 1
        %v2501 = vsel %vm2492, %v2498, %v2500
        %v2510 = vunpack.c.l.b16 %v2479
        %v2511 = vunpack.c.l.b16 %v2480
        %v2512 = vunpack.c.l.b16 %v2481
        %v2513 = vunpack.c.l.b16 %v2482
        %v2514 = vunpack.c.l.b16 %v2483
        %v2515 = vunpack.c.l.b16 %v2484
        %v2516 = vunpack.c.l.b16 %v2485
        %v2517 = vunpack.c.l.b16 %v2486
        %v2518 = vpack.c.b16 %v2511, %v2510
        %v2519 = vpack.c.b16 %v2513, %v2512
        %v2520 = vpack.c.b16 %v2515, %v2514
        %v2521 = vpack.c.b16 %v2517, %v2516
        %v2527 = vsel %vm1412, %v2495, 0
        %v2530 = vsel %vm1412, %v2497, 0
        %v2533 = vsel %vm1412, %v2499, 0
        %v2536 = vsel %vm1412, %v2501, 0
        %v2539 = vsel %vm1412, %v2500, 0
        %2541 = vmatprep.subr.bf16.mxu0 0
        %2542 = vmatpush1.bf16.msra.mxu0 0
        %2543 = vmatprep.subr.bf16.mxu0 0
        %2544 = vmatpush1.bf16.msra.mxu0 0
        %2545 = vmatprep.subr.bf16.mxu0 0
        %2546 = vmatpush1.bf16.msra.mxu0 0
        %2547 = vmatprep.subr.bf16.mxu0 0
        %2548 = vmatpush1.bf16.msra.mxu0 0
        %2549 = vmatprep.subr.bf16.mxu0 0
        %2550 = vmatpush1.bf16.msra.mxu0 %v2521
        %2551 = vmatprep.subr.bf16.mxu0 0
        %2552 = vmatpush1.bf16.msra.mxu0 %v2520
        %2553 = vmatprep.subr.bf16.mxu0 0
        %2554 = vmatpush1.bf16.msra.mxu0 %v2519
        %2555 = vmatprep.subr.bf16.mxu0 0
        %2556 = vmatpush1.bf16.msra.mxu0 %v2518
        %2557 = vmatprep.subr.bf16.mxu0 0
        %2558 = vmatpush2.bf16.msra.mxu0 0
        %2559 = vmatprep.subr.bf16.mxu0 0
        %2560 = vmatpush2.bf16.msra.mxu0 0
        %2561 = vmatprep.subr.bf16.mxu0 0
        %2562 = vmatpush2.bf16.msra.mxu0 0
        %2563 = vmatprep.subr.bf16.mxu0 0
        %2564 = vmatpush2.bf16.msra.mxu0 0
        %2565 = vmatprep.subr.bf16.mxu0 0
        %2566 = vmatpush2.bf16.msra.mxu0 0
        %2567 = vmatprep.subr.bf16.mxu0 0
        %2568 = vmatpush2.bf16.msra.mxu0 0
        %2569 = vmatprep.subr.bf16.mxu0 0
        %2570 = vmatpush2.bf16.msra.mxu0 0
        %2571 = vmatprep.subr.bf16.mxu0 0
        %2572 = vmatpush2.bf16.msra.mxu0 0
        %2573 = vmatprep.mubr.bf16.mxu0 0
        %2574 = vmatmul.mubr.bf16.gmra.mxu0 %v2527
        %v2575 = vpop.f32.mrf.mxu0
        %v2576 = vadd.f32 0.0, %v2575
        %v2577 = vpop.f32.mrf.mxu0
        %v2578 = vpop.f32.mrf.mxu0
        %v2579 = vadd.f32 0.0, %v2578
        %v2580 = vpop.f32.mrf.mxu0
        %2581 = vmatprep.mubr.bf16.mxu0 0
        %2582 = vmatmul.mubr.bf16.gmra.mxu0 %v2530
        %v2583 = vpop.f32.mrf.mxu0
        %v2584 = vadd.f32 0.0, %v2583
        %v2585 = vpop.f32.mrf.mxu0
        %v2586 = vpop.f32.mrf.mxu0
        %v2587 = vadd.f32 0.0, %v2586
        %v2588 = vpop.f32.mrf.mxu0
        %2589 = vmatprep.mubr.bf16.mxu0 0
        %2590 = vmatmul.mubr.bf16.gmra.mxu0 %v2533
        %v2591 = vpop.f32.mrf.mxu0
        %v2592 = vadd.f32 0.0, %v2591
        %v2593 = vpop.f32.mrf.mxu0
        %v2594 = vpop.f32.mrf.mxu0
        %v2595 = vadd.f32 0.0, %v2594
        %v2596 = vpop.f32.mrf.mxu0
        %2597 = vmatprep.mubr.bf16.mxu0 0
        %2598 = vmatmul.mubr.bf16.gmra.mxu0 %v2536
        %v2599 = vpop.f32.mrf.mxu0
        %v2600 = vadd.f32 0.0, %v2599
        %v2601 = vpop.f32.mrf.mxu0
        %v2602 = vpop.f32.mrf.mxu0
        %v2603 = vadd.f32 0.0, %v2602
        %v2604 = vpop.f32.mrf.mxu0
        %2605 = vmatprep.mubr.bf16.mxu0 0
        %2606 = vmatmul.mubr.bf16.gmra.mxu0 %v2539
        %v2607 = vpop.f32.mrf.mxu0
        %v2608 = vadd.f32 0.0, %v2607
        %v2609 = vpop.f32.mrf.mxu0
        %v2610 = vpop.f32.mrf.mxu0
        %v2611 = vpop.f32.mrf.mxu0
        %2612 = vdwg.mxu0
        %v2613 = vadd.f32 %v2441, %v2576
        %v2614 = vadd.f32 %v2444, %v2579
        %v2615 = vadd.f32 %v2449, %v2584
        %v2616 = vadd.f32 %v2452, %v2587
        %v2617 = vadd.f32 %v2457, %v2592
        %v2618 = vadd.f32 %v2460, %v2595
        %v2619 = vadd.f32 %v2465, %v2600
        %v2620 = vadd.f32 %v2468, %v2603
        %v2621 = vadd.f32 %v2473, %v2608
        %s2622 = scalar_lea.vmem %s5, 96
        %v2623 = vld [vmem:[%s2622] sm:$0xf]
        %v2624 = vld [vmem:[%s2622 + $0x4] sm:$0xf]
        %v2625 = vld [vmem:[%s2622 + $0x8] sm:$0xf]
        %v2626 = vld [vmem:[%s2622 + $0xc] sm:$0xf]
        %v2627 = vld [vmem:[%s2622 + $0x10] sm:$0xf]
        %v2628 = vld [vmem:[%s2622 + $0x14] sm:$0xf]
        %v2629 = vld [vmem:[%s2622 + $0x18] sm:$0xf]
        %v2630 = vld [vmem:[%s2622 + $0x1c] sm:$0xf]
        %v2631 = vrot.slane %v2199, 5
        %v2632 = vrot.slane %v2200, 5
        %v2633 = vsel %vm1811, %v2631, %v2632
        %v2634 = vrot.slane %v2201, 5
        %v2635 = vsel %vm1811, %v2632, %v2634
        %v2636 = vrot.slane %v2202, 5
        %v2637 = vsel %vm1811, %v2634, %v2636
        %v2638 = vrot.slane %v2203, 5
        %v2639 = vsel %vm1811, %v2636, %v2638
        %v2648 = vunpack.c.l.b16 %v2623
        %v2649 = vunpack.c.l.b16 %v2624
        %v2650 = vunpack.c.l.b16 %v2625
        %v2651 = vunpack.c.l.b16 %v2626
        %v2652 = vunpack.c.l.b16 %v2627
        %v2653 = vunpack.c.l.b16 %v2628
        %v2654 = vunpack.c.l.b16 %v2629
        %v2655 = vunpack.c.l.b16 %v2630
        %v2656 = vpack.c.b16 %v2649, %v2648
        %v2657 = vpack.c.b16 %v2651, %v2650
        %v2658 = vpack.c.b16 %v2653, %v2652
        %v2659 = vpack.c.b16 %v2655, %v2654
        %v2665 = vsel %vm1412, %v2633, 0
        %v2668 = vsel %vm1412, %v2635, 0
        %v2671 = vsel %vm1412, %v2637, 0
        %v2674 = vsel %vm1412, %v2639, 0
        %v2677 = vsel %vm1412, %v2638, 0
        %2679 = vmatprep.subr.bf16.mxu0 0
        %2680 = vmatpush1.bf16.msra.mxu0 0
        %2681 = vmatprep.subr.bf16.mxu0 0
        %2682 = vmatpush1.bf16.msra.mxu0 0
        %2683 = vmatprep.subr.bf16.mxu0 0
        %2684 = vmatpush1.bf16.msra.mxu0 0
        %2685 = vmatprep.subr.bf16.mxu0 0
        %2686 = vmatpush1.bf16.msra.mxu0 0
        %2687 = vmatprep.subr.bf16.mxu0 0
        %2688 = vmatpush1.bf16.msra.mxu0 %v2659
        %2689 = vmatprep.subr.bf16.mxu0 0
        %2690 = vmatpush1.bf16.msra.mxu0 %v2658
        %2691 = vmatprep.subr.bf16.mxu0 0
        %2692 = vmatpush1.bf16.msra.mxu0 %v2657
        %2693 = vmatprep.subr.bf16.mxu0 0
        %2694 = vmatpush1.bf16.msra.mxu0 %v2656
        %2695 = vmatprep.subr.bf16.mxu0 0
        %2696 = vmatpush2.bf16.msra.mxu0 0
        %2697 = vmatprep.subr.bf16.mxu0 0
        %2698 = vmatpush2.bf16.msra.mxu0 0
        %2699 = vmatprep.subr.bf16.mxu0 0
        %2700 = vmatpush2.bf16.msra.mxu0 0
        %2701 = vmatprep.subr.bf16.mxu0 0
        %2702 = vmatpush2.bf16.msra.mxu0 0
        %2703 = vmatprep.subr.bf16.mxu0 0
        %2704 = vmatpush2.bf16.msra.mxu0 0
        %2705 = vmatprep.subr.bf16.mxu0 0
        %2706 = vmatpush2.bf16.msra.mxu0 0
        %2707 = vmatprep.subr.bf16.mxu0 0
        %2708 = vmatpush2.bf16.msra.mxu0 0
        %2709 = vmatprep.subr.bf16.mxu0 0
        %2710 = vmatpush2.bf16.msra.mxu0 0
        %2711 = vmatprep.mubr.bf16.mxu0 0
        %2712 = vmatmul.mubr.bf16.gmra.mxu0 %v2665
        %v2713 = vpop.f32.mrf.mxu0
        %v2714 = vadd.f32 0.0, %v2713
        %v2715 = vpop.f32.mrf.mxu0
        %v2716 = vpop.f32.mrf.mxu0
        %v2717 = vadd.f32 0.0, %v2716
        %v2718 = vpop.f32.mrf.mxu0
        %2719 = vmatprep.mubr.bf16.mxu0 0
        %2720 = vmatmul.mubr.bf16.gmra.mxu0 %v2668
        %v2721 = vpop.f32.mrf.mxu0
        %v2722 = vadd.f32 0.0, %v2721
        %v2723 = vpop.f32.mrf.mxu0
        %v2724 = vpop.f32.mrf.mxu0
        %v2725 = vadd.f32 0.0, %v2724
        %v2726 = vpop.f32.mrf.mxu0
        %2727 = vmatprep.mubr.bf16.mxu0 0
        %2728 = vmatmul.mubr.bf16.gmra.mxu0 %v2671
        %v2729 = vpop.f32.mrf.mxu0
        %v2730 = vadd.f32 0.0, %v2729
        %v2731 = vpop.f32.mrf.mxu0
        %v2732 = vpop.f32.mrf.mxu0
        %v2733 = vadd.f32 0.0, %v2732
        %v2734 = vpop.f32.mrf.mxu0
        %2735 = vmatprep.mubr.bf16.mxu0 0
        %2736 = vmatmul.mubr.bf16.gmra.mxu0 %v2674
        %v2737 = vpop.f32.mrf.mxu0
        %v2738 = vadd.f32 0.0, %v2737
        %v2739 = vpop.f32.mrf.mxu0
        %v2740 = vpop.f32.mrf.mxu0
        %v2741 = vadd.f32 0.0, %v2740
        %v2742 = vpop.f32.mrf.mxu0
        %2743 = vmatprep.mubr.bf16.mxu0 0
        %2744 = vmatmul.mubr.bf16.gmra.mxu0 %v2677
        %v2745 = vpop.f32.mrf.mxu0
        %v2746 = vadd.f32 0.0, %v2745
        %v2747 = vpop.f32.mrf.mxu0
        %v2748 = vpop.f32.mrf.mxu0
        %v2749 = vpop.f32.mrf.mxu0
        %2750 = vdwg.mxu0
        %v2751 = vadd.f32 %v2613, %v2714
        %v2752 = vadd.f32 %v2614, %v2717
        %v2753 = vadd.f32 %v2615, %v2722
        %v2754 = vadd.f32 %v2616, %v2725
        %v2755 = vadd.f32 %v2617, %v2730
        %v2756 = vadd.f32 %v2618, %v2733
        %v2757 = vadd.f32 %v2619, %v2738
        %v2758 = vadd.f32 %v2620, %v2741
        %v2759 = vadd.f32 %v2621, %v2746
        %s2760 = scalar_lea.vmem %s5, 128
        %v2761 = vld [vmem:[%s2760] sm:$0xf]
        %v2762 = vld [vmem:[%s2760 + $0x4] sm:$0xf]
        %v2763 = vld [vmem:[%s2760 + $0x8] sm:$0xf]
        %v2764 = vld [vmem:[%s2760 + $0xc] sm:$0xf]
        %v2765 = vld [vmem:[%s2760 + $0x10] sm:$0xf]
        %v2766 = vld [vmem:[%s2760 + $0x14] sm:$0xf]
        %v2767 = vld [vmem:[%s2760 + $0x18] sm:$0xf]
        %v2768 = vld [vmem:[%s2760 + $0x1c] sm:$0xf]
        %v2769 = vrot.slane %v2223, 5
        %v2770 = vrot.slane %v2225, 6
        %v2771 = vor.u32 %v2769, %v2770
        %v2772 = vrot.slane %v2234, 5
        %v2773 = vrot.slane %v2230, 6
        %v2774 = vor.u32 %v2772, %v2773
        %v2775 = vsel %vm1989, %v2771, %v2774
        %v2776 = vrot.slane %v2242, 5
        %v2777 = vrot.slane %v2238, 6
        %v2778 = vor.u32 %v2776, %v2777
        %v2779 = vsel %vm1989, %v2774, %v2778
        %v2780 = vrot.slane %v2250, 5
        %v2781 = vrot.slane %v2246, 6
        %v2782 = vor.u32 %v2780, %v2781
        %v2783 = vsel %vm1989, %v2778, %v2782
        %v2784 = vrot.slane %v2258, 5
        %v2785 = vrot.slane %v2254, 6
        %v2786 = vor.u32 %v2784, %v2785
        %v2787 = vsel %vm1989, %v2782, %v2786
        %v2796 = vunpack.c.l.b16 %v2761
        %v2797 = vunpack.c.l.b16 %v2762
        %v2798 = vunpack.c.l.b16 %v2763
        %v2799 = vunpack.c.l.b16 %v2764
        %v2800 = vunpack.c.l.b16 %v2765
        %v2801 = vunpack.c.l.b16 %v2766
        %v2802 = vunpack.c.l.b16 %v2767
        %v2803 = vunpack.c.l.b16 %v2768
        %v2804 = vpack.c.b16 %v2797, %v2796
        %v2805 = vpack.c.b16 %v2799, %v2798
        %v2806 = vpack.c.b16 %v2801, %v2800
        %v2807 = vpack.c.b16 %v2803, %v2802
        %v2813 = vsel %vm1412, %v2775, 0
        %v2816 = vsel %vm1412, %v2779, 0
        %v2819 = vsel %vm1412, %v2783, 0
        %v2822 = vsel %vm1412, %v2787, 0
        %v2825 = vsel %vm1412, %v2786, 0
        %2827 = vmatprep.subr.bf16.mxu0 0
        %2828 = vmatpush1.bf16.msra.mxu0 0
        %2829 = vmatprep.subr.bf16.mxu0 0
        %2830 = vmatpush1.bf16.msra.mxu0 0
        %2831 = vmatprep.subr.bf16.mxu0 0
        %2832 = vmatpush1.bf16.msra.mxu0 0
        %2833 = vmatprep.subr.bf16.mxu0 0
        %2834 = vmatpush1.bf16.msra.mxu0 0
        %2835 = vmatprep.subr.bf16.mxu0 0
        %2836 = vmatpush1.bf16.msra.mxu0 %v2807
        %2837 = vmatprep.subr.bf16.mxu0 0
        %2838 = vmatpush1.bf16.msra.mxu0 %v2806
        %2839 = vmatprep.subr.bf16.mxu0 0
        %2840 = vmatpush1.bf16.msra.mxu0 %v2805
        %2841 = vmatprep.subr.bf16.mxu0 0
        %2842 = vmatpush1.bf16.msra.mxu0 %v2804
        %2843 = vmatprep.subr.bf16.mxu0 0
        %2844 = vmatpush2.bf16.msra.mxu0 0
        %2845 = vmatprep.subr.bf16.mxu0 0
        %2846 = vmatpush2.bf16.msra.mxu0 0
        %2847 = vmatprep.subr.bf16.mxu0 0
        %2848 = vmatpush2.bf16.msra.mxu0 0
        %2849 = vmatprep.subr.bf16.mxu0 0
        %2850 = vmatpush2.bf16.msra.mxu0 0
        %2851 = vmatprep.subr.bf16.mxu0 0
        %2852 = vmatpush2.bf16.msra.mxu0 0
        %2853 = vmatprep.subr.bf16.mxu0 0
        %2854 = vmatpush2.bf16.msra.mxu0 0
        %2855 = vmatprep.subr.bf16.mxu0 0
        %2856 = vmatpush2.bf16.msra.mxu0 0
        %2857 = vmatprep.subr.bf16.mxu0 0
        %2858 = vmatpush2.bf16.msra.mxu0 0
        %2859 = vmatprep.mubr.bf16.mxu0 0
        %2860 = vmatmul.mubr.bf16.gmra.mxu0 %v2813
        %v2861 = vpop.f32.mrf.mxu0
        %v2862 = vadd.f32 0.0, %v2861
        %v2863 = vpop.f32.mrf.mxu0
        %v2864 = vpop.f32.mrf.mxu0
        %v2865 = vadd.f32 0.0, %v2864
        %v2866 = vpop.f32.mrf.mxu0
        %2867 = vmatprep.mubr.bf16.mxu0 0
        %2868 = vmatmul.mubr.bf16.gmra.mxu0 %v2816
        %v2869 = vpop.f32.mrf.mxu0
        %v2870 = vadd.f32 0.0, %v2869
        %v2871 = vpop.f32.mrf.mxu0
        %v2872 = vpop.f32.mrf.mxu0
        %v2873 = vadd.f32 0.0, %v2872
        %v2874 = vpop.f32.mrf.mxu0
        %2875 = vmatprep.mubr.bf16.mxu0 0
        %2876 = vmatmul.mubr.bf16.gmra.mxu0 %v2819
        %v2877 = vpop.f32.mrf.mxu0
        %v2878 = vadd.f32 0.0, %v2877
        %v2879 = vpop.f32.mrf.mxu0
        %v2880 = vpop.f32.mrf.mxu0
        %v2881 = vadd.f32 0.0, %v2880
        %v2882 = vpop.f32.mrf.mxu0
        %2883 = vmatprep.mubr.bf16.mxu0 0
        %2884 = vmatmul.mubr.bf16.gmra.mxu0 %v2822
        %v2885 = vpop.f32.mrf.mxu0
        %v2886 = vadd.f32 0.0, %v2885
        %v2887 = vpop.f32.mrf.mxu0
        %v2888 = vpop.f32.mrf.mxu0
        %v2889 = vadd.f32 0.0, %v2888
        %v2890 = vpop.f32.mrf.mxu0
        %2891 = vmatprep.mubr.bf16.mxu0 0
        %2892 = vmatmul.mubr.bf16.gmra.mxu0 %v2825
        %v2893 = vpop.f32.mrf.mxu0
        %v2894 = vadd.f32 0.0, %v2893
        %v2895 = vpop.f32.mrf.mxu0
        %v2896 = vpop.f32.mrf.mxu0
        %v2897 = vpop.f32.mrf.mxu0
        %2898 = vdwg.mxu0
        %v2899 = vadd.f32 %v2751, %v2862
        %v2900 = vadd.f32 %v2752, %v2865
        %v2901 = vadd.f32 %v2753, %v2870
        %v2902 = vadd.f32 %v2754, %v2873
        %v2903 = vadd.f32 %v2755, %v2878
        %v2904 = vadd.f32 %v2756, %v2881
        %v2905 = vadd.f32 %v2757, %v2886
        %v2906 = vadd.f32 %v2758, %v2889
        %v2907 = vadd.f32 %v2759, %v2894
        %s2908 = scalar_lea.vmem %s5, 160
        %v2909 = vld [vmem:[%s2908] sm:$0xf]
        %v2910 = vld [vmem:[%s2908 + $0x4] sm:$0xf]
        %v2911 = vld [vmem:[%s2908 + $0x8] sm:$0xf]
        %v2912 = vld [vmem:[%s2908 + $0xc] sm:$0xf]
        %v2913 = vld [vmem:[%s2908 + $0x10] sm:$0xf]
        %v2914 = vld [vmem:[%s2908 + $0x14] sm:$0xf]
        %v2915 = vld [vmem:[%s2908 + $0x18] sm:$0xf]
        %v2916 = vld [vmem:[%s2908 + $0x1c] sm:$0xf]
        %vm2917 = vcmask 1041408
        %v2918 = vrot.slane %v2199, 6
        %v2919 = vrot.slane %v2200, 6
        %v2920 = vsel %vm2917, %v2918, %v2919
        %v2921 = vrot.slane %v2201, 6
        %v2922 = vsel %vm2917, %v2919, %v2921
        %v2923 = vrot.slane %v2202, 6
        %v2924 = vsel %vm2917, %v2921, %v2923
        %v2925 = vrot.slane %v2203, 6
        %v2926 = vsel %vm2917, %v2923, %v2925
        %v2935 = vunpack.c.l.b16 %v2909
        %v2936 = vunpack.c.l.b16 %v2910
        %v2937 = vunpack.c.l.b16 %v2911
        %v2938 = vunpack.c.l.b16 %v2912
        %v2939 = vunpack.c.l.b16 %v2913
        %v2940 = vunpack.c.l.b16 %v2914
        %v2941 = vunpack.c.l.b16 %v2915
        %v2942 = vunpack.c.l.b16 %v2916
        %v2943 = vpack.c.b16 %v2936, %v2935
        %v2944 = vpack.c.b16 %v2938, %v2937
        %v2945 = vpack.c.b16 %v2940, %v2939
        %v2946 = vpack.c.b16 %v2942, %v2941
        %v2952 = vsel %vm1412, %v2920, 0
        %v2955 = vsel %vm1412, %v2922, 0
        %v2958 = vsel %vm1412, %v2924, 0
        %v2961 = vsel %vm1412, %v2926, 0
        %v2964 = vsel %vm1412, %v2925, 0
        %2966 = vmatprep.subr.bf16.mxu0 0
        %2967 = vmatpush1.bf16.msra.mxu0 0
        %2968 = vmatprep.subr.bf16.mxu0 0
        %2969 = vmatpush1.bf16.msra.mxu0 0
        %2970 = vmatprep.subr.bf16.mxu0 0
        %2971 = vmatpush1.bf16.msra.mxu0 0
        %2972 = vmatprep.subr.bf16.mxu0 0
        %2973 = vmatpush1.bf16.msra.mxu0 0
        %2974 = vmatprep.subr.bf16.mxu0 0
        %2975 = vmatpush1.bf16.msra.mxu0 %v2946
        %2976 = vmatprep.subr.bf16.mxu0 0
        %2977 = vmatpush1.bf16.msra.mxu0 %v2945
        %2978 = vmatprep.subr.bf16.mxu0 0
        %2979 = vmatpush1.bf16.msra.mxu0 %v2944
        %2980 = vmatprep.subr.bf16.mxu0 0
        %2981 = vmatpush1.bf16.msra.mxu0 %v2943
        %2982 = vmatprep.subr.bf16.mxu0 0
        %2983 = vmatpush2.bf16.msra.mxu0 0
        %2984 = vmatprep.subr.bf16.mxu0 0
        %2985 = vmatpush2.bf16.msra.mxu0 0
        %2986 = vmatprep.subr.bf16.mxu0 0
        %2987 = vmatpush2.bf16.msra.mxu0 0
        %2988 = vmatprep.subr.bf16.mxu0 0
        %2989 = vmatpush2.bf16.msra.mxu0 0
        %2990 = vmatprep.subr.bf16.mxu0 0
        %2991 = vmatpush2.bf16.msra.mxu0 0
        %2992 = vmatprep.subr.bf16.mxu0 0
        %2993 = vmatpush2.bf16.msra.mxu0 0
        %2994 = vmatprep.subr.bf16.mxu0 0
        %2995 = vmatpush2.bf16.msra.mxu0 0
        %2996 = vmatprep.subr.bf16.mxu0 0
        %2997 = vmatpush2.bf16.msra.mxu0 0
        %2998 = vmatprep.mubr.bf16.mxu0 0
        %2999 = vmatmul.mubr.bf16.gmra.mxu0 %v2952
        %v3000 = vpop.f32.mrf.mxu0
        %v3001 = vadd.f32 0.0, %v3000
        %v3002 = vpop.f32.mrf.mxu0
        %v3003 = vpop.f32.mrf.mxu0
        %v3004 = vadd.f32 0.0, %v3003
        %v3005 = vpop.f32.mrf.mxu0
        %3006 = vmatprep.mubr.bf16.mxu0 0
        %3007 = vmatmul.mubr.bf16.gmra.mxu0 %v2955
        %v3008 = vpop.f32.mrf.mxu0
        %v3009 = vadd.f32 0.0, %v3008
        %v3010 = vpop.f32.mrf.mxu0
        %v3011 = vpop.f32.mrf.mxu0
        %v3012 = vadd.f32 0.0, %v3011
        %v3013 = vpop.f32.mrf.mxu0
        %3014 = vmatprep.mubr.bf16.mxu0 0
        %3015 = vmatmul.mubr.bf16.gmra.mxu0 %v2958
        %v3016 = vpop.f32.mrf.mxu0
        %v3017 = vadd.f32 0.0, %v3016
        %v3018 = vpop.f32.mrf.mxu0
        %v3019 = vpop.f32.mrf.mxu0
        %v3020 = vadd.f32 0.0, %v3019
        %v3021 = vpop.f32.mrf.mxu0
        %3022 = vmatprep.mubr.bf16.mxu0 0
        %3023 = vmatmul.mubr.bf16.gmra.mxu0 %v2961
        %v3024 = vpop.f32.mrf.mxu0
        %v3025 = vadd.f32 0.0, %v3024
        %v3026 = vpop.f32.mrf.mxu0
        %v3027 = vpop.f32.mrf.mxu0
        %v3028 = vadd.f32 0.0, %v3027
        %v3029 = vpop.f32.mrf.mxu0
        %3030 = vmatprep.mubr.bf16.mxu0 0
        %3031 = vmatmul.mubr.bf16.gmra.mxu0 %v2964
        %v3032 = vpop.f32.mrf.mxu0
        %v3033 = vadd.f32 0.0, %v3032
        %v3034 = vpop.f32.mrf.mxu0
        %v3035 = vpop.f32.mrf.mxu0
        %v3036 = vpop.f32.mrf.mxu0
        %3037 = vdwg.mxu0
        %v3038 = vadd.f32 %v2899, %v3001
        %v3039 = vadd.f32 %v2900, %v3004
        %v3040 = vadd.f32 %v2901, %v3009
        %v3041 = vadd.f32 %v2902, %v3012
        %v3042 = vadd.f32 %v2903, %v3017
        %v3043 = vadd.f32 %v2904, %v3020
        %v3044 = vadd.f32 %v2905, %v3025
        %v3045 = vadd.f32 %v2906, %v3028
        %v3046 = vadd.f32 %v2907, %v3033
        %s3047 = scalar_lea.vmem %s5, 192
        %v3048 = vld [vmem:[%s3047] sm:$0xf]
        %v3049 = vld [vmem:[%s3047 + $0x4] sm:$0xf]
        %v3050 = vld [vmem:[%s3047 + $0x8] sm:$0xf]
        %v3051 = vld [vmem:[%s3047 + $0xc] sm:$0xf]
        %v3052 = vld [vmem:[%s3047 + $0x10] sm:$0xf]
        %v3053 = vld [vmem:[%s3047 + $0x14] sm:$0xf]
        %v3054 = vld [vmem:[%s3047 + $0x18] sm:$0xf]
        %v3055 = vld [vmem:[%s3047 + $0x1c] sm:$0xf]
        %vm3057 = vcmask 1045504
        %v3058 = vrot.slane %v2200, 2
        %v3059 = vrot.slane %v2201, 2
        %v3060 = vsel %vm3057, %v3058, %v3059
        %v3061 = vrot.slane %v2202, 2
        %v3062 = vsel %vm3057, %v3059, %v3061
        %v3063 = vrot.slane %v2203, 2
        %v3064 = vsel %vm3057, %v3061, %v3063
        %v3065 = vrot.slane %v2204, 2
        %v3066 = vsel %vm3057, %v3063, %v3065
        %v3075 = vunpack.c.l.b16 %v3048
        %v3076 = vunpack.c.l.b16 %v3049
        %v3077 = vunpack.c.l.b16 %v3050
        %v3078 = vunpack.c.l.b16 %v3051
        %v3079 = vunpack.c.l.b16 %v3052
        %v3080 = vunpack.c.l.b16 %v3053
        %v3081 = vunpack.c.l.b16 %v3054
        %v3082 = vunpack.c.l.b16 %v3055
        %v3083 = vpack.c.b16 %v3076, %v3075
        %v3084 = vpack.c.b16 %v3078, %v3077
        %v3085 = vpack.c.b16 %v3080, %v3079
        %v3086 = vpack.c.b16 %v3082, %v3081
        %v3092 = vsel %vm1412, %v3060, 0
        %v3095 = vsel %vm1412, %v3062, 0
        %v3098 = vsel %vm1412, %v3064, 0
        %v3101 = vsel %vm1412, %v3066, 0
        %v3104 = vsel %vm1412, %v3065, 0
        %3106 = vmatprep.subr.bf16.mxu0 0
        %3107 = vmatpush1.bf16.msra.mxu0 0
        %3108 = vmatprep.subr.bf16.mxu0 0
        %3109 = vmatpush1.bf16.msra.mxu0 0
        %3110 = vmatprep.subr.bf16.mxu0 0
        %3111 = vmatpush1.bf16.msra.mxu0 0
        %3112 = vmatprep.subr.bf16.mxu0 0
        %3113 = vmatpush1.bf16.msra.mxu0 0
        %3114 = vmatprep.subr.bf16.mxu0 0
        %3115 = vmatpush1.bf16.msra.mxu0 %v3086
        %3116 = vmatprep.subr.bf16.mxu0 0
        %3117 = vmatpush1.bf16.msra.mxu0 %v3085
        %3118 = vmatprep.subr.bf16.mxu0 0
        %3119 = vmatpush1.bf16.msra.mxu0 %v3084
        %3120 = vmatprep.subr.bf16.mxu0 0
        %3121 = vmatpush1.bf16.msra.mxu0 %v3083
        %3122 = vmatprep.subr.bf16.mxu0 0
        %3123 = vmatpush2.bf16.msra.mxu0 0
        %3124 = vmatprep.subr.bf16.mxu0 0
        %3125 = vmatpush2.bf16.msra.mxu0 0
        %3126 = vmatprep.subr.bf16.mxu0 0
        %3127 = vmatpush2.bf16.msra.mxu0 0
        %3128 = vmatprep.subr.bf16.mxu0 0
        %3129 = vmatpush2.bf16.msra.mxu0 0
        %3130 = vmatprep.subr.bf16.mxu0 0
        %3131 = vmatpush2.bf16.msra.mxu0 0
        %3132 = vmatprep.subr.bf16.mxu0 0
        %3133 = vmatpush2.bf16.msra.mxu0 0
        %3134 = vmatprep.subr.bf16.mxu0 0
        %3135 = vmatpush2.bf16.msra.mxu0 0
        %3136 = vmatprep.subr.bf16.mxu0 0
        %3137 = vmatpush2.bf16.msra.mxu0 0
        %3138 = vmatprep.mubr.bf16.mxu0 0
        %3139 = vmatmul.mubr.bf16.gmra.mxu0 %v3092
        %v3140 = vpop.f32.mrf.mxu0
        %v3141 = vadd.f32 0.0, %v3140
        %v3142 = vpop.f32.mrf.mxu0
        %v3143 = vpop.f32.mrf.mxu0
        %v3144 = vadd.f32 0.0, %v3143
        %v3145 = vpop.f32.mrf.mxu0
        %3146 = vmatprep.mubr.bf16.mxu0 0
        %3147 = vmatmul.mubr.bf16.gmra.mxu0 %v3095
        %v3148 = vpop.f32.mrf.mxu0
        %v3149 = vadd.f32 0.0, %v3148
        %v3150 = vpop.f32.mrf.mxu0
        %v3151 = vpop.f32.mrf.mxu0
        %v3152 = vadd.f32 0.0, %v3151
        %v3153 = vpop.f32.mrf.mxu0
        %3154 = vmatprep.mubr.bf16.mxu0 0
        %3155 = vmatmul.mubr.bf16.gmra.mxu0 %v3098
        %v3156 = vpop.f32.mrf.mxu0
        %v3157 = vadd.f32 0.0, %v3156
        %v3158 = vpop.f32.mrf.mxu0
        %v3159 = vpop.f32.mrf.mxu0
        %v3160 = vadd.f32 0.0, %v3159
        %v3161 = vpop.f32.mrf.mxu0
        %3162 = vmatprep.mubr.bf16.mxu0 0
        %3163 = vmatmul.mubr.bf16.gmra.mxu0 %v3101
        %v3164 = vpop.f32.mrf.mxu0
        %v3165 = vadd.f32 0.0, %v3164
        %v3166 = vpop.f32.mrf.mxu0
        %v3167 = vpop.f32.mrf.mxu0
        %v3168 = vadd.f32 0.0, %v3167
        %v3169 = vpop.f32.mrf.mxu0
        %3170 = vmatprep.mubr.bf16.mxu0 0
        %3171 = vmatmul.mubr.bf16.gmra.mxu0 %v3104
        %v3172 = vpop.f32.mrf.mxu0
        %v3173 = vadd.f32 0.0, %v3172
        %v3174 = vpop.f32.mrf.mxu0
        %v3175 = vpop.f32.mrf.mxu0
        %v3176 = vpop.f32.mrf.mxu0
        %3177 = vdwg.mxu0
        %v3178 = vadd.f32 %v3038, %v3141
        %v3179 = vadd.f32 %v3039, %v3144
        %v3180 = vadd.f32 %v3040, %v3149
        %v3181 = vadd.f32 %v3041, %v3152
        %v3182 = vadd.f32 %v3042, %v3157
        %v3183 = vadd.f32 %v3043, %v3160
        %v3184 = vadd.f32 %v3044, %v3165
        %v3185 = vadd.f32 %v3045, %v3168
        %v3186 = vadd.f32 %v3046, %v3173
        %s3187 = scalar_lea.vmem %s5, 224
        %v3188 = vld [vmem:[%s3187] sm:$0xf]
        %v3189 = vld [vmem:[%s3187 + $0x4] sm:$0xf]
        %v3190 = vld [vmem:[%s3187 + $0x8] sm:$0xf]
        %v3191 = vld [vmem:[%s3187 + $0xc] sm:$0xf]
        %v3192 = vld [vmem:[%s3187 + $0x10] sm:$0xf]
        %v3193 = vld [vmem:[%s3187 + $0x14] sm:$0xf]
        %v3194 = vld [vmem:[%s3187 + $0x18] sm:$0xf]
        %v3195 = vld [vmem:[%s3187 + $0x1c] sm:$0xf]
        %vm3196 = vsmask.f32 5376
        %v3197 = vrot.slane %v2234, 2
        %v3198 = vrot.slane %v2230, 3
        %v3199 = vor.u32 %v3197, %v3198
        %v3200 = vrot.slane %v2242, 2
        %v3201 = vrot.slane %v2238, 3
        %v3202 = vor.u32 %v3200, %v3201
        %v3203 = vsel %vm3196, %v3199, %v3202
        %v3204 = vrot.slane %v2250, 2
        %v3205 = vrot.slane %v2246, 3
        %v3206 = vor.u32 %v3204, %v3205
        %v3207 = vsel %vm3196, %v3202, %v3206
        %v3208 = vrot.slane %v2258, 2
        %v3209 = vrot.slane %v2254, 3
        %v3210 = vor.u32 %v3208, %v3209
        %v3211 = vsel %vm3196, %v3206, %v3210
        %v3213 = vshrl.u32 %v2204, 16
        %v3215 = vrot.slane %v3213, 2
        %v3216 = vshll.u32 %v2204, 16
        %v3218 = vrot.slane %v3216, 3
        %v3219 = vor.u32 %v3215, %v3218
        %v3220 = vsel %vm3196, %v3210, %v3219
        %v3229 = vunpack.c.l.b16 %v3188
        %v3230 = vunpack.c.l.b16 %v3189
        %v3231 = vunpack.c.l.b16 %v3190
        %v3232 = vunpack.c.l.b16 %v3191
        %v3233 = vunpack.c.l.b16 %v3192
        %v3234 = vunpack.c.l.b16 %v3193
        %v3235 = vunpack.c.l.b16 %v3194
        %v3236 = vunpack.c.l.b16 %v3195
        %v3237 = vpack.c.b16 %v3230, %v3229
        %v3238 = vpack.c.b16 %v3232, %v3231
        %v3239 = vpack.c.b16 %v3234, %v3233
        %v3240 = vpack.c.b16 %v3236, %v3235
        %v3246 = vsel %vm1412, %v3203, 0
        %v3249 = vsel %vm1412, %v3207, 0
        %v3252 = vsel %vm1412, %v3211, 0
        %v3255 = vsel %vm1412, %v3220, 0
        %v3258 = vsel %vm1412, %v3219, 0
        %3260 = vmatprep.subr.bf16.mxu0 0
        %3261 = vmatpush1.bf16.msra.mxu0 0
        %3262 = vmatprep.subr.bf16.mxu0 0
        %3263 = vmatpush1.bf16.msra.mxu0 0
        %3264 = vmatprep.subr.bf16.mxu0 0
        %3265 = vmatpush1.bf16.msra.mxu0 0
        %3266 = vmatprep.subr.bf16.mxu0 0
        %3267 = vmatpush1.bf16.msra.mxu0 0
        %3268 = vmatprep.subr.bf16.mxu0 0
        %3269 = vmatpush1.bf16.msra.mxu0 %v3240
        %3270 = vmatprep.subr.bf16.mxu0 0
        %3271 = vmatpush1.bf16.msra.mxu0 %v3239
        %3272 = vmatprep.subr.bf16.mxu0 0
        %3273 = vmatpush1.bf16.msra.mxu0 %v3238
        %3274 = vmatprep.subr.bf16.mxu0 0
        %3275 = vmatpush1.bf16.msra.mxu0 %v3237
        %3276 = vmatprep.subr.bf16.mxu0 0
        %3277 = vmatpush2.bf16.msra.mxu0 0
        %3278 = vmatprep.subr.bf16.mxu0 0
        %3279 = vmatpush2.bf16.msra.mxu0 0
        %3280 = vmatprep.subr.bf16.mxu0 0
        %3281 = vmatpush2.bf16.msra.mxu0 0
        %3282 = vmatprep.subr.bf16.mxu0 0
        %3283 = vmatpush2.bf16.msra.mxu0 0
        %3284 = vmatprep.subr.bf16.mxu0 0
        %3285 = vmatpush2.bf16.msra.mxu0 0
        %3286 = vmatprep.subr.bf16.mxu0 0
        %3287 = vmatpush2.bf16.msra.mxu0 0
        %3288 = vmatprep.subr.bf16.mxu0 0
        %3289 = vmatpush2.bf16.msra.mxu0 0
        %3290 = vmatprep.subr.bf16.mxu0 0
        %3291 = vmatpush2.bf16.msra.mxu0 0
        %3292 = vmatprep.mubr.bf16.mxu0 0
        %3293 = vmatmul.mubr.bf16.gmra.mxu0 %v3246
        %v3294 = vpop.f32.mrf.mxu0
        %v3295 = vadd.f32 0.0, %v3294
        %v3296 = vpop.f32.mrf.mxu0
        %v3297 = vpop.f32.mrf.mxu0
        %v3298 = vadd.f32 0.0, %v3297
        %v3299 = vpop.f32.mrf.mxu0
        %3300 = vmatprep.mubr.bf16.mxu0 0
        %3301 = vmatmul.mubr.bf16.gmra.mxu0 %v3249
        %v3302 = vpop.f32.mrf.mxu0
        %v3303 = vadd.f32 0.0, %v3302
        %v3304 = vpop.f32.mrf.mxu0
        %v3305 = vpop.f32.mrf.mxu0
        %v3306 = vadd.f32 0.0, %v3305
        %v3307 = vpop.f32.mrf.mxu0
        %3308 = vmatprep.mubr.bf16.mxu0 0
        %3309 = vmatmul.mubr.bf16.gmra.mxu0 %v3252
        %v3310 = vpop.f32.mrf.mxu0
        %v3311 = vadd.f32 0.0, %v3310
        %v3312 = vpop.f32.mrf.mxu0
        %v3313 = vpop.f32.mrf.mxu0
        %v3314 = vadd.f32 0.0, %v3313
        %v3315 = vpop.f32.mrf.mxu0
        %3316 = vmatprep.mubr.bf16.mxu0 0
        %3317 = vmatmul.mubr.bf16.gmra.mxu0 %v3255
        %v3318 = vpop.f32.mrf.mxu0
        %v3319 = vadd.f32 0.0, %v3318
        %v3320 = vpop.f32.mrf.mxu0
        %v3321 = vpop.f32.mrf.mxu0
        %v3322 = vadd.f32 0.0, %v3321
        %v3323 = vpop.f32.mrf.mxu0
        %3324 = vmatprep.mubr.bf16.mxu0 0
        %3325 = vmatmul.mubr.bf16.gmra.mxu0 %v3258
        %v3326 = vpop.f32.mrf.mxu0
        %v3327 = vadd.f32 0.0, %v3326
        %v3328 = vpop.f32.mrf.mxu0
        %v3329 = vpop.f32.mrf.mxu0
        %v3330 = vpop.f32.mrf.mxu0
        %3331 = vdwg.mxu0
        %v3332 = vadd.f32 %v3178, %v3295
        %v3333 = vadd.f32 %v3179, %v3298
        %v3334 = vadd.f32 %v3180, %v3303
        %v3335 = vadd.f32 %v3181, %v3306
        %v3336 = vadd.f32 %v3182, %v3311
        %v3337 = vadd.f32 %v3183, %v3314
        %v3338 = vadd.f32 %v3184, %v3319
        %v3339 = vadd.f32 %v3185, %v3322
        %v3340 = vadd.f32 %v3186, %v3327
        %s3341 = scalar_lea.vmem %s5, 256
        %v3342 = vld [vmem:[%s3341] sm:$0xf]
        %v3343 = vld [vmem:[%s3341 + $0x4] sm:$0xf]
        %v3344 = vld [vmem:[%s3341 + $0x8] sm:$0xf]
        %v3345 = vld [vmem:[%s3341 + $0xc] sm:$0xf]
        %v3346 = vld [vmem:[%s3341 + $0x10] sm:$0xf]
        %v3347 = vld [vmem:[%s3341 + $0x14] sm:$0xf]
        %v3348 = vld [vmem:[%s3341 + $0x18] sm:$0xf]
        %v3349 = vld [vmem:[%s3341 + $0x1c] sm:$0xf]
        %vm3350 = vcmask 1044480
        %v3351 = vrot.slane %v2200, 3
        %v3352 = vrot.slane %v2201, 3
        %v3353 = vsel %vm3350, %v3351, %v3352
        %v3354 = vrot.slane %v2202, 3
        %v3355 = vsel %vm3350, %v3352, %v3354
        %v3356 = vrot.slane %v2203, 3
        %v3357 = vsel %vm3350, %v3354, %v3356
        %v3358 = vrot.slane %v2204, 3
        %v3359 = vsel %vm3350, %v3356, %v3358
        %v3368 = vunpack.c.l.b16 %v3342
        %v3369 = vunpack.c.l.b16 %v3343
        %v3370 = vunpack.c.l.b16 %v3344
        %v3371 = vunpack.c.l.b16 %v3345
        %v3372 = vunpack.c.l.b16 %v3346
        %v3373 = vunpack.c.l.b16 %v3347
        %v3374 = vunpack.c.l.b16 %v3348
        %v3375 = vunpack.c.l.b16 %v3349
        %v3376 = vpack.c.b16 %v3369, %v3368
        %v3377 = vpack.c.b16 %v3371, %v3370
        %v3378 = vpack.c.b16 %v3373, %v3372
        %v3379 = vpack.c.b16 %v3375, %v3374
        %v3385 = vsel %vm1412, %v3353, 0
        %v3388 = vsel %vm1412, %v3355, 0
        %v3391 = vsel %vm1412, %v3357, 0
        %v3394 = vsel %vm1412, %v3359, 0
        %v3397 = vsel %vm1412, %v3358, 0
        %3399 = vmatprep.subr.bf16.mxu0 0
        %3400 = vmatpush1.bf16.msra.mxu0 0
        %3401 = vmatprep.subr.bf16.mxu0 0
        %3402 = vmatpush1.bf16.msra.mxu0 0
        %3403 = vmatprep.subr.bf16.mxu0 0
        %3404 = vmatpush1.bf16.msra.mxu0 0
        %3405 = vmatprep.subr.bf16.mxu0 0
        %3406 = vmatpush1.bf16.msra.mxu0 0
        %3407 = vmatprep.subr.bf16.mxu0 0
        %3408 = vmatpush1.bf16.msra.mxu0 %v3379
        %3409 = vmatprep.subr.bf16.mxu0 0
        %3410 = vmatpush1.bf16.msra.mxu0 %v3378
        %3411 = vmatprep.subr.bf16.mxu0 0
        %3412 = vmatpush1.bf16.msra.mxu0 %v3377
        %3413 = vmatprep.subr.bf16.mxu0 0
        %3414 = vmatpush1.bf16.msra.mxu0 %v3376
        %3415 = vmatprep.subr.bf16.mxu0 0
        %3416 = vmatpush2.bf16.msra.mxu0 0
        %3417 = vmatprep.subr.bf16.mxu0 0
        %3418 = vmatpush2.bf16.msra.mxu0 0
        %3419 = vmatprep.subr.bf16.mxu0 0
        %3420 = vmatpush2.bf16.msra.mxu0 0
        %3421 = vmatprep.subr.bf16.mxu0 0
        %3422 = vmatpush2.bf16.msra.mxu0 0
        %3423 = vmatprep.subr.bf16.mxu0 0
        %3424 = vmatpush2.bf16.msra.mxu0 0
        %3425 = vmatprep.subr.bf16.mxu0 0
        %3426 = vmatpush2.bf16.msra.mxu0 0
        %3427 = vmatprep.subr.bf16.mxu0 0
        %3428 = vmatpush2.bf16.msra.mxu0 0
        %3429 = vmatprep.subr.bf16.mxu0 0
        %3430 = vmatpush2.bf16.msra.mxu0 0
        %3431 = vmatprep.mubr.bf16.mxu0 0
        %3432 = vmatmul.mubr.bf16.gmra.mxu0 %v3385
        %v3433 = vpop.f32.mrf.mxu0
        %v3434 = vadd.f32 0.0, %v3433
        %v3435 = vpop.f32.mrf.mxu0
        %v3436 = vpop.f32.mrf.mxu0
        %v3437 = vadd.f32 0.0, %v3436
        %v3438 = vpop.f32.mrf.mxu0
        %3439 = vmatprep.mubr.bf16.mxu0 0
        %3440 = vmatmul.mubr.bf16.gmra.mxu0 %v3388
        %v3441 = vpop.f32.mrf.mxu0
        %v3442 = vadd.f32 0.0, %v3441
        %v3443 = vpop.f32.mrf.mxu0
        %v3444 = vpop.f32.mrf.mxu0
        %v3445 = vadd.f32 0.0, %v3444
        %v3446 = vpop.f32.mrf.mxu0
        %3447 = vmatprep.mubr.bf16.mxu0 0
        %3448 = vmatmul.mubr.bf16.gmra.mxu0 %v3391
        %v3449 = vpop.f32.mrf.mxu0
        %v3450 = vadd.f32 0.0, %v3449
        %v3451 = vpop.f32.mrf.mxu0
        %v3452 = vpop.f32.mrf.mxu0
        %v3453 = vadd.f32 0.0, %v3452
        %v3454 = vpop.f32.mrf.mxu0
        %3455 = vmatprep.mubr.bf16.mxu0 0
        %3456 = vmatmul.mubr.bf16.gmra.mxu0 %v3394
        %v3457 = vpop.f32.mrf.mxu0
        %v3458 = vadd.f32 0.0, %v3457
        %v3459 = vpop.f32.mrf.mxu0
        %v3460 = vpop.f32.mrf.mxu0
        %v3461 = vadd.f32 0.0, %v3460
        %v3462 = vpop.f32.mrf.mxu0
        %3463 = vmatprep.mubr.bf16.mxu0 0
        %3464 = vmatmul.mubr.bf16.gmra.mxu0 %v3397
        %v3465 = vpop.f32.mrf.mxu0
        %v3466 = vadd.f32 0.0, %v3465
        %v3467 = vpop.f32.mrf.mxu0
        %v3468 = vpop.f32.mrf.mxu0
        %v3469 = vpop.f32.mrf.mxu0
        %3470 = vdwg.mxu0
        %v3471 = vadd.f32 %v3332, %v3434
        %v3472 = vadd.f32 %v3333, %v3437
        %v3473 = vadd.f32 %v3334, %v3442
        %v3474 = vadd.f32 %v3335, %v3445
        %v3475 = vadd.f32 %v3336, %v3450
        %v3476 = vadd.f32 %v3337, %v3453
        %v3477 = vadd.f32 %v3338, %v3458
        %v3478 = vadd.f32 %v3339, %v3461
        %v3479 = vadd.f32 %v3340, %v3466
        %v3480 = vld [vmem:[%s6] sm:$0x1]
        %v3482 = vlaneseq
        %v3483 = vshrl.u32 %v3482, 7
        %v3484 = vsub.s32 0, %v3483
        %v3485 = vrot.slane %v3480, %v3484
        %v3487 = vadd.f32 %v3471, %v3485
        %v3488 = vadd.f32 %v3472, %v3485
        %v3489 = vadd.f32 %v3473, %v3485
        %v3490 = vadd.f32 %v3474, %v3485
        %v3491 = vadd.f32 %v3475, %v3485
        %v3492 = vadd.f32 %v3476, %v3485
        %v3493 = vadd.f32 %v3477, %v3485
        %v3494 = vadd.f32 %v3478, %v3485
        %v3495 = vadd.f32 %v3479, %v3485
        %v3496 = vmax.f32 %v3487, 0.0
        %v3497 = vmax.f32 %v3488, 0.0
        %v3498 = vmax.f32 %v3489, 0.0
        %v3499 = vmax.f32 %v3490, 0.0
        %v3500 = vmax.f32 %v3491, 0.0
        %v3501 = vmax.f32 %v3492, 0.0
        %v3502 = vmax.f32 %v3493, 0.0
        %v3503 = vmax.f32 %v3494, 0.0
        %v3504 = vmax.f32 %v3495, 0.0
        %v3505 = vlaneseq
        %vm3506 = vcmp.ge.s32.totalorder %v3505, 0
        %vm3507 = vcmp.lt.s32.totalorder %v3505, 64
        %vm3508 = vmand %vm3506, %vm3507
        %3509 = vst.msk [vmem:[#allocation2] sm:$0x1] %vm3508, %v3496
        %v3512 = vunpack.c.l.s4 1966171168
        %v3513 = vunpack.c.0.s8 %v3512
        %v3514 = vlaneseq
        %v3515 = vshrl.u32 %v3514, 7
        %v3516 = vsub.s32 %v3513, %v3515
        %v3517 = vrot.slane %v3496, %v3516
        %v3518 = vcombine.high %v3517, %v3517
        %v3520 = vunpack.c.l.s4 1966171168
        %v3521 = vunpack.c.0.s8 %v3520
        %v3522 = vlaneseq
        %v3523 = vshrl.u32 %v3522, 7
        %v3524 = vsub.s32 %v3521, %v3523
        %v3525 = vrot.slane %v3517, %v3524
        %v3527 = vunpack.c.l.s4 1966171168
        %v3528 = vunpack.c.0.s8 %v3527
        %v3529 = vlaneseq
        %v3530 = vshrl.u32 %v3529, 7
        %v3531 = vsub.s32 %v3528, %v3530
        %v3532 = vrot.slane %v3518, %v3531
        %3533 = vrot.lane.b32.xlu0 %v3532, 64
        %v3534 = vpop.permute.xlu0 %3533
        %vm3536 = vcmp.ge.s32.totalorder %v3505, 64
        %vm3537 = vcmp.lt.s32.totalorder %v3505, 128
        %vm3538 = vmand %vm3536, %vm3537
        %3539 = vst.msk [vmem:[#allocation2] sm:$0x1] %vm3538, %v3534
        %v3540 = vcombine.high %v3525, %v3525
        %3542 = vst.msk [vmem:[#allocation2 + $0x1] sm:$0x1] %vm3508, %v3540
        %v3543 = vcombine.high %v3532, %v3532
        %3544 = vrot.lane.b32.xlu0 %v3543, 64
        %v3545 = vpop.permute.xlu0 %3544
        %3547 = vst.msk [vmem:[#allocation2 + $0x1] sm:$0x1] %vm3538, %v3545
        %v3548 = vcombine.high %v3496, %v3496
        %v3550 = vunpack.c.l.s4 1966171168
        %v3551 = vunpack.c.0.s8 %v3550
        %v3552 = vlaneseq
        %v3553 = vshrl.u32 %v3552, 7
        %v3554 = vsub.s32 %v3551, %v3553
        %v3555 = vrot.slane %v3548, %v3554
        %v3557 = vunpack.c.l.s4 1966171168
        %v3558 = vunpack.c.0.s8 %v3557
        %v3559 = vlaneseq
        %v3560 = vshrl.u32 %v3559, 7
        %v3561 = vsub.s32 %v3558, %v3560
        %v3562 = vrot.slane %v3555, %v3561
        %3564 = vst.msk [vmem:[#allocation2 + $0x2] sm:$0x1] %vm3508, %v3562
        %v3565 = vcombine.high %v3555, %v3555
        %v3567 = vunpack.c.l.s4 1966171168
        %v3568 = vunpack.c.0.s8 %v3567
        %v3569 = vlaneseq
        %v3570 = vshrl.u32 %v3569, 7
        %v3571 = vsub.s32 %v3568, %v3570
        %v3572 = vrot.slane %v3565, %v3571
        %3573 = vrot.lane.b32.xlu0 %v3572, 64
        %v3574 = vpop.permute.xlu0 %3573
        %3576 = vst.msk [vmem:[#allocation2 + $0x2] sm:$0x1] %vm3538, %v3574
        %v3577 = vcombine.high %v3562, %v3562
        %3579 = vst.msk [vmem:[#allocation2 + $0x3] sm:$0x1] %vm3508, %v3577
        %v3582 = vunpack.c.l.s4 1966171168
        %v3583 = vunpack.c.0.s8 %v3582
        %v3584 = vlaneseq
        %v3585 = vshrl.u32 %v3584, 7
        %v3586 = vsub.s32 %v3583, %v3585
        %v3587 = vrot.slane %v3497, %v3586
        %v3589 = vunpack.c.l.s4 1966171168
        %v3590 = vunpack.c.0.s8 %v3589
        %v3591 = vlaneseq
        %v3592 = vshrl.u32 %v3591, 7
        %v3593 = vsub.s32 %v3590, %v3592
        %v3594 = vrot.slane %v3587, %v3593
        %v3595 = vcombine.high %v3594, %v3594
        %3596 = vrot.lane.b32.xlu0 %v3595, 64
        %v3597 = vpop.permute.xlu0 %3596
        %3599 = vst.msk [vmem:[#allocation2 + $0x3] sm:$0x1] %vm3538, %v3597
        %v3600 = vcombine.high %v3587, %v3587
        %v3602 = vunpack.c.l.s4 1966171168
        %v3603 = vunpack.c.0.s8 %v3602
        %v3604 = vlaneseq
        %v3605 = vshrl.u32 %v3604, 7
        %v3606 = vsub.s32 %v3603, %v3605
        %v3607 = vrot.slane %v3600, %v3606
        %v3608 = vcombine.high %v3607, %v3607
        %3610 = vst.msk [vmem:[#allocation2 + $0x4] sm:$0x1] %vm3508, %v3608
        %v3611 = vcombine.high %v3497, %v3497
        %v3613 = vunpack.c.l.s4 1966171168
        %v3614 = vunpack.c.0.s8 %v3613
        %v3615 = vlaneseq
        %v3616 = vshrl.u32 %v3615, 7
        %v3617 = vsub.s32 %v3614, %v3616
        %v3618 = vrot.slane %v3611, %v3617
        %v3620 = vunpack.c.l.s4 1966171168
        %v3621 = vunpack.c.0.s8 %v3620
        %v3622 = vlaneseq
        %v3623 = vshrl.u32 %v3622, 7
        %v3624 = vsub.s32 %v3621, %v3623
        %v3625 = vrot.slane %v3618, %v3624
        %3626 = vrot.lane.b32.xlu0 %v3625, 64
        %v3627 = vpop.permute.xlu0 %3626
        %3629 = vst.msk [vmem:[#allocation2 + $0x4] sm:$0x1] %vm3538, %v3627
        %v3630 = vcombine.high %v3618, %v3618
        %v3632 = vunpack.c.l.s4 1966171168
        %v3633 = vunpack.c.0.s8 %v3632
        %v3634 = vlaneseq
        %v3635 = vshrl.u32 %v3634, 7
        %v3636 = vsub.s32 %v3633, %v3635
        %v3637 = vrot.slane %v3630, %v3636
        %3639 = vst.msk [vmem:[#allocation2 + $0x5] sm:$0x1] %vm3508, %v3637
        %v3640 = vcombine.high %v3625, %v3625
        %3641 = vrot.lane.b32.xlu0 %v3640, 64
        %v3642 = vpop.permute.xlu0 %3641
        %3644 = vst.msk [vmem:[#allocation2 + $0x5] sm:$0x1] %vm3538, %v3642
        %v3645 = vcombine.high %v3637, %v3637
        %3647 = vst.msk [vmem:[#allocation2 + $0x6] sm:$0x1] %vm3508, %v3645
        %v3650 = vunpack.c.l.s4 1966171168
        %v3651 = vunpack.c.0.s8 %v3650
        %v3652 = vlaneseq
        %v3653 = vshrl.u32 %v3652, 7
        %v3654 = vsub.s32 %v3651, %v3653
        %v3655 = vrot.slane %v3498, %v3654
        %v3657 = vunpack.c.l.s4 1966171168
        %v3658 = vunpack.c.0.s8 %v3657
        %v3659 = vlaneseq
        %v3660 = vshrl.u32 %v3659, 7
        %v3661 = vsub.s32 %v3658, %v3660
        %v3662 = vrot.slane %v3655, %v3661
        %3663 = vrot.lane.b32.xlu0 %v3662, 64
        %v3664 = vpop.permute.xlu0 %3663
        %3666 = vst.msk [vmem:[#allocation2 + $0x6] sm:$0x1] %vm3538, %v3664
        %v3667 = vcombine.high %v3498, %v3498
        %v3669 = vunpack.c.l.s4 1966171168
        %v3670 = vunpack.c.0.s8 %v3669
        %v3671 = vlaneseq
        %v3672 = vshrl.u32 %v3671, 7
        %v3673 = vsub.s32 %v3670, %v3672
        %v3674 = vrot.slane %v3667, %v3673
        %v3676 = vunpack.c.l.s4 1966171168
        %v3677 = vunpack.c.0.s8 %v3676
        %v3678 = vlaneseq
        %v3679 = vshrl.u32 %v3678, 7
        %v3680 = vsub.s32 %v3677, %v3679
        %v3681 = vrot.slane %v3674, %v3680
        %3683 = vst.msk [vmem:[#allocation2 + $0x7] sm:$0x1] %vm3508, %v3681
        %v3684 = vcombine.high %v3674, %v3674
        %v3686 = vunpack.c.l.s4 1966171168
        %v3687 = vunpack.c.0.s8 %v3686
        %v3688 = vlaneseq
        %v3689 = vshrl.u32 %v3688, 7
        %v3690 = vsub.s32 %v3687, %v3689
        %v3691 = vrot.slane %v3684, %v3690
        %3692 = vrot.lane.b32.xlu0 %v3691, 64
        %v3693 = vpop.permute.xlu0 %3692
        %3695 = vst.msk [vmem:[#allocation2 + $0x7] sm:$0x1] %vm3538, %v3693
        %v3696 = vcombine.high %v3681, %v3681
        %3698 = vst.msk [vmem:[#allocation2 + $0x8] sm:$0x1] %vm3508, %v3696
        %v3699 = vcombine.high %v3691, %v3691
        %3700 = vrot.lane.b32.xlu0 %v3699, 64
        %v3701 = vpop.permute.xlu0 %3700
        %3703 = vst.msk [vmem:[#allocation2 + $0x8] sm:$0x1] %vm3538, %v3701
        %3704 = vst.msk [vmem:[#allocation2 + $0x9] sm:$0x1] %vm3508, %v3499
        %v3707 = vunpack.c.l.s4 1966171168
        %v3708 = vunpack.c.0.s8 %v3707
        %v3709 = vlaneseq
        %v3710 = vshrl.u32 %v3709, 7
        %v3711 = vsub.s32 %v3708, %v3710
        %v3712 = vrot.slane %v3499, %v3711
        %v3713 = vcombine.high %v3712, %v3712
        %v3715 = vunpack.c.l.s4 1966171168
        %v3716 = vunpack.c.0.s8 %v3715
        %v3717 = vlaneseq
        %v3718 = vshrl.u32 %v3717, 7
        %v3719 = vsub.s32 %v3716, %v3718
        %v3720 = vrot.slane %v3712, %v3719
        %v3722 = vunpack.c.l.s4 1966171168
        %v3723 = vunpack.c.0.s8 %v3722
        %v3724 = vlaneseq
        %v3725 = vshrl.u32 %v3724, 7
        %v3726 = vsub.s32 %v3723, %v3725
        %v3727 = vrot.slane %v3713, %v3726
        %3728 = vrot.lane.b32.xlu0 %v3727, 64
        %v3729 = vpop.permute.xlu0 %3728
        %3731 = vst.msk [vmem:[#allocation2 + $0x9] sm:$0x1] %vm3538, %v3729
        %v3732 = vcombine.high %v3720, %v3720
        %3734 = vst.msk [vmem:[#allocation2 + $0xa] sm:$0x1] %vm3508, %v3732
        %v3735 = vcombine.high %v3499, %v3499
        %v3737 = vunpack.c.l.s4 1966171168
        %v3738 = vunpack.c.0.s8 %v3737
        %v3739 = vlaneseq
        %v3740 = vshrl.u32 %v3739, 7
        %v3741 = vsub.s32 %v3738, %v3740
        %v3742 = vrot.slane %v3735, %v3741
        %v3744 = vunpack.c.l.s4 1966171168
        %v3745 = vunpack.c.0.s8 %v3744
        %v3746 = vlaneseq
        %v3747 = vshrl.u32 %v3746, 7
        %v3748 = vsub.s32 %v3745, %v3747
        %v3749 = vrot.slane %v3742, %v3748
        %v3750 = vcombine.high %v3749, %v3749
        %3751 = vrot.lane.b32.xlu0 %v3750, 64
        %v3752 = vpop.permute.xlu0 %3751
        %3754 = vst.msk [vmem:[#allocation2 + $0xa] sm:$0x1] %vm3538, %v3752
        %v3755 = vcombine.high %v3742, %v3742
        %v3757 = vunpack.c.l.s4 1966171168
        %v3758 = vunpack.c.0.s8 %v3757
        %v3759 = vlaneseq
        %v3760 = vshrl.u32 %v3759, 7
        %v3761 = vsub.s32 %v3758, %v3760
        %v3762 = vrot.slane %v3755, %v3761
        %v3763 = vcombine.high %v3762, %v3762
        %3765 = vst.msk [vmem:[#allocation2 + $0xb] sm:$0x1] %vm3508, %v3763
        %v3768 = vunpack.c.l.s4 1966171168
        %v3769 = vunpack.c.0.s8 %v3768
        %v3770 = vlaneseq
        %v3771 = vshrl.u32 %v3770, 7
        %v3772 = vsub.s32 %v3769, %v3771
        %v3773 = vrot.slane %v3500, %v3772
        %v3775 = vunpack.c.l.s4 1966171168
        %v3776 = vunpack.c.0.s8 %v3775
        %v3777 = vlaneseq
        %v3778 = vshrl.u32 %v3777, 7
        %v3779 = vsub.s32 %v3776, %v3778
        %v3780 = vrot.slane %v3773, %v3779
        %3781 = vrot.lane.b32.xlu0 %v3780, 64
        %v3782 = vpop.permute.xlu0 %3781
        %3784 = vst.msk [vmem:[#allocation2 + $0xb] sm:$0x1] %vm3538, %v3782
        %v3785 = vcombine.high %v3773, %v3773
        %v3787 = vunpack.c.l.s4 1966171168
        %v3788 = vunpack.c.0.s8 %v3787
        %v3789 = vlaneseq
        %v3790 = vshrl.u32 %v3789, 7
        %v3791 = vsub.s32 %v3788, %v3790
        %v3792 = vrot.slane %v3785, %v3791
        %3794 = vst.msk [vmem:[#allocation2 + $0xc] sm:$0x1] %vm3508, %v3792
        %v3795 = vcombine.high %v3780, %v3780
        %3796 = vrot.lane.b32.xlu0 %v3795, 64
        %v3797 = vpop.permute.xlu0 %3796
        %3799 = vst.msk [vmem:[#allocation2 + $0xc] sm:$0x1] %vm3538, %v3797
        %v3800 = vcombine.high %v3792, %v3792
        %3802 = vst.msk [vmem:[#allocation2 + $0xd] sm:$0x1] %vm3508, %v3800
        %v3803 = vcombine.high %v3500, %v3500
        %v3805 = vunpack.c.l.s4 1966171168
        %v3806 = vunpack.c.0.s8 %v3805
        %v3807 = vlaneseq
        %v3808 = vshrl.u32 %v3807, 7
        %v3809 = vsub.s32 %v3806, %v3808
        %v3810 = vrot.slane %v3803, %v3809
        %v3812 = vunpack.c.l.s4 1966171168
        %v3813 = vunpack.c.0.s8 %v3812
        %v3814 = vlaneseq
        %v3815 = vshrl.u32 %v3814, 7
        %v3816 = vsub.s32 %v3813, %v3815
        %v3817 = vrot.slane %v3810, %v3816
        %3818 = vrot.lane.b32.xlu0 %v3817, 64
        %v3819 = vpop.permute.xlu0 %3818
        %3821 = vst.msk [vmem:[#allocation2 + $0xd] sm:$0x1] %vm3538, %v3819
        %3822 = vst.msk [vmem:[#allocation2 + $0xe] sm:$0x1] %vm3508, %v3501
        %v3825 = vunpack.c.l.s4 1966171168
        %v3826 = vunpack.c.0.s8 %v3825
        %v3827 = vlaneseq
        %v3828 = vshrl.u32 %v3827, 7
        %v3829 = vsub.s32 %v3826, %v3828
        %v3830 = vrot.slane %v3501, %v3829
        %v3831 = vcombine.high %v3830, %v3830
        %v3833 = vunpack.c.l.s4 1966171168
        %v3834 = vunpack.c.0.s8 %v3833
        %v3835 = vlaneseq
        %v3836 = vshrl.u32 %v3835, 7
        %v3837 = vsub.s32 %v3834, %v3836
        %v3838 = vrot.slane %v3830, %v3837
        %v3840 = vunpack.c.l.s4 1966171168
        %v3841 = vunpack.c.0.s8 %v3840
        %v3842 = vlaneseq
        %v3843 = vshrl.u32 %v3842, 7
        %v3844 = vsub.s32 %v3841, %v3843
        %v3845 = vrot.slane %v3831, %v3844
        %3846 = vrot.lane.b32.xlu0 %v3845, 64
        %v3847 = vpop.permute.xlu0 %3846
        %3849 = vst.msk [vmem:[#allocation2 + $0xe] sm:$0x1] %vm3538, %v3847
        %v3850 = vcombine.high %v3838, %v3838
        %3852 = vst.msk [vmem:[#allocation2 + $0xf] sm:$0x1] %vm3508, %v3850
        %v3853 = vcombine.high %v3845, %v3845
        %3854 = vrot.lane.b32.xlu0 %v3853, 64
        %v3855 = vpop.permute.xlu0 %3854
        %3857 = vst.msk [vmem:[#allocation2 + $0xf] sm:$0x1] %vm3538, %v3855
        %v3858 = vcombine.high %v3501, %v3501
        %v3860 = vunpack.c.l.s4 1966171168
        %v3861 = vunpack.c.0.s8 %v3860
        %v3862 = vlaneseq
        %v3863 = vshrl.u32 %v3862, 7
        %v3864 = vsub.s32 %v3861, %v3863
        %v3865 = vrot.slane %v3858, %v3864
        %v3867 = vunpack.c.l.s4 1966171168
        %v3868 = vunpack.c.0.s8 %v3867
        %v3869 = vlaneseq
        %v3870 = vshrl.u32 %v3869, 7
        %v3871 = vsub.s32 %v3868, %v3870
        %v3872 = vrot.slane %v3865, %v3871
        %3874 = vst.msk [vmem:[#allocation2 + $0x10] sm:$0x1] %vm3508, %v3872
        %v3875 = vcombine.high %v3865, %v3865
        %v3877 = vunpack.c.l.s4 1966171168
        %v3878 = vunpack.c.0.s8 %v3877
        %v3879 = vlaneseq
        %v3880 = vshrl.u32 %v3879, 7
        %v3881 = vsub.s32 %v3878, %v3880
        %v3882 = vrot.slane %v3875, %v3881
        %3883 = vrot.lane.b32.xlu0 %v3882, 64
        %v3884 = vpop.permute.xlu0 %3883
        %3886 = vst.msk [vmem:[#allocation2 + $0x10] sm:$0x1] %vm3538, %v3884
        %v3887 = vcombine.high %v3872, %v3872
        %3889 = vst.msk [vmem:[#allocation2 + $0x11] sm:$0x1] %vm3508, %v3887
        %v3892 = vunpack.c.l.s4 1966171168
        %v3893 = vunpack.c.0.s8 %v3892
        %v3894 = vlaneseq
        %v3895 = vshrl.u32 %v3894, 7
        %v3896 = vsub.s32 %v3893, %v3895
        %v3897 = vrot.slane %v3502, %v3896
        %v3899 = vunpack.c.l.s4 1966171168
        %v3900 = vunpack.c.0.s8 %v3899
        %v3901 = vlaneseq
        %v3902 = vshrl.u32 %v3901, 7
        %v3903 = vsub.s32 %v3900, %v3902
        %v3904 = vrot.slane %v3897, %v3903
        %v3905 = vcombine.high %v3904, %v3904
        %3906 = vrot.lane.b32.xlu0 %v3905, 64
        %v3907 = vpop.permute.xlu0 %3906
        %3909 = vst.msk [vmem:[#allocation2 + $0x11] sm:$0x1] %vm3538, %v3907
        %v3910 = vcombine.high %v3897, %v3897
        %v3912 = vunpack.c.l.s4 1966171168
        %v3913 = vunpack.c.0.s8 %v3912
        %v3914 = vlaneseq
        %v3915 = vshrl.u32 %v3914, 7
        %v3916 = vsub.s32 %v3913, %v3915
        %v3917 = vrot.slane %v3910, %v3916
        %v3918 = vcombine.high %v3917, %v3917
        %3920 = vst.msk [vmem:[#allocation2 + $0x12] sm:$0x1] %vm3508, %v3918
        %v3921 = vcombine.high %v3502, %v3502
        %v3923 = vunpack.c.l.s4 1966171168
        %v3924 = vunpack.c.0.s8 %v3923
        %v3925 = vlaneseq
        %v3926 = vshrl.u32 %v3925, 7
        %v3927 = vsub.s32 %v3924, %v3926
        %v3928 = vrot.slane %v3921, %v3927
        %v3930 = vunpack.c.l.s4 1966171168
        %v3931 = vunpack.c.0.s8 %v3930
        %v3932 = vlaneseq
        %v3933 = vshrl.u32 %v3932, 7
        %v3934 = vsub.s32 %v3931, %v3933
        %v3935 = vrot.slane %v3928, %v3934
        %3936 = vrot.lane.b32.xlu0 %v3935, 64
        %v3937 = vpop.permute.xlu0 %3936
        %3939 = vst.msk [vmem:[#allocation2 + $0x12] sm:$0x1] %vm3538, %v3937
        %v3940 = vcombine.high %v3928, %v3928
        %v3942 = vunpack.c.l.s4 1966171168
        %v3943 = vunpack.c.0.s8 %v3942
        %v3944 = vlaneseq
        %v3945 = vshrl.u32 %v3944, 7
        %v3946 = vsub.s32 %v3943, %v3945
        %v3947 = vrot.slane %v3940, %v3946
        %3949 = vst.msk [vmem:[#allocation2 + $0x13] sm:$0x1] %vm3508, %v3947
        %v3950 = vcombine.high %v3935, %v3935
        %3951 = vrot.lane.b32.xlu0 %v3950, 64
        %v3952 = vpop.permute.xlu0 %3951
        %3954 = vst.msk [vmem:[#allocation2 + $0x13] sm:$0x1] %vm3538, %v3952
        %v3955 = vcombine.high %v3947, %v3947
        %3957 = vst.msk [vmem:[#allocation2 + $0x14] sm:$0x1] %vm3508, %v3955
        %v3960 = vunpack.c.l.s4 1966171168
        %v3961 = vunpack.c.0.s8 %v3960
        %v3962 = vlaneseq
        %v3963 = vshrl.u32 %v3962, 7
        %v3964 = vsub.s32 %v3961, %v3963
        %v3965 = vrot.slane %v3503, %v3964
        %v3967 = vunpack.c.l.s4 1966171168
        %v3968 = vunpack.c.0.s8 %v3967
        %v3969 = vlaneseq
        %v3970 = vshrl.u32 %v3969, 7
        %v3971 = vsub.s32 %v3968, %v3970
        %v3972 = vrot.slane %v3965, %v3971
        %3973 = vrot.lane.b32.xlu0 %v3972, 64
        %v3974 = vpop.permute.xlu0 %3973
        %3976 = vst.msk [vmem:[#allocation2 + $0x14] sm:$0x1] %vm3538, %v3974
        %v3977 = vcombine.high %v3503, %v3503
        %v3979 = vunpack.c.l.s4 1966171168
        %v3980 = vunpack.c.0.s8 %v3979
        %v3981 = vlaneseq
        %v3982 = vshrl.u32 %v3981, 7
        %v3983 = vsub.s32 %v3980, %v3982
        %v3984 = vrot.slane %v3977, %v3983
        %v3986 = vunpack.c.l.s4 1966171168
        %v3987 = vunpack.c.0.s8 %v3986
        %v3988 = vlaneseq
        %v3989 = vshrl.u32 %v3988, 7
        %v3990 = vsub.s32 %v3987, %v3989
        %v3991 = vrot.slane %v3984, %v3990
        %3993 = vst.msk [vmem:[#allocation2 + $0x15] sm:$0x1] %vm3508, %v3991
        %v3994 = vcombine.high %v3984, %v3984
        %v3996 = vunpack.c.l.s4 1966171168
        %v3997 = vunpack.c.0.s8 %v3996
        %v3998 = vlaneseq
        %v3999 = vshrl.u32 %v3998, 7
        %v4000 = vsub.s32 %v3997, %v3999
        %v4001 = vrot.slane %v3994, %v4000
        %4002 = vrot.lane.b32.xlu0 %v4001, 64
        %v4003 = vpop.permute.xlu0 %4002
        %4005 = vst.msk [vmem:[#allocation2 + $0x15] sm:$0x1] %vm3538, %v4003
        %v4006 = vcombine.high %v3991, %v3991
        %4008 = vst.msk [vmem:[#allocation2 + $0x16] sm:$0x1] %vm3508, %v4006
        %v4009 = vcombine.high %v4001, %v4001
        %4010 = vrot.lane.b32.xlu0 %v4009, 64
        %v4011 = vpop.permute.xlu0 %4010
        %4013 = vst.msk [vmem:[#allocation2 + $0x16] sm:$0x1] %vm3538, %v4011
        %4014 = vst.msk [vmem:[#allocation2 + $0x17] sm:$0x1] %vm3508, %v3504
        %v4017 = vunpack.c.l.s4 1966171168
        %v4018 = vunpack.c.0.s8 %v4017
        %v4019 = vlaneseq
        %v4020 = vshrl.u32 %v4019, 7
        %v4021 = vsub.s32 %v4018, %v4020
        %v4022 = vrot.slane %v3504, %v4021
        %v4023 = vcombine.high %v4022, %v4022
        %v4025 = vunpack.c.l.s4 1966171168
        %v4026 = vunpack.c.0.s8 %v4025
        %v4027 = vlaneseq
        %v4028 = vshrl.u32 %v4027, 7
        %v4029 = vsub.s32 %v4026, %v4028
        %v4030 = vrot.slane %v4022, %v4029
        %v4032 = vunpack.c.l.s4 1966171168
        %v4033 = vunpack.c.0.s8 %v4032
        %v4034 = vlaneseq
        %v4035 = vshrl.u32 %v4034, 7
        %v4036 = vsub.s32 %v4033, %v4035
        %v4037 = vrot.slane %v4023, %v4036
        %4038 = vrot.lane.b32.xlu0 %v4037, 64
        %v4039 = vpop.permute.xlu0 %4038
        %4041 = vst.msk [vmem:[#allocation2 + $0x17] sm:$0x1] %vm3538, %v4039
        %v4042 = vcombine.high %v4030, %v4030
        %4044 = vst.msk [vmem:[#allocation2 + $0x18] sm:$0x1] %vm3508, %v4042
        %v4045 = vld [vmem:[#allocation2] sm:$0xff]
        %v4046 = vld [vmem:[#allocation2 + $0x8] sm:$0xff]
        %v4047 = vld [vmem:[#allocation2 + $0x10] sm:$0xff]
        %v4048 = vld [vmem:[#allocation2 + $0x18] sm:$0x1]
        %v4053 = vlaneseq
        %v4054 = vshrl.u32 %v4053, 7
        %v4055 = vsub.s32 0, %v4054
        %v4056 = vrot.slane %v4045, %v4055
        %v4057 = vlaneseq
        %v4058 = vshrl.u32 %v4057, 7
        %v4059 = vsub.s32 1, %v4058
        %v4060 = vrot.slane %v4045, %v4059
        %v4061 = vlaneseq
        %v4062 = vshrl.u32 %v4061, 7
        %v4063 = vsub.s32 2, %v4062
        %v4064 = vrot.slane %v4045, %v4063
        %v4065 = vlaneseq
        %v4066 = vshrl.u32 %v4065, 7
        %v4067 = vsub.s32 3, %v4066
        %v4068 = vrot.slane %v4045, %v4067
        %v4069 = vlaneseq
        %v4070 = vshrl.u32 %v4069, 7
        %v4071 = vsub.s32 4, %v4070
        %v4072 = vrot.slane %v4045, %v4071
        %v4073 = vlaneseq
        %v4074 = vshrl.u32 %v4073, 7
        %v4075 = vsub.s32 5, %v4074
        %v4076 = vrot.slane %v4045, %v4075
        %v4077 = vlaneseq
        %v4078 = vshrl.u32 %v4077, 7
        %v4079 = vsub.s32 6, %v4078
        %v4080 = vrot.slane %v4045, %v4079
        %v4081 = vlaneseq
        %v4082 = vshrl.u32 %v4081, 7
        %v4083 = vsub.s32 7, %v4082
        %v4084 = vrot.slane %v4045, %v4083
        %v4085 = vlaneseq
        %v4086 = vshrl.u32 %v4085, 7
        %v4087 = vsub.s32 0, %v4086
        %v4088 = vrot.slane %v4046, %v4087
        %v4089 = vlaneseq
        %v4090 = vshrl.u32 %v4089, 7
        %v4091 = vsub.s32 1, %v4090
        %v4092 = vrot.slane %v4046, %v4091
        %v4093 = vlaneseq
        %v4094 = vshrl.u32 %v4093, 7
        %v4095 = vsub.s32 2, %v4094
        %v4096 = vrot.slane %v4046, %v4095
        %v4097 = vlaneseq
        %v4098 = vshrl.u32 %v4097, 7
        %v4099 = vsub.s32 3, %v4098
        %v4100 = vrot.slane %v4046, %v4099
        %v4101 = vlaneseq
        %v4102 = vshrl.u32 %v4101, 7
        %v4103 = vsub.s32 4, %v4102
        %v4104 = vrot.slane %v4046, %v4103
        %v4105 = vlaneseq
        %v4106 = vshrl.u32 %v4105, 7
        %v4107 = vsub.s32 5, %v4106
        %v4108 = vrot.slane %v4046, %v4107
        %v4109 = vlaneseq
        %v4110 = vshrl.u32 %v4109, 7
        %v4111 = vsub.s32 6, %v4110
        %v4112 = vrot.slane %v4046, %v4111
        %v4113 = vlaneseq
        %v4114 = vshrl.u32 %v4113, 7
        %v4115 = vsub.s32 7, %v4114
        %v4116 = vrot.slane %v4046, %v4115
        %v4117 = vlaneseq
        %v4118 = vshrl.u32 %v4117, 7
        %v4119 = vsub.s32 0, %v4118
        %v4120 = vrot.slane %v4047, %v4119
        %v4121 = vlaneseq
        %v4122 = vshrl.u32 %v4121, 7
        %v4123 = vsub.s32 1, %v4122
        %v4124 = vrot.slane %v4047, %v4123
        %v4125 = vlaneseq
        %v4126 = vshrl.u32 %v4125, 7
        %v4127 = vsub.s32 2, %v4126
        %v4128 = vrot.slane %v4047, %v4127
        %v4129 = vlaneseq
        %v4130 = vshrl.u32 %v4129, 7
        %v4131 = vsub.s32 3, %v4130
        %v4132 = vrot.slane %v4047, %v4131
        %v4133 = vlaneseq
        %v4134 = vshrl.u32 %v4133, 7
        %v4135 = vsub.s32 4, %v4134
        %v4136 = vrot.slane %v4047, %v4135
        %v4137 = vlaneseq
        %v4138 = vshrl.u32 %v4137, 7
        %v4139 = vsub.s32 5, %v4138
        %v4140 = vrot.slane %v4047, %v4139
        %v4141 = vlaneseq
        %v4142 = vshrl.u32 %v4141, 7
        %v4143 = vsub.s32 6, %v4142
        %v4144 = vrot.slane %v4047, %v4143
        %v4145 = vlaneseq
        %v4146 = vshrl.u32 %v4145, 7
        %v4147 = vsub.s32 7, %v4146
        %v4148 = vrot.slane %v4047, %v4147
        %v4149 = vlaneseq
        %v4150 = vshrl.u32 %v4149, 7
        %v4151 = vsub.s32 0, %v4150
        %v4152 = vrot.slane %v4048, %v4151
        %v4178 = vpack.c.bf16 %v4056, %v4056
        %v4179 = vpack.c.bf16 %v4060, %v4060
        %v4180 = vpack.c.bf16 %v4064, %v4064
        %v4181 = vpack.c.bf16 %v4068, %v4068
        %v4182 = vpack.c.bf16 %v4072, %v4072
        %v4183 = vpack.c.bf16 %v4076, %v4076
        %v4184 = vpack.c.bf16 %v4080, %v4080
        %v4185 = vpack.c.bf16 %v4084, %v4084
        %v4186 = vpack.c.bf16 %v4088, %v4088
        %v4187 = vpack.c.bf16 %v4092, %v4092
        %v4188 = vpack.c.bf16 %v4096, %v4096
        %v4189 = vpack.c.bf16 %v4100, %v4100
        %v4190 = vpack.c.bf16 %v4104, %v4104
        %v4191 = vpack.c.bf16 %v4108, %v4108
        %v4192 = vpack.c.bf16 %v4112, %v4112
        %v4193 = vpack.c.bf16 %v4116, %v4116
        %v4194 = vpack.c.bf16 %v4120, %v4120
        %v4195 = vpack.c.bf16 %v4124, %v4124
        %v4196 = vpack.c.bf16 %v4128, %v4128
        %v4197 = vpack.c.bf16 %v4132, %v4132
        %v4198 = vpack.c.bf16 %v4136, %v4136
        %v4199 = vpack.c.bf16 %v4140, %v4140
        %v4200 = vpack.c.bf16 %v4144, %v4144
        %v4201 = vpack.c.bf16 %v4148, %v4148
        %v4202 = vpack.c.bf16 %v4152, %v4152
        %v4203 = vld [vmem:[%s7] sm:$0xff]
        %v4204 = vld [vmem:[%s7 + $0x8] sm:$0xff]
        %v4205 = vld [vmem:[%s7 + $0x10] sm:$0xff]
        %v4206 = vld [vmem:[%s7 + $0x18] sm:$0xff]
        %v4207 = vld [vmem:[%s7 + $0x20] sm:$0xff]
        %v4208 = vld [vmem:[%s7 + $0x28] sm:$0xff]
        %v4209 = vld [vmem:[%s7 + $0x30] sm:$0xff]
        %v4210 = vld [vmem:[%s7 + $0x38] sm:$0xff]
        %v4211 = vld [vmem:[%s7 + $0x40] sm:$0xff]
        %v4212 = vld [vmem:[%s7 + $0x48] sm:$0xff]
        %v4213 = vld [vmem:[%s7 + $0x50] sm:$0xff]
        %v4214 = vld [vmem:[%s7 + $0x58] sm:$0xff]
        %v4215 = vld [vmem:[%s7 + $0x60] sm:$0xff]
        %v4216 = vld [vmem:[%s7 + $0x68] sm:$0xff]
        %v4217 = vld [vmem:[%s7 + $0x70] sm:$0xff]
        %v4218 = vld [vmem:[%s7 + $0x78] sm:$0xff]
        %v4219 = vld [vmem:[%s7 + $0x80] sm:$0xff]
        %v4220 = vld [vmem:[%s7 + $0x88] sm:$0xff]
        %v4221 = vld [vmem:[%s7 + $0x90] sm:$0xff]
        %v4222 = vld [vmem:[%s7 + $0x98] sm:$0xff]
        %v4223 = vld [vmem:[%s7 + $0xa0] sm:$0xff]
        %v4224 = vld [vmem:[%s7 + $0xa8] sm:$0xff]
        %v4225 = vld [vmem:[%s7 + $0xb0] sm:$0xff]
        %v4226 = vld [vmem:[%s7 + $0xb8] sm:$0xff]
        %v4227 = vld [vmem:[%s7 + $0xc0] sm:$0xff]
        %v4228 = vld [vmem:[%s7 + $0xc8] sm:$0xff]
        %v4229 = vld [vmem:[%s7 + $0xd0] sm:$0xff]
        %v4230 = vld [vmem:[%s7 + $0xd8] sm:$0xff]
        %v4231 = vld [vmem:[%s7 + $0xe0] sm:$0xff]
        %v4232 = vld [vmem:[%s7 + $0xe8] sm:$0xff]
        %v4233 = vld [vmem:[%s7 + $0xf0] sm:$0xff]
        %v4234 = vld [vmem:[%s7 + $0xf8] sm:$0xff]
        %v4235 = vld [vmem:[%s7 + $0x100] sm:$0xff]
        %v4236 = vld [vmem:[%s7 + $0x108] sm:$0xff]
        %v4237 = vld [vmem:[%s7 + $0x110] sm:$0xff]
        %v4238 = vld [vmem:[%s7 + $0x118] sm:$0xff]
        %v4239 = vld [vmem:[%s7 + $0x120] sm:$0xff]
        %v4240 = vld [vmem:[%s7 + $0x128] sm:$0xff]
        %v4241 = vld [vmem:[%s7 + $0x130] sm:$0xff]
        %v4242 = vld [vmem:[%s7 + $0x138] sm:$0xff]
        %v4243 = vld [vmem:[%s7 + $0x140] sm:$0xff]
        %v4244 = vld [vmem:[%s7 + $0x148] sm:$0xff]
        %v4245 = vld [vmem:[%s7 + $0x150] sm:$0xff]
        %v4246 = vld [vmem:[%s7 + $0x158] sm:$0xff]
        %v4247 = vld [vmem:[%s7 + $0x160] sm:$0xff]
        %v4248 = vld [vmem:[%s7 + $0x168] sm:$0xff]
        %v4249 = vld [vmem:[%s7 + $0x170] sm:$0xff]
        %v4250 = vld [vmem:[%s7 + $0x178] sm:$0xff]
        %v4251 = vld [vmem:[%s7 + $0x180] sm:$0xff]
        %v4252 = vld [vmem:[%s7 + $0x188] sm:$0xff]
        %v4253 = vld [vmem:[%s7 + $0x190] sm:$0xff]
        %v4254 = vld [vmem:[%s7 + $0x198] sm:$0xff]
        %v4255 = vld [vmem:[%s7 + $0x1a0] sm:$0xff]
        %v4256 = vld [vmem:[%s7 + $0x1a8] sm:$0xff]
        %v4257 = vld [vmem:[%s7 + $0x1b0] sm:$0xff]
        %v4258 = vld [vmem:[%s7 + $0x1b8] sm:$0xff]
        %v4259 = vld [vmem:[%s7 + $0x1c0] sm:$0xff]
        %v4260 = vld [vmem:[%s7 + $0x1c8] sm:$0xff]
        %v4261 = vld [vmem:[%s7 + $0x1d0] sm:$0xff]
        %v4262 = vld [vmem:[%s7 + $0x1d8] sm:$0xff]
        %v4263 = vld [vmem:[%s7 + $0x1e0] sm:$0xff]
        %v4264 = vld [vmem:[%s7 + $0x1e8] sm:$0xff]
        %v4265 = vld [vmem:[%s7 + $0x1f0] sm:$0xff]
        %v4266 = vld [vmem:[%s7 + $0x1f8] sm:$0xff]
        %v4267 = vld [vmem:[%s7 + $0x200] sm:$0xff]
        %v4268 = vld [vmem:[%s7 + $0x208] sm:$0xff]
        %v4269 = vld [vmem:[%s7 + $0x210] sm:$0xff]
        %v4270 = vld [vmem:[%s7 + $0x218] sm:$0xff]
        %v4271 = vld [vmem:[%s7 + $0x220] sm:$0xff]
        %v4272 = vld [vmem:[%s7 + $0x228] sm:$0xff]
        %v4273 = vld [vmem:[%s7 + $0x230] sm:$0xff]
        %v4274 = vld [vmem:[%s7 + $0x238] sm:$0xff]
        %v4275 = vld [vmem:[%s7 + $0x240] sm:$0xff]
        %v4276 = vld [vmem:[%s7 + $0x248] sm:$0xff]
        %v4277 = vld [vmem:[%s7 + $0x250] sm:$0xff]
        %v4278 = vld [vmem:[%s7 + $0x258] sm:$0xff]
        %v4279 = vld [vmem:[%s7 + $0x260] sm:$0xff]
        %v4280 = vld [vmem:[%s7 + $0x268] sm:$0xff]
        %v4281 = vld [vmem:[%s7 + $0x270] sm:$0xff]
        %v4282 = vld [vmem:[%s7 + $0x278] sm:$0xff]
        %v4283 = vld [vmem:[%s7 + $0x280] sm:$0xff]
        %v4284 = vld [vmem:[%s7 + $0x288] sm:$0xff]
        %v4285 = vld [vmem:[%s7 + $0x290] sm:$0xff]
        %v4286 = vld [vmem:[%s7 + $0x298] sm:$0xff]
        %v4287 = vld [vmem:[%s7 + $0x2a0] sm:$0xff]
        %v4288 = vld [vmem:[%s7 + $0x2a8] sm:$0xff]
        %v4289 = vld [vmem:[%s7 + $0x2b0] sm:$0xff]
        %v4290 = vld [vmem:[%s7 + $0x2b8] sm:$0xff]
        %v4291 = vld [vmem:[%s7 + $0x2c0] sm:$0xff]
        %v4292 = vld [vmem:[%s7 + $0x2c8] sm:$0xff]
        %v4293 = vld [vmem:[%s7 + $0x2d0] sm:$0xff]
        %v4294 = vld [vmem:[%s7 + $0x2d8] sm:$0xff]
        %v4295 = vld [vmem:[%s7 + $0x2e0] sm:$0xff]
        %v4296 = vld [vmem:[%s7 + $0x2e8] sm:$0xff]
        %v4297 = vld [vmem:[%s7 + $0x2f0] sm:$0xff]
        %v4298 = vld [vmem:[%s7 + $0x2f8] sm:$0xff]
        %v4299 = vld [vmem:[%s7 + $0x300] sm:$0xff]
        %v4300 = vld [vmem:[%s7 + $0x308] sm:$0xff]
        %v4301 = vld [vmem:[%s7 + $0x310] sm:$0xff]
        %v4302 = vld [vmem:[%s7 + $0x318] sm:$0xff]
        %v4303 = vld [vmem:[%s7 + $0x320] sm:$0xff]
        %v4304 = vld [vmem:[%s7 + $0x328] sm:$0xff]
        %v4305 = vld [vmem:[%s7 + $0x330] sm:$0xff]
        %v4306 = vld [vmem:[%s7 + $0x338] sm:$0xff]
        %v4307 = vld [vmem:[%s7 + $0x340] sm:$0xff]
        %v4308 = vld [vmem:[%s7 + $0x348] sm:$0xff]
        %v4309 = vld [vmem:[%s7 + $0x350] sm:$0xff]
        %v4310 = vld [vmem:[%s7 + $0x358] sm:$0xff]
        %v4311 = vld [vmem:[%s7 + $0x360] sm:$0xff]
        %v4312 = vld [vmem:[%s7 + $0x368] sm:$0xff]
        %v4313 = vld [vmem:[%s7 + $0x370] sm:$0xff]
        %v4314 = vld [vmem:[%s7 + $0x378] sm:$0xff]
        %v4315 = vld [vmem:[%s7 + $0x380] sm:$0xff]
        %v4316 = vld [vmem:[%s7 + $0x388] sm:$0xff]
        %v4317 = vld [vmem:[%s7 + $0x390] sm:$0xff]
        %v4318 = vld [vmem:[%s7 + $0x398] sm:$0xff]
        %v4319 = vld [vmem:[%s7 + $0x3a0] sm:$0xff]
        %v4320 = vld [vmem:[%s7 + $0x3a8] sm:$0xff]
        %v4321 = vld [vmem:[%s7 + $0x3b0] sm:$0xff]
        %v4322 = vld [vmem:[%s7 + $0x3b8] sm:$0xff]
        %v4323 = vld [vmem:[%s7 + $0x3c0] sm:$0xff]
        %v4324 = vld [vmem:[%s7 + $0x3c8] sm:$0xff]
        %v4325 = vld [vmem:[%s7 + $0x3d0] sm:$0xff]
        %v4326 = vld [vmem:[%s7 + $0x3d8] sm:$0xff]
        %v4327 = vld [vmem:[%s7 + $0x3e0] sm:$0xff]
        %v4328 = vld [vmem:[%s7 + $0x3e8] sm:$0xff]
        %v4329 = vld [vmem:[%s7 + $0x3f0] sm:$0xff]
        %v4330 = vld [vmem:[%s7 + $0x3f8] sm:$0xff]
        %v4331 = vld [vmem:[%s7 + $0x400] sm:$0xff]
        %v4332 = vld [vmem:[%s7 + $0x408] sm:$0xff]
        %v4333 = vld [vmem:[%s7 + $0x410] sm:$0xff]
        %v4334 = vld [vmem:[%s7 + $0x418] sm:$0xff]
        %v4335 = vld [vmem:[%s7 + $0x420] sm:$0xff]
        %v4336 = vld [vmem:[%s7 + $0x428] sm:$0xff]
        %v4337 = vld [vmem:[%s7 + $0x430] sm:$0xff]
        %v4338 = vld [vmem:[%s7 + $0x438] sm:$0xff]
        %v4339 = vld [vmem:[%s7 + $0x440] sm:$0xff]
        %v4340 = vld [vmem:[%s7 + $0x448] sm:$0xff]
        %v4341 = vld [vmem:[%s7 + $0x450] sm:$0xff]
        %v4342 = vld [vmem:[%s7 + $0x458] sm:$0xff]
        %v4343 = vld [vmem:[%s7 + $0x460] sm:$0xff]
        %v4344 = vld [vmem:[%s7 + $0x468] sm:$0xff]
        %v4345 = vld [vmem:[%s7 + $0x470] sm:$0xff]
        %v4346 = vld [vmem:[%s7 + $0x478] sm:$0xff]
        %v4347 = vld [vmem:[%s7 + $0x480] sm:$0xff]
        %v4348 = vld [vmem:[%s7 + $0x488] sm:$0xff]
        %v4349 = vld [vmem:[%s7 + $0x490] sm:$0xff]
        %v4350 = vld [vmem:[%s7 + $0x498] sm:$0xff]
        %v4351 = vld [vmem:[%s7 + $0x4a0] sm:$0xff]
        %v4352 = vld [vmem:[%s7 + $0x4a8] sm:$0xff]
        %v4353 = vld [vmem:[%s7 + $0x4b0] sm:$0xff]
        %v4354 = vld [vmem:[%s7 + $0x4b8] sm:$0xff]
        %v4355 = vld [vmem:[%s7 + $0x4c0] sm:$0xff]
        %v4356 = vld [vmem:[%s7 + $0x4c8] sm:$0xff]
        %v4357 = vld [vmem:[%s7 + $0x4d0] sm:$0xff]
        %v4358 = vld [vmem:[%s7 + $0x4d8] sm:$0xff]
        %v4359 = vld [vmem:[%s7 + $0x4e0] sm:$0xff]
        %v4360 = vld [vmem:[%s7 + $0x4e8] sm:$0xff]
        %v4361 = vld [vmem:[%s7 + $0x4f0] sm:$0xff]
        %v4362 = vld [vmem:[%s7 + $0x4f8] sm:$0xff]
        %v4363 = vld [vmem:[%s7 + $0x500] sm:$0xff]
        %v4364 = vld [vmem:[%s7 + $0x508] sm:$0xff]
        %v4365 = vld [vmem:[%s7 + $0x510] sm:$0xff]
        %v4366 = vld [vmem:[%s7 + $0x518] sm:$0xff]
        %v4367 = vld [vmem:[%s7 + $0x520] sm:$0xff]
        %v4368 = vld [vmem:[%s7 + $0x528] sm:$0xff]
        %v4369 = vld [vmem:[%s7 + $0x530] sm:$0xff]
        %v4370 = vld [vmem:[%s7 + $0x538] sm:$0xff]
        %v4371 = vld [vmem:[%s7 + $0x540] sm:$0xff]
        %v4372 = vld [vmem:[%s7 + $0x548] sm:$0xff]
        %v4373 = vld [vmem:[%s7 + $0x550] sm:$0xff]
        %v4374 = vld [vmem:[%s7 + $0x558] sm:$0xff]
        %v4375 = vld [vmem:[%s7 + $0x560] sm:$0xff]
        %v4376 = vld [vmem:[%s7 + $0x568] sm:$0xff]
        %v4377 = vld [vmem:[%s7 + $0x570] sm:$0xff]
        %v4378 = vld [vmem:[%s7 + $0x578] sm:$0xff]
        %v4379 = vld [vmem:[%s7 + $0x580] sm:$0xff]
        %v4380 = vld [vmem:[%s7 + $0x588] sm:$0xff]
        %v4381 = vld [vmem:[%s7 + $0x590] sm:$0xff]
        %v4382 = vld [vmem:[%s7 + $0x598] sm:$0xff]
        %v4383 = vld [vmem:[%s7 + $0x5a0] sm:$0xff]
        %v4384 = vld [vmem:[%s7 + $0x5a8] sm:$0xff]
        %v4385 = vld [vmem:[%s7 + $0x5b0] sm:$0xff]
        %v4386 = vld [vmem:[%s7 + $0x5b8] sm:$0xff]
        %v4387 = vld [vmem:[%s7 + $0x5c0] sm:$0xff]
        %v4388 = vld [vmem:[%s7 + $0x5c8] sm:$0xff]
        %v4389 = vld [vmem:[%s7 + $0x5d0] sm:$0xff]
        %v4390 = vld [vmem:[%s7 + $0x5d8] sm:$0xff]
        %v4391 = vld [vmem:[%s7 + $0x5e0] sm:$0xff]
        %v4392 = vld [vmem:[%s7 + $0x5e8] sm:$0xff]
        %v4393 = vld [vmem:[%s7 + $0x5f0] sm:$0xff]
        %v4394 = vld [vmem:[%s7 + $0x5f8] sm:$0xff]
        %v4395 = vld [vmem:[%s7 + $0x600] sm:$0xff]
        %v4396 = vld [vmem:[%s7 + $0x608] sm:$0xff]
        %v4397 = vld [vmem:[%s7 + $0x610] sm:$0xff]
        %v4398 = vld [vmem:[%s7 + $0x618] sm:$0xff]
        %v4399 = vld [vmem:[%s7 + $0x620] sm:$0xff]
        %v4400 = vld [vmem:[%s7 + $0x628] sm:$0xff]
        %v4401 = vld [vmem:[%s7 + $0x630] sm:$0xff]
        %v4402 = vld [vmem:[%s7 + $0x638] sm:$0xff]
        %v4403 = vld [vmem:[%s7 + $0x640] sm:$0xff]
        %v4404 = vld [vmem:[%s7 + $0x648] sm:$0xff]
        %v4405 = vld [vmem:[%s7 + $0x650] sm:$0xff]
        %v4406 = vld [vmem:[%s7 + $0x658] sm:$0xff]
        %v4407 = vld [vmem:[%s7 + $0x660] sm:$0xff]
        %v4408 = vld [vmem:[%s7 + $0x668] sm:$0xff]
        %v4409 = vld [vmem:[%s7 + $0x670] sm:$0xff]
        %v4410 = vld [vmem:[%s7 + $0x678] sm:$0xff]
        %v4411 = vld [vmem:[%s7 + $0x680] sm:$0xff]
        %v4412 = vld [vmem:[%s7 + $0x688] sm:$0xff]
        %v4413 = vld [vmem:[%s7 + $0x690] sm:$0xff]
        %v4414 = vld [vmem:[%s7 + $0x698] sm:$0xff]
        %v4415 = vld [vmem:[%s7 + $0x6a0] sm:$0xff]
        %v4416 = vld [vmem:[%s7 + $0x6a8] sm:$0xff]
        %v4417 = vld [vmem:[%s7 + $0x6b0] sm:$0xff]
        %v4418 = vld [vmem:[%s7 + $0x6b8] sm:$0xff]
        %v4419 = vld [vmem:[%s7 + $0x6c0] sm:$0xff]
        %v4420 = vld [vmem:[%s7 + $0x6c8] sm:$0xff]
        %v4421 = vld [vmem:[%s7 + $0x6d0] sm:$0xff]
        %v4422 = vld [vmem:[%s7 + $0x6d8] sm:$0xff]
        %v4423 = vld [vmem:[%s7 + $0x6e0] sm:$0xff]
        %v4424 = vld [vmem:[%s7 + $0x6e8] sm:$0xff]
        %v4425 = vld [vmem:[%s7 + $0x6f0] sm:$0xff]
        %v4426 = vld [vmem:[%s7 + $0x6f8] sm:$0xff]
        %v4427 = vld [vmem:[%s7 + $0x700] sm:$0xff]
        %v4428 = vld [vmem:[%s7 + $0x708] sm:$0xff]
        %v4429 = vld [vmem:[%s7 + $0x710] sm:$0xff]
        %v4430 = vld [vmem:[%s7 + $0x718] sm:$0xff]
        %v4431 = vld [vmem:[%s7 + $0x720] sm:$0xff]
        %v4432 = vld [vmem:[%s7 + $0x728] sm:$0xff]
        %v4433 = vld [vmem:[%s7 + $0x730] sm:$0xff]
        %v4434 = vld [vmem:[%s7 + $0x738] sm:$0xff]
        %v4435 = vld [vmem:[%s7 + $0x740] sm:$0xff]
        %v4436 = vld [vmem:[%s7 + $0x748] sm:$0xff]
        %v4437 = vld [vmem:[%s7 + $0x750] sm:$0xff]
        %v4438 = vld [vmem:[%s7 + $0x758] sm:$0xff]
        %v4439 = vld [vmem:[%s7 + $0x760] sm:$0xff]
        %v4440 = vld [vmem:[%s7 + $0x768] sm:$0xff]
        %v4441 = vld [vmem:[%s7 + $0x770] sm:$0xff]
        %v4442 = vld [vmem:[%s7 + $0x778] sm:$0xff]
        %v4443 = vld [vmem:[%s7 + $0x780] sm:$0xff]
        %v4444 = vld [vmem:[%s7 + $0x788] sm:$0xff]
        %v4445 = vld [vmem:[%s7 + $0x790] sm:$0xff]
        %v4446 = vld [vmem:[%s7 + $0x798] sm:$0xff]
        %v4447 = vld [vmem:[%s7 + $0x7a0] sm:$0xff]
        %v4448 = vld [vmem:[%s7 + $0x7a8] sm:$0xff]
        %v4449 = vld [vmem:[%s7 + $0x7b0] sm:$0xff]
        %v4450 = vld [vmem:[%s7 + $0x7b8] sm:$0xff]
        %v4451 = vld [vmem:[%s7 + $0x7c0] sm:$0xff]
        %v4452 = vld [vmem:[%s7 + $0x7c8] sm:$0xff]
        %v4453 = vld [vmem:[%s7 + $0x7d0] sm:$0xff]
        %v4454 = vld [vmem:[%s7 + $0x7d8] sm:$0xff]
        %v4455 = vld [vmem:[%s7 + $0x7e0] sm:$0xff]
        %v4456 = vld [vmem:[%s7 + $0x7e8] sm:$0xff]
        %v4457 = vld [vmem:[%s7 + $0x7f0] sm:$0xff]
        %v4458 = vld [vmem:[%s7 + $0x7f8] sm:$0xff]
        %v4459 = vld [vmem:[%s7 + $0x800] sm:$0xff]
        %v4460 = vld [vmem:[%s7 + $0x808] sm:$0xff]
        %v4461 = vld [vmem:[%s7 + $0x810] sm:$0xff]
        %v4462 = vld [vmem:[%s7 + $0x818] sm:$0xff]
        %v4463 = vld [vmem:[%s7 + $0x820] sm:$0xff]
        %v4464 = vld [vmem:[%s7 + $0x828] sm:$0xff]
        %v4465 = vld [vmem:[%s7 + $0x830] sm:$0xff]
        %v4466 = vld [vmem:[%s7 + $0x838] sm:$0xff]
        %v4467 = vld [vmem:[%s7 + $0x840] sm:$0xff]
        %v4468 = vld [vmem:[%s7 + $0x848] sm:$0xff]
        %v4469 = vld [vmem:[%s7 + $0x850] sm:$0xff]
        %v4470 = vld [vmem:[%s7 + $0x858] sm:$0xff]
        %v4471 = vld [vmem:[%s7 + $0x860] sm:$0xff]
        %v4472 = vld [vmem:[%s7 + $0x868] sm:$0xff]
        %v4473 = vld [vmem:[%s7 + $0x870] sm:$0xff]
        %v4474 = vld [vmem:[%s7 + $0x878] sm:$0xff]
        %v4475 = vld [vmem:[%s7 + $0x880] sm:$0xff]
        %v4476 = vld [vmem:[%s7 + $0x888] sm:$0xff]
        %v4477 = vld [vmem:[%s7 + $0x890] sm:$0xff]
        %v4478 = vld [vmem:[%s7 + $0x898] sm:$0xff]
        %v4479 = vld [vmem:[%s7 + $0x8a0] sm:$0xff]
        %v4480 = vld [vmem:[%s7 + $0x8a8] sm:$0xff]
        %v4481 = vld [vmem:[%s7 + $0x8b0] sm:$0xff]
        %v4482 = vld [vmem:[%s7 + $0x8b8] sm:$0xff]
        %v4483 = vld [vmem:[%s7 + $0x8c0] sm:$0xff]
        %v4484 = vld [vmem:[%s7 + $0x8c8] sm:$0xff]
        %v4485 = vld [vmem:[%s7 + $0x8d0] sm:$0xff]
        %v4486 = vld [vmem:[%s7 + $0x8d8] sm:$0xff]
        %v4487 = vld [vmem:[%s7 + $0x8e0] sm:$0xff]
        %v4488 = vld [vmem:[%s7 + $0x8e8] sm:$0xff]
        %v4489 = vld [vmem:[%s7 + $0x8f0] sm:$0xff]
        %v4490 = vld [vmem:[%s7 + $0x8f8] sm:$0xff]
        %v4491 = vld [vmem:[%s7 + $0x900] sm:$0xff]
        %v4492 = vld [vmem:[%s7 + $0x908] sm:$0xff]
        %v4493 = vld [vmem:[%s7 + $0x910] sm:$0xff]
        %v4494 = vld [vmem:[%s7 + $0x918] sm:$0xff]
        %v4495 = vld [vmem:[%s7 + $0x920] sm:$0xff]
        %v4496 = vld [vmem:[%s7 + $0x928] sm:$0xff]
        %v4497 = vld [vmem:[%s7 + $0x930] sm:$0xff]
        %v4498 = vld [vmem:[%s7 + $0x938] sm:$0xff]
        %v4499 = vld [vmem:[%s7 + $0x940] sm:$0xff]
        %v4500 = vld [vmem:[%s7 + $0x948] sm:$0xff]
        %v4501 = vld [vmem:[%s7 + $0x950] sm:$0xff]
        %v4502 = vld [vmem:[%s7 + $0x958] sm:$0xff]
        %v4503 = vld [vmem:[%s7 + $0x960] sm:$0xff]
        %v4504 = vld [vmem:[%s7 + $0x968] sm:$0xff]
        %v4505 = vld [vmem:[%s7 + $0x970] sm:$0xff]
        %v4506 = vld [vmem:[%s7 + $0x978] sm:$0xff]
        %v4507 = vld [vmem:[%s7 + $0x980] sm:$0xff]
        %v4508 = vld [vmem:[%s7 + $0x988] sm:$0xff]
        %v4509 = vld [vmem:[%s7 + $0x990] sm:$0xff]
        %v4510 = vld [vmem:[%s7 + $0x998] sm:$0xff]
        %v4511 = vld [vmem:[%s7 + $0x9a0] sm:$0xff]
        %v4512 = vld [vmem:[%s7 + $0x9a8] sm:$0xff]
        %v4513 = vld [vmem:[%s7 + $0x9b0] sm:$0xff]
        %v4514 = vld [vmem:[%s7 + $0x9b8] sm:$0xff]
        %v4515 = vld [vmem:[%s7 + $0x9c0] sm:$0xff]
        %v4516 = vld [vmem:[%s7 + $0x9c8] sm:$0xff]
        %v4517 = vld [vmem:[%s7 + $0x9d0] sm:$0xff]
        %v4518 = vld [vmem:[%s7 + $0x9d8] sm:$0xff]
        %v4519 = vld [vmem:[%s7 + $0x9e0] sm:$0xff]
        %v4520 = vld [vmem:[%s7 + $0x9e8] sm:$0xff]
        %v4521 = vld [vmem:[%s7 + $0x9f0] sm:$0xff]
        %v4522 = vld [vmem:[%s7 + $0x9f8] sm:$0xff]
        %v4523 = vld [vmem:[%s7 + $0xa00] sm:$0xff]
        %v4524 = vld [vmem:[%s7 + $0xa08] sm:$0xff]
        %v4525 = vld [vmem:[%s7 + $0xa10] sm:$0xff]
        %v4526 = vld [vmem:[%s7 + $0xa18] sm:$0xff]
        %v4527 = vld [vmem:[%s7 + $0xa20] sm:$0xff]
        %v4528 = vld [vmem:[%s7 + $0xa28] sm:$0xff]
        %v4529 = vld [vmem:[%s7 + $0xa30] sm:$0xff]
        %v4530 = vld [vmem:[%s7 + $0xa38] sm:$0xff]
        %v4531 = vld [vmem:[%s7 + $0xa40] sm:$0xff]
        %v4532 = vld [vmem:[%s7 + $0xa48] sm:$0xff]
        %v4533 = vld [vmem:[%s7 + $0xa50] sm:$0xff]
        %v4534 = vld [vmem:[%s7 + $0xa58] sm:$0xff]
        %v4535 = vld [vmem:[%s7 + $0xa60] sm:$0xff]
        %v4536 = vld [vmem:[%s7 + $0xa68] sm:$0xff]
        %v4537 = vld [vmem:[%s7 + $0xa70] sm:$0xff]
        %v4538 = vld [vmem:[%s7 + $0xa78] sm:$0xff]
        %v4539 = vld [vmem:[%s7 + $0xa80] sm:$0xff]
        %v4540 = vld [vmem:[%s7 + $0xa88] sm:$0xff]
        %v4541 = vld [vmem:[%s7 + $0xa90] sm:$0xff]
        %v4542 = vld [vmem:[%s7 + $0xa98] sm:$0xff]
        %v4543 = vld [vmem:[%s7 + $0xaa0] sm:$0xff]
        %v4544 = vld [vmem:[%s7 + $0xaa8] sm:$0xff]
        %v4545 = vld [vmem:[%s7 + $0xab0] sm:$0xff]
        %v4546 = vld [vmem:[%s7 + $0xab8] sm:$0xff]
        %v4547 = vld [vmem:[%s7 + $0xac0] sm:$0xff]
        %v4548 = vld [vmem:[%s7 + $0xac8] sm:$0xff]
        %v4549 = vld [vmem:[%s7 + $0xad0] sm:$0xff]
        %v4550 = vld [vmem:[%s7 + $0xad8] sm:$0xff]
        %v4551 = vld [vmem:[%s7 + $0xae0] sm:$0xff]
        %v4552 = vld [vmem:[%s7 + $0xae8] sm:$0xff]
        %v4553 = vld [vmem:[%s7 + $0xaf0] sm:$0xff]
        %v4554 = vld [vmem:[%s7 + $0xaf8] sm:$0xff]
        %v4555 = vld [vmem:[%s7 + $0xb00] sm:$0xff]
        %v4556 = vld [vmem:[%s7 + $0xb08] sm:$0xff]
        %v4557 = vld [vmem:[%s7 + $0xb10] sm:$0xff]
        %v4558 = vld [vmem:[%s7 + $0xb18] sm:$0xff]
        %v4559 = vld [vmem:[%s7 + $0xb20] sm:$0xff]
        %v4560 = vld [vmem:[%s7 + $0xb28] sm:$0xff]
        %v4561 = vld [vmem:[%s7 + $0xb30] sm:$0xff]
        %v4562 = vld [vmem:[%s7 + $0xb38] sm:$0xff]
        %v4563 = vld [vmem:[%s7 + $0xb40] sm:$0xff]
        %v4564 = vld [vmem:[%s7 + $0xb48] sm:$0xff]
        %v4565 = vld [vmem:[%s7 + $0xb50] sm:$0xff]
        %v4566 = vld [vmem:[%s7 + $0xb58] sm:$0xff]
        %v4567 = vld [vmem:[%s7 + $0xb60] sm:$0xff]
        %v4568 = vld [vmem:[%s7 + $0xb68] sm:$0xff]
        %v4569 = vld [vmem:[%s7 + $0xb70] sm:$0xff]
        %v4570 = vld [vmem:[%s7 + $0xb78] sm:$0xff]
        %v4571 = vld [vmem:[%s7 + $0xb80] sm:$0xff]
        %v4572 = vld [vmem:[%s7 + $0xb88] sm:$0xff]
        %v4573 = vld [vmem:[%s7 + $0xb90] sm:$0xff]
        %v4574 = vld [vmem:[%s7 + $0xb98] sm:$0xff]
        %v4575 = vld [vmem:[%s7 + $0xba0] sm:$0xff]
        %v4576 = vld [vmem:[%s7 + $0xba8] sm:$0xff]
        %v4577 = vld [vmem:[%s7 + $0xbb0] sm:$0xff]
        %v4578 = vld [vmem:[%s7 + $0xbb8] sm:$0xff]
        %v4579 = vld [vmem:[%s7 + $0xbc0] sm:$0xff]
        %v4580 = vld [vmem:[%s7 + $0xbc8] sm:$0xff]
        %v4581 = vld [vmem:[%s7 + $0xbd0] sm:$0xff]
        %v4582 = vld [vmem:[%s7 + $0xbd8] sm:$0xff]
        %v4583 = vld [vmem:[%s7 + $0xbe0] sm:$0xff]
        %v4584 = vld [vmem:[%s7 + $0xbe8] sm:$0xff]
        %v4585 = vld [vmem:[%s7 + $0xbf0] sm:$0xff]
        %v4586 = vld [vmem:[%s7 + $0xbf8] sm:$0xff]
        %v4587 = vld [vmem:[%s7 + $0xc00] sm:$0xff]
        %v4588 = vld [vmem:[%s7 + $0xc08] sm:$0xff]
        %v4589 = vld [vmem:[%s7 + $0xc10] sm:$0xff]
        %v4590 = vld [vmem:[%s7 + $0xc18] sm:$0xff]
        %v4591 = vld [vmem:[%s7 + $0xc20] sm:$0xff]
        %v4592 = vld [vmem:[%s7 + $0xc28] sm:$0xff]
        %v4593 = vld [vmem:[%s7 + $0xc30] sm:$0xff]
        %v4594 = vld [vmem:[%s7 + $0xc38] sm:$0xff]
        %v4595 = vld [vmem:[%s7 + $0xc40] sm:$0xff]
        %v4596 = vld [vmem:[%s7 + $0xc48] sm:$0xff]
        %v4597 = vld [vmem:[%s7 + $0xc50] sm:$0xff]
        %v4598 = vld [vmem:[%s7 + $0xc58] sm:$0xff]
        %v4599 = vld [vmem:[%s7 + $0xc60] sm:$0xff]
        %v4600 = vld [vmem:[%s7 + $0xc68] sm:$0xff]
        %v4601 = vld [vmem:[%s7 + $0xc70] sm:$0xff]
        %v4602 = vld [vmem:[%s7 + $0xc78] sm:$0xff]
        %v4603 = vld [vmem:[%s7 + $0xc80] sm:$0xff]
        %v4604 = vld [vmem:[%s7 + $0xc88] sm:$0xff]
        %v4605 = vld [vmem:[%s7 + $0xc90] sm:$0xff]
        %v4606 = vld [vmem:[%s7 + $0xc98] sm:$0xff]
        %v4607 = vld [vmem:[%s7 + $0xca0] sm:$0xff]
        %v4608 = vld [vmem:[%s7 + $0xca8] sm:$0xff]
        %v4609 = vld [vmem:[%s7 + $0xcb0] sm:$0xff]
        %v4610 = vld [vmem:[%s7 + $0xcb8] sm:$0xff]
        %v4611 = vld [vmem:[%s7 + $0xcc0] sm:$0xff]
        %v4612 = vld [vmem:[%s7 + $0xcc8] sm:$0xff]
        %v4613 = vld [vmem:[%s7 + $0xcd0] sm:$0xff]
        %v4614 = vld [vmem:[%s7 + $0xcd8] sm:$0xff]
        %v4615 = vld [vmem:[%s7 + $0xce0] sm:$0xff]
        %v4616 = vld [vmem:[%s7 + $0xce8] sm:$0xff]
        %v4617 = vld [vmem:[%s7 + $0xcf0] sm:$0xff]
        %v4618 = vld [vmem:[%s7 + $0xcf8] sm:$0xff]
        %v4619 = vld [vmem:[%s7 + $0xd00] sm:$0xff]
        %v4620 = vld [vmem:[%s7 + $0xd08] sm:$0xff]
        %v4621 = vld [vmem:[%s7 + $0xd10] sm:$0xff]
        %v4622 = vld [vmem:[%s7 + $0xd18] sm:$0xff]
        %v4623 = vld [vmem:[%s7 + $0xd20] sm:$0xff]
        %v4624 = vld [vmem:[%s7 + $0xd28] sm:$0xff]
        %v4625 = vld [vmem:[%s7 + $0xd30] sm:$0xff]
        %v4626 = vld [vmem:[%s7 + $0xd38] sm:$0xff]
        %v4627 = vld [vmem:[%s7 + $0xd40] sm:$0xff]
        %v4628 = vld [vmem:[%s7 + $0xd48] sm:$0xff]
        %v4629 = vld [vmem:[%s7 + $0xd50] sm:$0xff]
        %v4630 = vld [vmem:[%s7 + $0xd58] sm:$0xff]
        %v4631 = vld [vmem:[%s7 + $0xd60] sm:$0xff]
        %v4632 = vld [vmem:[%s7 + $0xd68] sm:$0xff]
        %v4633 = vld [vmem:[%s7 + $0xd70] sm:$0xff]
        %v4634 = vld [vmem:[%s7 + $0xd78] sm:$0xff]
        %v4635 = vld [vmem:[%s7 + $0xd80] sm:$0xff]
        %v4636 = vld [vmem:[%s7 + $0xd88] sm:$0xff]
        %v4637 = vld [vmem:[%s7 + $0xd90] sm:$0xff]
        %v4638 = vld [vmem:[%s7 + $0xd98] sm:$0xff]
        %v4639 = vld [vmem:[%s7 + $0xda0] sm:$0xff]
        %v4640 = vld [vmem:[%s7 + $0xda8] sm:$0xff]
        %v4641 = vld [vmem:[%s7 + $0xdb0] sm:$0xff]
        %v4642 = vld [vmem:[%s7 + $0xdb8] sm:$0xff]
        %v4643 = vld [vmem:[%s7 + $0xdc0] sm:$0xff]
        %v4644 = vld [vmem:[%s7 + $0xdc8] sm:$0xff]
        %v4645 = vld [vmem:[%s7 + $0xdd0] sm:$0xff]
        %v4646 = vld [vmem:[%s7 + $0xdd8] sm:$0xff]
        %v4647 = vld [vmem:[%s7 + $0xde0] sm:$0xff]
        %v4648 = vld [vmem:[%s7 + $0xde8] sm:$0xff]
        %v4649 = vld [vmem:[%s7 + $0xdf0] sm:$0xff]
        %v4650 = vld [vmem:[%s7 + $0xdf8] sm:$0xff]
        %v4651 = vld [vmem:[%s7 + $0xe00] sm:$0xff]
        %v4652 = vld [vmem:[%s7 + $0xe08] sm:$0xff]
        %v4653 = vld [vmem:[%s7 + $0xe10] sm:$0xff]
        %v4654 = vld [vmem:[%s7 + $0xe18] sm:$0xff]
        %v4655 = vld [vmem:[%s7 + $0xe20] sm:$0xff]
        %v4656 = vld [vmem:[%s7 + $0xe28] sm:$0xff]
        %v4657 = vld [vmem:[%s7 + $0xe30] sm:$0xff]
        %v4658 = vld [vmem:[%s7 + $0xe38] sm:$0xff]
        %v4659 = vld [vmem:[%s7 + $0xe40] sm:$0xff]
        %v4660 = vld [vmem:[%s7 + $0xe48] sm:$0xff]
        %v4661 = vld [vmem:[%s7 + $0xe50] sm:$0xff]
        %v4662 = vld [vmem:[%s7 + $0xe58] sm:$0xff]
        %v4663 = vld [vmem:[%s7 + $0xe60] sm:$0xff]
        %v4664 = vld [vmem:[%s7 + $0xe68] sm:$0xff]
        %v4665 = vld [vmem:[%s7 + $0xe70] sm:$0xff]
        %v4666 = vld [vmem:[%s7 + $0xe78] sm:$0xff]
        %v4667 = vld [vmem:[%s7 + $0xe80] sm:$0xff]
        %v4668 = vld [vmem:[%s7 + $0xe88] sm:$0xff]
        %v4669 = vld [vmem:[%s7 + $0xe90] sm:$0xff]
        %v4670 = vld [vmem:[%s7 + $0xe98] sm:$0xff]
        %v4671 = vld [vmem:[%s7 + $0xea0] sm:$0xff]
        %v4672 = vld [vmem:[%s7 + $0xea8] sm:$0xff]
        %v4673 = vld [vmem:[%s7 + $0xeb0] sm:$0xff]
        %v4674 = vld [vmem:[%s7 + $0xeb8] sm:$0xff]
        %v4675 = vld [vmem:[%s7 + $0xec0] sm:$0xff]
        %v4676 = vld [vmem:[%s7 + $0xec8] sm:$0xff]
        %v4677 = vld [vmem:[%s7 + $0xed0] sm:$0xff]
        %v4678 = vld [vmem:[%s7 + $0xed8] sm:$0xff]
        %v4679 = vld [vmem:[%s7 + $0xee0] sm:$0xff]
        %v4680 = vld [vmem:[%s7 + $0xee8] sm:$0xff]
        %v4681 = vld [vmem:[%s7 + $0xef0] sm:$0xff]
        %v4682 = vld [vmem:[%s7 + $0xef8] sm:$0xff]
        %v4683 = vld [vmem:[%s7 + $0xf00] sm:$0xff]
        %v4684 = vld [vmem:[%s7 + $0xf08] sm:$0xff]
        %v4685 = vld [vmem:[%s7 + $0xf10] sm:$0xff]
        %v4686 = vld [vmem:[%s7 + $0xf18] sm:$0xff]
        %v4687 = vld [vmem:[%s7 + $0xf20] sm:$0xff]
        %v4688 = vld [vmem:[%s7 + $0xf28] sm:$0xff]
        %v4689 = vld [vmem:[%s7 + $0xf30] sm:$0xff]
        %v4690 = vld [vmem:[%s7 + $0xf38] sm:$0xff]
        %v4691 = vld [vmem:[%s7 + $0xf40] sm:$0xff]
        %v4692 = vld [vmem:[%s7 + $0xf48] sm:$0xff]
        %v4693 = vld [vmem:[%s7 + $0xf50] sm:$0xff]
        %v4694 = vld [vmem:[%s7 + $0xf58] sm:$0xff]
        %v4695 = vld [vmem:[%s7 + $0xf60] sm:$0xff]
        %v4696 = vld [vmem:[%s7 + $0xf68] sm:$0xff]
        %v4697 = vld [vmem:[%s7 + $0xf70] sm:$0xff]
        %v4698 = vld [vmem:[%s7 + $0xf78] sm:$0xff]
        %v4699 = vld [vmem:[%s7 + $0xf80] sm:$0xff]
        %v4700 = vld [vmem:[%s7 + $0xf88] sm:$0xff]
        %v4701 = vld [vmem:[%s7 + $0xf90] sm:$0xff]
        %v4702 = vld [vmem:[%s7 + $0xf98] sm:$0xff]
        %v4703 = vld [vmem:[%s7 + $0xfa0] sm:$0xff]
        %v4704 = vld [vmem:[%s7 + $0xfa8] sm:$0xff]
        %v4705 = vld [vmem:[%s7 + $0xfb0] sm:$0xff]
        %v4706 = vld [vmem:[%s7 + $0xfb8] sm:$0xff]
        %v4707 = vld [vmem:[%s7 + $0xfc0] sm:$0xff]
        %v4708 = vld [vmem:[%s7 + $0xfc8] sm:$0xff]
        %v4709 = vld [vmem:[%s7 + $0xfd0] sm:$0xff]
        %v4710 = vld [vmem:[%s7 + $0xfd8] sm:$0xff]
        %v4711 = vld [vmem:[%s7 + $0xfe0] sm:$0xff]
        %v4712 = vld [vmem:[%s7 + $0xfe8] sm:$0xff]
        %v4713 = vld [vmem:[%s7 + $0xff0] sm:$0xff]
        %v4714 = vld [vmem:[%s7 + $0xff8] sm:$0xff]
        %v4715 = vld [vmem:[%s7 + $0x1000] sm:$0xff]
        %v4716 = vld [vmem:[%s7 + $0x1008] sm:$0xff]
        %v4717 = vld [vmem:[%s7 + $0x1010] sm:$0xff]
        %v4718 = vld [vmem:[%s7 + $0x1018] sm:$0xff]
        %v4719 = vld [vmem:[%s7 + $0x1020] sm:$0xff]
        %v4720 = vld [vmem:[%s7 + $0x1028] sm:$0xff]
        %v4721 = vld [vmem:[%s7 + $0x1030] sm:$0xff]
        %v4722 = vld [vmem:[%s7 + $0x1038] sm:$0xff]
        %v4723 = vld [vmem:[%s7 + $0x1040] sm:$0xff]
        %v4724 = vld [vmem:[%s7 + $0x1048] sm:$0xff]
        %v4725 = vld [vmem:[%s7 + $0x1050] sm:$0xff]
        %v4726 = vld [vmem:[%s7 + $0x1058] sm:$0xff]
        %v4727 = vld [vmem:[%s7 + $0x1060] sm:$0xff]
        %v4728 = vld [vmem:[%s7 + $0x1068] sm:$0xff]
        %v4729 = vld [vmem:[%s7 + $0x1070] sm:$0xff]
        %v4730 = vld [vmem:[%s7 + $0x1078] sm:$0xff]
        %v4731 = vld [vmem:[%s7 + $0x1080] sm:$0xff]
        %v4732 = vld [vmem:[%s7 + $0x1088] sm:$0xff]
        %v4733 = vld [vmem:[%s7 + $0x1090] sm:$0xff]
        %v4734 = vld [vmem:[%s7 + $0x1098] sm:$0xff]
        %v4735 = vld [vmem:[%s7 + $0x10a0] sm:$0xff]
        %v4736 = vld [vmem:[%s7 + $0x10a8] sm:$0xff]
        %v4737 = vld [vmem:[%s7 + $0x10b0] sm:$0xff]
        %v4738 = vld [vmem:[%s7 + $0x10b8] sm:$0xff]
        %v4739 = vld [vmem:[%s7 + $0x10c0] sm:$0xff]
        %v4740 = vld [vmem:[%s7 + $0x10c8] sm:$0xff]
        %v4741 = vld [vmem:[%s7 + $0x10d0] sm:$0xff]
        %v4742 = vld [vmem:[%s7 + $0x10d8] sm:$0xff]
        %v4743 = vld [vmem:[%s7 + $0x10e0] sm:$0xff]
        %v4744 = vld [vmem:[%s7 + $0x10e8] sm:$0xff]
        %v4745 = vld [vmem:[%s7 + $0x10f0] sm:$0xff]
        %v4746 = vld [vmem:[%s7 + $0x10f8] sm:$0xff]
        %v4747 = vld [vmem:[%s7 + $0x1100] sm:$0xff]
        %v4748 = vld [vmem:[%s7 + $0x1108] sm:$0xff]
        %v4749 = vld [vmem:[%s7 + $0x1110] sm:$0xff]
        %v4750 = vld [vmem:[%s7 + $0x1118] sm:$0xff]
        %v4751 = vld [vmem:[%s7 + $0x1120] sm:$0xff]
        %v4752 = vld [vmem:[%s7 + $0x1128] sm:$0xff]
        %v4753 = vld [vmem:[%s7 + $0x1130] sm:$0xff]
        %v4754 = vld [vmem:[%s7 + $0x1138] sm:$0xff]
        %v4755 = vld [vmem:[%s7 + $0x1140] sm:$0xff]
        %v4756 = vld [vmem:[%s7 + $0x1148] sm:$0xff]
        %v4757 = vld [vmem:[%s7 + $0x1150] sm:$0xff]
        %v4758 = vld [vmem:[%s7 + $0x1158] sm:$0xff]
        %v4759 = vld [vmem:[%s7 + $0x1160] sm:$0xff]
        %v4760 = vld [vmem:[%s7 + $0x1168] sm:$0xff]
        %v4761 = vld [vmem:[%s7 + $0x1170] sm:$0xff]
        %v4762 = vld [vmem:[%s7 + $0x1178] sm:$0xff]
        %v4763 = vld [vmem:[%s7 + $0x1180] sm:$0xff]
        %v4764 = vld [vmem:[%s7 + $0x1188] sm:$0xff]
        %v4765 = vld [vmem:[%s7 + $0x1190] sm:$0xff]
        %v4766 = vld [vmem:[%s7 + $0x1198] sm:$0xff]
        %v4767 = vld [vmem:[%s7 + $0x11a0] sm:$0xff]
        %v4768 = vld [vmem:[%s7 + $0x11a8] sm:$0xff]
        %v4769 = vld [vmem:[%s7 + $0x11b0] sm:$0xff]
        %v4770 = vld [vmem:[%s7 + $0x11b8] sm:$0xff]
        %v4771 = vld [vmem:[%s7 + $0x11c0] sm:$0xff]
        %v4772 = vld [vmem:[%s7 + $0x11c8] sm:$0xff]
        %v4773 = vld [vmem:[%s7 + $0x11d0] sm:$0xff]
        %v4774 = vld [vmem:[%s7 + $0x11d8] sm:$0xff]
        %v4775 = vld [vmem:[%s7 + $0x11e0] sm:$0xff]
        %v4776 = vld [vmem:[%s7 + $0x11e8] sm:$0xff]
        %v4777 = vld [vmem:[%s7 + $0x11f0] sm:$0xff]
        %v4778 = vld [vmem:[%s7 + $0x11f8] sm:$0xff]
        %v4779 = vld [vmem:[%s7 + $0x1200] sm:$0xff]
        %v4780 = vld [vmem:[%s7 + $0x1208] sm:$0xff]
        %v4781 = vld [vmem:[%s7 + $0x1210] sm:$0xff]
        %v4782 = vld [vmem:[%s7 + $0x1218] sm:$0xff]
        %v4783 = vld [vmem:[%s7 + $0x1220] sm:$0xff]
        %v4784 = vld [vmem:[%s7 + $0x1228] sm:$0xff]
        %v4785 = vld [vmem:[%s7 + $0x1230] sm:$0xff]
        %v4786 = vld [vmem:[%s7 + $0x1238] sm:$0xff]
        %v4787 = vld [vmem:[%s7 + $0x1240] sm:$0xff]
        %v4788 = vld [vmem:[%s7 + $0x1248] sm:$0xff]
        %v4789 = vld [vmem:[%s7 + $0x1250] sm:$0xff]
        %v4790 = vld [vmem:[%s7 + $0x1258] sm:$0xff]
        %v4791 = vld [vmem:[%s7 + $0x1260] sm:$0xff]
        %v4792 = vld [vmem:[%s7 + $0x1268] sm:$0xff]
        %v4793 = vld [vmem:[%s7 + $0x1270] sm:$0xff]
        %v4794 = vld [vmem:[%s7 + $0x1278] sm:$0xff]
        %v4795 = vld [vmem:[%s7 + $0x1280] sm:$0xff]
        %v4796 = vld [vmem:[%s7 + $0x1288] sm:$0xff]
        %v4797 = vld [vmem:[%s7 + $0x1290] sm:$0xff]
        %v4798 = vld [vmem:[%s7 + $0x1298] sm:$0xff]
        %v4799 = vld [vmem:[%s7 + $0x12a0] sm:$0xff]
        %v4800 = vld [vmem:[%s7 + $0x12a8] sm:$0xff]
        %v4801 = vld [vmem:[%s7 + $0x12b0] sm:$0xff]
        %v4802 = vld [vmem:[%s7 + $0x12b8] sm:$0xff]
        %v4803 = vld [vmem:[%s7 + $0x12c0] sm:$0xff]
        %v4804 = vld [vmem:[%s7 + $0x12c8] sm:$0xff]
        %v4805 = vld [vmem:[%s7 + $0x12d0] sm:$0xff]
        %v4806 = vld [vmem:[%s7 + $0x12d8] sm:$0xff]
        %v4807 = vld [vmem:[%s7 + $0x12e0] sm:$0xff]
        %v4808 = vld [vmem:[%s7 + $0x12e8] sm:$0xff]
        %v4809 = vld [vmem:[%s7 + $0x12f0] sm:$0xff]
        %v4810 = vld [vmem:[%s7 + $0x12f8] sm:$0xff]
        %v4811 = vld [vmem:[%s7 + $0x1300] sm:$0xff]
        %v4812 = vld [vmem:[%s7 + $0x1308] sm:$0xff]
        %v4813 = vld [vmem:[%s7 + $0x1310] sm:$0xff]
        %v4814 = vld [vmem:[%s7 + $0x1318] sm:$0xff]
        %v4815 = vld [vmem:[%s7 + $0x1320] sm:$0xff]
        %v4816 = vld [vmem:[%s7 + $0x1328] sm:$0xff]
        %v4817 = vld [vmem:[%s7 + $0x1330] sm:$0xff]
        %v4818 = vld [vmem:[%s7 + $0x1338] sm:$0xff]
        %v4819 = vld [vmem:[%s7 + $0x1340] sm:$0xff]
        %v4820 = vld [vmem:[%s7 + $0x1348] sm:$0xff]
        %v4821 = vld [vmem:[%s7 + $0x1350] sm:$0xff]
        %v4822 = vld [vmem:[%s7 + $0x1358] sm:$0xff]
        %v4823 = vld [vmem:[%s7 + $0x1360] sm:$0xff]
        %v4824 = vld [vmem:[%s7 + $0x1368] sm:$0xff]
        %v4825 = vld [vmem:[%s7 + $0x1370] sm:$0xff]
        %v4826 = vld [vmem:[%s7 + $0x1378] sm:$0xff]
        %v4827 = vld [vmem:[%s7 + $0x1380] sm:$0xff]
        %v4828 = vld [vmem:[%s7 + $0x1388] sm:$0xff]
        %v4829 = vld [vmem:[%s7 + $0x1390] sm:$0xff]
        %v4830 = vld [vmem:[%s7 + $0x1398] sm:$0xff]
        %v4831 = vld [vmem:[%s7 + $0x13a0] sm:$0xff]
        %v4832 = vld [vmem:[%s7 + $0x13a8] sm:$0xff]
        %v4833 = vld [vmem:[%s7 + $0x13b0] sm:$0xff]
        %v4834 = vld [vmem:[%s7 + $0x13b8] sm:$0xff]
        %v4835 = vld [vmem:[%s7 + $0x13c0] sm:$0xff]
        %v4836 = vld [vmem:[%s7 + $0x13c8] sm:$0xff]
        %v4837 = vld [vmem:[%s7 + $0x13d0] sm:$0xff]
        %v4838 = vld [vmem:[%s7 + $0x13d8] sm:$0xff]
        %v4839 = vld [vmem:[%s7 + $0x13e0] sm:$0xff]
        %v4840 = vld [vmem:[%s7 + $0x13e8] sm:$0xff]
        %v4841 = vld [vmem:[%s7 + $0x13f0] sm:$0xff]
        %v4842 = vld [vmem:[%s7 + $0x13f8] sm:$0xff]
        %v4843 = vld [vmem:[%s7 + $0x1400] sm:$0xff]
        %v4844 = vld [vmem:[%s7 + $0x1408] sm:$0xff]
        %v4845 = vld [vmem:[%s7 + $0x1410] sm:$0xff]
        %v4846 = vld [vmem:[%s7 + $0x1418] sm:$0xff]
        %v4847 = vld [vmem:[%s7 + $0x1420] sm:$0xff]
        %v4848 = vld [vmem:[%s7 + $0x1428] sm:$0xff]
        %v4849 = vld [vmem:[%s7 + $0x1430] sm:$0xff]
        %v4850 = vld [vmem:[%s7 + $0x1438] sm:$0xff]
        %v4851 = vld [vmem:[%s7 + $0x1440] sm:$0xff]
        %v4852 = vld [vmem:[%s7 + $0x1448] sm:$0xff]
        %v4853 = vld [vmem:[%s7 + $0x1450] sm:$0xff]
        %v4854 = vld [vmem:[%s7 + $0x1458] sm:$0xff]
        %v4855 = vld [vmem:[%s7 + $0x1460] sm:$0xff]
        %v4856 = vld [vmem:[%s7 + $0x1468] sm:$0xff]
        %v4857 = vld [vmem:[%s7 + $0x1470] sm:$0xff]
        %v4858 = vld [vmem:[%s7 + $0x1478] sm:$0xff]
        %v4859 = vld [vmem:[%s7 + $0x1480] sm:$0xff]
        %v4860 = vld [vmem:[%s7 + $0x1488] sm:$0xff]
        %v4861 = vld [vmem:[%s7 + $0x1490] sm:$0xff]
        %v4862 = vld [vmem:[%s7 + $0x1498] sm:$0xff]
        %v4863 = vld [vmem:[%s7 + $0x14a0] sm:$0xff]
        %v4864 = vld [vmem:[%s7 + $0x14a8] sm:$0xff]
        %v4865 = vld [vmem:[%s7 + $0x14b0] sm:$0xff]
        %v4866 = vld [vmem:[%s7 + $0x14b8] sm:$0xff]
        %v4867 = vld [vmem:[%s7 + $0x14c0] sm:$0xff]
        %v4868 = vld [vmem:[%s7 + $0x14c8] sm:$0xff]
        %v4869 = vld [vmem:[%s7 + $0x14d0] sm:$0xff]
        %v4870 = vld [vmem:[%s7 + $0x14d8] sm:$0xff]
        %v4871 = vld [vmem:[%s7 + $0x14e0] sm:$0xff]
        %v4872 = vld [vmem:[%s7 + $0x14e8] sm:$0xff]
        %v4873 = vld [vmem:[%s7 + $0x14f0] sm:$0xff]
        %v4874 = vld [vmem:[%s7 + $0x14f8] sm:$0xff]
        %v4875 = vld [vmem:[%s7 + $0x1500] sm:$0xff]
        %v4876 = vld [vmem:[%s7 + $0x1508] sm:$0xff]
        %v4877 = vld [vmem:[%s7 + $0x1510] sm:$0xff]
        %v4878 = vld [vmem:[%s7 + $0x1518] sm:$0xff]
        %v4879 = vld [vmem:[%s7 + $0x1520] sm:$0xff]
        %v4880 = vld [vmem:[%s7 + $0x1528] sm:$0xff]
        %v4881 = vld [vmem:[%s7 + $0x1530] sm:$0xff]
        %v4882 = vld [vmem:[%s7 + $0x1538] sm:$0xff]
        %v4883 = vld [vmem:[%s7 + $0x1540] sm:$0xff]
        %v4884 = vld [vmem:[%s7 + $0x1548] sm:$0xff]
        %v4885 = vld [vmem:[%s7 + $0x1550] sm:$0xff]
        %v4886 = vld [vmem:[%s7 + $0x1558] sm:$0xff]
        %v4887 = vld [vmem:[%s7 + $0x1560] sm:$0xff]
        %v4888 = vld [vmem:[%s7 + $0x1568] sm:$0xff]
        %v4889 = vld [vmem:[%s7 + $0x1570] sm:$0xff]
        %v4890 = vld [vmem:[%s7 + $0x1578] sm:$0xff]
        %v4891 = vld [vmem:[%s7 + $0x1580] sm:$0xff]
        %v4892 = vld [vmem:[%s7 + $0x1588] sm:$0xff]
        %v4893 = vld [vmem:[%s7 + $0x1590] sm:$0xff]
        %v4894 = vld [vmem:[%s7 + $0x1598] sm:$0xff]
        %v4895 = vld [vmem:[%s7 + $0x15a0] sm:$0xff]
        %v4896 = vld [vmem:[%s7 + $0x15a8] sm:$0xff]
        %v4897 = vld [vmem:[%s7 + $0x15b0] sm:$0xff]
        %v4898 = vld [vmem:[%s7 + $0x15b8] sm:$0xff]
        %v4899 = vld [vmem:[%s7 + $0x15c0] sm:$0xff]
        %v4900 = vld [vmem:[%s7 + $0x15c8] sm:$0xff]
        %v4901 = vld [vmem:[%s7 + $0x15d0] sm:$0xff]
        %v4902 = vld [vmem:[%s7 + $0x15d8] sm:$0xff]
        %v4903 = vld [vmem:[%s7 + $0x15e0] sm:$0xff]
        %v4904 = vld [vmem:[%s7 + $0x15e8] sm:$0xff]
        %v4905 = vld [vmem:[%s7 + $0x15f0] sm:$0xff]
        %v4906 = vld [vmem:[%s7 + $0x15f8] sm:$0xff]
        %v4907 = vld [vmem:[%s7 + $0x1600] sm:$0xff]
        %v4908 = vld [vmem:[%s7 + $0x1608] sm:$0xff]
        %v4909 = vld [vmem:[%s7 + $0x1610] sm:$0xff]
        %v4910 = vld [vmem:[%s7 + $0x1618] sm:$0xff]
        %v4911 = vld [vmem:[%s7 + $0x1620] sm:$0xff]
        %v4912 = vld [vmem:[%s7 + $0x1628] sm:$0xff]
        %v4913 = vld [vmem:[%s7 + $0x1630] sm:$0xff]
        %v4914 = vld [vmem:[%s7 + $0x1638] sm:$0xff]
        %v4915 = vld [vmem:[%s7 + $0x1640] sm:$0xff]
        %v4916 = vld [vmem:[%s7 + $0x1648] sm:$0xff]
        %v4917 = vld [vmem:[%s7 + $0x1650] sm:$0xff]
        %v4918 = vld [vmem:[%s7 + $0x1658] sm:$0xff]
        %v4919 = vld [vmem:[%s7 + $0x1660] sm:$0xff]
        %v4920 = vld [vmem:[%s7 + $0x1668] sm:$0xff]
        %v4921 = vld [vmem:[%s7 + $0x1670] sm:$0xff]
        %v4922 = vld [vmem:[%s7 + $0x1678] sm:$0xff]
        %v4923 = vld [vmem:[%s7 + $0x1680] sm:$0xff]
        %v4924 = vld [vmem:[%s7 + $0x1688] sm:$0xff]
        %v4925 = vld [vmem:[%s7 + $0x1690] sm:$0xff]
        %v4926 = vld [vmem:[%s7 + $0x1698] sm:$0xff]
        %v4927 = vld [vmem:[%s7 + $0x16a0] sm:$0xff]
        %v4928 = vld [vmem:[%s7 + $0x16a8] sm:$0xff]
        %v4929 = vld [vmem:[%s7 + $0x16b0] sm:$0xff]
        %v4930 = vld [vmem:[%s7 + $0x16b8] sm:$0xff]
        %v4931 = vld [vmem:[%s7 + $0x16c0] sm:$0xff]
        %v4932 = vld [vmem:[%s7 + $0x16c8] sm:$0xff]
        %v4933 = vld [vmem:[%s7 + $0x16d0] sm:$0xff]
        %v4934 = vld [vmem:[%s7 + $0x16d8] sm:$0xff]
        %v4935 = vld [vmem:[%s7 + $0x16e0] sm:$0xff]
        %v4936 = vld [vmem:[%s7 + $0x16e8] sm:$0xff]
        %v4937 = vld [vmem:[%s7 + $0x16f0] sm:$0xff]
        %v4938 = vld [vmem:[%s7 + $0x16f8] sm:$0xff]
        %v4939 = vld [vmem:[%s7 + $0x1700] sm:$0xff]
        %v4940 = vld [vmem:[%s7 + $0x1708] sm:$0xff]
        %v4941 = vld [vmem:[%s7 + $0x1710] sm:$0xff]
        %v4942 = vld [vmem:[%s7 + $0x1718] sm:$0xff]
        %v4943 = vld [vmem:[%s7 + $0x1720] sm:$0xff]
        %v4944 = vld [vmem:[%s7 + $0x1728] sm:$0xff]
        %v4945 = vld [vmem:[%s7 + $0x1730] sm:$0xff]
        %v4946 = vld [vmem:[%s7 + $0x1738] sm:$0xff]
        %v4947 = vld [vmem:[%s7 + $0x1740] sm:$0xff]
        %v4948 = vld [vmem:[%s7 + $0x1748] sm:$0xff]
        %v4949 = vld [vmem:[%s7 + $0x1750] sm:$0xff]
        %v4950 = vld [vmem:[%s7 + $0x1758] sm:$0xff]
        %v4951 = vld [vmem:[%s7 + $0x1760] sm:$0xff]
        %v4952 = vld [vmem:[%s7 + $0x1768] sm:$0xff]
        %v4953 = vld [vmem:[%s7 + $0x1770] sm:$0xff]
        %v4954 = vld [vmem:[%s7 + $0x1778] sm:$0xff]
        %v4955 = vld [vmem:[%s7 + $0x1780] sm:$0xff]
        %v4956 = vld [vmem:[%s7 + $0x1788] sm:$0xff]
        %v4957 = vld [vmem:[%s7 + $0x1790] sm:$0xff]
        %v4958 = vld [vmem:[%s7 + $0x1798] sm:$0xff]
        %v4959 = vld [vmem:[%s7 + $0x17a0] sm:$0xff]
        %v4960 = vld [vmem:[%s7 + $0x17a8] sm:$0xff]
        %v4961 = vld [vmem:[%s7 + $0x17b0] sm:$0xff]
        %v4962 = vld [vmem:[%s7 + $0x17b8] sm:$0xff]
        %v4963 = vld [vmem:[%s7 + $0x17c0] sm:$0xff]
        %v4964 = vld [vmem:[%s7 + $0x17c8] sm:$0xff]
        %v4965 = vld [vmem:[%s7 + $0x17d0] sm:$0xff]
        %v4966 = vld [vmem:[%s7 + $0x17d8] sm:$0xff]
        %v4967 = vld [vmem:[%s7 + $0x17e0] sm:$0xff]
        %v4968 = vld [vmem:[%s7 + $0x17e8] sm:$0xff]
        %v4969 = vld [vmem:[%s7 + $0x17f0] sm:$0xff]
        %v4970 = vld [vmem:[%s7 + $0x17f8] sm:$0xff]
        %v4971 = vld [vmem:[%s7 + $0x1800] sm:$0xff]
        %v4972 = vld [vmem:[%s7 + $0x1808] sm:$0xff]
        %v4973 = vld [vmem:[%s7 + $0x1810] sm:$0xff]
        %v4974 = vld [vmem:[%s7 + $0x1818] sm:$0xff]
        %v4975 = vld [vmem:[%s7 + $0x1820] sm:$0xff]
        %v4976 = vld [vmem:[%s7 + $0x1828] sm:$0xff]
        %v4977 = vld [vmem:[%s7 + $0x1830] sm:$0xff]
        %v4978 = vld [vmem:[%s7 + $0x1838] sm:$0xff]
        %v4979 = vld [vmem:[%s7 + $0x1840] sm:$0xff]
        %v4980 = vld [vmem:[%s7 + $0x1848] sm:$0xff]
        %v4981 = vld [vmem:[%s7 + $0x1850] sm:$0xff]
        %v4982 = vld [vmem:[%s7 + $0x1858] sm:$0xff]
        %v4983 = vld [vmem:[%s7 + $0x1860] sm:$0xff]
        %v4984 = vld [vmem:[%s7 + $0x1868] sm:$0xff]
        %v4985 = vld [vmem:[%s7 + $0x1870] sm:$0xff]
        %v4986 = vld [vmem:[%s7 + $0x1878] sm:$0xff]
        %v4987 = vld [vmem:[%s8] sm:$0xf]
        %v5772 = vunpack.c.l.b16 %v4203
        %v5773 = vunpack.c.h.b16 %v4203
        %v5774 = vunpack.c.l.b16 %v4204
        %v5775 = vunpack.c.h.b16 %v4204
        %v5776 = vunpack.c.l.b16 %v4205
        %v5777 = vunpack.c.h.b16 %v4205
        %v5778 = vunpack.c.l.b16 %v4206
        %v5779 = vunpack.c.h.b16 %v4206
        %v5780 = vunpack.c.l.b16 %v4207
        %v5781 = vunpack.c.h.b16 %v4207
        %v5782 = vunpack.c.l.b16 %v4208
        %v5783 = vunpack.c.h.b16 %v4208
        %v5784 = vunpack.c.l.b16 %v4209
        %v5785 = vunpack.c.h.b16 %v4209
        %v5786 = vunpack.c.l.b16 %v4210
        %v5787 = vunpack.c.h.b16 %v4210
        %v5788 = vunpack.c.l.b16 %v4211
        %v5789 = vunpack.c.h.b16 %v4211
        %v5790 = vunpack.c.l.b16 %v4212
        %v5791 = vunpack.c.h.b16 %v4212
        %v5792 = vunpack.c.l.b16 %v4213
        %v5793 = vunpack.c.h.b16 %v4213
        %v5794 = vunpack.c.l.b16 %v4214
        %v5795 = vunpack.c.h.b16 %v4214
        %v5796 = vunpack.c.l.b16 %v4215
        %v5797 = vunpack.c.h.b16 %v4215
        %v5798 = vunpack.c.l.b16 %v4216
        %v5799 = vunpack.c.h.b16 %v4216
        %v5800 = vunpack.c.l.b16 %v4217
        %v5801 = vunpack.c.h.b16 %v4217
        %v5802 = vunpack.c.l.b16 %v4218
        %v5803 = vunpack.c.h.b16 %v4218
        %v5804 = vunpack.c.l.b16 %v4219
        %v5805 = vunpack.c.h.b16 %v4219
        %v5806 = vunpack.c.l.b16 %v4220
        %v5807 = vunpack.c.h.b16 %v4220
        %v5808 = vunpack.c.l.b16 %v4221
        %v5809 = vunpack.c.h.b16 %v4221
        %v5810 = vunpack.c.l.b16 %v4222
        %v5811 = vunpack.c.h.b16 %v4222
        %v5812 = vunpack.c.l.b16 %v4223
        %v5813 = vunpack.c.h.b16 %v4223
        %v5814 = vunpack.c.l.b16 %v4224
        %v5815 = vunpack.c.h.b16 %v4224
        %v5816 = vunpack.c.l.b16 %v4225
        %v5817 = vunpack.c.h.b16 %v4225
        %v5818 = vunpack.c.l.b16 %v4226
        %v5819 = vunpack.c.h.b16 %v4226
        %v5820 = vunpack.c.l.b16 %v4227
        %v5821 = vunpack.c.h.b16 %v4227
        %v5822 = vunpack.c.l.b16 %v4228
        %v5823 = vunpack.c.h.b16 %v4228
        %v5824 = vunpack.c.l.b16 %v4229
        %v5825 = vunpack.c.h.b16 %v4229
        %v5826 = vunpack.c.l.b16 %v4230
        %v5827 = vunpack.c.h.b16 %v4230
        %v5828 = vunpack.c.l.b16 %v4231
        %v5829 = vunpack.c.h.b16 %v4231
        %v5830 = vunpack.c.l.b16 %v4232
        %v5831 = vunpack.c.h.b16 %v4232
        %v5832 = vunpack.c.l.b16 %v4233
        %v5833 = vunpack.c.h.b16 %v4233
        %v5834 = vunpack.c.l.b16 %v4234
        %v5835 = vunpack.c.h.b16 %v4234
        %v5836 = vunpack.c.l.b16 %v4235
        %v5837 = vunpack.c.h.b16 %v4235
        %v5838 = vunpack.c.l.b16 %v4236
        %v5839 = vunpack.c.h.b16 %v4236
        %v5840 = vunpack.c.l.b16 %v4237
        %v5841 = vunpack.c.h.b16 %v4237
        %v5842 = vunpack.c.l.b16 %v4238
        %v5843 = vunpack.c.h.b16 %v4238
        %v5844 = vunpack.c.l.b16 %v4239
        %v5845 = vunpack.c.h.b16 %v4239
        %v5846 = vunpack.c.l.b16 %v4240
        %v5847 = vunpack.c.h.b16 %v4240
        %v5848 = vunpack.c.l.b16 %v4241
        %v5849 = vunpack.c.h.b16 %v4241
        %v5850 = vunpack.c.l.b16 %v4242
        %v5851 = vunpack.c.h.b16 %v4242
        %v5852 = vunpack.c.l.b16 %v4243
        %v5853 = vunpack.c.h.b16 %v4243
        %v5854 = vunpack.c.l.b16 %v4244
        %v5855 = vunpack.c.h.b16 %v4244
        %v5856 = vunpack.c.l.b16 %v4245
        %v5857 = vunpack.c.h.b16 %v4245
        %v5858 = vunpack.c.l.b16 %v4246
        %v5859 = vunpack.c.h.b16 %v4246
        %v5860 = vunpack.c.l.b16 %v4247
        %v5861 = vunpack.c.h.b16 %v4247
        %v5862 = vunpack.c.l.b16 %v4248
        %v5863 = vunpack.c.h.b16 %v4248
        %v5864 = vunpack.c.l.b16 %v4249
        %v5865 = vunpack.c.h.b16 %v4249
        %v5866 = vunpack.c.l.b16 %v4250
        %v5867 = vunpack.c.h.b16 %v4250
        %v5868 = vunpack.c.l.b16 %v4251
        %v5869 = vunpack.c.h.b16 %v4251
        %v5870 = vunpack.c.l.b16 %v4252
        %v5871 = vunpack.c.h.b16 %v4252
        %v5872 = vunpack.c.l.b16 %v4253
        %v5873 = vunpack.c.h.b16 %v4253
        %v5874 = vunpack.c.l.b16 %v4254
        %v5875 = vunpack.c.h.b16 %v4254
        %v5876 = vunpack.c.l.b16 %v4255
        %v5877 = vunpack.c.h.b16 %v4255
        %v5878 = vunpack.c.l.b16 %v4256
        %v5879 = vunpack.c.h.b16 %v4256
        %v5880 = vunpack.c.l.b16 %v4257
        %v5881 = vunpack.c.h.b16 %v4257
        %v5882 = vunpack.c.l.b16 %v4258
        %v5883 = vunpack.c.h.b16 %v4258
        %v5884 = vunpack.c.l.b16 %v4259
        %v5885 = vunpack.c.h.b16 %v4259
        %v5886 = vunpack.c.l.b16 %v4260
        %v5887 = vunpack.c.h.b16 %v4260
        %v5888 = vunpack.c.l.b16 %v4261
        %v5889 = vunpack.c.h.b16 %v4261
        %v5890 = vunpack.c.l.b16 %v4262
        %v5891 = vunpack.c.h.b16 %v4262
        %v5892 = vunpack.c.l.b16 %v4263
        %v5893 = vunpack.c.h.b16 %v4263
        %v5894 = vunpack.c.l.b16 %v4264
        %v5895 = vunpack.c.h.b16 %v4264
        %v5896 = vunpack.c.l.b16 %v4265
        %v5897 = vunpack.c.h.b16 %v4265
        %v5898 = vunpack.c.l.b16 %v4266
        %v5899 = vunpack.c.h.b16 %v4266
        %v5900 = vunpack.c.l.b16 %v4267
        %v5901 = vunpack.c.h.b16 %v4267
        %v5902 = vunpack.c.l.b16 %v4268
        %v5903 = vunpack.c.h.b16 %v4268
        %v5904 = vunpack.c.l.b16 %v4269
        %v5905 = vunpack.c.h.b16 %v4269
        %v5906 = vunpack.c.l.b16 %v4270
        %v5907 = vunpack.c.h.b16 %v4270
        %v5908 = vunpack.c.l.b16 %v4271
        %v5909 = vunpack.c.h.b16 %v4271
        %v5910 = vunpack.c.l.b16 %v4272
        %v5911 = vunpack.c.h.b16 %v4272
        %v5912 = vunpack.c.l.b16 %v4273
        %v5913 = vunpack.c.h.b16 %v4273
        %v5914 = vunpack.c.l.b16 %v4274
        %v5915 = vunpack.c.h.b16 %v4274
        %v5916 = vunpack.c.l.b16 %v4275
        %v5917 = vunpack.c.h.b16 %v4275
        %v5918 = vunpack.c.l.b16 %v4276
        %v5919 = vunpack.c.h.b16 %v4276
        %v5920 = vunpack.c.l.b16 %v4277
        %v5921 = vunpack.c.h.b16 %v4277
        %v5922 = vunpack.c.l.b16 %v4278
        %v5923 = vunpack.c.h.b16 %v4278
        %v5924 = vunpack.c.l.b16 %v4279
        %v5925 = vunpack.c.h.b16 %v4279
        %v5926 = vunpack.c.l.b16 %v4280
        %v5927 = vunpack.c.h.b16 %v4280
        %v5928 = vunpack.c.l.b16 %v4281
        %v5929 = vunpack.c.h.b16 %v4281
        %v5930 = vunpack.c.l.b16 %v4282
        %v5931 = vunpack.c.h.b16 %v4282
        %v5932 = vunpack.c.l.b16 %v4283
        %v5933 = vunpack.c.h.b16 %v4283
        %v5934 = vunpack.c.l.b16 %v4284
        %v5935 = vunpack.c.h.b16 %v4284
        %v5936 = vunpack.c.l.b16 %v4285
        %v5937 = vunpack.c.h.b16 %v4285
        %v5938 = vunpack.c.l.b16 %v4286
        %v5939 = vunpack.c.h.b16 %v4286
        %v5940 = vunpack.c.l.b16 %v4287
        %v5941 = vunpack.c.h.b16 %v4287
        %v5942 = vunpack.c.l.b16 %v4288
        %v5943 = vunpack.c.h.b16 %v4288
        %v5944 = vunpack.c.l.b16 %v4289
        %v5945 = vunpack.c.h.b16 %v4289
        %v5946 = vunpack.c.l.b16 %v4290
        %v5947 = vunpack.c.h.b16 %v4290
        %v5948 = vunpack.c.l.b16 %v4291
        %v5949 = vunpack.c.h.b16 %v4291
        %v5950 = vunpack.c.l.b16 %v4292
        %v5951 = vunpack.c.h.b16 %v4292
        %v5952 = vunpack.c.l.b16 %v4293
        %v5953 = vunpack.c.h.b16 %v4293
        %v5954 = vunpack.c.l.b16 %v4294
        %v5955 = vunpack.c.h.b16 %v4294
        %v5956 = vunpack.c.l.b16 %v4295
        %v5957 = vunpack.c.h.b16 %v4295
        %v5958 = vunpack.c.l.b16 %v4296
        %v5959 = vunpack.c.h.b16 %v4296
        %v5960 = vunpack.c.l.b16 %v4297
        %v5961 = vunpack.c.h.b16 %v4297
        %v5962 = vunpack.c.l.b16 %v4298
        %v5963 = vunpack.c.h.b16 %v4298
        %v5964 = vunpack.c.l.b16 %v4299
        %v5965 = vunpack.c.h.b16 %v4299
        %v5966 = vunpack.c.l.b16 %v4300
        %v5967 = vunpack.c.h.b16 %v4300
        %v5968 = vunpack.c.l.b16 %v4301
        %v5969 = vunpack.c.h.b16 %v4301
        %v5970 = vunpack.c.l.b16 %v4302
        %v5971 = vunpack.c.h.b16 %v4302
        %v5972 = vunpack.c.l.b16 %v4303
        %v5973 = vunpack.c.h.b16 %v4303
        %v5974 = vunpack.c.l.b16 %v4304
        %v5975 = vunpack.c.h.b16 %v4304
        %v5976 = vunpack.c.l.b16 %v4305
        %v5977 = vunpack.c.h.b16 %v4305
        %v5978 = vunpack.c.l.b16 %v4306
        %v5979 = vunpack.c.h.b16 %v4306
        %v5980 = vunpack.c.l.b16 %v4307
        %v5981 = vunpack.c.h.b16 %v4307
        %v5982 = vunpack.c.l.b16 %v4308
        %v5983 = vunpack.c.h.b16 %v4308
        %v5984 = vunpack.c.l.b16 %v4309
        %v5985 = vunpack.c.h.b16 %v4309
        %v5986 = vunpack.c.l.b16 %v4310
        %v5987 = vunpack.c.h.b16 %v4310
        %v5988 = vunpack.c.l.b16 %v4311
        %v5989 = vunpack.c.h.b16 %v4311
        %v5990 = vunpack.c.l.b16 %v4312
        %v5991 = vunpack.c.h.b16 %v4312
        %v5992 = vunpack.c.l.b16 %v4313
        %v5993 = vunpack.c.h.b16 %v4313
        %v5994 = vunpack.c.l.b16 %v4314
        %v5995 = vunpack.c.h.b16 %v4314
        %v5996 = vunpack.c.l.b16 %v4315
        %v5997 = vunpack.c.h.b16 %v4315
        %v5998 = vunpack.c.l.b16 %v4316
        %v5999 = vunpack.c.h.b16 %v4316
        %v6000 = vunpack.c.l.b16 %v4317
        %v6001 = vunpack.c.h.b16 %v4317
        %v6002 = vunpack.c.l.b16 %v4318
        %v6003 = vunpack.c.h.b16 %v4318
        %v6004 = vunpack.c.l.b16 %v4319
        %v6005 = vunpack.c.h.b16 %v4319
        %v6006 = vunpack.c.l.b16 %v4320
        %v6007 = vunpack.c.h.b16 %v4320
        %v6008 = vunpack.c.l.b16 %v4321
        %v6009 = vunpack.c.h.b16 %v4321
        %v6010 = vunpack.c.l.b16 %v4322
        %v6011 = vunpack.c.h.b16 %v4322
        %v6012 = vunpack.c.l.b16 %v4323
        %v6013 = vunpack.c.h.b16 %v4323
        %v6014 = vunpack.c.l.b16 %v4324
        %v6015 = vunpack.c.h.b16 %v4324
        %v6016 = vunpack.c.l.b16 %v4325
        %v6017 = vunpack.c.h.b16 %v4325
        %v6018 = vunpack.c.l.b16 %v4326
        %v6019 = vunpack.c.h.b16 %v4326
        %v6020 = vunpack.c.l.b16 %v4327
        %v6021 = vunpack.c.h.b16 %v4327
        %v6022 = vunpack.c.l.b16 %v4328
        %v6023 = vunpack.c.h.b16 %v4328
        %v6024 = vunpack.c.l.b16 %v4329
        %v6025 = vunpack.c.h.b16 %v4329
        %v6026 = vunpack.c.l.b16 %v4330
        %v6027 = vunpack.c.h.b16 %v4330
        %v6028 = vunpack.c.l.b16 %v4331
        %v6029 = vunpack.c.h.b16 %v4331
        %v6030 = vunpack.c.l.b16 %v4332
        %v6031 = vunpack.c.h.b16 %v4332
        %v6032 = vunpack.c.l.b16 %v4333
        %v6033 = vunpack.c.h.b16 %v4333
        %v6034 = vunpack.c.l.b16 %v4334
        %v6035 = vunpack.c.h.b16 %v4334
        %v6036 = vunpack.c.l.b16 %v4335
        %v6037 = vunpack.c.h.b16 %v4335
        %v6038 = vunpack.c.l.b16 %v4336
        %v6039 = vunpack.c.h.b16 %v4336
        %v6040 = vunpack.c.l.b16 %v4337
        %v6041 = vunpack.c.h.b16 %v4337
        %v6042 = vunpack.c.l.b16 %v4338
        %v6043 = vunpack.c.h.b16 %v4338
        %v6044 = vunpack.c.l.b16 %v4339
        %v6045 = vunpack.c.h.b16 %v4339
        %v6046 = vunpack.c.l.b16 %v4340
        %v6047 = vunpack.c.h.b16 %v4340
        %v6048 = vunpack.c.l.b16 %v4341
        %v6049 = vunpack.c.h.b16 %v4341
        %v6050 = vunpack.c.l.b16 %v4342
        %v6051 = vunpack.c.h.b16 %v4342
        %v6052 = vunpack.c.l.b16 %v4343
        %v6053 = vunpack.c.h.b16 %v4343
        %v6054 = vunpack.c.l.b16 %v4344
        %v6055 = vunpack.c.h.b16 %v4344
        %v6056 = vunpack.c.l.b16 %v4345
        %v6057 = vunpack.c.h.b16 %v4345
        %v6058 = vunpack.c.l.b16 %v4346
        %v6059 = vunpack.c.h.b16 %v4346
        %v6060 = vunpack.c.l.b16 %v4347
        %v6061 = vunpack.c.h.b16 %v4347
        %v6062 = vunpack.c.l.b16 %v4348
        %v6063 = vunpack.c.h.b16 %v4348
        %v6064 = vunpack.c.l.b16 %v4349
        %v6065 = vunpack.c.h.b16 %v4349
        %v6066 = vunpack.c.l.b16 %v4350
        %v6067 = vunpack.c.h.b16 %v4350
        %v6068 = vunpack.c.l.b16 %v4351
        %v6069 = vunpack.c.h.b16 %v4351
        %v6070 = vunpack.c.l.b16 %v4352
        %v6071 = vunpack.c.h.b16 %v4352
        %v6072 = vunpack.c.l.b16 %v4353
        %v6073 = vunpack.c.h.b16 %v4353
        %v6074 = vunpack.c.l.b16 %v4354
        %v6075 = vunpack.c.h.b16 %v4354
        %v6076 = vunpack.c.l.b16 %v4355
        %v6077 = vunpack.c.h.b16 %v4355
        %v6078 = vunpack.c.l.b16 %v4356
        %v6079 = vunpack.c.h.b16 %v4356
        %v6080 = vunpack.c.l.b16 %v4357
        %v6081 = vunpack.c.h.b16 %v4357
        %v6082 = vunpack.c.l.b16 %v4358
        %v6083 = vunpack.c.h.b16 %v4358
        %v6084 = vunpack.c.l.b16 %v4359
        %v6085 = vunpack.c.h.b16 %v4359
        %v6086 = vunpack.c.l.b16 %v4360
        %v6087 = vunpack.c.h.b16 %v4360
        %v6088 = vunpack.c.l.b16 %v4361
        %v6089 = vunpack.c.h.b16 %v4361
        %v6090 = vunpack.c.l.b16 %v4362
        %v6091 = vunpack.c.h.b16 %v4362
        %v6092 = vunpack.c.l.b16 %v4363
        %v6093 = vunpack.c.h.b16 %v4363
        %v6094 = vunpack.c.l.b16 %v4364
        %v6095 = vunpack.c.h.b16 %v4364
        %v6096 = vunpack.c.l.b16 %v4365
        %v6097 = vunpack.c.h.b16 %v4365
        %v6098 = vunpack.c.l.b16 %v4366
        %v6099 = vunpack.c.h.b16 %v4366
        %v6100 = vunpack.c.l.b16 %v4367
        %v6101 = vunpack.c.h.b16 %v4367
        %v6102 = vunpack.c.l.b16 %v4368
        %v6103 = vunpack.c.h.b16 %v4368
        %v6104 = vunpack.c.l.b16 %v4369
        %v6105 = vunpack.c.h.b16 %v4369
        %v6106 = vunpack.c.l.b16 %v4370
        %v6107 = vunpack.c.h.b16 %v4370
        %v6108 = vunpack.c.l.b16 %v4371
        %v6109 = vunpack.c.h.b16 %v4371
        %v6110 = vunpack.c.l.b16 %v4372
        %v6111 = vunpack.c.h.b16 %v4372
        %v6112 = vunpack.c.l.b16 %v4373
        %v6113 = vunpack.c.h.b16 %v4373
        %v6114 = vunpack.c.l.b16 %v4374
        %v6115 = vunpack.c.h.b16 %v4374
        %v6116 = vunpack.c.l.b16 %v4375
        %v6117 = vunpack.c.h.b16 %v4375
        %v6118 = vunpack.c.l.b16 %v4376
        %v6119 = vunpack.c.h.b16 %v4376
        %v6120 = vunpack.c.l.b16 %v4377
        %v6121 = vunpack.c.h.b16 %v4377
        %v6122 = vunpack.c.l.b16 %v4378
        %v6123 = vunpack.c.h.b16 %v4378
        %v6124 = vunpack.c.l.b16 %v4379
        %v6125 = vunpack.c.h.b16 %v4379
        %v6126 = vunpack.c.l.b16 %v4380
        %v6127 = vunpack.c.h.b16 %v4380
        %v6128 = vunpack.c.l.b16 %v4381
        %v6129 = vunpack.c.h.b16 %v4381
        %v6130 = vunpack.c.l.b16 %v4382
        %v6131 = vunpack.c.h.b16 %v4382
        %v6132 = vunpack.c.l.b16 %v4383
        %v6133 = vunpack.c.h.b16 %v4383
        %v6134 = vunpack.c.l.b16 %v4384
        %v6135 = vunpack.c.h.b16 %v4384
        %v6136 = vunpack.c.l.b16 %v4385
        %v6137 = vunpack.c.h.b16 %v4385
        %v6138 = vunpack.c.l.b16 %v4386
        %v6139 = vunpack.c.h.b16 %v4386
        %v6140 = vunpack.c.l.b16 %v4387
        %v6141 = vunpack.c.h.b16 %v4387
        %v6142 = vunpack.c.l.b16 %v4388
        %v6143 = vunpack.c.h.b16 %v4388
        %v6144 = vunpack.c.l.b16 %v4389
        %v6145 = vunpack.c.h.b16 %v4389
        %v6146 = vunpack.c.l.b16 %v4390
        %v6147 = vunpack.c.h.b16 %v4390
        %v6148 = vunpack.c.l.b16 %v4391
        %v6149 = vunpack.c.h.b16 %v4391
        %v6150 = vunpack.c.l.b16 %v4392
        %v6151 = vunpack.c.h.b16 %v4392
        %v6152 = vunpack.c.l.b16 %v4393
        %v6153 = vunpack.c.h.b16 %v4393
        %v6154 = vunpack.c.l.b16 %v4394
        %v6155 = vunpack.c.h.b16 %v4394
        %v6156 = vunpack.c.l.b16 %v4395
        %v6157 = vunpack.c.h.b16 %v4395
        %v6158 = vunpack.c.l.b16 %v4396
        %v6159 = vunpack.c.h.b16 %v4396
        %v6160 = vunpack.c.l.b16 %v4397
        %v6161 = vunpack.c.h.b16 %v4397
        %v6162 = vunpack.c.l.b16 %v4398
        %v6163 = vunpack.c.h.b16 %v4398
        %v6164 = vunpack.c.l.b16 %v4399
        %v6165 = vunpack.c.h.b16 %v4399
        %v6166 = vunpack.c.l.b16 %v4400
        %v6167 = vunpack.c.h.b16 %v4400
        %v6168 = vunpack.c.l.b16 %v4401
        %v6169 = vunpack.c.h.b16 %v4401
        %v6170 = vunpack.c.l.b16 %v4402
        %v6171 = vunpack.c.h.b16 %v4402
        %v6172 = vunpack.c.l.b16 %v4403
        %v6173 = vunpack.c.h.b16 %v4403
        %v6174 = vunpack.c.l.b16 %v4404
        %v6175 = vunpack.c.h.b16 %v4404
        %v6176 = vunpack.c.l.b16 %v4405
        %v6177 = vunpack.c.h.b16 %v4405
        %v6178 = vunpack.c.l.b16 %v4406
        %v6179 = vunpack.c.h.b16 %v4406
        %v6180 = vunpack.c.l.b16 %v4407
        %v6181 = vunpack.c.h.b16 %v4407
        %v6182 = vunpack.c.l.b16 %v4408
        %v6183 = vunpack.c.h.b16 %v4408
        %v6184 = vunpack.c.l.b16 %v4409
        %v6185 = vunpack.c.h.b16 %v4409
        %v6186 = vunpack.c.l.b16 %v4410
        %v6187 = vunpack.c.h.b16 %v4410
        %v6188 = vunpack.c.l.b16 %v4411
        %v6189 = vunpack.c.h.b16 %v4411
        %v6190 = vunpack.c.l.b16 %v4412
        %v6191 = vunpack.c.h.b16 %v4412
        %v6192 = vunpack.c.l.b16 %v4413
        %v6193 = vunpack.c.h.b16 %v4413
        %v6194 = vunpack.c.l.b16 %v4414
        %v6195 = vunpack.c.h.b16 %v4414
        %v6196 = vunpack.c.l.b16 %v4415
        %v6197 = vunpack.c.h.b16 %v4415
        %v6198 = vunpack.c.l.b16 %v4416
        %v6199 = vunpack.c.h.b16 %v4416
        %v6200 = vunpack.c.l.b16 %v4417
        %v6201 = vunpack.c.h.b16 %v4417
        %v6202 = vunpack.c.l.b16 %v4418
        %v6203 = vunpack.c.h.b16 %v4418
        %v6204 = vunpack.c.l.b16 %v4419
        %v6205 = vunpack.c.h.b16 %v4419
        %v6206 = vunpack.c.l.b16 %v4420
        %v6207 = vunpack.c.h.b16 %v4420
        %v6208 = vunpack.c.l.b16 %v4421
        %v6209 = vunpack.c.h.b16 %v4421
        %v6210 = vunpack.c.l.b16 %v4422
        %v6211 = vunpack.c.h.b16 %v4422
        %v6212 = vunpack.c.l.b16 %v4423
        %v6213 = vunpack.c.h.b16 %v4423
        %v6214 = vunpack.c.l.b16 %v4424
        %v6215 = vunpack.c.h.b16 %v4424
        %v6216 = vunpack.c.l.b16 %v4425
        %v6217 = vunpack.c.h.b16 %v4425
        %v6218 = vunpack.c.l.b16 %v4426
        %v6219 = vunpack.c.h.b16 %v4426
        %v6220 = vunpack.c.l.b16 %v4427
        %v6221 = vunpack.c.h.b16 %v4427
        %v6222 = vunpack.c.l.b16 %v4428
        %v6223 = vunpack.c.h.b16 %v4428
        %v6224 = vunpack.c.l.b16 %v4429
        %v6225 = vunpack.c.h.b16 %v4429
        %v6226 = vunpack.c.l.b16 %v4430
        %v6227 = vunpack.c.h.b16 %v4430
        %v6228 = vunpack.c.l.b16 %v4431
        %v6229 = vunpack.c.h.b16 %v4431
        %v6230 = vunpack.c.l.b16 %v4432
        %v6231 = vunpack.c.h.b16 %v4432
        %v6232 = vunpack.c.l.b16 %v4433
        %v6233 = vunpack.c.h.b16 %v4433
        %v6234 = vunpack.c.l.b16 %v4434
        %v6235 = vunpack.c.h.b16 %v4434
        %v6236 = vunpack.c.l.b16 %v4435
        %v6237 = vunpack.c.h.b16 %v4435
        %v6238 = vunpack.c.l.b16 %v4436
        %v6239 = vunpack.c.h.b16 %v4436
        %v6240 = vunpack.c.l.b16 %v4437
        %v6241 = vunpack.c.h.b16 %v4437
        %v6242 = vunpack.c.l.b16 %v4438
        %v6243 = vunpack.c.h.b16 %v4438
        %v6244 = vunpack.c.l.b16 %v4439
        %v6245 = vunpack.c.h.b16 %v4439
        %v6246 = vunpack.c.l.b16 %v4440
        %v6247 = vunpack.c.h.b16 %v4440
        %v6248 = vunpack.c.l.b16 %v4441
        %v6249 = vunpack.c.h.b16 %v4441
        %v6250 = vunpack.c.l.b16 %v4442
        %v6251 = vunpack.c.h.b16 %v4442
        %v6252 = vunpack.c.l.b16 %v4443
        %v6253 = vunpack.c.h.b16 %v4443
        %v6254 = vunpack.c.l.b16 %v4444
        %v6255 = vunpack.c.h.b16 %v4444
        %v6256 = vunpack.c.l.b16 %v4445
        %v6257 = vunpack.c.h.b16 %v4445
        %v6258 = vunpack.c.l.b16 %v4446
        %v6259 = vunpack.c.h.b16 %v4446
        %v6260 = vunpack.c.l.b16 %v4447
        %v6261 = vunpack.c.h.b16 %v4447
        %v6262 = vunpack.c.l.b16 %v4448
        %v6263 = vunpack.c.h.b16 %v4448
        %v6264 = vunpack.c.l.b16 %v4449
        %v6265 = vunpack.c.h.b16 %v4449
        %v6266 = vunpack.c.l.b16 %v4450
        %v6267 = vunpack.c.h.b16 %v4450
        %v6268 = vunpack.c.l.b16 %v4451
        %v6269 = vunpack.c.h.b16 %v4451
        %v6270 = vunpack.c.l.b16 %v4452
        %v6271 = vunpack.c.h.b16 %v4452
        %v6272 = vunpack.c.l.b16 %v4453
        %v6273 = vunpack.c.h.b16 %v4453
        %v6274 = vunpack.c.l.b16 %v4454
        %v6275 = vunpack.c.h.b16 %v4454
        %v6276 = vunpack.c.l.b16 %v4455
        %v6277 = vunpack.c.h.b16 %v4455
        %v6278 = vunpack.c.l.b16 %v4456
        %v6279 = vunpack.c.h.b16 %v4456
        %v6280 = vunpack.c.l.b16 %v4457
        %v6281 = vunpack.c.h.b16 %v4457
        %v6282 = vunpack.c.l.b16 %v4458
        %v6283 = vunpack.c.h.b16 %v4458
        %v6284 = vunpack.c.l.b16 %v4459
        %v6285 = vunpack.c.h.b16 %v4459
        %v6286 = vunpack.c.l.b16 %v4460
        %v6287 = vunpack.c.h.b16 %v4460
        %v6288 = vunpack.c.l.b16 %v4461
        %v6289 = vunpack.c.h.b16 %v4461
        %v6290 = vunpack.c.l.b16 %v4462
        %v6291 = vunpack.c.h.b16 %v4462
        %v6292 = vunpack.c.l.b16 %v4463
        %v6293 = vunpack.c.h.b16 %v4463
        %v6294 = vunpack.c.l.b16 %v4464
        %v6295 = vunpack.c.h.b16 %v4464
        %v6296 = vunpack.c.l.b16 %v4465
        %v6297 = vunpack.c.h.b16 %v4465
        %v6298 = vunpack.c.l.b16 %v4466
        %v6299 = vunpack.c.h.b16 %v4466
        %v6300 = vunpack.c.l.b16 %v4467
        %v6301 = vunpack.c.h.b16 %v4467
        %v6302 = vunpack.c.l.b16 %v4468
        %v6303 = vunpack.c.h.b16 %v4468
        %v6304 = vunpack.c.l.b16 %v4469
        %v6305 = vunpack.c.h.b16 %v4469
        %v6306 = vunpack.c.l.b16 %v4470
        %v6307 = vunpack.c.h.b16 %v4470
        %v6308 = vunpack.c.l.b16 %v4471
        %v6309 = vunpack.c.h.b16 %v4471
        %v6310 = vunpack.c.l.b16 %v4472
        %v6311 = vunpack.c.h.b16 %v4472
        %v6312 = vunpack.c.l.b16 %v4473
        %v6313 = vunpack.c.h.b16 %v4473
        %v6314 = vunpack.c.l.b16 %v4474
        %v6315 = vunpack.c.h.b16 %v4474
        %v6316 = vunpack.c.l.b16 %v4475
        %v6317 = vunpack.c.h.b16 %v4475
        %v6318 = vunpack.c.l.b16 %v4476
        %v6319 = vunpack.c.h.b16 %v4476
        %v6320 = vunpack.c.l.b16 %v4477
        %v6321 = vunpack.c.h.b16 %v4477
        %v6322 = vunpack.c.l.b16 %v4478
        %v6323 = vunpack.c.h.b16 %v4478
        %v6324 = vunpack.c.l.b16 %v4479
        %v6325 = vunpack.c.h.b16 %v4479
        %v6326 = vunpack.c.l.b16 %v4480
        %v6327 = vunpack.c.h.b16 %v4480
        %v6328 = vunpack.c.l.b16 %v4481
        %v6329 = vunpack.c.h.b16 %v4481
        %v6330 = vunpack.c.l.b16 %v4482
        %v6331 = vunpack.c.h.b16 %v4482
        %v6332 = vunpack.c.l.b16 %v4483
        %v6333 = vunpack.c.h.b16 %v4483
        %v6334 = vunpack.c.l.b16 %v4484
        %v6335 = vunpack.c.h.b16 %v4484
        %v6336 = vunpack.c.l.b16 %v4485
        %v6337 = vunpack.c.h.b16 %v4485
        %v6338 = vunpack.c.l.b16 %v4486
        %v6339 = vunpack.c.h.b16 %v4486
        %v6340 = vunpack.c.l.b16 %v4487
        %v6341 = vunpack.c.h.b16 %v4487
        %v6342 = vunpack.c.l.b16 %v4488
        %v6343 = vunpack.c.h.b16 %v4488
        %v6344 = vunpack.c.l.b16 %v4489
        %v6345 = vunpack.c.h.b16 %v4489
        %v6346 = vunpack.c.l.b16 %v4490
        %v6347 = vunpack.c.h.b16 %v4490
        %v6348 = vunpack.c.l.b16 %v4491
        %v6349 = vunpack.c.h.b16 %v4491
        %v6350 = vunpack.c.l.b16 %v4492
        %v6351 = vunpack.c.h.b16 %v4492
        %v6352 = vunpack.c.l.b16 %v4493
        %v6353 = vunpack.c.h.b16 %v4493
        %v6354 = vunpack.c.l.b16 %v4494
        %v6355 = vunpack.c.h.b16 %v4494
        %v6356 = vunpack.c.l.b16 %v4495
        %v6357 = vunpack.c.h.b16 %v4495
        %v6358 = vunpack.c.l.b16 %v4496
        %v6359 = vunpack.c.h.b16 %v4496
        %v6360 = vunpack.c.l.b16 %v4497
        %v6361 = vunpack.c.h.b16 %v4497
        %v6362 = vunpack.c.l.b16 %v4498
        %v6363 = vunpack.c.h.b16 %v4498
        %v6364 = vunpack.c.l.b16 %v4499
        %v6365 = vunpack.c.h.b16 %v4499
        %v6366 = vunpack.c.l.b16 %v4500
        %v6367 = vunpack.c.h.b16 %v4500
        %v6368 = vunpack.c.l.b16 %v4501
        %v6369 = vunpack.c.h.b16 %v4501
        %v6370 = vunpack.c.l.b16 %v4502
        %v6371 = vunpack.c.h.b16 %v4502
        %v6372 = vunpack.c.l.b16 %v4503
        %v6373 = vunpack.c.h.b16 %v4503
        %v6374 = vunpack.c.l.b16 %v4504
        %v6375 = vunpack.c.h.b16 %v4504
        %v6376 = vunpack.c.l.b16 %v4505
        %v6377 = vunpack.c.h.b16 %v4505
        %v6378 = vunpack.c.l.b16 %v4506
        %v6379 = vunpack.c.h.b16 %v4506
        %v6380 = vunpack.c.l.b16 %v4507
        %v6381 = vunpack.c.h.b16 %v4507
        %v6382 = vunpack.c.l.b16 %v4508
        %v6383 = vunpack.c.h.b16 %v4508
        %v6384 = vunpack.c.l.b16 %v4509
        %v6385 = vunpack.c.h.b16 %v4509
        %v6386 = vunpack.c.l.b16 %v4510
        %v6387 = vunpack.c.h.b16 %v4510
        %v6388 = vunpack.c.l.b16 %v4511
        %v6389 = vunpack.c.h.b16 %v4511
        %v6390 = vunpack.c.l.b16 %v4512
        %v6391 = vunpack.c.h.b16 %v4512
        %v6392 = vunpack.c.l.b16 %v4513
        %v6393 = vunpack.c.h.b16 %v4513
        %v6394 = vunpack.c.l.b16 %v4514
        %v6395 = vunpack.c.h.b16 %v4514
        %v6396 = vunpack.c.l.b16 %v4515
        %v6397 = vunpack.c.h.b16 %v4515
        %v6398 = vunpack.c.l.b16 %v4516
        %v6399 = vunpack.c.h.b16 %v4516
        %v6400 = vunpack.c.l.b16 %v4517
        %v6401 = vunpack.c.h.b16 %v4517
        %v6402 = vunpack.c.l.b16 %v4518
        %v6403 = vunpack.c.h.b16 %v4518
        %v6404 = vunpack.c.l.b16 %v4519
        %v6405 = vunpack.c.h.b16 %v4519
        %v6406 = vunpack.c.l.b16 %v4520
        %v6407 = vunpack.c.h.b16 %v4520
        %v6408 = vunpack.c.l.b16 %v4521
        %v6409 = vunpack.c.h.b16 %v4521
        %v6410 = vunpack.c.l.b16 %v4522
        %v6411 = vunpack.c.h.b16 %v4522
        %v6412 = vunpack.c.l.b16 %v4523
        %v6413 = vunpack.c.h.b16 %v4523
        %v6414 = vunpack.c.l.b16 %v4524
        %v6415 = vunpack.c.h.b16 %v4524
        %v6416 = vunpack.c.l.b16 %v4525
        %v6417 = vunpack.c.h.b16 %v4525
        %v6418 = vunpack.c.l.b16 %v4526
        %v6419 = vunpack.c.h.b16 %v4526
        %v6420 = vunpack.c.l.b16 %v4527
        %v6421 = vunpack.c.h.b16 %v4527
        %v6422 = vunpack.c.l.b16 %v4528
        %v6423 = vunpack.c.h.b16 %v4528
        %v6424 = vunpack.c.l.b16 %v4529
        %v6425 = vunpack.c.h.b16 %v4529
        %v6426 = vunpack.c.l.b16 %v4530
        %v6427 = vunpack.c.h.b16 %v4530
        %v6428 = vunpack.c.l.b16 %v4531
        %v6429 = vunpack.c.h.b16 %v4531
        %v6430 = vunpack.c.l.b16 %v4532
        %v6431 = vunpack.c.h.b16 %v4532
        %v6432 = vunpack.c.l.b16 %v4533
        %v6433 = vunpack.c.h.b16 %v4533
        %v6434 = vunpack.c.l.b16 %v4534
        %v6435 = vunpack.c.h.b16 %v4534
        %v6436 = vunpack.c.l.b16 %v4535
        %v6437 = vunpack.c.h.b16 %v4535
        %v6438 = vunpack.c.l.b16 %v4536
        %v6439 = vunpack.c.h.b16 %v4536
        %v6440 = vunpack.c.l.b16 %v4537
        %v6441 = vunpack.c.h.b16 %v4537
        %v6442 = vunpack.c.l.b16 %v4538
        %v6443 = vunpack.c.h.b16 %v4538
        %v6444 = vunpack.c.l.b16 %v4539
        %v6445 = vunpack.c.h.b16 %v4539
        %v6446 = vunpack.c.l.b16 %v4540
        %v6447 = vunpack.c.h.b16 %v4540
        %v6448 = vunpack.c.l.b16 %v4541
        %v6449 = vunpack.c.h.b16 %v4541
        %v6450 = vunpack.c.l.b16 %v4542
        %v6451 = vunpack.c.h.b16 %v4542
        %v6452 = vunpack.c.l.b16 %v4543
        %v6453 = vunpack.c.h.b16 %v4543
        %v6454 = vunpack.c.l.b16 %v4544
        %v6455 = vunpack.c.h.b16 %v4544
        %v6456 = vunpack.c.l.b16 %v4545
        %v6457 = vunpack.c.h.b16 %v4545
        %v6458 = vunpack.c.l.b16 %v4546
        %v6459 = vunpack.c.h.b16 %v4546
        %v6460 = vunpack.c.l.b16 %v4547
        %v6461 = vunpack.c.h.b16 %v4547
        %v6462 = vunpack.c.l.b16 %v4548
        %v6463 = vunpack.c.h.b16 %v4548
        %v6464 = vunpack.c.l.b16 %v4549
        %v6465 = vunpack.c.h.b16 %v4549
        %v6466 = vunpack.c.l.b16 %v4550
        %v6467 = vunpack.c.h.b16 %v4550
        %v6468 = vunpack.c.l.b16 %v4551
        %v6469 = vunpack.c.h.b16 %v4551
        %v6470 = vunpack.c.l.b16 %v4552
        %v6471 = vunpack.c.h.b16 %v4552
        %v6472 = vunpack.c.l.b16 %v4553
        %v6473 = vunpack.c.h.b16 %v4553
        %v6474 = vunpack.c.l.b16 %v4554
        %v6475 = vunpack.c.h.b16 %v4554
        %v6476 = vunpack.c.l.b16 %v4555
        %v6477 = vunpack.c.h.b16 %v4555
        %v6478 = vunpack.c.l.b16 %v4556
        %v6479 = vunpack.c.h.b16 %v4556
        %v6480 = vunpack.c.l.b16 %v4557
        %v6481 = vunpack.c.h.b16 %v4557
        %v6482 = vunpack.c.l.b16 %v4558
        %v6483 = vunpack.c.h.b16 %v4558
        %v6484 = vunpack.c.l.b16 %v4559
        %v6485 = vunpack.c.h.b16 %v4559
        %v6486 = vunpack.c.l.b16 %v4560
        %v6487 = vunpack.c.h.b16 %v4560
        %v6488 = vunpack.c.l.b16 %v4561
        %v6489 = vunpack.c.h.b16 %v4561
        %v6490 = vunpack.c.l.b16 %v4562
        %v6491 = vunpack.c.h.b16 %v4562
        %v6492 = vunpack.c.l.b16 %v4563
        %v6493 = vunpack.c.h.b16 %v4563
        %v6494 = vunpack.c.l.b16 %v4564
        %v6495 = vunpack.c.h.b16 %v4564
        %v6496 = vunpack.c.l.b16 %v4565
        %v6497 = vunpack.c.h.b16 %v4565
        %v6498 = vunpack.c.l.b16 %v4566
        %v6499 = vunpack.c.h.b16 %v4566
        %v6500 = vunpack.c.l.b16 %v4567
        %v6501 = vunpack.c.h.b16 %v4567
        %v6502 = vunpack.c.l.b16 %v4568
        %v6503 = vunpack.c.h.b16 %v4568
        %v6504 = vunpack.c.l.b16 %v4569
        %v6505 = vunpack.c.h.b16 %v4569
        %v6506 = vunpack.c.l.b16 %v4570
        %v6507 = vunpack.c.h.b16 %v4570
        %v6508 = vunpack.c.l.b16 %v4571
        %v6509 = vunpack.c.h.b16 %v4571
        %v6510 = vunpack.c.l.b16 %v4572
        %v6511 = vunpack.c.h.b16 %v4572
        %v6512 = vunpack.c.l.b16 %v4573
        %v6513 = vunpack.c.h.b16 %v4573
        %v6514 = vunpack.c.l.b16 %v4574
        %v6515 = vunpack.c.h.b16 %v4574
        %v6516 = vunpack.c.l.b16 %v4575
        %v6517 = vunpack.c.h.b16 %v4575
        %v6518 = vunpack.c.l.b16 %v4576
        %v6519 = vunpack.c.h.b16 %v4576
        %v6520 = vunpack.c.l.b16 %v4577
        %v6521 = vunpack.c.h.b16 %v4577
        %v6522 = vunpack.c.l.b16 %v4578
        %v6523 = vunpack.c.h.b16 %v4578
        %v6524 = vunpack.c.l.b16 %v4579
        %v6525 = vunpack.c.h.b16 %v4579
        %v6526 = vunpack.c.l.b16 %v4580
        %v6527 = vunpack.c.h.b16 %v4580
        %v6528 = vunpack.c.l.b16 %v4581
        %v6529 = vunpack.c.h.b16 %v4581
        %v6530 = vunpack.c.l.b16 %v4582
        %v6531 = vunpack.c.h.b16 %v4582
        %v6532 = vunpack.c.l.b16 %v4583
        %v6533 = vunpack.c.h.b16 %v4583
        %v6534 = vunpack.c.l.b16 %v4584
        %v6535 = vunpack.c.h.b16 %v4584
        %v6536 = vunpack.c.l.b16 %v4585
        %v6537 = vunpack.c.h.b16 %v4585
        %v6538 = vunpack.c.l.b16 %v4586
        %v6539 = vunpack.c.h.b16 %v4586
        %v6540 = vunpack.c.l.b16 %v4587
        %v6541 = vunpack.c.h.b16 %v4587
        %v6542 = vunpack.c.l.b16 %v4588
        %v6543 = vunpack.c.h.b16 %v4588
        %v6544 = vunpack.c.l.b16 %v4589
        %v6545 = vunpack.c.h.b16 %v4589
        %v6546 = vunpack.c.l.b16 %v4590
        %v6547 = vunpack.c.h.b16 %v4590
        %v6548 = vunpack.c.l.b16 %v4591
        %v6549 = vunpack.c.h.b16 %v4591
        %v6550 = vunpack.c.l.b16 %v4592
        %v6551 = vunpack.c.h.b16 %v4592
        %v6552 = vunpack.c.l.b16 %v4593
        %v6553 = vunpack.c.h.b16 %v4593
        %v6554 = vunpack.c.l.b16 %v4594
        %v6555 = vunpack.c.h.b16 %v4594
        %v6556 = vunpack.c.l.b16 %v4595
        %v6557 = vunpack.c.h.b16 %v4595
        %v6558 = vunpack.c.l.b16 %v4596
        %v6559 = vunpack.c.h.b16 %v4596
        %v6560 = vunpack.c.l.b16 %v4597
        %v6561 = vunpack.c.h.b16 %v4597
        %v6562 = vunpack.c.l.b16 %v4598
        %v6563 = vunpack.c.h.b16 %v4598
        %v6564 = vunpack.c.l.b16 %v4599
        %v6565 = vunpack.c.h.b16 %v4599
        %v6566 = vunpack.c.l.b16 %v4600
        %v6567 = vunpack.c.h.b16 %v4600
        %v6568 = vunpack.c.l.b16 %v4601
        %v6569 = vunpack.c.h.b16 %v4601
        %v6570 = vunpack.c.l.b16 %v4602
        %v6571 = vunpack.c.h.b16 %v4602
        %v6572 = vunpack.c.l.b16 %v4603
        %v6573 = vunpack.c.h.b16 %v4603
        %v6574 = vunpack.c.l.b16 %v4604
        %v6575 = vunpack.c.h.b16 %v4604
        %v6576 = vunpack.c.l.b16 %v4605
        %v6577 = vunpack.c.h.b16 %v4605
        %v6578 = vunpack.c.l.b16 %v4606
        %v6579 = vunpack.c.h.b16 %v4606
        %v6580 = vunpack.c.l.b16 %v4607
        %v6581 = vunpack.c.h.b16 %v4607
        %v6582 = vunpack.c.l.b16 %v4608
        %v6583 = vunpack.c.h.b16 %v4608
        %v6584 = vunpack.c.l.b16 %v4609
        %v6585 = vunpack.c.h.b16 %v4609
        %v6586 = vunpack.c.l.b16 %v4610
        %v6587 = vunpack.c.h.b16 %v4610
        %v6588 = vunpack.c.l.b16 %v4611
        %v6589 = vunpack.c.h.b16 %v4611
        %v6590 = vunpack.c.l.b16 %v4612
        %v6591 = vunpack.c.h.b16 %v4612
        %v6592 = vunpack.c.l.b16 %v4613
        %v6593 = vunpack.c.h.b16 %v4613
        %v6594 = vunpack.c.l.b16 %v4614
        %v6595 = vunpack.c.h.b16 %v4614
        %v6596 = vunpack.c.l.b16 %v4615
        %v6597 = vunpack.c.h.b16 %v4615
        %v6598 = vunpack.c.l.b16 %v4616
        %v6599 = vunpack.c.h.b16 %v4616
        %v6600 = vunpack.c.l.b16 %v4617
        %v6601 = vunpack.c.h.b16 %v4617
        %v6602 = vunpack.c.l.b16 %v4618
        %v6603 = vunpack.c.h.b16 %v4618
        %v6604 = vunpack.c.l.b16 %v4619
        %v6605 = vunpack.c.h.b16 %v4619
        %v6606 = vunpack.c.l.b16 %v4620
        %v6607 = vunpack.c.h.b16 %v4620
        %v6608 = vunpack.c.l.b16 %v4621
        %v6609 = vunpack.c.h.b16 %v4621
        %v6610 = vunpack.c.l.b16 %v4622
        %v6611 = vunpack.c.h.b16 %v4622
        %v6612 = vunpack.c.l.b16 %v4623
        %v6613 = vunpack.c.h.b16 %v4623
        %v6614 = vunpack.c.l.b16 %v4624
        %v6615 = vunpack.c.h.b16 %v4624
        %v6616 = vunpack.c.l.b16 %v4625
        %v6617 = vunpack.c.h.b16 %v4625
        %v6618 = vunpack.c.l.b16 %v4626
        %v6619 = vunpack.c.h.b16 %v4626
        %v6620 = vunpack.c.l.b16 %v4627
        %v6621 = vunpack.c.h.b16 %v4627
        %v6622 = vunpack.c.l.b16 %v4628
        %v6623 = vunpack.c.h.b16 %v4628
        %v6624 = vunpack.c.l.b16 %v4629
        %v6625 = vunpack.c.h.b16 %v4629
        %v6626 = vunpack.c.l.b16 %v4630
        %v6627 = vunpack.c.h.b16 %v4630
        %v6628 = vunpack.c.l.b16 %v4631
        %v6629 = vunpack.c.h.b16 %v4631
        %v6630 = vunpack.c.l.b16 %v4632
        %v6631 = vunpack.c.h.b16 %v4632
        %v6632 = vunpack.c.l.b16 %v4633
        %v6633 = vunpack.c.h.b16 %v4633
        %v6634 = vunpack.c.l.b16 %v4634
        %v6635 = vunpack.c.h.b16 %v4634
        %v6636 = vunpack.c.l.b16 %v4635
        %v6637 = vunpack.c.h.b16 %v4635
        %v6638 = vunpack.c.l.b16 %v4636
        %v6639 = vunpack.c.h.b16 %v4636
        %v6640 = vunpack.c.l.b16 %v4637
        %v6641 = vunpack.c.h.b16 %v4637
        %v6642 = vunpack.c.l.b16 %v4638
        %v6643 = vunpack.c.h.b16 %v4638
        %v6644 = vunpack.c.l.b16 %v4639
        %v6645 = vunpack.c.h.b16 %v4639
        %v6646 = vunpack.c.l.b16 %v4640
        %v6647 = vunpack.c.h.b16 %v4640
        %v6648 = vunpack.c.l.b16 %v4641
        %v6649 = vunpack.c.h.b16 %v4641
        %v6650 = vunpack.c.l.b16 %v4642
        %v6651 = vunpack.c.h.b16 %v4642
        %v6652 = vunpack.c.l.b16 %v4643
        %v6653 = vunpack.c.h.b16 %v4643
        %v6654 = vunpack.c.l.b16 %v4644
        %v6655 = vunpack.c.h.b16 %v4644
        %v6656 = vunpack.c.l.b16 %v4645
        %v6657 = vunpack.c.h.b16 %v4645
        %v6658 = vunpack.c.l.b16 %v4646
        %v6659 = vunpack.c.h.b16 %v4646
        %v6660 = vunpack.c.l.b16 %v4647
        %v6661 = vunpack.c.h.b16 %v4647
        %v6662 = vunpack.c.l.b16 %v4648
        %v6663 = vunpack.c.h.b16 %v4648
        %v6664 = vunpack.c.l.b16 %v4649
        %v6665 = vunpack.c.h.b16 %v4649
        %v6666 = vunpack.c.l.b16 %v4650
        %v6667 = vunpack.c.h.b16 %v4650
        %v6668 = vunpack.c.l.b16 %v4651
        %v6669 = vunpack.c.h.b16 %v4651
        %v6670 = vunpack.c.l.b16 %v4652
        %v6671 = vunpack.c.h.b16 %v4652
        %v6672 = vunpack.c.l.b16 %v4653
        %v6673 = vunpack.c.h.b16 %v4653
        %v6674 = vunpack.c.l.b16 %v4654
        %v6675 = vunpack.c.h.b16 %v4654
        %v6676 = vunpack.c.l.b16 %v4655
        %v6677 = vunpack.c.h.b16 %v4655
        %v6678 = vunpack.c.l.b16 %v4656
        %v6679 = vunpack.c.h.b16 %v4656
        %v6680 = vunpack.c.l.b16 %v4657
        %v6681 = vunpack.c.h.b16 %v4657
        %v6682 = vunpack.c.l.b16 %v4658
        %v6683 = vunpack.c.h.b16 %v4658
        %v6684 = vunpack.c.l.b16 %v4659
        %v6685 = vunpack.c.h.b16 %v4659
        %v6686 = vunpack.c.l.b16 %v4660
        %v6687 = vunpack.c.h.b16 %v4660
        %v6688 = vunpack.c.l.b16 %v4661
        %v6689 = vunpack.c.h.b16 %v4661
        %v6690 = vunpack.c.l.b16 %v4662
        %v6691 = vunpack.c.h.b16 %v4662
        %v6692 = vunpack.c.l.b16 %v4663
        %v6693 = vunpack.c.h.b16 %v4663
        %v6694 = vunpack.c.l.b16 %v4664
        %v6695 = vunpack.c.h.b16 %v4664
        %v6696 = vunpack.c.l.b16 %v4665
        %v6697 = vunpack.c.h.b16 %v4665
        %v6698 = vunpack.c.l.b16 %v4666
        %v6699 = vunpack.c.h.b16 %v4666
        %v6700 = vunpack.c.l.b16 %v4667
        %v6701 = vunpack.c.h.b16 %v4667
        %v6702 = vunpack.c.l.b16 %v4668
        %v6703 = vunpack.c.h.b16 %v4668
        %v6704 = vunpack.c.l.b16 %v4669
        %v6705 = vunpack.c.h.b16 %v4669
        %v6706 = vunpack.c.l.b16 %v4670
        %v6707 = vunpack.c.h.b16 %v4670
        %v6708 = vunpack.c.l.b16 %v4671
        %v6709 = vunpack.c.h.b16 %v4671
        %v6710 = vunpack.c.l.b16 %v4672
        %v6711 = vunpack.c.h.b16 %v4672
        %v6712 = vunpack.c.l.b16 %v4673
        %v6713 = vunpack.c.h.b16 %v4673
        %v6714 = vunpack.c.l.b16 %v4674
        %v6715 = vunpack.c.h.b16 %v4674
        %v6716 = vunpack.c.l.b16 %v4675
        %v6717 = vunpack.c.h.b16 %v4675
        %v6718 = vunpack.c.l.b16 %v4676
        %v6719 = vunpack.c.h.b16 %v4676
        %v6720 = vunpack.c.l.b16 %v4677
        %v6721 = vunpack.c.h.b16 %v4677
        %v6722 = vunpack.c.l.b16 %v4678
        %v6723 = vunpack.c.h.b16 %v4678
        %v6724 = vunpack.c.l.b16 %v4679
        %v6725 = vunpack.c.h.b16 %v4679
        %v6726 = vunpack.c.l.b16 %v4680
        %v6727 = vunpack.c.h.b16 %v4680
        %v6728 = vunpack.c.l.b16 %v4681
        %v6729 = vunpack.c.h.b16 %v4681
        %v6730 = vunpack.c.l.b16 %v4682
        %v6731 = vunpack.c.h.b16 %v4682
        %v6732 = vunpack.c.l.b16 %v4683
        %v6733 = vunpack.c.h.b16 %v4683
        %v6734 = vunpack.c.l.b16 %v4684
        %v6735 = vunpack.c.h.b16 %v4684
        %v6736 = vunpack.c.l.b16 %v4685
        %v6737 = vunpack.c.h.b16 %v4685
        %v6738 = vunpack.c.l.b16 %v4686
        %v6739 = vunpack.c.h.b16 %v4686
        %v6740 = vunpack.c.l.b16 %v4687
        %v6741 = vunpack.c.h.b16 %v4687
        %v6742 = vunpack.c.l.b16 %v4688
        %v6743 = vunpack.c.h.b16 %v4688
        %v6744 = vunpack.c.l.b16 %v4689
        %v6745 = vunpack.c.h.b16 %v4689
        %v6746 = vunpack.c.l.b16 %v4690
        %v6747 = vunpack.c.h.b16 %v4690
        %v6748 = vunpack.c.l.b16 %v4691
        %v6749 = vunpack.c.h.b16 %v4691
        %v6750 = vunpack.c.l.b16 %v4692
        %v6751 = vunpack.c.h.b16 %v4692
        %v6752 = vunpack.c.l.b16 %v4693
        %v6753 = vunpack.c.h.b16 %v4693
        %v6754 = vunpack.c.l.b16 %v4694
        %v6755 = vunpack.c.h.b16 %v4694
        %v6756 = vunpack.c.l.b16 %v4695
        %v6757 = vunpack.c.h.b16 %v4695
        %v6758 = vunpack.c.l.b16 %v4696
        %v6759 = vunpack.c.h.b16 %v4696
        %v6760 = vunpack.c.l.b16 %v4697
        %v6761 = vunpack.c.h.b16 %v4697
        %v6762 = vunpack.c.l.b16 %v4698
        %v6763 = vunpack.c.h.b16 %v4698
        %v6764 = vunpack.c.l.b16 %v4699
        %v6765 = vunpack.c.h.b16 %v4699
        %v6766 = vunpack.c.l.b16 %v4700
        %v6767 = vunpack.c.h.b16 %v4700
        %v6768 = vunpack.c.l.b16 %v4701
        %v6769 = vunpack.c.h.b16 %v4701
        %v6770 = vunpack.c.l.b16 %v4702
        %v6771 = vunpack.c.h.b16 %v4702
        %v6772 = vunpack.c.l.b16 %v4703
        %v6773 = vunpack.c.h.b16 %v4703
        %v6774 = vunpack.c.l.b16 %v4704
        %v6775 = vunpack.c.h.b16 %v4704
        %v6776 = vunpack.c.l.b16 %v4705
        %v6777 = vunpack.c.h.b16 %v4705
        %v6778 = vunpack.c.l.b16 %v4706
        %v6779 = vunpack.c.h.b16 %v4706
        %v6780 = vunpack.c.l.b16 %v4707
        %v6781 = vunpack.c.h.b16 %v4707
        %v6782 = vunpack.c.l.b16 %v4708
        %v6783 = vunpack.c.h.b16 %v4708
        %v6784 = vunpack.c.l.b16 %v4709
        %v6785 = vunpack.c.h.b16 %v4709
        %v6786 = vunpack.c.l.b16 %v4710
        %v6787 = vunpack.c.h.b16 %v4710
        %v6788 = vunpack.c.l.b16 %v4711
        %v6789 = vunpack.c.h.b16 %v4711
        %v6790 = vunpack.c.l.b16 %v4712
        %v6791 = vunpack.c.h.b16 %v4712
        %v6792 = vunpack.c.l.b16 %v4713
        %v6793 = vunpack.c.h.b16 %v4713
        %v6794 = vunpack.c.l.b16 %v4714
        %v6795 = vunpack.c.h.b16 %v4714
        %v6796 = vunpack.c.l.b16 %v4715
        %v6797 = vunpack.c.h.b16 %v4715
        %v6798 = vunpack.c.l.b16 %v4716
        %v6799 = vunpack.c.h.b16 %v4716
        %v6800 = vunpack.c.l.b16 %v4717
        %v6801 = vunpack.c.h.b16 %v4717
        %v6802 = vunpack.c.l.b16 %v4718
        %v6803 = vunpack.c.h.b16 %v4718
        %v6804 = vunpack.c.l.b16 %v4719
        %v6805 = vunpack.c.h.b16 %v4719
        %v6806 = vunpack.c.l.b16 %v4720
        %v6807 = vunpack.c.h.b16 %v4720
        %v6808 = vunpack.c.l.b16 %v4721
        %v6809 = vunpack.c.h.b16 %v4721
        %v6810 = vunpack.c.l.b16 %v4722
        %v6811 = vunpack.c.h.b16 %v4722
        %v6812 = vunpack.c.l.b16 %v4723
        %v6813 = vunpack.c.h.b16 %v4723
        %v6814 = vunpack.c.l.b16 %v4724
        %v6815 = vunpack.c.h.b16 %v4724
        %v6816 = vunpack.c.l.b16 %v4725
        %v6817 = vunpack.c.h.b16 %v4725
        %v6818 = vunpack.c.l.b16 %v4726
        %v6819 = vunpack.c.h.b16 %v4726
        %v6820 = vunpack.c.l.b16 %v4727
        %v6821 = vunpack.c.h.b16 %v4727
        %v6822 = vunpack.c.l.b16 %v4728
        %v6823 = vunpack.c.h.b16 %v4728
        %v6824 = vunpack.c.l.b16 %v4729
        %v6825 = vunpack.c.h.b16 %v4729
        %v6826 = vunpack.c.l.b16 %v4730
        %v6827 = vunpack.c.h.b16 %v4730
        %v6828 = vunpack.c.l.b16 %v4731
        %v6829 = vunpack.c.h.b16 %v4731
        %v6830 = vunpack.c.l.b16 %v4732
        %v6831 = vunpack.c.h.b16 %v4732
        %v6832 = vunpack.c.l.b16 %v4733
        %v6833 = vunpack.c.h.b16 %v4733
        %v6834 = vunpack.c.l.b16 %v4734
        %v6835 = vunpack.c.h.b16 %v4734
        %v6836 = vunpack.c.l.b16 %v4735
        %v6837 = vunpack.c.h.b16 %v4735
        %v6838 = vunpack.c.l.b16 %v4736
        %v6839 = vunpack.c.h.b16 %v4736
        %v6840 = vunpack.c.l.b16 %v4737
        %v6841 = vunpack.c.h.b16 %v4737
        %v6842 = vunpack.c.l.b16 %v4738
        %v6843 = vunpack.c.h.b16 %v4738
        %v6844 = vunpack.c.l.b16 %v4739
        %v6845 = vunpack.c.h.b16 %v4739
        %v6846 = vunpack.c.l.b16 %v4740
        %v6847 = vunpack.c.h.b16 %v4740
        %v6848 = vunpack.c.l.b16 %v4741
        %v6849 = vunpack.c.h.b16 %v4741
        %v6850 = vunpack.c.l.b16 %v4742
        %v6851 = vunpack.c.h.b16 %v4742
        %v6852 = vunpack.c.l.b16 %v4743
        %v6853 = vunpack.c.h.b16 %v4743
        %v6854 = vunpack.c.l.b16 %v4744
        %v6855 = vunpack.c.h.b16 %v4744
        %v6856 = vunpack.c.l.b16 %v4745
        %v6857 = vunpack.c.h.b16 %v4745
        %v6858 = vunpack.c.l.b16 %v4746
        %v6859 = vunpack.c.h.b16 %v4746
        %v6860 = vunpack.c.l.b16 %v4747
        %v6861 = vunpack.c.h.b16 %v4747
        %v6862 = vunpack.c.l.b16 %v4748
        %v6863 = vunpack.c.h.b16 %v4748
        %v6864 = vunpack.c.l.b16 %v4749
        %v6865 = vunpack.c.h.b16 %v4749
        %v6866 = vunpack.c.l.b16 %v4750
        %v6867 = vunpack.c.h.b16 %v4750
        %v6868 = vunpack.c.l.b16 %v4751
        %v6869 = vunpack.c.h.b16 %v4751
        %v6870 = vunpack.c.l.b16 %v4752
        %v6871 = vunpack.c.h.b16 %v4752
        %v6872 = vunpack.c.l.b16 %v4753
        %v6873 = vunpack.c.h.b16 %v4753
        %v6874 = vunpack.c.l.b16 %v4754
        %v6875 = vunpack.c.h.b16 %v4754
        %v6876 = vunpack.c.l.b16 %v4755
        %v6877 = vunpack.c.h.b16 %v4755
        %v6878 = vunpack.c.l.b16 %v4756
        %v6879 = vunpack.c.h.b16 %v4756
        %v6880 = vunpack.c.l.b16 %v4757
        %v6881 = vunpack.c.h.b16 %v4757
        %v6882 = vunpack.c.l.b16 %v4758
        %v6883 = vunpack.c.h.b16 %v4758
        %v6884 = vunpack.c.l.b16 %v4759
        %v6885 = vunpack.c.h.b16 %v4759
        %v6886 = vunpack.c.l.b16 %v4760
        %v6887 = vunpack.c.h.b16 %v4760
        %v6888 = vunpack.c.l.b16 %v4761
        %v6889 = vunpack.c.h.b16 %v4761
        %v6890 = vunpack.c.l.b16 %v4762
        %v6891 = vunpack.c.h.b16 %v4762
        %v6892 = vunpack.c.l.b16 %v4763
        %v6893 = vunpack.c.h.b16 %v4763
        %v6894 = vunpack.c.l.b16 %v4764
        %v6895 = vunpack.c.h.b16 %v4764
        %v6896 = vunpack.c.l.b16 %v4765
        %v6897 = vunpack.c.h.b16 %v4765
        %v6898 = vunpack.c.l.b16 %v4766
        %v6899 = vunpack.c.h.b16 %v4766
        %v6900 = vunpack.c.l.b16 %v4767
        %v6901 = vunpack.c.h.b16 %v4767
        %v6902 = vunpack.c.l.b16 %v4768
        %v6903 = vunpack.c.h.b16 %v4768
        %v6904 = vunpack.c.l.b16 %v4769
        %v6905 = vunpack.c.h.b16 %v4769
        %v6906 = vunpack.c.l.b16 %v4770
        %v6907 = vunpack.c.h.b16 %v4770
        %v6908 = vunpack.c.l.b16 %v4771
        %v6909 = vunpack.c.h.b16 %v4771
        %v6910 = vunpack.c.l.b16 %v4772
        %v6911 = vunpack.c.h.b16 %v4772
        %v6912 = vunpack.c.l.b16 %v4773
        %v6913 = vunpack.c.h.b16 %v4773
        %v6914 = vunpack.c.l.b16 %v4774
        %v6915 = vunpack.c.h.b16 %v4774
        %v6916 = vunpack.c.l.b16 %v4775
        %v6917 = vunpack.c.h.b16 %v4775
        %v6918 = vunpack.c.l.b16 %v4776
        %v6919 = vunpack.c.h.b16 %v4776
        %v6920 = vunpack.c.l.b16 %v4777
        %v6921 = vunpack.c.h.b16 %v4777
        %v6922 = vunpack.c.l.b16 %v4778
        %v6923 = vunpack.c.h.b16 %v4778
        %v6924 = vunpack.c.l.b16 %v4779
        %v6925 = vunpack.c.h.b16 %v4779
        %v6926 = vunpack.c.l.b16 %v4780
        %v6927 = vunpack.c.h.b16 %v4780
        %v6928 = vunpack.c.l.b16 %v4781
        %v6929 = vunpack.c.h.b16 %v4781
        %v6930 = vunpack.c.l.b16 %v4782
        %v6931 = vunpack.c.h.b16 %v4782
        %v6932 = vunpack.c.l.b16 %v4783
        %v6933 = vunpack.c.h.b16 %v4783
        %v6934 = vunpack.c.l.b16 %v4784
        %v6935 = vunpack.c.h.b16 %v4784
        %v6936 = vunpack.c.l.b16 %v4785
        %v6937 = vunpack.c.h.b16 %v4785
        %v6938 = vunpack.c.l.b16 %v4786
        %v6939 = vunpack.c.h.b16 %v4786
        %v6940 = vunpack.c.l.b16 %v4787
        %v6941 = vunpack.c.h.b16 %v4787
        %v6942 = vunpack.c.l.b16 %v4788
        %v6943 = vunpack.c.h.b16 %v4788
        %v6944 = vunpack.c.l.b16 %v4789
        %v6945 = vunpack.c.h.b16 %v4789
        %v6946 = vunpack.c.l.b16 %v4790
        %v6947 = vunpack.c.h.b16 %v4790
        %v6948 = vunpack.c.l.b16 %v4791
        %v6949 = vunpack.c.h.b16 %v4791
        %v6950 = vunpack.c.l.b16 %v4792
        %v6951 = vunpack.c.h.b16 %v4792
        %v6952 = vunpack.c.l.b16 %v4793
        %v6953 = vunpack.c.h.b16 %v4793
        %v6954 = vunpack.c.l.b16 %v4794
        %v6955 = vunpack.c.h.b16 %v4794
        %v6956 = vunpack.c.l.b16 %v4795
        %v6957 = vunpack.c.h.b16 %v4795
        %v6958 = vunpack.c.l.b16 %v4796
        %v6959 = vunpack.c.h.b16 %v4796
        %v6960 = vunpack.c.l.b16 %v4797
        %v6961 = vunpack.c.h.b16 %v4797
        %v6962 = vunpack.c.l.b16 %v4798
        %v6963 = vunpack.c.h.b16 %v4798
        %v6964 = vunpack.c.l.b16 %v4799
        %v6965 = vunpack.c.h.b16 %v4799
        %v6966 = vunpack.c.l.b16 %v4800
        %v6967 = vunpack.c.h.b16 %v4800
        %v6968 = vunpack.c.l.b16 %v4801
        %v6969 = vunpack.c.h.b16 %v4801
        %v6970 = vunpack.c.l.b16 %v4802
        %v6971 = vunpack.c.h.b16 %v4802
        %v6972 = vunpack.c.l.b16 %v4803
        %v6973 = vunpack.c.h.b16 %v4803
        %v6974 = vunpack.c.l.b16 %v4804
        %v6975 = vunpack.c.h.b16 %v4804
        %v6976 = vunpack.c.l.b16 %v4805
        %v6977 = vunpack.c.h.b16 %v4805
        %v6978 = vunpack.c.l.b16 %v4806
        %v6979 = vunpack.c.h.b16 %v4806
        %v6980 = vunpack.c.l.b16 %v4807
        %v6981 = vunpack.c.h.b16 %v4807
        %v6982 = vunpack.c.l.b16 %v4808
        %v6983 = vunpack.c.h.b16 %v4808
        %v6984 = vunpack.c.l.b16 %v4809
        %v6985 = vunpack.c.h.b16 %v4809
        %v6986 = vunpack.c.l.b16 %v4810
        %v6987 = vunpack.c.h.b16 %v4810
        %v6988 = vunpack.c.l.b16 %v4811
        %v6989 = vunpack.c.h.b16 %v4811
        %v6990 = vunpack.c.l.b16 %v4812
        %v6991 = vunpack.c.h.b16 %v4812
        %v6992 = vunpack.c.l.b16 %v4813
        %v6993 = vunpack.c.h.b16 %v4813
        %v6994 = vunpack.c.l.b16 %v4814
        %v6995 = vunpack.c.h.b16 %v4814
        %v6996 = vunpack.c.l.b16 %v4815
        %v6997 = vunpack.c.h.b16 %v4815
        %v6998 = vunpack.c.l.b16 %v4816
        %v6999 = vunpack.c.h.b16 %v4816
        %v7000 = vunpack.c.l.b16 %v4817
        %v7001 = vunpack.c.h.b16 %v4817
        %v7002 = vunpack.c.l.b16 %v4818
        %v7003 = vunpack.c.h.b16 %v4818
        %v7004 = vunpack.c.l.b16 %v4819
        %v7005 = vunpack.c.h.b16 %v4819
        %v7006 = vunpack.c.l.b16 %v4820
        %v7007 = vunpack.c.h.b16 %v4820
        %v7008 = vunpack.c.l.b16 %v4821
        %v7009 = vunpack.c.h.b16 %v4821
        %v7010 = vunpack.c.l.b16 %v4822
        %v7011 = vunpack.c.h.b16 %v4822
        %v7012 = vunpack.c.l.b16 %v4823
        %v7013 = vunpack.c.h.b16 %v4823
        %v7014 = vunpack.c.l.b16 %v4824
        %v7015 = vunpack.c.h.b16 %v4824
        %v7016 = vunpack.c.l.b16 %v4825
        %v7017 = vunpack.c.h.b16 %v4825
        %v7018 = vunpack.c.l.b16 %v4826
        %v7019 = vunpack.c.h.b16 %v4826
        %v7020 = vunpack.c.l.b16 %v4827
        %v7021 = vunpack.c.h.b16 %v4827
        %v7022 = vunpack.c.l.b16 %v4828
        %v7023 = vunpack.c.h.b16 %v4828
        %v7024 = vunpack.c.l.b16 %v4829
        %v7025 = vunpack.c.h.b16 %v4829
        %v7026 = vunpack.c.l.b16 %v4830
        %v7027 = vunpack.c.h.b16 %v4830
        %v7028 = vunpack.c.l.b16 %v4831
        %v7029 = vunpack.c.h.b16 %v4831
        %v7030 = vunpack.c.l.b16 %v4832
        %v7031 = vunpack.c.h.b16 %v4832
        %v7032 = vunpack.c.l.b16 %v4833
        %v7033 = vunpack.c.h.b16 %v4833
        %v7034 = vunpack.c.l.b16 %v4834
        %v7035 = vunpack.c.h.b16 %v4834
        %v7036 = vunpack.c.l.b16 %v4835
        %v7037 = vunpack.c.h.b16 %v4835
        %v7038 = vunpack.c.l.b16 %v4836
        %v7039 = vunpack.c.h.b16 %v4836
        %v7040 = vunpack.c.l.b16 %v4837
        %v7041 = vunpack.c.h.b16 %v4837
        %v7042 = vunpack.c.l.b16 %v4838
        %v7043 = vunpack.c.h.b16 %v4838
        %v7044 = vunpack.c.l.b16 %v4839
        %v7045 = vunpack.c.h.b16 %v4839
        %v7046 = vunpack.c.l.b16 %v4840
        %v7047 = vunpack.c.h.b16 %v4840
        %v7048 = vunpack.c.l.b16 %v4841
        %v7049 = vunpack.c.h.b16 %v4841
        %v7050 = vunpack.c.l.b16 %v4842
        %v7051 = vunpack.c.h.b16 %v4842
        %v7052 = vunpack.c.l.b16 %v4843
        %v7053 = vunpack.c.h.b16 %v4843
        %v7054 = vunpack.c.l.b16 %v4844
        %v7055 = vunpack.c.h.b16 %v4844
        %v7056 = vunpack.c.l.b16 %v4845
        %v7057 = vunpack.c.h.b16 %v4845
        %v7058 = vunpack.c.l.b16 %v4846
        %v7059 = vunpack.c.h.b16 %v4846
        %v7060 = vunpack.c.l.b16 %v4847
        %v7061 = vunpack.c.h.b16 %v4847
        %v7062 = vunpack.c.l.b16 %v4848
        %v7063 = vunpack.c.h.b16 %v4848
        %v7064 = vunpack.c.l.b16 %v4849
        %v7065 = vunpack.c.h.b16 %v4849
        %v7066 = vunpack.c.l.b16 %v4850
        %v7067 = vunpack.c.h.b16 %v4850
        %v7068 = vunpack.c.l.b16 %v4851
        %v7069 = vunpack.c.h.b16 %v4851
        %v7070 = vunpack.c.l.b16 %v4852
        %v7071 = vunpack.c.h.b16 %v4852
        %v7072 = vunpack.c.l.b16 %v4853
        %v7073 = vunpack.c.h.b16 %v4853
        %v7074 = vunpack.c.l.b16 %v4854
        %v7075 = vunpack.c.h.b16 %v4854
        %v7076 = vunpack.c.l.b16 %v4855
        %v7077 = vunpack.c.h.b16 %v4855
        %v7078 = vunpack.c.l.b16 %v4856
        %v7079 = vunpack.c.h.b16 %v4856
        %v7080 = vunpack.c.l.b16 %v4857
        %v7081 = vunpack.c.h.b16 %v4857
        %v7082 = vunpack.c.l.b16 %v4858
        %v7083 = vunpack.c.h.b16 %v4858
        %v7084 = vunpack.c.l.b16 %v4859
        %v7085 = vunpack.c.h.b16 %v4859
        %v7086 = vunpack.c.l.b16 %v4860
        %v7087 = vunpack.c.h.b16 %v4860
        %v7088 = vunpack.c.l.b16 %v4861
        %v7089 = vunpack.c.h.b16 %v4861
        %v7090 = vunpack.c.l.b16 %v4862
        %v7091 = vunpack.c.h.b16 %v4862
        %v7092 = vunpack.c.l.b16 %v4863
        %v7093 = vunpack.c.h.b16 %v4863
        %v7094 = vunpack.c.l.b16 %v4864
        %v7095 = vunpack.c.h.b16 %v4864
        %v7096 = vunpack.c.l.b16 %v4865
        %v7097 = vunpack.c.h.b16 %v4865
        %v7098 = vunpack.c.l.b16 %v4866
        %v7099 = vunpack.c.h.b16 %v4866
        %v7100 = vunpack.c.l.b16 %v4867
        %v7101 = vunpack.c.h.b16 %v4867
        %v7102 = vunpack.c.l.b16 %v4868
        %v7103 = vunpack.c.h.b16 %v4868
        %v7104 = vunpack.c.l.b16 %v4869
        %v7105 = vunpack.c.h.b16 %v4869
        %v7106 = vunpack.c.l.b16 %v4870
        %v7107 = vunpack.c.h.b16 %v4870
        %v7108 = vunpack.c.l.b16 %v4871
        %v7109 = vunpack.c.h.b16 %v4871
        %v7110 = vunpack.c.l.b16 %v4872
        %v7111 = vunpack.c.h.b16 %v4872
        %v7112 = vunpack.c.l.b16 %v4873
        %v7113 = vunpack.c.h.b16 %v4873
        %v7114 = vunpack.c.l.b16 %v4874
        %v7115 = vunpack.c.h.b16 %v4874
        %v7116 = vunpack.c.l.b16 %v4875
        %v7117 = vunpack.c.h.b16 %v4875
        %v7118 = vunpack.c.l.b16 %v4876
        %v7119 = vunpack.c.h.b16 %v4876
        %v7120 = vunpack.c.l.b16 %v4877
        %v7121 = vunpack.c.h.b16 %v4877
        %v7122 = vunpack.c.l.b16 %v4878
        %v7123 = vunpack.c.h.b16 %v4878
        %v7124 = vunpack.c.l.b16 %v4879
        %v7125 = vunpack.c.h.b16 %v4879
        %v7126 = vunpack.c.l.b16 %v4880
        %v7127 = vunpack.c.h.b16 %v4880
        %v7128 = vunpack.c.l.b16 %v4881
        %v7129 = vunpack.c.h.b16 %v4881
        %v7130 = vunpack.c.l.b16 %v4882
        %v7131 = vunpack.c.h.b16 %v4882
        %v7132 = vunpack.c.l.b16 %v4883
        %v7133 = vunpack.c.h.b16 %v4883
        %v7134 = vunpack.c.l.b16 %v4884
        %v7135 = vunpack.c.h.b16 %v4884
        %v7136 = vunpack.c.l.b16 %v4885
        %v7137 = vunpack.c.h.b16 %v4885
        %v7138 = vunpack.c.l.b16 %v4886
        %v7139 = vunpack.c.h.b16 %v4886
        %v7140 = vunpack.c.l.b16 %v4887
        %v7141 = vunpack.c.h.b16 %v4887
        %v7142 = vunpack.c.l.b16 %v4888
        %v7143 = vunpack.c.h.b16 %v4888
        %v7144 = vunpack.c.l.b16 %v4889
        %v7145 = vunpack.c.h.b16 %v4889
        %v7146 = vunpack.c.l.b16 %v4890
        %v7147 = vunpack.c.h.b16 %v4890
        %v7148 = vunpack.c.l.b16 %v4891
        %v7149 = vunpack.c.h.b16 %v4891
        %v7150 = vunpack.c.l.b16 %v4892
        %v7151 = vunpack.c.h.b16 %v4892
        %v7152 = vunpack.c.l.b16 %v4893
        %v7153 = vunpack.c.h.b16 %v4893
        %v7154 = vunpack.c.l.b16 %v4894
        %v7155 = vunpack.c.h.b16 %v4894
        %v7156 = vunpack.c.l.b16 %v4895
        %v7157 = vunpack.c.h.b16 %v4895
        %v7158 = vunpack.c.l.b16 %v4896
        %v7159 = vunpack.c.h.b16 %v4896
        %v7160 = vunpack.c.l.b16 %v4897
        %v7161 = vunpack.c.h.b16 %v4897
        %v7162 = vunpack.c.l.b16 %v4898
        %v7163 = vunpack.c.h.b16 %v4898
        %v7164 = vunpack.c.l.b16 %v4899
        %v7165 = vunpack.c.h.b16 %v4899
        %v7166 = vunpack.c.l.b16 %v4900
        %v7167 = vunpack.c.h.b16 %v4900
        %v7168 = vunpack.c.l.b16 %v4901
        %v7169 = vunpack.c.h.b16 %v4901
        %v7170 = vunpack.c.l.b16 %v4902
        %v7171 = vunpack.c.h.b16 %v4902
        %v7172 = vunpack.c.l.b16 %v4903
        %v7173 = vunpack.c.h.b16 %v4903
        %v7174 = vunpack.c.l.b16 %v4904
        %v7175 = vunpack.c.h.b16 %v4904
        %v7176 = vunpack.c.l.b16 %v4905
        %v7177 = vunpack.c.h.b16 %v4905
        %v7178 = vunpack.c.l.b16 %v4906
        %v7179 = vunpack.c.h.b16 %v4906
        %v7180 = vunpack.c.l.b16 %v4907
        %v7181 = vunpack.c.h.b16 %v4907
        %v7182 = vunpack.c.l.b16 %v4908
        %v7183 = vunpack.c.h.b16 %v4908
        %v7184 = vunpack.c.l.b16 %v4909
        %v7185 = vunpack.c.h.b16 %v4909
        %v7186 = vunpack.c.l.b16 %v4910
        %v7187 = vunpack.c.h.b16 %v4910
        %v7188 = vunpack.c.l.b16 %v4911
        %v7189 = vunpack.c.h.b16 %v4911
        %v7190 = vunpack.c.l.b16 %v4912
        %v7191 = vunpack.c.h.b16 %v4912
        %v7192 = vunpack.c.l.b16 %v4913
        %v7193 = vunpack.c.h.b16 %v4913
        %v7194 = vunpack.c.l.b16 %v4914
        %v7195 = vunpack.c.h.b16 %v4914
        %v7196 = vunpack.c.l.b16 %v4915
        %v7197 = vunpack.c.h.b16 %v4915
        %v7198 = vunpack.c.l.b16 %v4916
        %v7199 = vunpack.c.h.b16 %v4916
        %v7200 = vunpack.c.l.b16 %v4917
        %v7201 = vunpack.c.h.b16 %v4917
        %v7202 = vunpack.c.l.b16 %v4918
        %v7203 = vunpack.c.h.b16 %v4918
        %v7204 = vunpack.c.l.b16 %v4919
        %v7205 = vunpack.c.h.b16 %v4919
        %v7206 = vunpack.c.l.b16 %v4920
        %v7207 = vunpack.c.h.b16 %v4920
        %v7208 = vunpack.c.l.b16 %v4921
        %v7209 = vunpack.c.h.b16 %v4921
        %v7210 = vunpack.c.l.b16 %v4922
        %v7211 = vunpack.c.h.b16 %v4922
        %v7212 = vunpack.c.l.b16 %v4923
        %v7213 = vunpack.c.h.b16 %v4923
        %v7214 = vunpack.c.l.b16 %v4924
        %v7215 = vunpack.c.h.b16 %v4924
        %v7216 = vunpack.c.l.b16 %v4925
        %v7217 = vunpack.c.h.b16 %v4925
        %v7218 = vunpack.c.l.b16 %v4926
        %v7219 = vunpack.c.h.b16 %v4926
        %v7220 = vunpack.c.l.b16 %v4927
        %v7221 = vunpack.c.h.b16 %v4927
        %v7222 = vunpack.c.l.b16 %v4928
        %v7223 = vunpack.c.h.b16 %v4928
        %v7224 = vunpack.c.l.b16 %v4929
        %v7225 = vunpack.c.h.b16 %v4929
        %v7226 = vunpack.c.l.b16 %v4930
        %v7227 = vunpack.c.h.b16 %v4930
        %v7228 = vunpack.c.l.b16 %v4931
        %v7229 = vunpack.c.h.b16 %v4931
        %v7230 = vunpack.c.l.b16 %v4932
        %v7231 = vunpack.c.h.b16 %v4932
        %v7232 = vunpack.c.l.b16 %v4933
        %v7233 = vunpack.c.h.b16 %v4933
        %v7234 = vunpack.c.l.b16 %v4934
        %v7235 = vunpack.c.h.b16 %v4934
        %v7236 = vunpack.c.l.b16 %v4935
        %v7237 = vunpack.c.h.b16 %v4935
        %v7238 = vunpack.c.l.b16 %v4936
        %v7239 = vunpack.c.h.b16 %v4936
        %v7240 = vunpack.c.l.b16 %v4937
        %v7241 = vunpack.c.h.b16 %v4937
        %v7242 = vunpack.c.l.b16 %v4938
        %v7243 = vunpack.c.h.b16 %v4938
        %v7244 = vunpack.c.l.b16 %v4939
        %v7245 = vunpack.c.h.b16 %v4939
        %v7246 = vunpack.c.l.b16 %v4940
        %v7247 = vunpack.c.h.b16 %v4940
        %v7248 = vunpack.c.l.b16 %v4941
        %v7249 = vunpack.c.h.b16 %v4941
        %v7250 = vunpack.c.l.b16 %v4942
        %v7251 = vunpack.c.h.b16 %v4942
        %v7252 = vunpack.c.l.b16 %v4943
        %v7253 = vunpack.c.h.b16 %v4943
        %v7254 = vunpack.c.l.b16 %v4944
        %v7255 = vunpack.c.h.b16 %v4944
        %v7256 = vunpack.c.l.b16 %v4945
        %v7257 = vunpack.c.h.b16 %v4945
        %v7258 = vunpack.c.l.b16 %v4946
        %v7259 = vunpack.c.h.b16 %v4946
        %v7260 = vunpack.c.l.b16 %v4947
        %v7261 = vunpack.c.h.b16 %v4947
        %v7262 = vunpack.c.l.b16 %v4948
        %v7263 = vunpack.c.h.b16 %v4948
        %v7264 = vunpack.c.l.b16 %v4949
        %v7265 = vunpack.c.h.b16 %v4949
        %v7266 = vunpack.c.l.b16 %v4950
        %v7267 = vunpack.c.h.b16 %v4950
        %v7268 = vunpack.c.l.b16 %v4951
        %v7269 = vunpack.c.h.b16 %v4951
        %v7270 = vunpack.c.l.b16 %v4952
        %v7271 = vunpack.c.h.b16 %v4952
        %v7272 = vunpack.c.l.b16 %v4953
        %v7273 = vunpack.c.h.b16 %v4953
        %v7274 = vunpack.c.l.b16 %v4954
        %v7275 = vunpack.c.h.b16 %v4954
        %v7276 = vunpack.c.l.b16 %v4955
        %v7277 = vunpack.c.h.b16 %v4955
        %v7278 = vunpack.c.l.b16 %v4956
        %v7279 = vunpack.c.h.b16 %v4956
        %v7280 = vunpack.c.l.b16 %v4957
        %v7281 = vunpack.c.h.b16 %v4957
        %v7282 = vunpack.c.l.b16 %v4958
        %v7283 = vunpack.c.h.b16 %v4958
        %v7284 = vunpack.c.l.b16 %v4959
        %v7285 = vunpack.c.h.b16 %v4959
        %v7286 = vunpack.c.l.b16 %v4960
        %v7287 = vunpack.c.h.b16 %v4960
        %v7288 = vunpack.c.l.b16 %v4961
        %v7289 = vunpack.c.h.b16 %v4961
        %v7290 = vunpack.c.l.b16 %v4962
        %v7291 = vunpack.c.h.b16 %v4962
        %v7292 = vunpack.c.l.b16 %v4963
        %v7293 = vunpack.c.h.b16 %v4963
        %v7294 = vunpack.c.l.b16 %v4964
        %v7295 = vunpack.c.h.b16 %v4964
        %v7296 = vunpack.c.l.b16 %v4965
        %v7297 = vunpack.c.h.b16 %v4965
        %v7298 = vunpack.c.l.b16 %v4966
        %v7299 = vunpack.c.h.b16 %v4966
        %v7300 = vunpack.c.l.b16 %v4967
        %v7301 = vunpack.c.h.b16 %v4967
        %v7302 = vunpack.c.l.b16 %v4968
        %v7303 = vunpack.c.h.b16 %v4968
        %v7304 = vunpack.c.l.b16 %v4969
        %v7305 = vunpack.c.h.b16 %v4969
        %v7306 = vunpack.c.l.b16 %v4970
        %v7307 = vunpack.c.h.b16 %v4970
        %v7308 = vunpack.c.l.b16 %v4971
        %v7309 = vunpack.c.h.b16 %v4971
        %v7310 = vunpack.c.l.b16 %v4972
        %v7311 = vunpack.c.h.b16 %v4972
        %v7312 = vunpack.c.l.b16 %v4973
        %v7313 = vunpack.c.h.b16 %v4973
        %v7314 = vunpack.c.l.b16 %v4974
        %v7315 = vunpack.c.h.b16 %v4974
        %v7316 = vunpack.c.l.b16 %v4975
        %v7317 = vunpack.c.h.b16 %v4975
        %v7318 = vunpack.c.l.b16 %v4976
        %v7319 = vunpack.c.h.b16 %v4976
        %v7320 = vunpack.c.l.b16 %v4977
        %v7321 = vunpack.c.h.b16 %v4977
        %v7322 = vunpack.c.l.b16 %v4978
        %v7323 = vunpack.c.h.b16 %v4978
        %v7324 = vunpack.c.l.b16 %v4979
        %v7325 = vunpack.c.h.b16 %v4979
        %v7326 = vunpack.c.l.b16 %v4980
        %v7327 = vunpack.c.h.b16 %v4980
        %v7328 = vunpack.c.l.b16 %v4981
        %v7329 = vunpack.c.h.b16 %v4981
        %v7330 = vunpack.c.l.b16 %v4982
        %v7331 = vunpack.c.h.b16 %v4982
        %v7332 = vunpack.c.l.b16 %v4983
        %v7333 = vunpack.c.h.b16 %v4983
        %v7334 = vunpack.c.l.b16 %v4984
        %v7335 = vunpack.c.h.b16 %v4984
        %v7336 = vunpack.c.l.b16 %v4985
        %v7337 = vunpack.c.h.b16 %v4985
        %v7338 = vunpack.c.l.b16 %v4986
        %v7339 = vunpack.c.h.b16 %v4986
        %v7340 = vpack.c.b16 %v5776, %v5772
        %v7341 = vpack.c.b16 %v5777, %v5773
        %v7342 = vpack.c.b16 %v5778, %v5774
        %v7343 = vpack.c.b16 %v5779, %v5775
        %v7344 = vpack.c.b16 %v5784, %v5780
        %v7345 = vpack.c.b16 %v5785, %v5781
        %v7346 = vpack.c.b16 %v5786, %v5782
        %v7347 = vpack.c.b16 %v5787, %v5783
        %v7348 = vpack.c.b16 %v5792, %v5788
        %v7349 = vpack.c.b16 %v5793, %v5789
        %v7350 = vpack.c.b16 %v5794, %v5790
        %v7351 = vpack.c.b16 %v5795, %v5791
        %v7352 = vpack.c.b16 %v5800, %v5796
        %v7353 = vpack.c.b16 %v5801, %v5797
        %v7354 = vpack.c.b16 %v5802, %v5798
        %v7355 = vpack.c.b16 %v5803, %v5799
        %v7356 = vpack.c.b16 %v5808, %v5804
        %v7357 = vpack.c.b16 %v5809, %v5805
        %v7358 = vpack.c.b16 %v5810, %v5806
        %v7359 = vpack.c.b16 %v5811, %v5807
        %v7360 = vpack.c.b16 %v5816, %v5812
        %v7361 = vpack.c.b16 %v5817, %v5813
        %v7362 = vpack.c.b16 %v5818, %v5814
        %v7363 = vpack.c.b16 %v5819, %v5815
        %v7364 = vpack.c.b16 %v5824, %v5820
        %v7365 = vpack.c.b16 %v5825, %v5821
        %v7366 = vpack.c.b16 %v5826, %v5822
        %v7367 = vpack.c.b16 %v5827, %v5823
        %v7368 = vpack.c.b16 %v5832, %v5828
        %v7369 = vpack.c.b16 %v5833, %v5829
        %v7370 = vpack.c.b16 %v5834, %v5830
        %v7371 = vpack.c.b16 %v5835, %v5831
        %v7372 = vpack.c.b16 %v5840, %v5836
        %v7373 = vpack.c.b16 %v5841, %v5837
        %v7374 = vpack.c.b16 %v5842, %v5838
        %v7375 = vpack.c.b16 %v5843, %v5839
        %v7376 = vpack.c.b16 %v5848, %v5844
        %v7377 = vpack.c.b16 %v5849, %v5845
        %v7378 = vpack.c.b16 %v5850, %v5846
        %v7379 = vpack.c.b16 %v5851, %v5847
        %v7380 = vpack.c.b16 %v5856, %v5852
        %v7381 = vpack.c.b16 %v5857, %v5853
        %v7382 = vpack.c.b16 %v5858, %v5854
        %v7383 = vpack.c.b16 %v5859, %v5855
        %v7384 = vpack.c.b16 %v5864, %v5860
        %v7385 = vpack.c.b16 %v5865, %v5861
        %v7386 = vpack.c.b16 %v5866, %v5862
        %v7387 = vpack.c.b16 %v5867, %v5863
        %v7388 = vpack.c.b16 %v5872, %v5868
        %v7389 = vpack.c.b16 %v5873, %v5869
        %v7390 = vpack.c.b16 %v5874, %v5870
        %v7391 = vpack.c.b16 %v5875, %v5871
        %v7392 = vpack.c.b16 %v5880, %v5876
        %v7393 = vpack.c.b16 %v5881, %v5877
        %v7394 = vpack.c.b16 %v5882, %v5878
        %v7395 = vpack.c.b16 %v5883, %v5879
        %v7396 = vpack.c.b16 %v5888, %v5884
        %v7397 = vpack.c.b16 %v5889, %v5885
        %v7398 = vpack.c.b16 %v5890, %v5886
        %v7399 = vpack.c.b16 %v5891, %v5887
        %v7400 = vpack.c.b16 %v5896, %v5892
        %v7401 = vpack.c.b16 %v5897, %v5893
        %v7402 = vpack.c.b16 %v5898, %v5894
        %v7403 = vpack.c.b16 %v5899, %v5895
        %v7404 = vpack.c.b16 %v5904, %v5900
        %v7405 = vpack.c.b16 %v5905, %v5901
        %v7406 = vpack.c.b16 %v5906, %v5902
        %v7407 = vpack.c.b16 %v5907, %v5903
        %v7408 = vpack.c.b16 %v5912, %v5908
        %v7409 = vpack.c.b16 %v5913, %v5909
        %v7410 = vpack.c.b16 %v5914, %v5910
        %v7411 = vpack.c.b16 %v5915, %v5911
        %v7412 = vpack.c.b16 %v5920, %v5916
        %v7413 = vpack.c.b16 %v5921, %v5917
        %v7414 = vpack.c.b16 %v5922, %v5918
        %v7415 = vpack.c.b16 %v5923, %v5919
        %v7416 = vpack.c.b16 %v5928, %v5924
        %v7417 = vpack.c.b16 %v5929, %v5925
        %v7418 = vpack.c.b16 %v5930, %v5926
        %v7419 = vpack.c.b16 %v5931, %v5927
        %v7420 = vpack.c.b16 %v5936, %v5932
        %v7421 = vpack.c.b16 %v5937, %v5933
        %v7422 = vpack.c.b16 %v5938, %v5934
        %v7423 = vpack.c.b16 %v5939, %v5935
        %v7424 = vpack.c.b16 %v5944, %v5940
        %v7425 = vpack.c.b16 %v5945, %v5941
        %v7426 = vpack.c.b16 %v5946, %v5942
        %v7427 = vpack.c.b16 %v5947, %v5943
        %v7428 = vpack.c.b16 %v5952, %v5948
        %v7429 = vpack.c.b16 %v5953, %v5949
        %v7430 = vpack.c.b16 %v5954, %v5950
        %v7431 = vpack.c.b16 %v5955, %v5951
        %v7432 = vpack.c.b16 %v5960, %v5956
        %v7433 = vpack.c.b16 %v5961, %v5957
        %v7434 = vpack.c.b16 %v5962, %v5958
        %v7435 = vpack.c.b16 %v5963, %v5959
        %v7436 = vpack.c.b16 %v5968, %v5964
        %v7437 = vpack.c.b16 %v5969, %v5965
        %v7438 = vpack.c.b16 %v5970, %v5966
        %v7439 = vpack.c.b16 %v5971, %v5967
        %v7440 = vpack.c.b16 %v5976, %v5972
        %v7441 = vpack.c.b16 %v5977, %v5973
        %v7442 = vpack.c.b16 %v5978, %v5974
        %v7443 = vpack.c.b16 %v5979, %v5975
        %v7444 = vpack.c.b16 %v5984, %v5980
        %v7445 = vpack.c.b16 %v5985, %v5981
        %v7446 = vpack.c.b16 %v5986, %v5982
        %v7447 = vpack.c.b16 %v5987, %v5983
        %v7448 = vpack.c.b16 %v5992, %v5988
        %v7449 = vpack.c.b16 %v5993, %v5989
        %v7450 = vpack.c.b16 %v5994, %v5990
        %v7451 = vpack.c.b16 %v5995, %v5991
        %v7452 = vpack.c.b16 %v6000, %v5996
        %v7453 = vpack.c.b16 %v6001, %v5997
        %v7454 = vpack.c.b16 %v6002, %v5998
        %v7455 = vpack.c.b16 %v6003, %v5999
        %v7456 = vpack.c.b16 %v6008, %v6004
        %v7457 = vpack.c.b16 %v6009, %v6005
        %v7458 = vpack.c.b16 %v6010, %v6006
        %v7459 = vpack.c.b16 %v6011, %v6007
        %v7460 = vpack.c.b16 %v6016, %v6012
        %v7461 = vpack.c.b16 %v6017, %v6013
        %v7462 = vpack.c.b16 %v6018, %v6014
        %v7463 = vpack.c.b16 %v6019, %v6015
        %v7464 = vpack.c.b16 %v6024, %v6020
        %v7465 = vpack.c.b16 %v6025, %v6021
        %v7466 = vpack.c.b16 %v6026, %v6022
        %v7467 = vpack.c.b16 %v6027, %v6023
        %v7468 = vpack.c.b16 %v6032, %v6028
        %v7469 = vpack.c.b16 %v6033, %v6029
        %v7470 = vpack.c.b16 %v6034, %v6030
        %v7471 = vpack.c.b16 %v6035, %v6031
        %v7472 = vpack.c.b16 %v6040, %v6036
        %v7473 = vpack.c.b16 %v6041, %v6037
        %v7474 = vpack.c.b16 %v6042, %v6038
        %v7475 = vpack.c.b16 %v6043, %v6039
        %v7476 = vpack.c.b16 %v6048, %v6044
        %v7477 = vpack.c.b16 %v6049, %v6045
        %v7478 = vpack.c.b16 %v6050, %v6046
        %v7479 = vpack.c.b16 %v6051, %v6047
        %v7480 = vpack.c.b16 %v6056, %v6052
        %v7481 = vpack.c.b16 %v6057, %v6053
        %v7482 = vpack.c.b16 %v6058, %v6054
        %v7483 = vpack.c.b16 %v6059, %v6055
        %v7484 = vpack.c.b16 %v6064, %v6060
        %v7485 = vpack.c.b16 %v6065, %v6061
        %v7486 = vpack.c.b16 %v6066, %v6062
        %v7487 = vpack.c.b16 %v6067, %v6063
        %v7488 = vpack.c.b16 %v6072, %v6068
        %v7489 = vpack.c.b16 %v6073, %v6069
        %v7490 = vpack.c.b16 %v6074, %v6070
        %v7491 = vpack.c.b16 %v6075, %v6071
        %v7492 = vpack.c.b16 %v6080, %v6076
        %v7493 = vpack.c.b16 %v6081, %v6077
        %v7494 = vpack.c.b16 %v6082, %v6078
        %v7495 = vpack.c.b16 %v6083, %v6079
        %v7496 = vpack.c.b16 %v6088, %v6084
        %v7497 = vpack.c.b16 %v6089, %v6085
        %v7498 = vpack.c.b16 %v6090, %v6086
        %v7499 = vpack.c.b16 %v6091, %v6087
        %v7500 = vpack.c.b16 %v6096, %v6092
        %v7501 = vpack.c.b16 %v6097, %v6093
        %v7502 = vpack.c.b16 %v6098, %v6094
        %v7503 = vpack.c.b16 %v6099, %v6095
        %v7504 = vpack.c.b16 %v6104, %v6100
        %v7505 = vpack.c.b16 %v6105, %v6101
        %v7506 = vpack.c.b16 %v6106, %v6102
        %v7507 = vpack.c.b16 %v6107, %v6103
        %v7508 = vpack.c.b16 %v6112, %v6108
        %v7509 = vpack.c.b16 %v6113, %v6109
        %v7510 = vpack.c.b16 %v6114, %v6110
        %v7511 = vpack.c.b16 %v6115, %v6111
        %v7512 = vpack.c.b16 %v6120, %v6116
        %v7513 = vpack.c.b16 %v6121, %v6117
        %v7514 = vpack.c.b16 %v6122, %v6118
        %v7515 = vpack.c.b16 %v6123, %v6119
        %v7516 = vpack.c.b16 %v6128, %v6124
        %v7517 = vpack.c.b16 %v6129, %v6125
        %v7518 = vpack.c.b16 %v6130, %v6126
        %v7519 = vpack.c.b16 %v6131, %v6127
        %v7520 = vpack.c.b16 %v6136, %v6132
        %v7521 = vpack.c.b16 %v6137, %v6133
        %v7522 = vpack.c.b16 %v6138, %v6134
        %v7523 = vpack.c.b16 %v6139, %v6135
        %v7524 = vpack.c.b16 %v6144, %v6140
        %v7525 = vpack.c.b16 %v6145, %v6141
        %v7526 = vpack.c.b16 %v6146, %v6142
        %v7527 = vpack.c.b16 %v6147, %v6143
        %v7528 = vpack.c.b16 %v6152, %v6148
        %v7529 = vpack.c.b16 %v6153, %v6149
        %v7530 = vpack.c.b16 %v6154, %v6150
        %v7531 = vpack.c.b16 %v6155, %v6151
        %v7532 = vpack.c.b16 %v6160, %v6156
        %v7533 = vpack.c.b16 %v6161, %v6157
        %v7534 = vpack.c.b16 %v6162, %v6158
        %v7535 = vpack.c.b16 %v6163, %v6159
        %v7536 = vpack.c.b16 %v6168, %v6164
        %v7537 = vpack.c.b16 %v6169, %v6165
        %v7538 = vpack.c.b16 %v6170, %v6166
        %v7539 = vpack.c.b16 %v6171, %v6167
        %v7540 = vpack.c.b16 %v6176, %v6172
        %v7541 = vpack.c.b16 %v6177, %v6173
        %v7542 = vpack.c.b16 %v6178, %v6174
        %v7543 = vpack.c.b16 %v6179, %v6175
        %v7544 = vpack.c.b16 %v6184, %v6180
        %v7545 = vpack.c.b16 %v6185, %v6181
        %v7546 = vpack.c.b16 %v6186, %v6182
        %v7547 = vpack.c.b16 %v6187, %v6183
        %v7548 = vpack.c.b16 %v6192, %v6188
        %v7549 = vpack.c.b16 %v6193, %v6189
        %v7550 = vpack.c.b16 %v6194, %v6190
        %v7551 = vpack.c.b16 %v6195, %v6191
        %v7552 = vpack.c.b16 %v6200, %v6196
        %v7553 = vpack.c.b16 %v6201, %v6197
        %v7554 = vpack.c.b16 %v6202, %v6198
        %v7555 = vpack.c.b16 %v6203, %v6199
        %v7556 = vpack.c.b16 %v6208, %v6204
        %v7557 = vpack.c.b16 %v6209, %v6205
        %v7558 = vpack.c.b16 %v6210, %v6206
        %v7559 = vpack.c.b16 %v6211, %v6207
        %v7560 = vpack.c.b16 %v6216, %v6212
        %v7561 = vpack.c.b16 %v6217, %v6213
        %v7562 = vpack.c.b16 %v6218, %v6214
        %v7563 = vpack.c.b16 %v6219, %v6215
        %v7564 = vpack.c.b16 %v6224, %v6220
        %v7565 = vpack.c.b16 %v6225, %v6221
        %v7566 = vpack.c.b16 %v6226, %v6222
        %v7567 = vpack.c.b16 %v6227, %v6223
        %v7568 = vpack.c.b16 %v6232, %v6228
        %v7569 = vpack.c.b16 %v6233, %v6229
        %v7570 = vpack.c.b16 %v6234, %v6230
        %v7571 = vpack.c.b16 %v6235, %v6231
        %v7572 = vpack.c.b16 %v6240, %v6236
        %v7573 = vpack.c.b16 %v6241, %v6237
        %v7574 = vpack.c.b16 %v6242, %v6238
        %v7575 = vpack.c.b16 %v6243, %v6239
        %v7576 = vpack.c.b16 %v6248, %v6244
        %v7577 = vpack.c.b16 %v6249, %v6245
        %v7578 = vpack.c.b16 %v6250, %v6246
        %v7579 = vpack.c.b16 %v6251, %v6247
        %v7580 = vpack.c.b16 %v6256, %v6252
        %v7581 = vpack.c.b16 %v6257, %v6253
        %v7582 = vpack.c.b16 %v6258, %v6254
        %v7583 = vpack.c.b16 %v6259, %v6255
        %v7584 = vpack.c.b16 %v6264, %v6260
        %v7585 = vpack.c.b16 %v6265, %v6261
        %v7586 = vpack.c.b16 %v6266, %v6262
        %v7587 = vpack.c.b16 %v6267, %v6263
        %v7588 = vpack.c.b16 %v6272, %v6268
        %v7589 = vpack.c.b16 %v6273, %v6269
        %v7590 = vpack.c.b16 %v6274, %v6270
        %v7591 = vpack.c.b16 %v6275, %v6271
        %v7592 = vpack.c.b16 %v6280, %v6276
        %v7593 = vpack.c.b16 %v6281, %v6277
        %v7594 = vpack.c.b16 %v6282, %v6278
        %v7595 = vpack.c.b16 %v6283, %v6279
        %v7596 = vpack.c.b16 %v6288, %v6284
        %v7597 = vpack.c.b16 %v6289, %v6285
        %v7598 = vpack.c.b16 %v6290, %v6286
        %v7599 = vpack.c.b16 %v6291, %v6287
        %v7600 = vpack.c.b16 %v6296, %v6292
        %v7601 = vpack.c.b16 %v6297, %v6293
        %v7602 = vpack.c.b16 %v6298, %v6294
        %v7603 = vpack.c.b16 %v6299, %v6295
        %v7604 = vpack.c.b16 %v6304, %v6300
        %v7605 = vpack.c.b16 %v6305, %v6301
        %v7606 = vpack.c.b16 %v6306, %v6302
        %v7607 = vpack.c.b16 %v6307, %v6303
        %v7608 = vpack.c.b16 %v6312, %v6308
        %v7609 = vpack.c.b16 %v6313, %v6309
        %v7610 = vpack.c.b16 %v6314, %v6310
        %v7611 = vpack.c.b16 %v6315, %v6311
        %v7612 = vpack.c.b16 %v6320, %v6316
        %v7613 = vpack.c.b16 %v6321, %v6317
        %v7614 = vpack.c.b16 %v6322, %v6318
        %v7615 = vpack.c.b16 %v6323, %v6319
        %v7616 = vpack.c.b16 %v6328, %v6324
        %v7617 = vpack.c.b16 %v6329, %v6325
        %v7618 = vpack.c.b16 %v6330, %v6326
        %v7619 = vpack.c.b16 %v6331, %v6327
        %v7620 = vpack.c.b16 %v6336, %v6332
        %v7621 = vpack.c.b16 %v6337, %v6333
        %v7622 = vpack.c.b16 %v6338, %v6334
        %v7623 = vpack.c.b16 %v6339, %v6335
        %v7624 = vpack.c.b16 %v6344, %v6340
        %v7625 = vpack.c.b16 %v6345, %v6341
        %v7626 = vpack.c.b16 %v6346, %v6342
        %v7627 = vpack.c.b16 %v6347, %v6343
        %v7628 = vpack.c.b16 %v6352, %v6348
        %v7629 = vpack.c.b16 %v6353, %v6349
        %v7630 = vpack.c.b16 %v6354, %v6350
        %v7631 = vpack.c.b16 %v6355, %v6351
        %v7632 = vpack.c.b16 %v6360, %v6356
        %v7633 = vpack.c.b16 %v6361, %v6357
        %v7634 = vpack.c.b16 %v6362, %v6358
        %v7635 = vpack.c.b16 %v6363, %v6359
        %v7636 = vpack.c.b16 %v6368, %v6364
        %v7637 = vpack.c.b16 %v6369, %v6365
        %v7638 = vpack.c.b16 %v6370, %v6366
        %v7639 = vpack.c.b16 %v6371, %v6367
        %v7640 = vpack.c.b16 %v6376, %v6372
        %v7641 = vpack.c.b16 %v6377, %v6373
        %v7642 = vpack.c.b16 %v6378, %v6374
        %v7643 = vpack.c.b16 %v6379, %v6375
        %v7644 = vpack.c.b16 %v6384, %v6380
        %v7645 = vpack.c.b16 %v6385, %v6381
        %v7646 = vpack.c.b16 %v6386, %v6382
        %v7647 = vpack.c.b16 %v6387, %v6383
        %v7648 = vpack.c.b16 %v6392, %v6388
        %v7649 = vpack.c.b16 %v6393, %v6389
        %v7650 = vpack.c.b16 %v6394, %v6390
        %v7651 = vpack.c.b16 %v6395, %v6391
        %v7652 = vpack.c.b16 %v6400, %v6396
        %v7653 = vpack.c.b16 %v6401, %v6397
        %v7654 = vpack.c.b16 %v6402, %v6398
        %v7655 = vpack.c.b16 %v6403, %v6399
        %v7656 = vpack.c.b16 %v6408, %v6404
        %v7657 = vpack.c.b16 %v6409, %v6405
        %v7658 = vpack.c.b16 %v6410, %v6406
        %v7659 = vpack.c.b16 %v6411, %v6407
        %v7660 = vpack.c.b16 %v6416, %v6412
        %v7661 = vpack.c.b16 %v6417, %v6413
        %v7662 = vpack.c.b16 %v6418, %v6414
        %v7663 = vpack.c.b16 %v6419, %v6415
        %v7664 = vpack.c.b16 %v6424, %v6420
        %v7665 = vpack.c.b16 %v6425, %v6421
        %v7666 = vpack.c.b16 %v6426, %v6422
        %v7667 = vpack.c.b16 %v6427, %v6423
        %v7668 = vpack.c.b16 %v6432, %v6428
        %v7669 = vpack.c.b16 %v6433, %v6429
        %v7670 = vpack.c.b16 %v6434, %v6430
        %v7671 = vpack.c.b16 %v6435, %v6431
        %v7672 = vpack.c.b16 %v6440, %v6436
        %v7673 = vpack.c.b16 %v6441, %v6437
        %v7674 = vpack.c.b16 %v6442, %v6438
        %v7675 = vpack.c.b16 %v6443, %v6439
        %v7676 = vpack.c.b16 %v6448, %v6444
        %v7677 = vpack.c.b16 %v6449, %v6445
        %v7678 = vpack.c.b16 %v6450, %v6446
        %v7679 = vpack.c.b16 %v6451, %v6447
        %v7680 = vpack.c.b16 %v6456, %v6452
        %v7681 = vpack.c.b16 %v6457, %v6453
        %v7682 = vpack.c.b16 %v6458, %v6454
        %v7683 = vpack.c.b16 %v6459, %v6455
        %v7684 = vpack.c.b16 %v6464, %v6460
        %v7685 = vpack.c.b16 %v6465, %v6461
        %v7686 = vpack.c.b16 %v6466, %v6462
        %v7687 = vpack.c.b16 %v6467, %v6463
        %v7688 = vpack.c.b16 %v6472, %v6468
        %v7689 = vpack.c.b16 %v6473, %v6469
        %v7690 = vpack.c.b16 %v6474, %v6470
        %v7691 = vpack.c.b16 %v6475, %v6471
        %v7692 = vpack.c.b16 %v6480, %v6476
        %v7693 = vpack.c.b16 %v6481, %v6477
        %v7694 = vpack.c.b16 %v6482, %v6478
        %v7695 = vpack.c.b16 %v6483, %v6479
        %v7696 = vpack.c.b16 %v6488, %v6484
        %v7697 = vpack.c.b16 %v6489, %v6485
        %v7698 = vpack.c.b16 %v6490, %v6486
        %v7699 = vpack.c.b16 %v6491, %v6487
        %v7700 = vpack.c.b16 %v6496, %v6492
        %v7701 = vpack.c.b16 %v6497, %v6493
        %v7702 = vpack.c.b16 %v6498, %v6494
        %v7703 = vpack.c.b16 %v6499, %v6495
        %v7704 = vpack.c.b16 %v6504, %v6500
        %v7705 = vpack.c.b16 %v6505, %v6501
        %v7706 = vpack.c.b16 %v6506, %v6502
        %v7707 = vpack.c.b16 %v6507, %v6503
        %v7708 = vpack.c.b16 %v6512, %v6508
        %v7709 = vpack.c.b16 %v6513, %v6509
        %v7710 = vpack.c.b16 %v6514, %v6510
        %v7711 = vpack.c.b16 %v6515, %v6511
        %v7712 = vpack.c.b16 %v6520, %v6516
        %v7713 = vpack.c.b16 %v6521, %v6517
        %v7714 = vpack.c.b16 %v6522, %v6518
        %v7715 = vpack.c.b16 %v6523, %v6519
        %v7716 = vpack.c.b16 %v6528, %v6524
        %v7717 = vpack.c.b16 %v6529, %v6525
        %v7718 = vpack.c.b16 %v6530, %v6526
        %v7719 = vpack.c.b16 %v6531, %v6527
        %v7720 = vpack.c.b16 %v6536, %v6532
        %v7721 = vpack.c.b16 %v6537, %v6533
        %v7722 = vpack.c.b16 %v6538, %v6534
        %v7723 = vpack.c.b16 %v6539, %v6535
        %v7724 = vpack.c.b16 %v6544, %v6540
        %v7725 = vpack.c.b16 %v6545, %v6541
        %v7726 = vpack.c.b16 %v6546, %v6542
        %v7727 = vpack.c.b16 %v6547, %v6543
        %v7728 = vpack.c.b16 %v6552, %v6548
        %v7729 = vpack.c.b16 %v6553, %v6549
        %v7730 = vpack.c.b16 %v6554, %v6550
        %v7731 = vpack.c.b16 %v6555, %v6551
        %v7732 = vpack.c.b16 %v6560, %v6556
        %v7733 = vpack.c.b16 %v6561, %v6557
        %v7734 = vpack.c.b16 %v6562, %v6558
        %v7735 = vpack.c.b16 %v6563, %v6559
        %v7736 = vpack.c.b16 %v6568, %v6564
        %v7737 = vpack.c.b16 %v6569, %v6565
        %v7738 = vpack.c.b16 %v6570, %v6566
        %v7739 = vpack.c.b16 %v6571, %v6567
        %v7740 = vpack.c.b16 %v6576, %v6572
        %v7741 = vpack.c.b16 %v6577, %v6573
        %v7742 = vpack.c.b16 %v6578, %v6574
        %v7743 = vpack.c.b16 %v6579, %v6575
        %v7744 = vpack.c.b16 %v6584, %v6580
        %v7745 = vpack.c.b16 %v6585, %v6581
        %v7746 = vpack.c.b16 %v6586, %v6582
        %v7747 = vpack.c.b16 %v6587, %v6583
        %v7748 = vpack.c.b16 %v6592, %v6588
        %v7749 = vpack.c.b16 %v6593, %v6589
        %v7750 = vpack.c.b16 %v6594, %v6590
        %v7751 = vpack.c.b16 %v6595, %v6591
        %v7752 = vpack.c.b16 %v6600, %v6596
        %v7753 = vpack.c.b16 %v6601, %v6597
        %v7754 = vpack.c.b16 %v6602, %v6598
        %v7755 = vpack.c.b16 %v6603, %v6599
        %v7756 = vpack.c.b16 %v6608, %v6604
        %v7757 = vpack.c.b16 %v6609, %v6605
        %v7758 = vpack.c.b16 %v6610, %v6606
        %v7759 = vpack.c.b16 %v6611, %v6607
        %v7760 = vpack.c.b16 %v6616, %v6612
        %v7761 = vpack.c.b16 %v6617, %v6613
        %v7762 = vpack.c.b16 %v6618, %v6614
        %v7763 = vpack.c.b16 %v6619, %v6615
        %v7764 = vpack.c.b16 %v6624, %v6620
        %v7765 = vpack.c.b16 %v6625, %v6621
        %v7766 = vpack.c.b16 %v6626, %v6622
        %v7767 = vpack.c.b16 %v6627, %v6623
        %v7768 = vpack.c.b16 %v6632, %v6628
        %v7769 = vpack.c.b16 %v6633, %v6629
        %v7770 = vpack.c.b16 %v6634, %v6630
        %v7771 = vpack.c.b16 %v6635, %v6631
        %v7772 = vpack.c.b16 %v6640, %v6636
        %v7773 = vpack.c.b16 %v6641, %v6637
        %v7774 = vpack.c.b16 %v6642, %v6638
        %v7775 = vpack.c.b16 %v6643, %v6639
        %v7776 = vpack.c.b16 %v6648, %v6644
        %v7777 = vpack.c.b16 %v6649, %v6645
        %v7778 = vpack.c.b16 %v6650, %v6646
        %v7779 = vpack.c.b16 %v6651, %v6647
        %v7780 = vpack.c.b16 %v6656, %v6652
        %v7781 = vpack.c.b16 %v6657, %v6653
        %v7782 = vpack.c.b16 %v6658, %v6654
        %v7783 = vpack.c.b16 %v6659, %v6655
        %v7784 = vpack.c.b16 %v6664, %v6660
        %v7785 = vpack.c.b16 %v6665, %v6661
        %v7786 = vpack.c.b16 %v6666, %v6662
        %v7787 = vpack.c.b16 %v6667, %v6663
        %v7788 = vpack.c.b16 %v6672, %v6668
        %v7789 = vpack.c.b16 %v6673, %v6669
        %v7790 = vpack.c.b16 %v6674, %v6670
        %v7791 = vpack.c.b16 %v6675, %v6671
        %v7792 = vpack.c.b16 %v6680, %v6676
        %v7793 = vpack.c.b16 %v6681, %v6677
        %v7794 = vpack.c.b16 %v6682, %v6678
        %v7795 = vpack.c.b16 %v6683, %v6679
        %v7796 = vpack.c.b16 %v6688, %v6684
        %v7797 = vpack.c.b16 %v6689, %v6685
        %v7798 = vpack.c.b16 %v6690, %v6686
        %v7799 = vpack.c.b16 %v6691, %v6687
        %v7800 = vpack.c.b16 %v6696, %v6692
        %v7801 = vpack.c.b16 %v6697, %v6693
        %v7802 = vpack.c.b16 %v6698, %v6694
        %v7803 = vpack.c.b16 %v6699, %v6695
        %v7804 = vpack.c.b16 %v6704, %v6700
        %v7805 = vpack.c.b16 %v6705, %v6701
        %v7806 = vpack.c.b16 %v6706, %v6702
        %v7807 = vpack.c.b16 %v6707, %v6703
        %v7808 = vpack.c.b16 %v6712, %v6708
        %v7809 = vpack.c.b16 %v6713, %v6709
        %v7810 = vpack.c.b16 %v6714, %v6710
        %v7811 = vpack.c.b16 %v6715, %v6711
        %v7812 = vpack.c.b16 %v6720, %v6716
        %v7813 = vpack.c.b16 %v6721, %v6717
        %v7814 = vpack.c.b16 %v6722, %v6718
        %v7815 = vpack.c.b16 %v6723, %v6719
        %v7816 = vpack.c.b16 %v6728, %v6724
        %v7817 = vpack.c.b16 %v6729, %v6725
        %v7818 = vpack.c.b16 %v6730, %v6726
        %v7819 = vpack.c.b16 %v6731, %v6727
        %v7820 = vpack.c.b16 %v6736, %v6732
        %v7821 = vpack.c.b16 %v6737, %v6733
        %v7822 = vpack.c.b16 %v6738, %v6734
        %v7823 = vpack.c.b16 %v6739, %v6735
        %v7824 = vpack.c.b16 %v6744, %v6740
        %v7825 = vpack.c.b16 %v6745, %v6741
        %v7826 = vpack.c.b16 %v6746, %v6742
        %v7827 = vpack.c.b16 %v6747, %v6743
        %v7828 = vpack.c.b16 %v6752, %v6748
        %v7829 = vpack.c.b16 %v6753, %v6749
        %v7830 = vpack.c.b16 %v6754, %v6750
        %v7831 = vpack.c.b16 %v6755, %v6751
        %v7832 = vpack.c.b16 %v6760, %v6756
        %v7833 = vpack.c.b16 %v6761, %v6757
        %v7834 = vpack.c.b16 %v6762, %v6758
        %v7835 = vpack.c.b16 %v6763, %v6759
        %v7836 = vpack.c.b16 %v6768, %v6764
        %v7837 = vpack.c.b16 %v6769, %v6765
        %v7838 = vpack.c.b16 %v6770, %v6766
        %v7839 = vpack.c.b16 %v6771, %v6767
        %v7840 = vpack.c.b16 %v6776, %v6772
        %v7841 = vpack.c.b16 %v6777, %v6773
        %v7842 = vpack.c.b16 %v6778, %v6774
        %v7843 = vpack.c.b16 %v6779, %v6775
        %v7844 = vpack.c.b16 %v6784, %v6780
        %v7845 = vpack.c.b16 %v6785, %v6781
        %v7846 = vpack.c.b16 %v6786, %v6782
        %v7847 = vpack.c.b16 %v6787, %v6783
        %v7848 = vpack.c.b16 %v6792, %v6788
        %v7849 = vpack.c.b16 %v6793, %v6789
        %v7850 = vpack.c.b16 %v6794, %v6790
        %v7851 = vpack.c.b16 %v6795, %v6791
        %v7852 = vpack.c.b16 %v6800, %v6796
        %v7853 = vpack.c.b16 %v6801, %v6797
        %v7854 = vpack.c.b16 %v6802, %v6798
        %v7855 = vpack.c.b16 %v6803, %v6799
        %v7856 = vpack.c.b16 %v6808, %v6804
        %v7857 = vpack.c.b16 %v6809, %v6805
        %v7858 = vpack.c.b16 %v6810, %v6806
        %v7859 = vpack.c.b16 %v6811, %v6807
        %v7860 = vpack.c.b16 %v6816, %v6812
        %v7861 = vpack.c.b16 %v6817, %v6813
        %v7862 = vpack.c.b16 %v6818, %v6814
        %v7863 = vpack.c.b16 %v6819, %v6815
        %v7864 = vpack.c.b16 %v6824, %v6820
        %v7865 = vpack.c.b16 %v6825, %v6821
        %v7866 = vpack.c.b16 %v6826, %v6822
        %v7867 = vpack.c.b16 %v6827, %v6823
        %v7868 = vpack.c.b16 %v6832, %v6828
        %v7869 = vpack.c.b16 %v6833, %v6829
        %v7870 = vpack.c.b16 %v6834, %v6830
        %v7871 = vpack.c.b16 %v6835, %v6831
        %v7872 = vpack.c.b16 %v6840, %v6836
        %v7873 = vpack.c.b16 %v6841, %v6837
        %v7874 = vpack.c.b16 %v6842, %v6838
        %v7875 = vpack.c.b16 %v6843, %v6839
        %v7876 = vpack.c.b16 %v6848, %v6844
        %v7877 = vpack.c.b16 %v6849, %v6845
        %v7878 = vpack.c.b16 %v6850, %v6846
        %v7879 = vpack.c.b16 %v6851, %v6847
        %v7880 = vpack.c.b16 %v6856, %v6852
        %v7881 = vpack.c.b16 %v6857, %v6853
        %v7882 = vpack.c.b16 %v6858, %v6854
        %v7883 = vpack.c.b16 %v6859, %v6855
        %v7884 = vpack.c.b16 %v6864, %v6860
        %v7885 = vpack.c.b16 %v6865, %v6861
        %v7886 = vpack.c.b16 %v6866, %v6862
        %v7887 = vpack.c.b16 %v6867, %v6863
        %v7888 = vpack.c.b16 %v6872, %v6868
        %v7889 = vpack.c.b16 %v6873, %v6869
        %v7890 = vpack.c.b16 %v6874, %v6870
        %v7891 = vpack.c.b16 %v6875, %v6871
        %v7892 = vpack.c.b16 %v6880, %v6876
        %v7893 = vpack.c.b16 %v6881, %v6877
        %v7894 = vpack.c.b16 %v6882, %v6878
        %v7895 = vpack.c.b16 %v6883, %v6879
        %v7896 = vpack.c.b16 %v6888, %v6884
        %v7897 = vpack.c.b16 %v6889, %v6885
        %v7898 = vpack.c.b16 %v6890, %v6886
        %v7899 = vpack.c.b16 %v6891, %v6887
        %v7900 = vpack.c.b16 %v6896, %v6892
        %v7901 = vpack.c.b16 %v6897, %v6893
        %v7902 = vpack.c.b16 %v6898, %v6894
        %v7903 = vpack.c.b16 %v6899, %v6895
        %v7904 = vpack.c.b16 %v6904, %v6900
        %v7905 = vpack.c.b16 %v6905, %v6901
        %v7906 = vpack.c.b16 %v6906, %v6902
        %v7907 = vpack.c.b16 %v6907, %v6903
        %v7908 = vpack.c.b16 %v6912, %v6908
        %v7909 = vpack.c.b16 %v6913, %v6909
        %v7910 = vpack.c.b16 %v6914, %v6910
        %v7911 = vpack.c.b16 %v6915, %v6911
        %v7912 = vpack.c.b16 %v6920, %v6916
        %v7913 = vpack.c.b16 %v6921, %v6917
        %v7914 = vpack.c.b16 %v6922, %v6918
        %v7915 = vpack.c.b16 %v6923, %v6919
        %v7916 = vpack.c.b16 %v6928, %v6924
        %v7917 = vpack.c.b16 %v6929, %v6925
        %v7918 = vpack.c.b16 %v6930, %v6926
        %v7919 = vpack.c.b16 %v6931, %v6927
        %v7920 = vpack.c.b16 %v6936, %v6932
        %v7921 = vpack.c.b16 %v6937, %v6933
        %v7922 = vpack.c.b16 %v6938, %v6934
        %v7923 = vpack.c.b16 %v6939, %v6935
        %v7924 = vpack.c.b16 %v6944, %v6940
        %v7925 = vpack.c.b16 %v6945, %v6941
        %v7926 = vpack.c.b16 %v6946, %v6942
        %v7927 = vpack.c.b16 %v6947, %v6943
        %v7928 = vpack.c.b16 %v6952, %v6948
        %v7929 = vpack.c.b16 %v6953, %v6949
        %v7930 = vpack.c.b16 %v6954, %v6950
        %v7931 = vpack.c.b16 %v6955, %v6951
        %v7932 = vpack.c.b16 %v6960, %v6956
        %v7933 = vpack.c.b16 %v6961, %v6957
        %v7934 = vpack.c.b16 %v6962, %v6958
        %v7935 = vpack.c.b16 %v6963, %v6959
        %v7936 = vpack.c.b16 %v6968, %v6964
        %v7937 = vpack.c.b16 %v6969, %v6965
        %v7938 = vpack.c.b16 %v6970, %v6966
        %v7939 = vpack.c.b16 %v6971, %v6967
        %v7940 = vpack.c.b16 %v6976, %v6972
        %v7941 = vpack.c.b16 %v6977, %v6973
        %v7942 = vpack.c.b16 %v6978, %v6974
        %v7943 = vpack.c.b16 %v6979, %v6975
        %v7944 = vpack.c.b16 %v6984, %v6980
        %v7945 = vpack.c.b16 %v6985, %v6981
        %v7946 = vpack.c.b16 %v6986, %v6982
        %v7947 = vpack.c.b16 %v6987, %v6983
        %v7948 = vpack.c.b16 %v6992, %v6988
        %v7949 = vpack.c.b16 %v6993, %v6989
        %v7950 = vpack.c.b16 %v6994, %v6990
        %v7951 = vpack.c.b16 %v6995, %v6991
        %v7952 = vpack.c.b16 %v7000, %v6996
        %v7953 = vpack.c.b16 %v7001, %v6997
        %v7954 = vpack.c.b16 %v7002, %v6998
        %v7955 = vpack.c.b16 %v7003, %v6999
        %v7956 = vpack.c.b16 %v7008, %v7004
        %v7957 = vpack.c.b16 %v7009, %v7005
        %v7958 = vpack.c.b16 %v7010, %v7006
        %v7959 = vpack.c.b16 %v7011, %v7007
        %v7960 = vpack.c.b16 %v7016, %v7012
        %v7961 = vpack.c.b16 %v7017, %v7013
        %v7962 = vpack.c.b16 %v7018, %v7014
        %v7963 = vpack.c.b16 %v7019, %v7015
        %v7964 = vpack.c.b16 %v7024, %v7020
        %v7965 = vpack.c.b16 %v7025, %v7021
        %v7966 = vpack.c.b16 %v7026, %v7022
        %v7967 = vpack.c.b16 %v7027, %v7023
        %v7968 = vpack.c.b16 %v7032, %v7028
        %v7969 = vpack.c.b16 %v7033, %v7029
        %v7970 = vpack.c.b16 %v7034, %v7030
        %v7971 = vpack.c.b16 %v7035, %v7031
        %v7972 = vpack.c.b16 %v7040, %v7036
        %v7973 = vpack.c.b16 %v7041, %v7037
        %v7974 = vpack.c.b16 %v7042, %v7038
        %v7975 = vpack.c.b16 %v7043, %v7039
        %v7976 = vpack.c.b16 %v7048, %v7044
        %v7977 = vpack.c.b16 %v7049, %v7045
        %v7978 = vpack.c.b16 %v7050, %v7046
        %v7979 = vpack.c.b16 %v7051, %v7047
        %v7980 = vpack.c.b16 %v7056, %v7052
        %v7981 = vpack.c.b16 %v7057, %v7053
        %v7982 = vpack.c.b16 %v7058, %v7054
        %v7983 = vpack.c.b16 %v7059, %v7055
        %v7984 = vpack.c.b16 %v7064, %v7060
        %v7985 = vpack.c.b16 %v7065, %v7061
        %v7986 = vpack.c.b16 %v7066, %v7062
        %v7987 = vpack.c.b16 %v7067, %v7063
        %v7988 = vpack.c.b16 %v7072, %v7068
        %v7989 = vpack.c.b16 %v7073, %v7069
        %v7990 = vpack.c.b16 %v7074, %v7070
        %v7991 = vpack.c.b16 %v7075, %v7071
        %v7992 = vpack.c.b16 %v7080, %v7076
        %v7993 = vpack.c.b16 %v7081, %v7077
        %v7994 = vpack.c.b16 %v7082, %v7078
        %v7995 = vpack.c.b16 %v7083, %v7079
        %v7996 = vpack.c.b16 %v7088, %v7084
        %v7997 = vpack.c.b16 %v7089, %v7085
        %v7998 = vpack.c.b16 %v7090, %v7086
        %v7999 = vpack.c.b16 %v7091, %v7087
        %v8000 = vpack.c.b16 %v7096, %v7092
        %v8001 = vpack.c.b16 %v7097, %v7093
        %v8002 = vpack.c.b16 %v7098, %v7094
        %v8003 = vpack.c.b16 %v7099, %v7095
        %v8004 = vpack.c.b16 %v7104, %v7100
        %v8005 = vpack.c.b16 %v7105, %v7101
        %v8006 = vpack.c.b16 %v7106, %v7102
        %v8007 = vpack.c.b16 %v7107, %v7103
        %v8008 = vpack.c.b16 %v7112, %v7108
        %v8009 = vpack.c.b16 %v7113, %v7109
        %v8010 = vpack.c.b16 %v7114, %v7110
        %v8011 = vpack.c.b16 %v7115, %v7111
        %v8012 = vpack.c.b16 %v7120, %v7116
        %v8013 = vpack.c.b16 %v7121, %v7117
        %v8014 = vpack.c.b16 %v7122, %v7118
        %v8015 = vpack.c.b16 %v7123, %v7119
        %v8016 = vpack.c.b16 %v7128, %v7124
        %v8017 = vpack.c.b16 %v7129, %v7125
        %v8018 = vpack.c.b16 %v7130, %v7126
        %v8019 = vpack.c.b16 %v7131, %v7127
        %v8020 = vpack.c.b16 %v7136, %v7132
        %v8021 = vpack.c.b16 %v7137, %v7133
        %v8022 = vpack.c.b16 %v7138, %v7134
        %v8023 = vpack.c.b16 %v7139, %v7135
        %v8024 = vpack.c.b16 %v7144, %v7140
        %v8025 = vpack.c.b16 %v7145, %v7141
        %v8026 = vpack.c.b16 %v7146, %v7142
        %v8027 = vpack.c.b16 %v7147, %v7143
        %v8028 = vpack.c.b16 %v7152, %v7148
        %v8029 = vpack.c.b16 %v7153, %v7149
        %v8030 = vpack.c.b16 %v7154, %v7150
        %v8031 = vpack.c.b16 %v7155, %v7151
        %v8032 = vpack.c.b16 %v7160, %v7156
        %v8033 = vpack.c.b16 %v7161, %v7157
        %v8034 = vpack.c.b16 %v7162, %v7158
        %v8035 = vpack.c.b16 %v7163, %v7159
        %v8036 = vpack.c.b16 %v7168, %v7164
        %v8037 = vpack.c.b16 %v7169, %v7165
        %v8038 = vpack.c.b16 %v7170, %v7166
        %v8039 = vpack.c.b16 %v7171, %v7167
        %v8040 = vpack.c.b16 %v7176, %v7172
        %v8041 = vpack.c.b16 %v7177, %v7173
        %v8042 = vpack.c.b16 %v7178, %v7174
        %v8043 = vpack.c.b16 %v7179, %v7175
        %v8044 = vpack.c.b16 %v7184, %v7180
        %v8045 = vpack.c.b16 %v7185, %v7181
        %v8046 = vpack.c.b16 %v7186, %v7182
        %v8047 = vpack.c.b16 %v7187, %v7183
        %v8048 = vpack.c.b16 %v7192, %v7188
        %v8049 = vpack.c.b16 %v7193, %v7189
        %v8050 = vpack.c.b16 %v7194, %v7190
        %v8051 = vpack.c.b16 %v7195, %v7191
        %v8052 = vpack.c.b16 %v7200, %v7196
        %v8053 = vpack.c.b16 %v7201, %v7197
        %v8054 = vpack.c.b16 %v7202, %v7198
        %v8055 = vpack.c.b16 %v7203, %v7199
        %v8056 = vpack.c.b16 %v7208, %v7204
        %v8057 = vpack.c.b16 %v7209, %v7205
        %v8058 = vpack.c.b16 %v7210, %v7206
        %v8059 = vpack.c.b16 %v7211, %v7207
        %v8060 = vpack.c.b16 %v7216, %v7212
        %v8061 = vpack.c.b16 %v7217, %v7213
        %v8062 = vpack.c.b16 %v7218, %v7214
        %v8063 = vpack.c.b16 %v7219, %v7215
        %v8064 = vpack.c.b16 %v7224, %v7220
        %v8065 = vpack.c.b16 %v7225, %v7221
        %v8066 = vpack.c.b16 %v7226, %v7222
        %v8067 = vpack.c.b16 %v7227, %v7223
        %v8068 = vpack.c.b16 %v7232, %v7228
        %v8069 = vpack.c.b16 %v7233, %v7229
        %v8070 = vpack.c.b16 %v7234, %v7230
        %v8071 = vpack.c.b16 %v7235, %v7231
        %v8072 = vpack.c.b16 %v7240, %v7236
        %v8073 = vpack.c.b16 %v7241, %v7237
        %v8074 = vpack.c.b16 %v7242, %v7238
        %v8075 = vpack.c.b16 %v7243, %v7239
        %v8076 = vpack.c.b16 %v7248, %v7244
        %v8077 = vpack.c.b16 %v7249, %v7245
        %v8078 = vpack.c.b16 %v7250, %v7246
        %v8079 = vpack.c.b16 %v7251, %v7247
        %v8080 = vpack.c.b16 %v7256, %v7252
        %v8081 = vpack.c.b16 %v7257, %v7253
        %v8082 = vpack.c.b16 %v7258, %v7254
        %v8083 = vpack.c.b16 %v7259, %v7255
        %v8084 = vpack.c.b16 %v7264, %v7260
        %v8085 = vpack.c.b16 %v7265, %v7261
        %v8086 = vpack.c.b16 %v7266, %v7262
        %v8087 = vpack.c.b16 %v7267, %v7263
        %v8088 = vpack.c.b16 %v7272, %v7268
        %v8089 = vpack.c.b16 %v7273, %v7269
        %v8090 = vpack.c.b16 %v7274, %v7270
        %v8091 = vpack.c.b16 %v7275, %v7271
        %v8092 = vpack.c.b16 %v7280, %v7276
        %v8093 = vpack.c.b16 %v7281, %v7277
        %v8094 = vpack.c.b16 %v7282, %v7278
        %v8095 = vpack.c.b16 %v7283, %v7279
        %v8096 = vpack.c.b16 %v7288, %v7284
        %v8097 = vpack.c.b16 %v7289, %v7285
        %v8098 = vpack.c.b16 %v7290, %v7286
        %v8099 = vpack.c.b16 %v7291, %v7287
        %v8100 = vpack.c.b16 %v7296, %v7292
        %v8101 = vpack.c.b16 %v7297, %v7293
        %v8102 = vpack.c.b16 %v7298, %v7294
        %v8103 = vpack.c.b16 %v7299, %v7295
        %v8104 = vpack.c.b16 %v7304, %v7300
        %v8105 = vpack.c.b16 %v7305, %v7301
        %v8106 = vpack.c.b16 %v7306, %v7302
        %v8107 = vpack.c.b16 %v7307, %v7303
        %v8108 = vpack.c.b16 %v7312, %v7308
        %v8109 = vpack.c.b16 %v7313, %v7309
        %v8110 = vpack.c.b16 %v7314, %v7310
        %v8111 = vpack.c.b16 %v7315, %v7311
        %v8112 = vpack.c.b16 %v7320, %v7316
        %v8113 = vpack.c.b16 %v7321, %v7317
        %v8114 = vpack.c.b16 %v7322, %v7318
        %v8115 = vpack.c.b16 %v7323, %v7319
        %v8116 = vpack.c.b16 %v7328, %v7324
        %v8117 = vpack.c.b16 %v7329, %v7325
        %v8118 = vpack.c.b16 %v7330, %v7326
        %v8119 = vpack.c.b16 %v7331, %v7327
        %v8120 = vpack.c.b16 %v7336, %v7332
        %v8121 = vpack.c.b16 %v7337, %v7333
        %v8122 = vpack.c.b16 %v7338, %v7334
        %v8123 = vpack.c.b16 %v7339, %v7335
        %v8909 = vlaneseq
        %v8910 = vshrl.u32 %v8909, 7
        %v8911 = vsub.s32 0, %v8910
        %v8912 = vrot.slane %v4987, %v8911
        %v8913 = vlaneseq
        %v8914 = vshrl.u32 %v8913, 7
        %v8915 = vsub.s32 1, %v8914
        %v8916 = vrot.slane %v4987, %v8915
        %v8917 = vlaneseq
        %v8918 = vshrl.u32 %v8917, 7
        %v8919 = vsub.s32 2, %v8918
        %v8920 = vrot.slane %v4987, %v8919
        %v8921 = vlaneseq
        %v8922 = vshrl.u32 %v8921, 7
        %v8923 = vsub.s32 3, %v8922
        %v8924 = vrot.slane %v4987, %v8923
        %v8930 = vsel %vm1412, %v4202, 0
        %8932 = vmatprep.subr.bf16.mxu0 %v7369
        %8933 = vmatpush1.bf16.msra.mxu0 %v7368
        %8934 = vmatprep.subr.bf16.mxu0 %v7365
        %8935 = vmatpush1.bf16.msra.mxu0 %v7364
        %8936 = vmatprep.subr.bf16.mxu0 %v7361
        %8937 = vmatpush1.bf16.msra.mxu0 %v7360
        %8938 = vmatprep.subr.bf16.mxu0 %v7357
        %8939 = vmatpush1.bf16.msra.mxu0 %v7356
        %8940 = vmatprep.subr.bf16.mxu0 %v7353
        %8941 = vmatpush1.bf16.msra.mxu0 %v7352
        %8942 = vmatprep.subr.bf16.mxu0 %v7349
        %8943 = vmatpush1.bf16.msra.mxu0 %v7348
        %8944 = vmatprep.subr.bf16.mxu0 %v7345
        %8945 = vmatpush1.bf16.msra.mxu0 %v7344
        %8946 = vmatprep.subr.bf16.mxu0 %v7341
        %8947 = vmatpush1.bf16.msra.mxu0 %v7340
        %8948 = vmatprep.subr.bf16.mxu0 %v7401
        %8949 = vmatpush2.bf16.msra.mxu0 %v7400
        %8950 = vmatprep.subr.bf16.mxu0 %v7397
        %8951 = vmatpush2.bf16.msra.mxu0 %v7396
        %8952 = vmatprep.subr.bf16.mxu0 %v7393
        %8953 = vmatpush2.bf16.msra.mxu0 %v7392
        %8954 = vmatprep.subr.bf16.mxu0 %v7389
        %8955 = vmatpush2.bf16.msra.mxu0 %v7388
        %8956 = vmatprep.subr.bf16.mxu0 %v7385
        %8957 = vmatpush2.bf16.msra.mxu0 %v7384
        %8958 = vmatprep.subr.bf16.mxu0 %v7381
        %8959 = vmatpush2.bf16.msra.mxu0 %v7380
        %8960 = vmatprep.subr.bf16.mxu0 %v7377
        %8961 = vmatpush2.bf16.msra.mxu0 %v7376
        %8962 = vmatprep.subr.bf16.mxu0 %v7373
        %8963 = vmatpush2.bf16.msra.mxu0 %v7372
        %8964 = vmatprep.mubr.bf16.mxu0 %v4179
        %8965 = vmatmul.mubr.bf16.gmra.mxu0 %v4178
        %v8966 = vpop.f32.mrf.mxu0
        %v8967 = vadd.f32 %v8912, %v8966
        %v8968 = vpop.f32.mrf.mxu0
        %v8969 = vadd.f32 %v8916, %v8968
        %v8970 = vpop.f32.mrf.mxu0
        %v8971 = vpop.f32.mrf.mxu0
        %8972 = vdwg.mxu0
        %8973 = vmatprep.subr.bf16.mxu0 %v7433
        %8974 = vmatpush1.bf16.msra.mxu0 %v7432
        %8975 = vmatprep.subr.bf16.mxu0 %v7429
        %8976 = vmatpush1.bf16.msra.mxu0 %v7428
        %8977 = vmatprep.subr.bf16.mxu0 %v7425
        %8978 = vmatpush1.bf16.msra.mxu0 %v7424
        %8979 = vmatprep.subr.bf16.mxu0 %v7421
        %8980 = vmatpush1.bf16.msra.mxu0 %v7420
        %8981 = vmatprep.subr.bf16.mxu0 %v7417
        %8982 = vmatpush1.bf16.msra.mxu0 %v7416
        %8983 = vmatprep.subr.bf16.mxu0 %v7413
        %8984 = vmatpush1.bf16.msra.mxu0 %v7412
        %8985 = vmatprep.subr.bf16.mxu0 %v7409
        %8986 = vmatpush1.bf16.msra.mxu0 %v7408
        %8987 = vmatprep.subr.bf16.mxu0 %v7405
        %8988 = vmatpush1.bf16.msra.mxu0 %v7404
        %8989 = vmatprep.subr.bf16.mxu0 %v7465
        %8990 = vmatpush2.bf16.msra.mxu0 %v7464
        %8991 = vmatprep.subr.bf16.mxu0 %v7461
        %8992 = vmatpush2.bf16.msra.mxu0 %v7460
        %8993 = vmatprep.subr.bf16.mxu0 %v7457
        %8994 = vmatpush2.bf16.msra.mxu0 %v7456
        %8995 = vmatprep.subr.bf16.mxu0 %v7453
        %8996 = vmatpush2.bf16.msra.mxu0 %v7452
        %8997 = vmatprep.subr.bf16.mxu0 %v7449
        %8998 = vmatpush2.bf16.msra.mxu0 %v7448
        %8999 = vmatprep.subr.bf16.mxu0 %v7445
        %9000 = vmatpush2.bf16.msra.mxu0 %v7444
        %9001 = vmatprep.subr.bf16.mxu0 %v7441
        %9002 = vmatpush2.bf16.msra.mxu0 %v7440
        %9003 = vmatprep.subr.bf16.mxu0 %v7437
        %9004 = vmatpush2.bf16.msra.mxu0 %v7436
        %9005 = vmatprep.mubr.bf16.mxu0 %v4181
        %9006 = vmatmul.mubr.bf16.gmra.mxu0 %v4180
        %v9007 = vpop.f32.mrf.mxu0
        %v9008 = vadd.f32 %v8967, %v9007
        %v9009 = vpop.f32.mrf.mxu0
        %v9010 = vadd.f32 %v8969, %v9009
        %v9011 = vpop.f32.mrf.mxu0
        %v9012 = vpop.f32.mrf.mxu0
        %9013 = vdwg.mxu0
        %9014 = vmatprep.subr.bf16.mxu0 %v7497
        %9015 = vmatpush1.bf16.msra.mxu0 %v7496
        %9016 = vmatprep.subr.bf16.mxu0 %v7493
        %9017 = vmatpush1.bf16.msra.mxu0 %v7492
        %9018 = vmatprep.subr.bf16.mxu0 %v7489
        %9019 = vmatpush1.bf16.msra.mxu0 %v7488
        %9020 = vmatprep.subr.bf16.mxu0 %v7485
        %9021 = vmatpush1.bf16.msra.mxu0 %v7484
        %9022 = vmatprep.subr.bf16.mxu0 %v7481
        %9023 = vmatpush1.bf16.msra.mxu0 %v7480
        %9024 = vmatprep.subr.bf16.mxu0 %v7477
        %9025 = vmatpush1.bf16.msra.mxu0 %v7476
        %9026 = vmatprep.subr.bf16.mxu0 %v7473
        %9027 = vmatpush1.bf16.msra.mxu0 %v7472
        %9028 = vmatprep.subr.bf16.mxu0 %v7469
        %9029 = vmatpush1.bf16.msra.mxu0 %v7468
        %9030 = vmatprep.subr.bf16.mxu0 %v7529
        %9031 = vmatpush2.bf16.msra.mxu0 %v7528
        %9032 = vmatprep.subr.bf16.mxu0 %v7525
        %9033 = vmatpush2.bf16.msra.mxu0 %v7524
        %9034 = vmatprep.subr.bf16.mxu0 %v7521
        %9035 = vmatpush2.bf16.msra.mxu0 %v7520
        %9036 = vmatprep.subr.bf16.mxu0 %v7517
        %9037 = vmatpush2.bf16.msra.mxu0 %v7516
        %9038 = vmatprep.subr.bf16.mxu0 %v7513
        %9039 = vmatpush2.bf16.msra.mxu0 %v7512
        %9040 = vmatprep.subr.bf16.mxu0 %v7509
        %9041 = vmatpush2.bf16.msra.mxu0 %v7508
        %9042 = vmatprep.subr.bf16.mxu0 %v7505
        %9043 = vmatpush2.bf16.msra.mxu0 %v7504
        %9044 = vmatprep.subr.bf16.mxu0 %v7501
        %9045 = vmatpush2.bf16.msra.mxu0 %v7500
        %9046 = vmatprep.mubr.bf16.mxu0 %v4183
        %9047 = vmatmul.mubr.bf16.gmra.mxu0 %v4182
        %v9048 = vpop.f32.mrf.mxu0
        %v9049 = vadd.f32 %v9008, %v9048
        %v9050 = vpop.f32.mrf.mxu0
        %v9051 = vadd.f32 %v9010, %v9050
        %v9052 = vpop.f32.mrf.mxu0
        %v9053 = vpop.f32.mrf.mxu0
        %9054 = vdwg.mxu0
        %9055 = vmatprep.subr.bf16.mxu0 %v7561
        %9056 = vmatpush1.bf16.msra.mxu0 %v7560
        %9057 = vmatprep.subr.bf16.mxu0 %v7557
        %9058 = vmatpush1.bf16.msra.mxu0 %v7556
        %9059 = vmatprep.subr.bf16.mxu0 %v7553
        %9060 = vmatpush1.bf16.msra.mxu0 %v7552
        %9061 = vmatprep.subr.bf16.mxu0 %v7549
        %9062 = vmatpush1.bf16.msra.mxu0 %v7548
        %9063 = vmatprep.subr.bf16.mxu0 %v7545
        %9064 = vmatpush1.bf16.msra.mxu0 %v7544
        %9065 = vmatprep.subr.bf16.mxu0 %v7541
        %9066 = vmatpush1.bf16.msra.mxu0 %v7540
        %9067 = vmatprep.subr.bf16.mxu0 %v7537
        %9068 = vmatpush1.bf16.msra.mxu0 %v7536
        %9069 = vmatprep.subr.bf16.mxu0 %v7533
        %9070 = vmatpush1.bf16.msra.mxu0 %v7532
        %9071 = vmatprep.subr.bf16.mxu0 %v7593
        %9072 = vmatpush2.bf16.msra.mxu0 %v7592
        %9073 = vmatprep.subr.bf16.mxu0 %v7589
        %9074 = vmatpush2.bf16.msra.mxu0 %v7588
        %9075 = vmatprep.subr.bf16.mxu0 %v7585
        %9076 = vmatpush2.bf16.msra.mxu0 %v7584
        %9077 = vmatprep.subr.bf16.mxu0 %v7581
        %9078 = vmatpush2.bf16.msra.mxu0 %v7580
        %9079 = vmatprep.subr.bf16.mxu0 %v7577
        %9080 = vmatpush2.bf16.msra.mxu0 %v7576
        %9081 = vmatprep.subr.bf16.mxu0 %v7573
        %9082 = vmatpush2.bf16.msra.mxu0 %v7572
        %9083 = vmatprep.subr.bf16.mxu0 %v7569
        %9084 = vmatpush2.bf16.msra.mxu0 %v7568
        %9085 = vmatprep.subr.bf16.mxu0 %v7565
        %9086 = vmatpush2.bf16.msra.mxu0 %v7564
        %9087 = vmatprep.mubr.bf16.mxu0 %v4185
        %9088 = vmatmul.mubr.bf16.gmra.mxu0 %v4184
        %v9089 = vpop.f32.mrf.mxu0
        %v9090 = vadd.f32 %v9049, %v9089
        %v9091 = vpop.f32.mrf.mxu0
        %v9092 = vadd.f32 %v9051, %v9091
        %v9093 = vpop.f32.mrf.mxu0
        %v9094 = vpop.f32.mrf.mxu0
        %9095 = vdwg.mxu0
        %9096 = vmatprep.subr.bf16.mxu0 %v7625
        %9097 = vmatpush1.bf16.msra.mxu0 %v7624
        %9098 = vmatprep.subr.bf16.mxu0 %v7621
        %9099 = vmatpush1.bf16.msra.mxu0 %v7620
        %9100 = vmatprep.subr.bf16.mxu0 %v7617
        %9101 = vmatpush1.bf16.msra.mxu0 %v7616
        %9102 = vmatprep.subr.bf16.mxu0 %v7613
        %9103 = vmatpush1.bf16.msra.mxu0 %v7612
        %9104 = vmatprep.subr.bf16.mxu0 %v7609
        %9105 = vmatpush1.bf16.msra.mxu0 %v7608
        %9106 = vmatprep.subr.bf16.mxu0 %v7605
        %9107 = vmatpush1.bf16.msra.mxu0 %v7604
        %9108 = vmatprep.subr.bf16.mxu0 %v7601
        %9109 = vmatpush1.bf16.msra.mxu0 %v7600
        %9110 = vmatprep.subr.bf16.mxu0 %v7597
        %9111 = vmatpush1.bf16.msra.mxu0 %v7596
        %9112 = vmatprep.subr.bf16.mxu0 %v7657
        %9113 = vmatpush2.bf16.msra.mxu0 %v7656
        %9114 = vmatprep.subr.bf16.mxu0 %v7653
        %9115 = vmatpush2.bf16.msra.mxu0 %v7652
        %9116 = vmatprep.subr.bf16.mxu0 %v7649
        %9117 = vmatpush2.bf16.msra.mxu0 %v7648
        %9118 = vmatprep.subr.bf16.mxu0 %v7645
        %9119 = vmatpush2.bf16.msra.mxu0 %v7644
        %9120 = vmatprep.subr.bf16.mxu0 %v7641
        %9121 = vmatpush2.bf16.msra.mxu0 %v7640
        %9122 = vmatprep.subr.bf16.mxu0 %v7637
        %9123 = vmatpush2.bf16.msra.mxu0 %v7636
        %9124 = vmatprep.subr.bf16.mxu0 %v7633
        %9125 = vmatpush2.bf16.msra.mxu0 %v7632
        %9126 = vmatprep.subr.bf16.mxu0 %v7629
        %9127 = vmatpush2.bf16.msra.mxu0 %v7628
        %9128 = vmatprep.mubr.bf16.mxu0 %v4187
        %9129 = vmatmul.mubr.bf16.gmra.mxu0 %v4186
        %v9130 = vpop.f32.mrf.mxu0
        %v9131 = vadd.f32 %v9090, %v9130
        %v9132 = vpop.f32.mrf.mxu0
        %v9133 = vadd.f32 %v9092, %v9132
        %v9134 = vpop.f32.mrf.mxu0
        %v9135 = vpop.f32.mrf.mxu0
        %9136 = vdwg.mxu0
        %9137 = vmatprep.subr.bf16.mxu0 %v7689
        %9138 = vmatpush1.bf16.msra.mxu0 %v7688
        %9139 = vmatprep.subr.bf16.mxu0 %v7685
        %9140 = vmatpush1.bf16.msra.mxu0 %v7684
        %9141 = vmatprep.subr.bf16.mxu0 %v7681
        %9142 = vmatpush1.bf16.msra.mxu0 %v7680
        %9143 = vmatprep.subr.bf16.mxu0 %v7677
        %9144 = vmatpush1.bf16.msra.mxu0 %v7676
        %9145 = vmatprep.subr.bf16.mxu0 %v7673
        %9146 = vmatpush1.bf16.msra.mxu0 %v7672
        %9147 = vmatprep.subr.bf16.mxu0 %v7669
        %9148 = vmatpush1.bf16.msra.mxu0 %v7668
        %9149 = vmatprep.subr.bf16.mxu0 %v7665
        %9150 = vmatpush1.bf16.msra.mxu0 %v7664
        %9151 = vmatprep.subr.bf16.mxu0 %v7661
        %9152 = vmatpush1.bf16.msra.mxu0 %v7660
        %9153 = vmatprep.subr.bf16.mxu0 %v7721
        %9154 = vmatpush2.bf16.msra.mxu0 %v7720
        %9155 = vmatprep.subr.bf16.mxu0 %v7717
        %9156 = vmatpush2.bf16.msra.mxu0 %v7716
        %9157 = vmatprep.subr.bf16.mxu0 %v7713
        %9158 = vmatpush2.bf16.msra.mxu0 %v7712
        %9159 = vmatprep.subr.bf16.mxu0 %v7709
        %9160 = vmatpush2.bf16.msra.mxu0 %v7708
        %9161 = vmatprep.subr.bf16.mxu0 %v7705
        %9162 = vmatpush2.bf16.msra.mxu0 %v7704
        %9163 = vmatprep.subr.bf16.mxu0 %v7701
        %9164 = vmatpush2.bf16.msra.mxu0 %v7700
        %9165 = vmatprep.subr.bf16.mxu0 %v7697
        %9166 = vmatpush2.bf16.msra.mxu0 %v7696
        %9167 = vmatprep.subr.bf16.mxu0 %v7693
        %9168 = vmatpush2.bf16.msra.mxu0 %v7692
        %9169 = vmatprep.mubr.bf16.mxu0 %v4189
        %9170 = vmatmul.mubr.bf16.gmra.mxu0 %v4188
        %v9171 = vpop.f32.mrf.mxu0
        %v9172 = vadd.f32 %v9131, %v9171
        %v9173 = vpop.f32.mrf.mxu0
        %v9174 = vadd.f32 %v9133, %v9173
        %v9175 = vpop.f32.mrf.mxu0
        %v9176 = vpop.f32.mrf.mxu0
        %9177 = vdwg.mxu0
        %9178 = vmatprep.subr.bf16.mxu0 %v7753
        %9179 = vmatpush1.bf16.msra.mxu0 %v7752
        %9180 = vmatprep.subr.bf16.mxu0 %v7749
        %9181 = vmatpush1.bf16.msra.mxu0 %v7748
        %9182 = vmatprep.subr.bf16.mxu0 %v7745
        %9183 = vmatpush1.bf16.msra.mxu0 %v7744
        %9184 = vmatprep.subr.bf16.mxu0 %v7741
        %9185 = vmatpush1.bf16.msra.mxu0 %v7740
        %9186 = vmatprep.subr.bf16.mxu0 %v7737
        %9187 = vmatpush1.bf16.msra.mxu0 %v7736
        %9188 = vmatprep.subr.bf16.mxu0 %v7733
        %9189 = vmatpush1.bf16.msra.mxu0 %v7732
        %9190 = vmatprep.subr.bf16.mxu0 %v7729
        %9191 = vmatpush1.bf16.msra.mxu0 %v7728
        %9192 = vmatprep.subr.bf16.mxu0 %v7725
        %9193 = vmatpush1.bf16.msra.mxu0 %v7724
        %9194 = vmatprep.subr.bf16.mxu0 %v7785
        %9195 = vmatpush2.bf16.msra.mxu0 %v7784
        %9196 = vmatprep.subr.bf16.mxu0 %v7781
        %9197 = vmatpush2.bf16.msra.mxu0 %v7780
        %9198 = vmatprep.subr.bf16.mxu0 %v7777
        %9199 = vmatpush2.bf16.msra.mxu0 %v7776
        %9200 = vmatprep.subr.bf16.mxu0 %v7773
        %9201 = vmatpush2.bf16.msra.mxu0 %v7772
        %9202 = vmatprep.subr.bf16.mxu0 %v7769
        %9203 = vmatpush2.bf16.msra.mxu0 %v7768
        %9204 = vmatprep.subr.bf16.mxu0 %v7765
        %9205 = vmatpush2.bf16.msra.mxu0 %v7764
        %9206 = vmatprep.subr.bf16.mxu0 %v7761
        %9207 = vmatpush2.bf16.msra.mxu0 %v7760
        %9208 = vmatprep.subr.bf16.mxu0 %v7757
        %9209 = vmatpush2.bf16.msra.mxu0 %v7756
        %9210 = vmatprep.mubr.bf16.mxu0 %v4191
        %9211 = vmatmul.mubr.bf16.gmra.mxu0 %v4190
        %v9212 = vpop.f32.mrf.mxu0
        %v9213 = vadd.f32 %v9172, %v9212
        %v9214 = vpop.f32.mrf.mxu0
        %v9215 = vadd.f32 %v9174, %v9214
        %v9216 = vpop.f32.mrf.mxu0
        %v9217 = vpop.f32.mrf.mxu0
        %9218 = vdwg.mxu0
        %9219 = vmatprep.subr.bf16.mxu0 %v7817
        %9220 = vmatpush1.bf16.msra.mxu0 %v7816
        %9221 = vmatprep.subr.bf16.mxu0 %v7813
        %9222 = vmatpush1.bf16.msra.mxu0 %v7812
        %9223 = vmatprep.subr.bf16.mxu0 %v7809
        %9224 = vmatpush1.bf16.msra.mxu0 %v7808
        %9225 = vmatprep.subr.bf16.mxu0 %v7805
        %9226 = vmatpush1.bf16.msra.mxu0 %v7804
        %9227 = vmatprep.subr.bf16.mxu0 %v7801
        %9228 = vmatpush1.bf16.msra.mxu0 %v7800
        %9229 = vmatprep.subr.bf16.mxu0 %v7797
        %9230 = vmatpush1.bf16.msra.mxu0 %v7796
        %9231 = vmatprep.subr.bf16.mxu0 %v7793
        %9232 = vmatpush1.bf16.msra.mxu0 %v7792
        %9233 = vmatprep.subr.bf16.mxu0 %v7789
        %9234 = vmatpush1.bf16.msra.mxu0 %v7788
        %9235 = vmatprep.subr.bf16.mxu0 %v7849
        %9236 = vmatpush2.bf16.msra.mxu0 %v7848
        %9237 = vmatprep.subr.bf16.mxu0 %v7845
        %9238 = vmatpush2.bf16.msra.mxu0 %v7844
        %9239 = vmatprep.subr.bf16.mxu0 %v7841
        %9240 = vmatpush2.bf16.msra.mxu0 %v7840
        %9241 = vmatprep.subr.bf16.mxu0 %v7837
        %9242 = vmatpush2.bf16.msra.mxu0 %v7836
        %9243 = vmatprep.subr.bf16.mxu0 %v7833
        %9244 = vmatpush2.bf16.msra.mxu0 %v7832
        %9245 = vmatprep.subr.bf16.mxu0 %v7829
        %9246 = vmatpush2.bf16.msra.mxu0 %v7828
        %9247 = vmatprep.subr.bf16.mxu0 %v7825
        %9248 = vmatpush2.bf16.msra.mxu0 %v7824
        %9249 = vmatprep.subr.bf16.mxu0 %v7821
        %9250 = vmatpush2.bf16.msra.mxu0 %v7820
        %9251 = vmatprep.mubr.bf16.mxu0 %v4193
        %9252 = vmatmul.mubr.bf16.gmra.mxu0 %v4192
        %v9253 = vpop.f32.mrf.mxu0
        %v9254 = vadd.f32 %v9213, %v9253
        %v9255 = vpop.f32.mrf.mxu0
        %v9256 = vadd.f32 %v9215, %v9255
        %v9257 = vpop.f32.mrf.mxu0
        %v9258 = vpop.f32.mrf.mxu0
        %9259 = vdwg.mxu0
        %9260 = vmatprep.subr.bf16.mxu0 %v7881
        %9261 = vmatpush1.bf16.msra.mxu0 %v7880
        %9262 = vmatprep.subr.bf16.mxu0 %v7877
        %9263 = vmatpush1.bf16.msra.mxu0 %v7876
        %9264 = vmatprep.subr.bf16.mxu0 %v7873
        %9265 = vmatpush1.bf16.msra.mxu0 %v7872
        %9266 = vmatprep.subr.bf16.mxu0 %v7869
        %9267 = vmatpush1.bf16.msra.mxu0 %v7868
        %9268 = vmatprep.subr.bf16.mxu0 %v7865
        %9269 = vmatpush1.bf16.msra.mxu0 %v7864
        %9270 = vmatprep.subr.bf16.mxu0 %v7861
        %9271 = vmatpush1.bf16.msra.mxu0 %v7860
        %9272 = vmatprep.subr.bf16.mxu0 %v7857
        %9273 = vmatpush1.bf16.msra.mxu0 %v7856
        %9274 = vmatprep.subr.bf16.mxu0 %v7853
        %9275 = vmatpush1.bf16.msra.mxu0 %v7852
        %9276 = vmatprep.subr.bf16.mxu0 %v7913
        %9277 = vmatpush2.bf16.msra.mxu0 %v7912
        %9278 = vmatprep.subr.bf16.mxu0 %v7909
        %9279 = vmatpush2.bf16.msra.mxu0 %v7908
        %9280 = vmatprep.subr.bf16.mxu0 %v7905
        %9281 = vmatpush2.bf16.msra.mxu0 %v7904
        %9282 = vmatprep.subr.bf16.mxu0 %v7901
        %9283 = vmatpush2.bf16.msra.mxu0 %v7900
        %9284 = vmatprep.subr.bf16.mxu0 %v7897
        %9285 = vmatpush2.bf16.msra.mxu0 %v7896
        %9286 = vmatprep.subr.bf16.mxu0 %v7893
        %9287 = vmatpush2.bf16.msra.mxu0 %v7892
        %9288 = vmatprep.subr.bf16.mxu0 %v7889
        %9289 = vmatpush2.bf16.msra.mxu0 %v7888
        %9290 = vmatprep.subr.bf16.mxu0 %v7885
        %9291 = vmatpush2.bf16.msra.mxu0 %v7884
        %9292 = vmatprep.mubr.bf16.mxu0 %v4195
        %9293 = vmatmul.mubr.bf16.gmra.mxu0 %v4194
        %v9294 = vpop.f32.mrf.mxu0
        %v9295 = vadd.f32 %v9254, %v9294
        %v9296 = vpop.f32.mrf.mxu0
        %v9297 = vadd.f32 %v9256, %v9296
        %v9298 = vpop.f32.mrf.mxu0
        %v9299 = vpop.f32.mrf.mxu0
        %9300 = vdwg.mxu0
        %9301 = vmatprep.subr.bf16.mxu0 %v7945
        %9302 = vmatpush1.bf16.msra.mxu0 %v7944
        %9303 = vmatprep.subr.bf16.mxu0 %v7941
        %9304 = vmatpush1.bf16.msra.mxu0 %v7940
        %9305 = vmatprep.subr.bf16.mxu0 %v7937
        %9306 = vmatpush1.bf16.msra.mxu0 %v7936
        %9307 = vmatprep.subr.bf16.mxu0 %v7933
        %9308 = vmatpush1.bf16.msra.mxu0 %v7932
        %9309 = vmatprep.subr.bf16.mxu0 %v7929
        %9310 = vmatpush1.bf16.msra.mxu0 %v7928
        %9311 = vmatprep.subr.bf16.mxu0 %v7925
        %9312 = vmatpush1.bf16.msra.mxu0 %v7924
        %9313 = vmatprep.subr.bf16.mxu0 %v7921
        %9314 = vmatpush1.bf16.msra.mxu0 %v7920
        %9315 = vmatprep.subr.bf16.mxu0 %v7917
        %9316 = vmatpush1.bf16.msra.mxu0 %v7916
        %9317 = vmatprep.subr.bf16.mxu0 %v7977
        %9318 = vmatpush2.bf16.msra.mxu0 %v7976
        %9319 = vmatprep.subr.bf16.mxu0 %v7973
        %9320 = vmatpush2.bf16.msra.mxu0 %v7972
        %9321 = vmatprep.subr.bf16.mxu0 %v7969
        %9322 = vmatpush2.bf16.msra.mxu0 %v7968
        %9323 = vmatprep.subr.bf16.mxu0 %v7965
        %9324 = vmatpush2.bf16.msra.mxu0 %v7964
        %9325 = vmatprep.subr.bf16.mxu0 %v7961
        %9326 = vmatpush2.bf16.msra.mxu0 %v7960
        %9327 = vmatprep.subr.bf16.mxu0 %v7957
        %9328 = vmatpush2.bf16.msra.mxu0 %v7956
        %9329 = vmatprep.subr.bf16.mxu0 %v7953
        %9330 = vmatpush2.bf16.msra.mxu0 %v7952
        %9331 = vmatprep.subr.bf16.mxu0 %v7949
        %9332 = vmatpush2.bf16.msra.mxu0 %v7948
        %9333 = vmatprep.mubr.bf16.mxu0 %v4197
        %9334 = vmatmul.mubr.bf16.gmra.mxu0 %v4196
        %v9335 = vpop.f32.mrf.mxu0
        %v9336 = vadd.f32 %v9295, %v9335
        %v9337 = vpop.f32.mrf.mxu0
        %v9338 = vadd.f32 %v9297, %v9337
        %v9339 = vpop.f32.mrf.mxu0
        %v9340 = vpop.f32.mrf.mxu0
        %9341 = vdwg.mxu0
        %9342 = vmatprep.subr.bf16.mxu0 %v8009
        %9343 = vmatpush1.bf16.msra.mxu0 %v8008
        %9344 = vmatprep.subr.bf16.mxu0 %v8005
        %9345 = vmatpush1.bf16.msra.mxu0 %v8004
        %9346 = vmatprep.subr.bf16.mxu0 %v8001
        %9347 = vmatpush1.bf16.msra.mxu0 %v8000
        %9348 = vmatprep.subr.bf16.mxu0 %v7997
        %9349 = vmatpush1.bf16.msra.mxu0 %v7996
        %9350 = vmatprep.subr.bf16.mxu0 %v7993
        %9351 = vmatpush1.bf16.msra.mxu0 %v7992
        %9352 = vmatprep.subr.bf16.mxu0 %v7989
        %9353 = vmatpush1.bf16.msra.mxu0 %v7988
        %9354 = vmatprep.subr.bf16.mxu0 %v7985
        %9355 = vmatpush1.bf16.msra.mxu0 %v7984
        %9356 = vmatprep.subr.bf16.mxu0 %v7981
        %9357 = vmatpush1.bf16.msra.mxu0 %v7980
        %9358 = vmatprep.subr.bf16.mxu0 %v8041
        %9359 = vmatpush2.bf16.msra.mxu0 %v8040
        %9360 = vmatprep.subr.bf16.mxu0 %v8037
        %9361 = vmatpush2.bf16.msra.mxu0 %v8036
        %9362 = vmatprep.subr.bf16.mxu0 %v8033
        %9363 = vmatpush2.bf16.msra.mxu0 %v8032
        %9364 = vmatprep.subr.bf16.mxu0 %v8029
        %9365 = vmatpush2.bf16.msra.mxu0 %v8028
        %9366 = vmatprep.subr.bf16.mxu0 %v8025
        %9367 = vmatpush2.bf16.msra.mxu0 %v8024
        %9368 = vmatprep.subr.bf16.mxu0 %v8021
        %9369 = vmatpush2.bf16.msra.mxu0 %v8020
        %9370 = vmatprep.subr.bf16.mxu0 %v8017
        %9371 = vmatpush2.bf16.msra.mxu0 %v8016
        %9372 = vmatprep.subr.bf16.mxu0 %v8013
        %9373 = vmatpush2.bf16.msra.mxu0 %v8012
        %9374 = vmatprep.mubr.bf16.mxu0 %v4199
        %9375 = vmatmul.mubr.bf16.gmra.mxu0 %v4198
        %v9376 = vpop.f32.mrf.mxu0
        %v9377 = vadd.f32 %v9336, %v9376
        %v9378 = vpop.f32.mrf.mxu0
        %v9379 = vadd.f32 %v9338, %v9378
        %v9380 = vpop.f32.mrf.mxu0
        %v9381 = vpop.f32.mrf.mxu0
        %9382 = vdwg.mxu0
        %9383 = vmatprep.subr.bf16.mxu0 %v8073
        %9384 = vmatpush1.bf16.msra.mxu0 %v8072
        %9385 = vmatprep.subr.bf16.mxu0 %v8069
        %9386 = vmatpush1.bf16.msra.mxu0 %v8068
        %9387 = vmatprep.subr.bf16.mxu0 %v8065
        %9388 = vmatpush1.bf16.msra.mxu0 %v8064
        %9389 = vmatprep.subr.bf16.mxu0 %v8061
        %9390 = vmatpush1.bf16.msra.mxu0 %v8060
        %9391 = vmatprep.subr.bf16.mxu0 %v8057
        %9392 = vmatpush1.bf16.msra.mxu0 %v8056
        %9393 = vmatprep.subr.bf16.mxu0 %v8053
        %9394 = vmatpush1.bf16.msra.mxu0 %v8052
        %9395 = vmatprep.subr.bf16.mxu0 %v8049
        %9396 = vmatpush1.bf16.msra.mxu0 %v8048
        %9397 = vmatprep.subr.bf16.mxu0 %v8045
        %9398 = vmatpush1.bf16.msra.mxu0 %v8044
        %9399 = vmatprep.subr.bf16.mxu0 %v8105
        %9400 = vmatpush2.bf16.msra.mxu0 %v8104
        %9401 = vmatprep.subr.bf16.mxu0 %v8101
        %9402 = vmatpush2.bf16.msra.mxu0 %v8100
        %9403 = vmatprep.subr.bf16.mxu0 %v8097
        %9404 = vmatpush2.bf16.msra.mxu0 %v8096
        %9405 = vmatprep.subr.bf16.mxu0 %v8093
        %9406 = vmatpush2.bf16.msra.mxu0 %v8092
        %9407 = vmatprep.subr.bf16.mxu0 %v8089
        %9408 = vmatpush2.bf16.msra.mxu0 %v8088
        %9409 = vmatprep.subr.bf16.mxu0 %v8085
        %9410 = vmatpush2.bf16.msra.mxu0 %v8084
        %9411 = vmatprep.subr.bf16.mxu0 %v8081
        %9412 = vmatpush2.bf16.msra.mxu0 %v8080
        %9413 = vmatprep.subr.bf16.mxu0 %v8077
        %9414 = vmatpush2.bf16.msra.mxu0 %v8076
        %9415 = vmatprep.mubr.bf16.mxu0 %v4201
        %9416 = vmatmul.mubr.bf16.gmra.mxu0 %v4200
        %v9417 = vpop.f32.mrf.mxu0
        %v9418 = vadd.f32 %v9377, %v9417
        %v9419 = vpop.f32.mrf.mxu0
        %v9420 = vadd.f32 %v9379, %v9419
        %v9421 = vpop.f32.mrf.mxu0
        %v9422 = vpop.f32.mrf.mxu0
        %9423 = vdwg.mxu0
        %9424 = vmatprep.subr.bf16.mxu0 0
        %9425 = vmatpush1.bf16.msra.mxu0 0
        %9426 = vmatprep.subr.bf16.mxu0 0
        %9427 = vmatpush1.bf16.msra.mxu0 0
        %9428 = vmatprep.subr.bf16.mxu0 0
        %9429 = vmatpush1.bf16.msra.mxu0 0
        %9430 = vmatprep.subr.bf16.mxu0 0
        %9431 = vmatpush1.bf16.msra.mxu0 0
        %9432 = vmatprep.subr.bf16.mxu0 %v8121
        %9433 = vmatpush1.bf16.msra.mxu0 %v8120
        %9434 = vmatprep.subr.bf16.mxu0 %v8117
        %9435 = vmatpush1.bf16.msra.mxu0 %v8116
        %9436 = vmatprep.subr.bf16.mxu0 %v8113
        %9437 = vmatpush1.bf16.msra.mxu0 %v8112
        %9438 = vmatprep.subr.bf16.mxu0 %v8109
        %9439 = vmatpush1.bf16.msra.mxu0 %v8108
        %9440 = vmatprep.subr.bf16.mxu0 0
        %9441 = vmatpush2.bf16.msra.mxu0 0
        %9442 = vmatprep.subr.bf16.mxu0 0
        %9443 = vmatpush2.bf16.msra.mxu0 0
        %9444 = vmatprep.subr.bf16.mxu0 0
        %9445 = vmatpush2.bf16.msra.mxu0 0
        %9446 = vmatprep.subr.bf16.mxu0 0
        %9447 = vmatpush2.bf16.msra.mxu0 0
        %9448 = vmatprep.subr.bf16.mxu0 0
        %9449 = vmatpush2.bf16.msra.mxu0 0
        %9450 = vmatprep.subr.bf16.mxu0 0
        %9451 = vmatpush2.bf16.msra.mxu0 0
        %9452 = vmatprep.subr.bf16.mxu0 0
        %9453 = vmatpush2.bf16.msra.mxu0 0
        %9454 = vmatprep.subr.bf16.mxu0 0
        %9455 = vmatpush2.bf16.msra.mxu0 0
        %9456 = vmatprep.mubr.bf16.mxu0 0
        %9457 = vmatmul.mubr.bf16.gmra.mxu0 %v8930
        %v9458 = vpop.f32.mrf.mxu0
        %v9459 = vadd.f32 %v9418, %v9458
        %v9460 = vpop.f32.mrf.mxu0
        %v9461 = vadd.f32 %v9420, %v9460
        %v9462 = vpop.f32.mrf.mxu0
        %v9463 = vpop.f32.mrf.mxu0
        %9464 = vdwg.mxu0
        %9465 = vmatprep.subr.bf16.mxu0 %v7371
        %9466 = vmatpush1.bf16.msra.mxu0 %v7370
        %9467 = vmatprep.subr.bf16.mxu0 %v7367
        %9468 = vmatpush1.bf16.msra.mxu0 %v7366
        %9469 = vmatprep.subr.bf16.mxu0 %v7363
        %9470 = vmatpush1.bf16.msra.mxu0 %v7362
        %9471 = vmatprep.subr.bf16.mxu0 %v7359
        %9472 = vmatpush1.bf16.msra.mxu0 %v7358
        %9473 = vmatprep.subr.bf16.mxu0 %v7355
        %9474 = vmatpush1.bf16.msra.mxu0 %v7354
        %9475 = vmatprep.subr.bf16.mxu0 %v7351
        %9476 = vmatpush1.bf16.msra.mxu0 %v7350
        %9477 = vmatprep.subr.bf16.mxu0 %v7347
        %9478 = vmatpush1.bf16.msra.mxu0 %v7346
        %9479 = vmatprep.subr.bf16.mxu0 %v7343
        %9480 = vmatpush1.bf16.msra.mxu0 %v7342
        %9481 = vmatprep.subr.bf16.mxu0 %v7403
        %9482 = vmatpush2.bf16.msra.mxu0 %v7402
        %9483 = vmatprep.subr.bf16.mxu0 %v7399
        %9484 = vmatpush2.bf16.msra.mxu0 %v7398
        %9485 = vmatprep.subr.bf16.mxu0 %v7395
        %9486 = vmatpush2.bf16.msra.mxu0 %v7394
        %9487 = vmatprep.subr.bf16.mxu0 %v7391
        %9488 = vmatpush2.bf16.msra.mxu0 %v7390
        %9489 = vmatprep.subr.bf16.mxu0 %v7387
        %9490 = vmatpush2.bf16.msra.mxu0 %v7386
        %9491 = vmatprep.subr.bf16.mxu0 %v7383
        %9492 = vmatpush2.bf16.msra.mxu0 %v7382
        %9493 = vmatprep.subr.bf16.mxu0 %v7379
        %9494 = vmatpush2.bf16.msra.mxu0 %v7378
        %9495 = vmatprep.subr.bf16.mxu0 %v7375
        %9496 = vmatpush2.bf16.msra.mxu0 %v7374
        %9497 = vmatprep.mubr.bf16.mxu0 %v4179
        %9498 = vmatmul.mubr.bf16.gmra.mxu0 %v4178
        %v9499 = vpop.f32.mrf.mxu0
        %v9500 = vadd.f32 %v8920, %v9499
        %v9501 = vpop.f32.mrf.mxu0
        %v9502 = vadd.f32 %v8924, %v9501
        %v9503 = vpop.f32.mrf.mxu0
        %v9504 = vpop.f32.mrf.mxu0
        %9505 = vdwg.mxu0
        %9506 = vmatprep.subr.bf16.mxu0 %v7435
        %9507 = vmatpush1.bf16.msra.mxu0 %v7434
        %9508 = vmatprep.subr.bf16.mxu0 %v7431
        %9509 = vmatpush1.bf16.msra.mxu0 %v7430
        %9510 = vmatprep.subr.bf16.mxu0 %v7427
        %9511 = vmatpush1.bf16.msra.mxu0 %v7426
        %9512 = vmatprep.subr.bf16.mxu0 %v7423
        %9513 = vmatpush1.bf16.msra.mxu0 %v7422
        %9514 = vmatprep.subr.bf16.mxu0 %v7419
        %9515 = vmatpush1.bf16.msra.mxu0 %v7418
        %9516 = vmatprep.subr.bf16.mxu0 %v7415
        %9517 = vmatpush1.bf16.msra.mxu0 %v7414
        %9518 = vmatprep.subr.bf16.mxu0 %v7411
        %9519 = vmatpush1.bf16.msra.mxu0 %v7410
        %9520 = vmatprep.subr.bf16.mxu0 %v7407
        %9521 = vmatpush1.bf16.msra.mxu0 %v7406
        %9522 = vmatprep.subr.bf16.mxu0 %v7467
        %9523 = vmatpush2.bf16.msra.mxu0 %v7466
        %9524 = vmatprep.subr.bf16.mxu0 %v7463
        %9525 = vmatpush2.bf16.msra.mxu0 %v7462
        %9526 = vmatprep.subr.bf16.mxu0 %v7459
        %9527 = vmatpush2.bf16.msra.mxu0 %v7458
        %9528 = vmatprep.subr.bf16.mxu0 %v7455
        %9529 = vmatpush2.bf16.msra.mxu0 %v7454
        %9530 = vmatprep.subr.bf16.mxu0 %v7451
        %9531 = vmatpush2.bf16.msra.mxu0 %v7450
        %9532 = vmatprep.subr.bf16.mxu0 %v7447
        %9533 = vmatpush2.bf16.msra.mxu0 %v7446
        %9534 = vmatprep.subr.bf16.mxu0 %v7443
        %9535 = vmatpush2.bf16.msra.mxu0 %v7442
        %9536 = vmatprep.subr.bf16.mxu0 %v7439
        %9537 = vmatpush2.bf16.msra.mxu0 %v7438
        %9538 = vmatprep.mubr.bf16.mxu0 %v4181
        %9539 = vmatmul.mubr.bf16.gmra.mxu0 %v4180
        %v9540 = vpop.f32.mrf.mxu0
        %v9541 = vadd.f32 %v9500, %v9540
        %v9542 = vpop.f32.mrf.mxu0
        %v9543 = vadd.f32 %v9502, %v9542
        %v9544 = vpop.f32.mrf.mxu0
        %v9545 = vpop.f32.mrf.mxu0
        %9546 = vdwg.mxu0
        %9547 = vmatprep.subr.bf16.mxu0 %v7499
        %9548 = vmatpush1.bf16.msra.mxu0 %v7498
        %9549 = vmatprep.subr.bf16.mxu0 %v7495
        %9550 = vmatpush1.bf16.msra.mxu0 %v7494
        %9551 = vmatprep.subr.bf16.mxu0 %v7491
        %9552 = vmatpush1.bf16.msra.mxu0 %v7490
        %9553 = vmatprep.subr.bf16.mxu0 %v7487
        %9554 = vmatpush1.bf16.msra.mxu0 %v7486
        %9555 = vmatprep.subr.bf16.mxu0 %v7483
        %9556 = vmatpush1.bf16.msra.mxu0 %v7482
        %9557 = vmatprep.subr.bf16.mxu0 %v7479
        %9558 = vmatpush1.bf16.msra.mxu0 %v7478
        %9559 = vmatprep.subr.bf16.mxu0 %v7475
        %9560 = vmatpush1.bf16.msra.mxu0 %v7474
        %9561 = vmatprep.subr.bf16.mxu0 %v7471
        %9562 = vmatpush1.bf16.msra.mxu0 %v7470
        %9563 = vmatprep.subr.bf16.mxu0 %v7531
        %9564 = vmatpush2.bf16.msra.mxu0 %v7530
        %9565 = vmatprep.subr.bf16.mxu0 %v7527
        %9566 = vmatpush2.bf16.msra.mxu0 %v7526
        %9567 = vmatprep.subr.bf16.mxu0 %v7523
        %9568 = vmatpush2.bf16.msra.mxu0 %v7522
        %9569 = vmatprep.subr.bf16.mxu0 %v7519
        %9570 = vmatpush2.bf16.msra.mxu0 %v7518
        %9571 = vmatprep.subr.bf16.mxu0 %v7515
        %9572 = vmatpush2.bf16.msra.mxu0 %v7514
        %9573 = vmatprep.subr.bf16.mxu0 %v7511
        %9574 = vmatpush2.bf16.msra.mxu0 %v7510
        %9575 = vmatprep.subr.bf16.mxu0 %v7507
        %9576 = vmatpush2.bf16.msra.mxu0 %v7506
        %9577 = vmatprep.subr.bf16.mxu0 %v7503
        %9578 = vmatpush2.bf16.msra.mxu0 %v7502
        %9579 = vmatprep.mubr.bf16.mxu0 %v4183
        %9580 = vmatmul.mubr.bf16.gmra.mxu0 %v4182
        %v9581 = vpop.f32.mrf.mxu0
        %v9582 = vadd.f32 %v9541, %v9581
        %v9583 = vpop.f32.mrf.mxu0
        %v9584 = vadd.f32 %v9543, %v9583
        %v9585 = vpop.f32.mrf.mxu0
        %v9586 = vpop.f32.mrf.mxu0
        %9587 = vdwg.mxu0
        %9588 = vmatprep.subr.bf16.mxu0 %v7563
        %9589 = vmatpush1.bf16.msra.mxu0 %v7562
        %9590 = vmatprep.subr.bf16.mxu0 %v7559
        %9591 = vmatpush1.bf16.msra.mxu0 %v7558
        %9592 = vmatprep.subr.bf16.mxu0 %v7555
        %9593 = vmatpush1.bf16.msra.mxu0 %v7554
        %9594 = vmatprep.subr.bf16.mxu0 %v7551
        %9595 = vmatpush1.bf16.msra.mxu0 %v7550
        %9596 = vmatprep.subr.bf16.mxu0 %v7547
        %9597 = vmatpush1.bf16.msra.mxu0 %v7546
        %9598 = vmatprep.subr.bf16.mxu0 %v7543
        %9599 = vmatpush1.bf16.msra.mxu0 %v7542
        %9600 = vmatprep.subr.bf16.mxu0 %v7539
        %9601 = vmatpush1.bf16.msra.mxu0 %v7538
        %9602 = vmatprep.subr.bf16.mxu0 %v7535
        %9603 = vmatpush1.bf16.msra.mxu0 %v7534
        %9604 = vmatprep.subr.bf16.mxu0 %v7595
        %9605 = vmatpush2.bf16.msra.mxu0 %v7594
        %9606 = vmatprep.subr.bf16.mxu0 %v7591
        %9607 = vmatpush2.bf16.msra.mxu0 %v7590
        %9608 = vmatprep.subr.bf16.mxu0 %v7587
        %9609 = vmatpush2.bf16.msra.mxu0 %v7586
        %9610 = vmatprep.subr.bf16.mxu0 %v7583
        %9611 = vmatpush2.bf16.msra.mxu0 %v7582
        %9612 = vmatprep.subr.bf16.mxu0 %v7579
        %9613 = vmatpush2.bf16.msra.mxu0 %v7578
        %9614 = vmatprep.subr.bf16.mxu0 %v7575
        %9615 = vmatpush2.bf16.msra.mxu0 %v7574
        %9616 = vmatprep.subr.bf16.mxu0 %v7571
        %9617 = vmatpush2.bf16.msra.mxu0 %v7570
        %9618 = vmatprep.subr.bf16.mxu0 %v7567
        %9619 = vmatpush2.bf16.msra.mxu0 %v7566
        %9620 = vmatprep.mubr.bf16.mxu0 %v4185
        %9621 = vmatmul.mubr.bf16.gmra.mxu0 %v4184
        %v9622 = vpop.f32.mrf.mxu0
        %v9623 = vadd.f32 %v9582, %v9622
        %v9624 = vpop.f32.mrf.mxu0
        %v9625 = vadd.f32 %v9584, %v9624
        %v9626 = vpop.f32.mrf.mxu0
        %v9627 = vpop.f32.mrf.mxu0
        %9628 = vdwg.mxu0
        %9629 = vmatprep.subr.bf16.mxu0 %v7627
        %9630 = vmatpush1.bf16.msra.mxu0 %v7626
        %9631 = vmatprep.subr.bf16.mxu0 %v7623
        %9632 = vmatpush1.bf16.msra.mxu0 %v7622
        %9633 = vmatprep.subr.bf16.mxu0 %v7619
        %9634 = vmatpush1.bf16.msra.mxu0 %v7618
        %9635 = vmatprep.subr.bf16.mxu0 %v7615
        %9636 = vmatpush1.bf16.msra.mxu0 %v7614
        %9637 = vmatprep.subr.bf16.mxu0 %v7611
        %9638 = vmatpush1.bf16.msra.mxu0 %v7610
        %9639 = vmatprep.subr.bf16.mxu0 %v7607
        %9640 = vmatpush1.bf16.msra.mxu0 %v7606
        %9641 = vmatprep.subr.bf16.mxu0 %v7603
        %9642 = vmatpush1.bf16.msra.mxu0 %v7602
        %9643 = vmatprep.subr.bf16.mxu0 %v7599
        %9644 = vmatpush1.bf16.msra.mxu0 %v7598
        %9645 = vmatprep.subr.bf16.mxu0 %v7659
        %9646 = vmatpush2.bf16.msra.mxu0 %v7658
        %9647 = vmatprep.subr.bf16.mxu0 %v7655
        %9648 = vmatpush2.bf16.msra.mxu0 %v7654
        %9649 = vmatprep.subr.bf16.mxu0 %v7651
        %9650 = vmatpush2.bf16.msra.mxu0 %v7650
        %9651 = vmatprep.subr.bf16.mxu0 %v7647
        %9652 = vmatpush2.bf16.msra.mxu0 %v7646
        %9653 = vmatprep.subr.bf16.mxu0 %v7643
        %9654 = vmatpush2.bf16.msra.mxu0 %v7642
        %9655 = vmatprep.subr.bf16.mxu0 %v7639
        %9656 = vmatpush2.bf16.msra.mxu0 %v7638
        %9657 = vmatprep.subr.bf16.mxu0 %v7635
        %9658 = vmatpush2.bf16.msra.mxu0 %v7634
        %9659 = vmatprep.subr.bf16.mxu0 %v7631
        %9660 = vmatpush2.bf16.msra.mxu0 %v7630
        %9661 = vmatprep.mubr.bf16.mxu0 %v4187
        %9662 = vmatmul.mubr.bf16.gmra.mxu0 %v4186
        %v9663 = vpop.f32.mrf.mxu0
        %v9664 = vadd.f32 %v9623, %v9663
        %v9665 = vpop.f32.mrf.mxu0
        %v9666 = vadd.f32 %v9625, %v9665
        %v9667 = vpop.f32.mrf.mxu0
        %v9668 = vpop.f32.mrf.mxu0
        %9669 = vdwg.mxu0
        %9670 = vmatprep.subr.bf16.mxu0 %v7691
        %9671 = vmatpush1.bf16.msra.mxu0 %v7690
        %9672 = vmatprep.subr.bf16.mxu0 %v7687
        %9673 = vmatpush1.bf16.msra.mxu0 %v7686
        %9674 = vmatprep.subr.bf16.mxu0 %v7683
        %9675 = vmatpush1.bf16.msra.mxu0 %v7682
        %9676 = vmatprep.subr.bf16.mxu0 %v7679
        %9677 = vmatpush1.bf16.msra.mxu0 %v7678
        %9678 = vmatprep.subr.bf16.mxu0 %v7675
        %9679 = vmatpush1.bf16.msra.mxu0 %v7674
        %9680 = vmatprep.subr.bf16.mxu0 %v7671
        %9681 = vmatpush1.bf16.msra.mxu0 %v7670
        %9682 = vmatprep.subr.bf16.mxu0 %v7667
        %9683 = vmatpush1.bf16.msra.mxu0 %v7666
        %9684 = vmatprep.subr.bf16.mxu0 %v7663
        %9685 = vmatpush1.bf16.msra.mxu0 %v7662
        %9686 = vmatprep.subr.bf16.mxu0 %v7723
        %9687 = vmatpush2.bf16.msra.mxu0 %v7722
        %9688 = vmatprep.subr.bf16.mxu0 %v7719
        %9689 = vmatpush2.bf16.msra.mxu0 %v7718
        %9690 = vmatprep.subr.bf16.mxu0 %v7715
        %9691 = vmatpush2.bf16.msra.mxu0 %v7714
        %9692 = vmatprep.subr.bf16.mxu0 %v7711
        %9693 = vmatpush2.bf16.msra.mxu0 %v7710
        %9694 = vmatprep.subr.bf16.mxu0 %v7707
        %9695 = vmatpush2.bf16.msra.mxu0 %v7706
        %9696 = vmatprep.subr.bf16.mxu0 %v7703
        %9697 = vmatpush2.bf16.msra.mxu0 %v7702
        %9698 = vmatprep.subr.bf16.mxu0 %v7699
        %9699 = vmatpush2.bf16.msra.mxu0 %v7698
        %9700 = vmatprep.subr.bf16.mxu0 %v7695
        %9701 = vmatpush2.bf16.msra.mxu0 %v7694
        %9702 = vmatprep.mubr.bf16.mxu0 %v4189
        %9703 = vmatmul.mubr.bf16.gmra.mxu0 %v4188
        %v9704 = vpop.f32.mrf.mxu0
        %v9705 = vadd.f32 %v9664, %v9704
        %v9706 = vpop.f32.mrf.mxu0
        %v9707 = vadd.f32 %v9666, %v9706
        %v9708 = vpop.f32.mrf.mxu0
        %v9709 = vpop.f32.mrf.mxu0
        %9710 = vdwg.mxu0
        %9711 = vmatprep.subr.bf16.mxu0 %v7755
        %9712 = vmatpush1.bf16.msra.mxu0 %v7754
        %9713 = vmatprep.subr.bf16.mxu0 %v7751
        %9714 = vmatpush1.bf16.msra.mxu0 %v7750
        %9715 = vmatprep.subr.bf16.mxu0 %v7747
        %9716 = vmatpush1.bf16.msra.mxu0 %v7746
        %9717 = vmatprep.subr.bf16.mxu0 %v7743
        %9718 = vmatpush1.bf16.msra.mxu0 %v7742
        %9719 = vmatprep.subr.bf16.mxu0 %v7739
        %9720 = vmatpush1.bf16.msra.mxu0 %v7738
        %9721 = vmatprep.subr.bf16.mxu0 %v7735
        %9722 = vmatpush1.bf16.msra.mxu0 %v7734
        %9723 = vmatprep.subr.bf16.mxu0 %v7731
        %9724 = vmatpush1.bf16.msra.mxu0 %v7730
        %9725 = vmatprep.subr.bf16.mxu0 %v7727
        %9726 = vmatpush1.bf16.msra.mxu0 %v7726
        %9727 = vmatprep.subr.bf16.mxu0 %v7787
        %9728 = vmatpush2.bf16.msra.mxu0 %v7786
        %9729 = vmatprep.subr.bf16.mxu0 %v7783
        %9730 = vmatpush2.bf16.msra.mxu0 %v7782
        %9731 = vmatprep.subr.bf16.mxu0 %v7779
        %9732 = vmatpush2.bf16.msra.mxu0 %v7778
        %9733 = vmatprep.subr.bf16.mxu0 %v7775
        %9734 = vmatpush2.bf16.msra.mxu0 %v7774
        %9735 = vmatprep.subr.bf16.mxu0 %v7771
        %9736 = vmatpush2.bf16.msra.mxu0 %v7770
        %9737 = vmatprep.subr.bf16.mxu0 %v7767
        %9738 = vmatpush2.bf16.msra.mxu0 %v7766
        %9739 = vmatprep.subr.bf16.mxu0 %v7763
        %9740 = vmatpush2.bf16.msra.mxu0 %v7762
        %9741 = vmatprep.subr.bf16.mxu0 %v7759
        %9742 = vmatpush2.bf16.msra.mxu0 %v7758
        %9743 = vmatprep.mubr.bf16.mxu0 %v4191
        %9744 = vmatmul.mubr.bf16.gmra.mxu0 %v4190
        %v9745 = vpop.f32.mrf.mxu0
        %v9746 = vadd.f32 %v9705, %v9745
        %v9747 = vpop.f32.mrf.mxu0
        %v9748 = vadd.f32 %v9707, %v9747
        %v9749 = vpop.f32.mrf.mxu0
        %v9750 = vpop.f32.mrf.mxu0
        %9751 = vdwg.mxu0
        %9752 = vmatprep.subr.bf16.mxu0 %v7819
        %9753 = vmatpush1.bf16.msra.mxu0 %v7818
        %9754 = vmatprep.subr.bf16.mxu0 %v7815
        %9755 = vmatpush1.bf16.msra.mxu0 %v7814
        %9756 = vmatprep.subr.bf16.mxu0 %v7811
        %9757 = vmatpush1.bf16.msra.mxu0 %v7810
        %9758 = vmatprep.subr.bf16.mxu0 %v7807
        %9759 = vmatpush1.bf16.msra.mxu0 %v7806
        %9760 = vmatprep.subr.bf16.mxu0 %v7803
        %9761 = vmatpush1.bf16.msra.mxu0 %v7802
        %9762 = vmatprep.subr.bf16.mxu0 %v7799
        %9763 = vmatpush1.bf16.msra.mxu0 %v7798
        %9764 = vmatprep.subr.bf16.mxu0 %v7795
        %9765 = vmatpush1.bf16.msra.mxu0 %v7794
        %9766 = vmatprep.subr.bf16.mxu0 %v7791
        %9767 = vmatpush1.bf16.msra.mxu0 %v7790
        %9768 = vmatprep.subr.bf16.mxu0 %v7851
        %9769 = vmatpush2.bf16.msra.mxu0 %v7850
        %9770 = vmatprep.subr.bf16.mxu0 %v7847
        %9771 = vmatpush2.bf16.msra.mxu0 %v7846
        %9772 = vmatprep.subr.bf16.mxu0 %v7843
        %9773 = vmatpush2.bf16.msra.mxu0 %v7842
        %9774 = vmatprep.subr.bf16.mxu0 %v7839
        %9775 = vmatpush2.bf16.msra.mxu0 %v7838
        %9776 = vmatprep.subr.bf16.mxu0 %v7835
        %9777 = vmatpush2.bf16.msra.mxu0 %v7834
        %9778 = vmatprep.subr.bf16.mxu0 %v7831
        %9779 = vmatpush2.bf16.msra.mxu0 %v7830
        %9780 = vmatprep.subr.bf16.mxu0 %v7827
        %9781 = vmatpush2.bf16.msra.mxu0 %v7826
        %9782 = vmatprep.subr.bf16.mxu0 %v7823
        %9783 = vmatpush2.bf16.msra.mxu0 %v7822
        %9784 = vmatprep.mubr.bf16.mxu0 %v4193
        %9785 = vmatmul.mubr.bf16.gmra.mxu0 %v4192
        %v9786 = vpop.f32.mrf.mxu0
        %v9787 = vadd.f32 %v9746, %v9786
        %v9788 = vpop.f32.mrf.mxu0
        %v9789 = vadd.f32 %v9748, %v9788
        %v9790 = vpop.f32.mrf.mxu0
        %v9791 = vpop.f32.mrf.mxu0
        %9792 = vdwg.mxu0
        %9793 = vmatprep.subr.bf16.mxu0 %v7883
        %9794 = vmatpush1.bf16.msra.mxu0 %v7882
        %9795 = vmatprep.subr.bf16.mxu0 %v7879
        %9796 = vmatpush1.bf16.msra.mxu0 %v7878
        %9797 = vmatprep.subr.bf16.mxu0 %v7875
        %9798 = vmatpush1.bf16.msra.mxu0 %v7874
        %9799 = vmatprep.subr.bf16.mxu0 %v7871
        %9800 = vmatpush1.bf16.msra.mxu0 %v7870
        %9801 = vmatprep.subr.bf16.mxu0 %v7867
        %9802 = vmatpush1.bf16.msra.mxu0 %v7866
        %9803 = vmatprep.subr.bf16.mxu0 %v7863
        %9804 = vmatpush1.bf16.msra.mxu0 %v7862
        %9805 = vmatprep.subr.bf16.mxu0 %v7859
        %9806 = vmatpush1.bf16.msra.mxu0 %v7858
        %9807 = vmatprep.subr.bf16.mxu0 %v7855
        %9808 = vmatpush1.bf16.msra.mxu0 %v7854
        %9809 = vmatprep.subr.bf16.mxu0 %v7915
        %9810 = vmatpush2.bf16.msra.mxu0 %v7914
        %9811 = vmatprep.subr.bf16.mxu0 %v7911
        %9812 = vmatpush2.bf16.msra.mxu0 %v7910
        %9813 = vmatprep.subr.bf16.mxu0 %v7907
        %9814 = vmatpush2.bf16.msra.mxu0 %v7906
        %9815 = vmatprep.subr.bf16.mxu0 %v7903
        %9816 = vmatpush2.bf16.msra.mxu0 %v7902
        %9817 = vmatprep.subr.bf16.mxu0 %v7899
        %9818 = vmatpush2.bf16.msra.mxu0 %v7898
        %9819 = vmatprep.subr.bf16.mxu0 %v7895
        %9820 = vmatpush2.bf16.msra.mxu0 %v7894
        %9821 = vmatprep.subr.bf16.mxu0 %v7891
        %9822 = vmatpush2.bf16.msra.mxu0 %v7890
        %9823 = vmatprep.subr.bf16.mxu0 %v7887
        %9824 = vmatpush2.bf16.msra.mxu0 %v7886
        %9825 = vmatprep.mubr.bf16.mxu0 %v4195
        %9826 = vmatmul.mubr.bf16.gmra.mxu0 %v4194
        %v9827 = vpop.f32.mrf.mxu0
        %v9828 = vadd.f32 %v9787, %v9827
        %v9829 = vpop.f32.mrf.mxu0
        %v9830 = vadd.f32 %v9789, %v9829
        %v9831 = vpop.f32.mrf.mxu0
        %v9832 = vpop.f32.mrf.mxu0
        %9833 = vdwg.mxu0
        %9834 = vmatprep.subr.bf16.mxu0 %v7947
        %9835 = vmatpush1.bf16.msra.mxu0 %v7946
        %9836 = vmatprep.subr.bf16.mxu0 %v7943
        %9837 = vmatpush1.bf16.msra.mxu0 %v7942
        %9838 = vmatprep.subr.bf16.mxu0 %v7939
        %9839 = vmatpush1.bf16.msra.mxu0 %v7938
        %9840 = vmatprep.subr.bf16.mxu0 %v7935
        %9841 = vmatpush1.bf16.msra.mxu0 %v7934
        %9842 = vmatprep.subr.bf16.mxu0 %v7931
        %9843 = vmatpush1.bf16.msra.mxu0 %v7930
        %9844 = vmatprep.subr.bf16.mxu0 %v7927
        %9845 = vmatpush1.bf16.msra.mxu0 %v7926
        %9846 = vmatprep.subr.bf16.mxu0 %v7923
        %9847 = vmatpush1.bf16.msra.mxu0 %v7922
        %9848 = vmatprep.subr.bf16.mxu0 %v7919
        %9849 = vmatpush1.bf16.msra.mxu0 %v7918
        %9850 = vmatprep.subr.bf16.mxu0 %v7979
        %9851 = vmatpush2.bf16.msra.mxu0 %v7978
        %9852 = vmatprep.subr.bf16.mxu0 %v7975
        %9853 = vmatpush2.bf16.msra.mxu0 %v7974
        %9854 = vmatprep.subr.bf16.mxu0 %v7971
        %9855 = vmatpush2.bf16.msra.mxu0 %v7970
        %9856 = vmatprep.subr.bf16.mxu0 %v7967
        %9857 = vmatpush2.bf16.msra.mxu0 %v7966
        %9858 = vmatprep.subr.bf16.mxu0 %v7963
        %9859 = vmatpush2.bf16.msra.mxu0 %v7962
        %9860 = vmatprep.subr.bf16.mxu0 %v7959
        %9861 = vmatpush2.bf16.msra.mxu0 %v7958
        %9862 = vmatprep.subr.bf16.mxu0 %v7955
        %9863 = vmatpush2.bf16.msra.mxu0 %v7954
        %9864 = vmatprep.subr.bf16.mxu0 %v7951
        %9865 = vmatpush2.bf16.msra.mxu0 %v7950
        %9866 = vmatprep.mubr.bf16.mxu0 %v4197
        %9867 = vmatmul.mubr.bf16.gmra.mxu0 %v4196
        %v9868 = vpop.f32.mrf.mxu0
        %v9869 = vadd.f32 %v9828, %v9868
        %v9870 = vpop.f32.mrf.mxu0
        %v9871 = vadd.f32 %v9830, %v9870
        %v9872 = vpop.f32.mrf.mxu0
        %v9873 = vpop.f32.mrf.mxu0
        %9874 = vdwg.mxu0
        %9875 = vmatprep.subr.bf16.mxu0 %v8011
        %9876 = vmatpush1.bf16.msra.mxu0 %v8010
        %9877 = vmatprep.subr.bf16.mxu0 %v8007
        %9878 = vmatpush1.bf16.msra.mxu0 %v8006
        %9879 = vmatprep.subr.bf16.mxu0 %v8003
        %9880 = vmatpush1.bf16.msra.mxu0 %v8002
        %9881 = vmatprep.subr.bf16.mxu0 %v7999
        %9882 = vmatpush1.bf16.msra.mxu0 %v7998
        %9883 = vmatprep.subr.bf16.mxu0 %v7995
        %9884 = vmatpush1.bf16.msra.mxu0 %v7994
        %9885 = vmatprep.subr.bf16.mxu0 %v7991
        %9886 = vmatpush1.bf16.msra.mxu0 %v7990
        %9887 = vmatprep.subr.bf16.mxu0 %v7987
        %9888 = vmatpush1.bf16.msra.mxu0 %v7986
        %9889 = vmatprep.subr.bf16.mxu0 %v7983
        %9890 = vmatpush1.bf16.msra.mxu0 %v7982
        %9891 = vmatprep.subr.bf16.mxu0 %v8043
        %9892 = vmatpush2.bf16.msra.mxu0 %v8042
        %9893 = vmatprep.subr.bf16.mxu0 %v8039
        %9894 = vmatpush2.bf16.msra.mxu0 %v8038
        %9895 = vmatprep.subr.bf16.mxu0 %v8035
        %9896 = vmatpush2.bf16.msra.mxu0 %v8034
        %9897 = vmatprep.subr.bf16.mxu0 %v8031
        %9898 = vmatpush2.bf16.msra.mxu0 %v8030
        %9899 = vmatprep.subr.bf16.mxu0 %v8027
        %9900 = vmatpush2.bf16.msra.mxu0 %v8026
        %9901 = vmatprep.subr.bf16.mxu0 %v8023
        %9902 = vmatpush2.bf16.msra.mxu0 %v8022
        %9903 = vmatprep.subr.bf16.mxu0 %v8019
        %9904 = vmatpush2.bf16.msra.mxu0 %v8018
        %9905 = vmatprep.subr.bf16.mxu0 %v8015
        %9906 = vmatpush2.bf16.msra.mxu0 %v8014
        %9907 = vmatprep.mubr.bf16.mxu0 %v4199
        %9908 = vmatmul.mubr.bf16.gmra.mxu0 %v4198
        %v9909 = vpop.f32.mrf.mxu0
        %v9910 = vadd.f32 %v9869, %v9909
        %v9911 = vpop.f32.mrf.mxu0
        %v9912 = vadd.f32 %v9871, %v9911
        %v9913 = vpop.f32.mrf.mxu0
        %v9914 = vpop.f32.mrf.mxu0
        %9915 = vdwg.mxu0
        %9916 = vmatprep.subr.bf16.mxu0 %v8075
        %9917 = vmatpush1.bf16.msra.mxu0 %v8074
        %9918 = vmatprep.subr.bf16.mxu0 %v8071
        %9919 = vmatpush1.bf16.msra.mxu0 %v8070
        %9920 = vmatprep.subr.bf16.mxu0 %v8067
        %9921 = vmatpush1.bf16.msra.mxu0 %v8066
        %9922 = vmatprep.subr.bf16.mxu0 %v8063
        %9923 = vmatpush1.bf16.msra.mxu0 %v8062
        %9924 = vmatprep.subr.bf16.mxu0 %v8059
        %9925 = vmatpush1.bf16.msra.mxu0 %v8058
        %9926 = vmatprep.subr.bf16.mxu0 %v8055
        %9927 = vmatpush1.bf16.msra.mxu0 %v8054
        %9928 = vmatprep.subr.bf16.mxu0 %v8051
        %9929 = vmatpush1.bf16.msra.mxu0 %v8050
        %9930 = vmatprep.subr.bf16.mxu0 %v8047
        %9931 = vmatpush1.bf16.msra.mxu0 %v8046
        %9932 = vmatprep.subr.bf16.mxu0 %v8107
        %9933 = vmatpush2.bf16.msra.mxu0 %v8106
        %9934 = vmatprep.subr.bf16.mxu0 %v8103
        %9935 = vmatpush2.bf16.msra.mxu0 %v8102
        %9936 = vmatprep.subr.bf16.mxu0 %v8099
        %9937 = vmatpush2.bf16.msra.mxu0 %v8098
        %9938 = vmatprep.subr.bf16.mxu0 %v8095
        %9939 = vmatpush2.bf16.msra.mxu0 %v8094
        %9940 = vmatprep.subr.bf16.mxu0 %v8091
        %9941 = vmatpush2.bf16.msra.mxu0 %v8090
        %9942 = vmatprep.subr.bf16.mxu0 %v8087
        %9943 = vmatpush2.bf16.msra.mxu0 %v8086
        %9944 = vmatprep.subr.bf16.mxu0 %v8083
        %9945 = vmatpush2.bf16.msra.mxu0 %v8082
        %9946 = vmatprep.subr.bf16.mxu0 %v8079
        %9947 = vmatpush2.bf16.msra.mxu0 %v8078
        %9948 = vmatprep.mubr.bf16.mxu0 %v4201
        %9949 = vmatmul.mubr.bf16.gmra.mxu0 %v4200
        %v9950 = vpop.f32.mrf.mxu0
        %v9951 = vadd.f32 %v9910, %v9950
        %v9952 = vpop.f32.mrf.mxu0
        %v9953 = vadd.f32 %v9912, %v9952
        %v9954 = vpop.f32.mrf.mxu0
        %v9955 = vpop.f32.mrf.mxu0
        %9956 = vdwg.mxu0
        %9957 = vmatprep.subr.bf16.mxu0 0
        %9958 = vmatpush1.bf16.msra.mxu0 0
        %9959 = vmatprep.subr.bf16.mxu0 0
        %9960 = vmatpush1.bf16.msra.mxu0 0
        %9961 = vmatprep.subr.bf16.mxu0 0
        %9962 = vmatpush1.bf16.msra.mxu0 0
        %9963 = vmatprep.subr.bf16.mxu0 0
        %9964 = vmatpush1.bf16.msra.mxu0 0
        %9965 = vmatprep.subr.bf16.mxu0 %v8123
        %9966 = vmatpush1.bf16.msra.mxu0 %v8122
        %9967 = vmatprep.subr.bf16.mxu0 %v8119
        %9968 = vmatpush1.bf16.msra.mxu0 %v8118
        %9969 = vmatprep.subr.bf16.mxu0 %v8115
        %9970 = vmatpush1.bf16.msra.mxu0 %v8114
        %9971 = vmatprep.subr.bf16.mxu0 %v8111
        %9972 = vmatpush1.bf16.msra.mxu0 %v8110
        %9973 = vmatprep.subr.bf16.mxu0 0
        %9974 = vmatpush2.bf16.msra.mxu0 0
        %9975 = vmatprep.subr.bf16.mxu0 0
        %9976 = vmatpush2.bf16.msra.mxu0 0
        %9977 = vmatprep.subr.bf16.mxu0 0
        %9978 = vmatpush2.bf16.msra.mxu0 0
        %9979 = vmatprep.subr.bf16.mxu0 0
        %9980 = vmatpush2.bf16.msra.mxu0 0
        %9981 = vmatprep.subr.bf16.mxu0 0
        %9982 = vmatpush2.bf16.msra.mxu0 0
        %9983 = vmatprep.subr.bf16.mxu0 0
        %9984 = vmatpush2.bf16.msra.mxu0 0
        %9985 = vmatprep.subr.bf16.mxu0 0
        %9986 = vmatpush2.bf16.msra.mxu0 0
        %9987 = vmatprep.subr.bf16.mxu0 0
        %9988 = vmatpush2.bf16.msra.mxu0 0
        %9989 = vmatprep.mubr.bf16.mxu0 0
        %9990 = vmatmul.mubr.bf16.gmra.mxu0 %v8930
        %v9991 = vpop.f32.mrf.mxu0
        %v9992 = vadd.f32 %v9951, %v9991
        %v9993 = vpop.f32.mrf.mxu0
        %v9994 = vadd.f32 %v9953, %v9993
        %v9995 = vpop.f32.mrf.mxu0
        %v9996 = vpop.f32.mrf.mxu0
        %9997 = vdwg.mxu0
        %v9998 = vmax.f32 %v9459, 0.0
        %v9999 = vmax.f32 %v9461, 0.0
        %v10000 = vmax.f32 %v9992, 0.0
        %v10001 = vmax.f32 %v9994, 0.0
        %v10002 = vpack.c.bf16 %v9998, %v9998
        %v10003 = vpack.c.bf16 %v9999, %v9999
        %v10004 = vpack.c.bf16 %v10000, %v10000
        %v10005 = vpack.c.bf16 %v10001, %v10001
        %v10006 = vld [vmem:[%s9] sm:$0xf]
        %v10007 = vld [vmem:[%s9 + $0x4] sm:$0xf]
        %v10008 = vld [vmem:[%s9 + $0x8] sm:$0xf]
        %v10009 = vld [vmem:[%s9 + $0xc] sm:$0xf]
        %v10010 = vld [vmem:[%s9 + $0x10] sm:$0xf]
        %v10011 = vld [vmem:[%s9 + $0x14] sm:$0xf]
        %v10012 = vld [vmem:[%s9 + $0x18] sm:$0xf]
        %v10013 = vld [vmem:[%s9 + $0x1c] sm:$0xf]
        %v10014 = vld [vmem:[%s9 + $0x20] sm:$0xf]
        %v10015 = vld [vmem:[%s9 + $0x24] sm:$0xf]
        %v10016 = vld [vmem:[%s9 + $0x28] sm:$0xf]
        %v10017 = vld [vmem:[%s9 + $0x2c] sm:$0xf]
        %v10018 = vld [vmem:[%s9 + $0x30] sm:$0xf]
        %v10019 = vld [vmem:[%s9 + $0x34] sm:$0xf]
        %v10020 = vld [vmem:[%s9 + $0x38] sm:$0xf]
        %v10021 = vld [vmem:[%s9 + $0x3c] sm:$0xf]
        %v10022 = vld [vmem:[%s9 + $0x40] sm:$0xf]
        %v10023 = vld [vmem:[%s9 + $0x44] sm:$0xf]
        %v10024 = vld [vmem:[%s9 + $0x48] sm:$0xf]
        %v10025 = vld [vmem:[%s9 + $0x4c] sm:$0xf]
        %v10026 = vld [vmem:[%s9 + $0x50] sm:$0xf]
        %v10027 = vld [vmem:[%s9 + $0x54] sm:$0xf]
        %v10028 = vld [vmem:[%s9 + $0x58] sm:$0xf]
        %v10029 = vld [vmem:[%s9 + $0x5c] sm:$0xf]
        %v10030 = vld [vmem:[%s9 + $0x60] sm:$0xf]
        %v10031 = vld [vmem:[%s9 + $0x64] sm:$0xf]
        %v10032 = vld [vmem:[%s9 + $0x68] sm:$0xf]
        %v10033 = vld [vmem:[%s9 + $0x6c] sm:$0xf]
        %v10034 = vld [vmem:[%s9 + $0x70] sm:$0xf]
        %v10035 = vld [vmem:[%s9 + $0x74] sm:$0xf]
        %v10036 = vld [vmem:[%s9 + $0x78] sm:$0xf]
        %v10037 = vld [vmem:[%s9 + $0x7c] sm:$0xf]
        %v10038 = vld [vmem:[%s9 + $0x80] sm:$0xf]
        %v10039 = vld [vmem:[%s9 + $0x84] sm:$0xf]
        %v10040 = vld [vmem:[%s9 + $0x88] sm:$0xf]
        %v10041 = vld [vmem:[%s9 + $0x8c] sm:$0xf]
        %v10042 = vld [vmem:[%s9 + $0x90] sm:$0xf]
        %v10043 = vld [vmem:[%s9 + $0x94] sm:$0xf]
        %v10044 = vld [vmem:[%s9 + $0x98] sm:$0xf]
        %v10045 = vld [vmem:[%s9 + $0x9c] sm:$0xf]
        %v10046 = vld [vmem:[%s9 + $0xa0] sm:$0xf]
        %v10047 = vld [vmem:[%s9 + $0xa4] sm:$0xf]
        %v10048 = vld [vmem:[%s9 + $0xa8] sm:$0xf]
        %v10049 = vld [vmem:[%s9 + $0xac] sm:$0xf]
        %v10050 = vld [vmem:[%s9 + $0xb0] sm:$0xf]
        %v10051 = vld [vmem:[%s9 + $0xb4] sm:$0xf]
        %v10052 = vld [vmem:[%s9 + $0xb8] sm:$0xf]
        %v10053 = vld [vmem:[%s9 + $0xbc] sm:$0xf]
        %v10054 = vld [vmem:[%s9 + $0xc0] sm:$0xf]
        %v10055 = vld [vmem:[%s9 + $0xc4] sm:$0xf]
        %v10056 = vld [vmem:[%s9 + $0xc8] sm:$0xf]
        %v10057 = vld [vmem:[%s9 + $0xcc] sm:$0xf]
        %v10058 = vld [vmem:[%s9 + $0xd0] sm:$0xf]
        %v10059 = vld [vmem:[%s9 + $0xd4] sm:$0xf]
        %v10060 = vld [vmem:[%s9 + $0xd8] sm:$0xf]
        %v10061 = vld [vmem:[%s9 + $0xdc] sm:$0xf]
        %v10062 = vld [vmem:[%s9 + $0xe0] sm:$0xf]
        %v10063 = vld [vmem:[%s9 + $0xe4] sm:$0xf]
        %v10064 = vld [vmem:[%s9 + $0xe8] sm:$0xf]
        %v10065 = vld [vmem:[%s9 + $0xec] sm:$0xf]
        %v10066 = vld [vmem:[%s9 + $0xf0] sm:$0xf]
        %v10067 = vld [vmem:[%s9 + $0xf4] sm:$0xf]
        %v10068 = vld [vmem:[%s9 + $0xf8] sm:$0xf]
        %v10069 = vld [vmem:[%s9 + $0xfc] sm:$0xf]
        %v10070 = vld [vmem:[%s10] sm:$0x1]
        %v10135 = vunpack.c.l.b16 %v10006
        %v10136 = vunpack.c.l.b16 %v10007
        %v10137 = vunpack.c.l.b16 %v10008
        %v10138 = vunpack.c.l.b16 %v10009
        %v10139 = vunpack.c.l.b16 %v10010
        %v10140 = vunpack.c.l.b16 %v10011
        %v10141 = vunpack.c.l.b16 %v10012
        %v10142 = vunpack.c.l.b16 %v10013
        %v10143 = vunpack.c.l.b16 %v10014
        %v10144 = vunpack.c.l.b16 %v10015
        %v10145 = vunpack.c.l.b16 %v10016
        %v10146 = vunpack.c.l.b16 %v10017
        %v10147 = vunpack.c.l.b16 %v10018
        %v10148 = vunpack.c.l.b16 %v10019
        %v10149 = vunpack.c.l.b16 %v10020
        %v10150 = vunpack.c.l.b16 %v10021
        %v10151 = vunpack.c.l.b16 %v10022
        %v10152 = vunpack.c.l.b16 %v10023
        %v10153 = vunpack.c.l.b16 %v10024
        %v10154 = vunpack.c.l.b16 %v10025
        %v10155 = vunpack.c.l.b16 %v10026
        %v10156 = vunpack.c.l.b16 %v10027
        %v10157 = vunpack.c.l.b16 %v10028
        %v10158 = vunpack.c.l.b16 %v10029
        %v10159 = vunpack.c.l.b16 %v10030
        %v10160 = vunpack.c.l.b16 %v10031
        %v10161 = vunpack.c.l.b16 %v10032
        %v10162 = vunpack.c.l.b16 %v10033
        %v10163 = vunpack.c.l.b16 %v10034
        %v10164 = vunpack.c.l.b16 %v10035
        %v10165 = vunpack.c.l.b16 %v10036
        %v10166 = vunpack.c.l.b16 %v10037
        %v10167 = vunpack.c.l.b16 %v10038
        %v10168 = vunpack.c.l.b16 %v10039
        %v10169 = vunpack.c.l.b16 %v10040
        %v10170 = vunpack.c.l.b16 %v10041
        %v10171 = vunpack.c.l.b16 %v10042
        %v10172 = vunpack.c.l.b16 %v10043
        %v10173 = vunpack.c.l.b16 %v10044
        %v10174 = vunpack.c.l.b16 %v10045
        %v10175 = vunpack.c.l.b16 %v10046
        %v10176 = vunpack.c.l.b16 %v10047
        %v10177 = vunpack.c.l.b16 %v10048
        %v10178 = vunpack.c.l.b16 %v10049
        %v10179 = vunpack.c.l.b16 %v10050
        %v10180 = vunpack.c.l.b16 %v10051
        %v10181 = vunpack.c.l.b16 %v10052
        %v10182 = vunpack.c.l.b16 %v10053
        %v10183 = vunpack.c.l.b16 %v10054
        %v10184 = vunpack.c.l.b16 %v10055
        %v10185 = vunpack.c.l.b16 %v10056
        %v10186 = vunpack.c.l.b16 %v10057
        %v10187 = vunpack.c.l.b16 %v10058
        %v10188 = vunpack.c.l.b16 %v10059
        %v10189 = vunpack.c.l.b16 %v10060
        %v10190 = vunpack.c.l.b16 %v10061
        %v10191 = vunpack.c.l.b16 %v10062
        %v10192 = vunpack.c.l.b16 %v10063
        %v10193 = vunpack.c.l.b16 %v10064
        %v10194 = vunpack.c.l.b16 %v10065
        %v10195 = vunpack.c.l.b16 %v10066
        %v10196 = vunpack.c.l.b16 %v10067
        %v10197 = vunpack.c.l.b16 %v10068
        %v10198 = vunpack.c.l.b16 %v10069
        %v10199 = vpack.c.b16 %v10136, %v10135
        %v10200 = vpack.c.b16 %v10138, %v10137
        %v10201 = vpack.c.b16 %v10140, %v10139
        %v10202 = vpack.c.b16 %v10142, %v10141
        %v10203 = vpack.c.b16 %v10144, %v10143
        %v10204 = vpack.c.b16 %v10146, %v10145
        %v10205 = vpack.c.b16 %v10148, %v10147
        %v10206 = vpack.c.b16 %v10150, %v10149
        %v10207 = vpack.c.b16 %v10152, %v10151
        %v10208 = vpack.c.b16 %v10154, %v10153
        %v10209 = vpack.c.b16 %v10156, %v10155
        %v10210 = vpack.c.b16 %v10158, %v10157
        %v10211 = vpack.c.b16 %v10160, %v10159
        %v10212 = vpack.c.b16 %v10162, %v10161
        %v10213 = vpack.c.b16 %v10164, %v10163
        %v10214 = vpack.c.b16 %v10166, %v10165
        %v10215 = vpack.c.b16 %v10168, %v10167
        %v10216 = vpack.c.b16 %v10170, %v10169
        %v10217 = vpack.c.b16 %v10172, %v10171
        %v10218 = vpack.c.b16 %v10174, %v10173
        %v10219 = vpack.c.b16 %v10176, %v10175
        %v10220 = vpack.c.b16 %v10178, %v10177
        %v10221 = vpack.c.b16 %v10180, %v10179
        %v10222 = vpack.c.b16 %v10182, %v10181
        %v10223 = vpack.c.b16 %v10184, %v10183
        %v10224 = vpack.c.b16 %v10186, %v10185
        %v10225 = vpack.c.b16 %v10188, %v10187
        %v10226 = vpack.c.b16 %v10190, %v10189
        %v10227 = vpack.c.b16 %v10192, %v10191
        %v10228 = vpack.c.b16 %v10194, %v10193
        %v10229 = vpack.c.b16 %v10196, %v10195
        %v10230 = vpack.c.b16 %v10198, %v10197
        %10263 = vmatprep.subr.bf16.mxu0 0
        %10264 = vmatpush1.bf16.msra.mxu0 %v10206
        %10265 = vmatprep.subr.bf16.mxu0 0
        %10266 = vmatpush1.bf16.msra.mxu0 %v10205
        %10267 = vmatprep.subr.bf16.mxu0 0
        %10268 = vmatpush1.bf16.msra.mxu0 %v10204
        %10269 = vmatprep.subr.bf16.mxu0 0
        %10270 = vmatpush1.bf16.msra.mxu0 %v10203
        %10271 = vmatprep.subr.bf16.mxu0 0
        %10272 = vmatpush1.bf16.msra.mxu0 %v10202
        %10273 = vmatprep.subr.bf16.mxu0 0
        %10274 = vmatpush1.bf16.msra.mxu0 %v10201
        %10275 = vmatprep.subr.bf16.mxu0 0
        %10276 = vmatpush1.bf16.msra.mxu0 %v10200
        %10277 = vmatprep.subr.bf16.mxu0 0
        %10278 = vmatpush1.bf16.msra.mxu0 %v10199
        %10279 = vmatprep.subr.bf16.mxu0 0
        %10280 = vmatpush2.bf16.msra.mxu0 %v10214
        %10281 = vmatprep.subr.bf16.mxu0 0
        %10282 = vmatpush2.bf16.msra.mxu0 %v10213
        %10283 = vmatprep.subr.bf16.mxu0 0
        %10284 = vmatpush2.bf16.msra.mxu0 %v10212
        %10285 = vmatprep.subr.bf16.mxu0 0
        %10286 = vmatpush2.bf16.msra.mxu0 %v10211
        %10287 = vmatprep.subr.bf16.mxu0 0
        %10288 = vmatpush2.bf16.msra.mxu0 %v10210
        %10289 = vmatprep.subr.bf16.mxu0 0
        %10290 = vmatpush2.bf16.msra.mxu0 %v10209
        %10291 = vmatprep.subr.bf16.mxu0 0
        %10292 = vmatpush2.bf16.msra.mxu0 %v10208
        %10293 = vmatprep.subr.bf16.mxu0 0
        %10294 = vmatpush2.bf16.msra.mxu0 %v10207
        %10295 = vmatprep.mubr.bf16.mxu0 %v10003
        %10296 = vmatmul.mubr.bf16.gmra.mxu0 %v10002
        %v10297 = vpop.f32.mrf.mxu0
        %v10298 = vadd.f32 %v10070, %v10297
        %v10299 = vpop.f32.mrf.mxu0
        %v10300 = vpop.f32.mrf.mxu0
        %v10301 = vpop.f32.mrf.mxu0
        %10302 = vdwg.mxu0
        %10303 = vmatprep.subr.bf16.mxu0 0
        %10304 = vmatpush1.bf16.msra.mxu0 %v10222
        %10305 = vmatprep.subr.bf16.mxu0 0
        %10306 = vmatpush1.bf16.msra.mxu0 %v10221
        %10307 = vmatprep.subr.bf16.mxu0 0
        %10308 = vmatpush1.bf16.msra.mxu0 %v10220
        %10309 = vmatprep.subr.bf16.mxu0 0
        %10310 = vmatpush1.bf16.msra.mxu0 %v10219
        %10311 = vmatprep.subr.bf16.mxu0 0
        %10312 = vmatpush1.bf16.msra.mxu0 %v10218
        %10313 = vmatprep.subr.bf16.mxu0 0
        %10314 = vmatpush1.bf16.msra.mxu0 %v10217
        %10315 = vmatprep.subr.bf16.mxu0 0
        %10316 = vmatpush1.bf16.msra.mxu0 %v10216
        %10317 = vmatprep.subr.bf16.mxu0 0
        %10318 = vmatpush1.bf16.msra.mxu0 %v10215
        %10319 = vmatprep.subr.bf16.mxu0 0
        %10320 = vmatpush2.bf16.msra.mxu0 %v10230
        %10321 = vmatprep.subr.bf16.mxu0 0
        %10322 = vmatpush2.bf16.msra.mxu0 %v10229
        %10323 = vmatprep.subr.bf16.mxu0 0
        %10324 = vmatpush2.bf16.msra.mxu0 %v10228
        %10325 = vmatprep.subr.bf16.mxu0 0
        %10326 = vmatpush2.bf16.msra.mxu0 %v10227
        %10327 = vmatprep.subr.bf16.mxu0 0
        %10328 = vmatpush2.bf16.msra.mxu0 %v10226
        %10329 = vmatprep.subr.bf16.mxu0 0
        %10330 = vmatpush2.bf16.msra.mxu0 %v10225
        %10331 = vmatprep.subr.bf16.mxu0 0
        %10332 = vmatpush2.bf16.msra.mxu0 %v10224
        %10333 = vmatprep.subr.bf16.mxu0 0
        %10334 = vmatpush2.bf16.msra.mxu0 %v10223
        %10335 = vmatprep.mubr.bf16.mxu0 %v10005
        %10336 = vmatmul.mubr.bf16.gmra.mxu0 %v10004
        %v10337 = vpop.f32.mrf.mxu0
        %v10338 = vadd.f32 %v10298, %v10337
        %v10339 = vpop.f32.mrf.mxu0
        %v10340 = vpop.f32.mrf.mxu0
        %v10341 = vpop.f32.mrf.mxu0
        %10342 = vdwg.mxu0
        %vm10343 = vcmask 40960
        %10344 = vst.msk [vmem:[%s378] sm:$0x1] %vm10343, %v10338
        %s10345 = sand.u32 %s269, 1
        %s10346 = scalar_lea.sflag [#allocation4], %s10345
        %s10347 = sand.u32 %s269, 1
        %s10348 = scalar_lea.vmem [#allocation3], %s10347
        // Predicated region
        $region65: #{dqn_forward.1} parent=63 // pred_check
          %p10349 = pneg %p279
        $region66: #{dqn_forward.1} parent=63 // pred_check_branch
          %10351 = sbr.rel (%p10349) target = $region68
        $region67: #{dqn_forward.1} parent=63 // pred_region
          %s10353 = ssub.s32 16, 16
          %10354 = vsyncadd %s10346, %s10353
          %s10355 = smul.addr %s25, 16
          %s10356 = scalar_lea.hbm %s11, %s10355
          %s10358 = sshll.u32 %s10348, 4
          %s10359 = int_to_ptr.vmem [resolvable:$true] %s10358
          %10361 = dma.vmem_to_hbm [thread:$0]  %s10359, 16, %s10356, %s10346
        $region68: #{dqn_forward.1} parent=63 // pred_fallthru
          _
      $region64: #{dqn_forward.1} parent=5 // pred_fallthru
        _
      %p10362 = scmp.le.s32.totalorder 2, %s20
      // Predicated region
      $region69: #{dqn_forward.1} parent=5 // pred_check
        %p10363 = pneg %p10362
      $region70: #{dqn_forward.1} parent=5 // pred_check_branch
        %10365 = sbr.rel (%p10363) target = $region72
      $region71: #{dqn_forward.1} parent=5 // pred_region
        %s10366 = ssub.s32 %s20, 2
        // Predicated region
        $region73: #{dqn_forward.1} parent=71 // pred_check
          %p10367 = pneg %p285
        $region74: #{dqn_forward.1} parent=71 // pred_check_branch
          %10369 = sbr.rel (%p10367) target = $region76
        $region75: #{dqn_forward.1} parent=71 // pred_region
          %s10370 = sand.u32 %s270, 1
          %s10371 = scalar_lea.sflag [#allocation4], %s10370
          %s10372 = sand.u32 %s270, 1
          %s10373 = scalar_lea.vmem [#allocation3], %s10372
          %10374 = dma.done %s10371, 16
        $region76: #{dqn_forward.1} parent=71 // pred_fallthru
          _
      $region72: #{dqn_forward.1} parent=5 // pred_fallthru
        _
    $region6: #{dqn_forward.1} parent=1 // loop_footer
      %s24 = sadd.s32 1, %s20
    $region7: #{dqn_forward.1} parent=1 // loop_footer_branch
      %19 = sbr.rel target = $region3
    $region8: #{dqn_forward.1} parent=1 // loop_exit
      _
    %10375 = vsyncpa [#allocation4], 1
    %s10376 = scalar_lea.sflag [#allocation4], 1
    %10377 = vsyncpa %s10376, 1

</llo_original>
